<compile_context>
chip_gen: v6e
topology: v6e:2x2x1
jax: 0.10.0
libtpu: 0.0.40
codegen_flags: <defaults>
</compile_context>

<pallas_src>
import functools

import jax
import jax.numpy as jnp
from jax.experimental import pallas as pl
from jax.experimental.pallas import tpu as pltpu


# ----------------------------------------------------------------------------
# Pallas kernels (transposed, lane-dense orientation: out = W[Cout,K] @ P[K,M])
# ----------------------------------------------------------------------------
def gemm_act_kernel(w_ref, p_ref, o_ref, *, act):
    """One M-tile of the conv GEMM, fused with an optional activation."""
    acc = jnp.dot(w_ref[...], p_ref[...], preferred_element_type=jnp.float32)
    if act == "leaky":
        acc = jnp.where(acc >= 0.0, acc, 0.2 * acc)
    elif act == "sigmoid":
        # sigmoid(x) = 0.5 * (tanh(x/2) + 1): numerically clean, runs on the EUP.
        acc = 0.5 * (jnp.tanh(0.5 * acc) + 1.0)
    o_ref[...] = acc.astype(o_ref.dtype)


def gemm_bn_lrelu_kernel(w_ref, p_ref, g_ref, b_ref, o_ref):
    """Fused conv GEMM + training-mode BatchNorm + LeakyReLU(0.2).

    The whole (Cout, M) layer output is a single VMEM block, so per-channel
    mean/var over M = N*H*W (reduced along the lane axis) are computed on the
    f32 accumulator before the single store.
    """
    acc = jnp.dot(w_ref[...], p_ref[...], preferred_element_type=jnp.float32)
    mean = jnp.mean(acc, axis=1, keepdims=True)
    # Biased variance, matching PyTorch BN normalization in training mode.
    # (No running-stat bookkeeping: forward-only, training-mode semantics.)
    var = jnp.mean(jnp.square(acc - mean), axis=1, keepdims=True)
    y = (acc - mean) * jax.lax.rsqrt(var + 1e-5) * g_ref[...] + b_ref[...]
    o_ref[...] = jnp.where(y >= 0.0, y, 0.2 * y).astype(o_ref.dtype)


# ----------------------------------------------------------------------------
# Wrappers around pallas_call
# ----------------------------------------------------------------------------
def _pick_tile(m, target=2048):
    """Largest convenient M-tile that divides M (no masking needed)."""
    if m <= target:
        return m
    for t in (target, 1024, 512, 256, 128):
        if m % t == 0:
            return t
    return m  # fall back to a single block


def conv_gemm_act(wT, patchesT, act, out_dtype):
    """wT: (Cout, K) bf16, patchesT: (K, M) bf16 -> act(wT @ patchesT): (Cout, M)."""
    cout, k = wT.shape
    m = patchesT.shape[1]
    tm = _pick_tile(m)
    kernel = functools.partial(gemm_act_kernel, act=act)
    return pl.pallas_call(
        kernel,
        out_shape=jax.ShapeDtypeStruct((cout, m), out_dtype),
        grid=(m // tm,),
        in_specs=[
            pl.BlockSpec((cout, k), lambda i: (0, 0)),
            pl.BlockSpec((k, tm), lambda i: (0, i)),
        ],
        out_specs=pl.BlockSpec((cout, tm), lambda i: (0, i)),
        compiler_params=pltpu.CompilerParams(dimension_semantics=("parallel",)),
    )(wT, patchesT)


def conv_gemm_bn_lrelu(wT, patchesT, gamma, beta, out_dtype):
    """Single-block fused conv + BN + LeakyReLU. gamma/beta: (Cout, 1) f32."""
    cout, k = wT.shape
    m = patchesT.shape[1]
    return pl.pallas_call(
        gemm_bn_lrelu_kernel,
        out_shape=jax.ShapeDtypeStruct((cout, m), out_dtype),
        grid=(1,),
        in_specs=[
            pl.BlockSpec((cout, k), lambda i: (0, 0)),
            pl.BlockSpec((k, m), lambda i: (0, 0)),
            pl.BlockSpec((cout, 1), lambda i: (0, 0)),
            pl.BlockSpec((cout, 1), lambda i: (0, 0)),
        ],
        out_specs=pl.BlockSpec((cout, m), lambda i: (0, 0)),
    )(wT, patchesT, gamma, beta)


# ----------------------------------------------------------------------------
# Glue: channel-major im2col, weight reshaping, full forward pass
# ----------------------------------------------------------------------------
def im2col_nchw(x, ksize, stride, pad):
    """x: (N, C, H, W) -> patchesT: (C*k*k, N*Ho*Wo), K order (c, kh, kw)."""
    n, c, h, w = x.shape
    xp = jnp.pad(x, ((0, 0), (0, 0), (pad, pad), (pad, pad)))
    ho = (h + 2 * pad - ksize) // stride + 1
    wo = (w + 2 * pad - ksize) // stride + 1
    taps = []
    for i in range(ksize):
        for j in range(ksize):
            taps.append(xp[:, :, i:i + stride * ho:stride, j:j + stride * wo:stride])
    p = jnp.stack(taps, axis=2)                     # (N, C, k*k, Ho, Wo)
    p = p.reshape(n, c * ksize * ksize, ho, wo)     # K order (c, kh, kw)
    p = jnp.transpose(p, (1, 0, 2, 3)).reshape(c * ksize * ksize, n * ho * wo)
    return p, ho, wo


def to_nchw(yT, n, ho, wo):
    """(Cout, N*Ho*Wo) -> (N, Cout, Ho, Wo)."""
    return jnp.transpose(yT.reshape(-1, n, ho, wo), (1, 0, 2, 3))


def discriminator_forward(x_nchw, params):
    n = x_nchw.shape[0]
    x = x_nchw.astype(jnp.bfloat16)   # bf16 GEMM operands; all BN/act math stays f32

    # conv1 + LeakyReLU (fused in the GEMM kernel), tiled over M with a parallel grid
    p, ho, wo = im2col_nchw(x, 4, 2, 1)
    y = conv_gemm_act(params["w1"], p, act="leaky", out_dtype=jnp.bfloat16)
    x = to_nchw(y, n, ho, wo)

    # conv2..conv5: conv + BatchNorm + LeakyReLU fused into ONE kernel each
    for li in (2, 3, 4, 5):
        p, ho, wo = im2col_nchw(x, 4, 2, 1)
        y = conv_gemm_bn_lrelu(params[f"w{li}"], p, params[f"g{li}"], params[f"b{li}"],
                               out_dtype=jnp.bfloat16)
        x = to_nchw(y, n, ho, wo)

    # conv6 (4x4, stride 1, valid) + sigmoid (fused in the GEMM kernel)
    p, ho, wo = im2col_nchw(x, 4, 1, 0)
    y = conv_gemm_act(params["w6"], p, act="sigmoid", out_dtype=jnp.float32)  # (1, N)
    return to_nchw(y, n, ho, wo)   # (N, 1, 1, 1)


def init_params(key, in_channels, fmd):
    """Deterministic synthetic init (DCGAN-style N(0, 0.02) conv weights)."""
    chans = [in_channels, fmd, fmd * 2, fmd * 4, fmd * 8, fmd * 16, 1]
    params = {}
    keys = jax.random.split(key, 6)
    for i in range(6):
        cout, cin = chans[i + 1], chans[i]
        w = 0.02 * jax.random.normal(keys[i], (cout, cin, 4, 4), dtype=jnp.float32)
        # (Cout, Cin, KH, KW) -> (Cout, K) with K order (c, kh, kw); bf16 MXU operand.
        params[f"w{i + 1}"] = w.reshape(cout, cin * 16).astype(jnp.bfloat16)
    # BatchNorm affine params: PyTorch defaults gamma=1, beta=0 (f32, column vectors)
    for li, c in zip((2, 3, 4, 5), (fmd * 2, fmd * 4, fmd * 8, fmd * 16)):
        params[f"g{li}"] = jnp.ones((c, 1), jnp.float32)
        params[f"b{li}"] = jnp.zeros((c, 1), jnp.float32)
    return params


if __name__ == "__main__":
    CHANNEL = 3       # cfg.DATASET.CHANNEL
    FMD = 8           # cfg.MODEL.FEATURE_MAPS_D (kept small)
    N, H, W = 2, 128, 128   # 128x128 required by the 5x stride-2 + 4x4-valid topology

    key = jax.random.PRNGKey(0)
    kx, kp = jax.random.split(key)
    x = jax.random.normal(kx, (N, CHANNEL, H, W), dtype=jnp.float32)
    params = init_params(kp, CHANNEL, FMD)

    out = jax.jit(discriminator_forward)(x, params)
    out = jax.block_until_ready(out)
    assert out.shape == (N, 1, 1, 1)
    assert bool(jnp.all((out >= 0.0) & (out <= 1.0)))
    print("KERNEL_OK")
</pallas_src>

<mosaic_0001>
module attributes {stable_mosaic.version = 11 : i64} {
  func.func @gemm_act_kernel(%arg0: i32, %arg1: memref<8x48xbf16, #tpu.memory_space<vmem>>, %arg2: memref<48x2048xbf16, #tpu.memory_space<vmem>>, %arg3: memref<8x2048xbf16, #tpu.memory_space<vmem>>) attributes {dimension_semantics = [#tpu.dimension_semantics<parallel>], iteration_bounds = array<i64: 4>, scalar_prefetch = 0 : i64, scratch_operands = 0 : i64, tpu.core_type = #tpu.core_type<tc>, window_params = [{pipeline_mode = #tpu.pipeline_mode<synchronous>, transform_indices = @transform_0, window_bounds = array<i64: 8, 48>}, {transform_indices = @transform_1, window_bounds = array<i64: 48, 2048>}, {transform_indices = @transform_2, window_bounds = array<i64: 8, 2048>}]} {
    %c0 = arith.constant 0 : index
    %c0_0 = arith.constant 0 : index
    %0 = vector.load %arg1[%c0, %c0_0] : memref<8x48xbf16, #tpu.memory_space<vmem>>, vector<8x48xbf16>
    %c0_1 = arith.constant 0 : index
    %c0_2 = arith.constant 0 : index
    %1 = vector.load %arg2[%c0_1, %c0_2] : memref<48x2048xbf16, #tpu.memory_space<vmem>>, vector<48x2048xbf16>
    %cst = arith.constant dense<0.000000e+00> : vector<8x2048xf32>
    %2 = tpu.matmul %0, %1, %cst {dimension_numbers = #tpu.dot_dimension_numbers<[1], [0], [0], [1], [0, 0, 1, 1], [], []>} : vector<8x48xbf16>, vector<48x2048xbf16>, vector<8x2048xf32> -> vector<8x2048xf32>
    %cst_3 = arith.constant 0.000000e+00 : f32
    %3 = vector.broadcast %cst_3 : f32 to vector<8x2048xf32>
    %4 = arith.cmpf oge, %2, %3 : vector<8x2048xf32>
    %cst_4 = arith.constant 2.000000e-01 : f32
    %5 = vector.broadcast %cst_4 : f32 to vector<8x2048xf32>
    %6 = arith.mulf %5, %2 : vector<8x2048xf32>
    %7 = arith.select %4, %2, %6 : vector<8x2048xi1>, vector<8x2048xf32>
    %8 = arith.truncf %7 : vector<8x2048xf32> to vector<8x2048xbf16>
    %c0_5 = arith.constant 0 : index
    %c0_6 = arith.constant 0 : index
    %9 = vector.load %arg3[%c0_5, %c0_6] : memref<8x2048xbf16, #tpu.memory_space<vmem>>, vector<8x2048xbf16>
    tpu.vector_store %arg3[%c0_5, %c0_6], %8 {strides = array<i32>} : memref<8x2048xbf16, #tpu.memory_space<vmem>>, vector<8x2048xbf16>,
    return
  }
  func.func @transform_0(%arg0: i32) -> (i32, i32) {
    %c0_i32 = arith.constant 0 : i32
    %c0_i32_0 = arith.constant 0 : i32
    %c0_i32_1 = arith.constant 0 : i32
    return %c0_i32, %c0_i32_0 : i32, i32
  }
  func.func @transform_1(%arg0: i32) -> (i32, i32) {
    %c0_i32 = arith.constant 0 : i32
    %c0_i32_0 = arith.constant 0 : i32
    return %c0_i32, %arg0 : i32, i32
  }
  func.func @transform_2(%arg0: i32) -> (i32, i32) {
    %c0_i32 = arith.constant 0 : i32
    %c0_i32_0 = arith.constant 0 : i32
    return %c0_i32, %arg0 : i32, i32
  }
}

module attributes {stable_mosaic.version = 11 : i64} {
  func.func @gemm_bn_lrelu_kernel(%arg0: i32, %arg1: memref<16x128xbf16, #tpu.memory_space<vmem>>, %arg2: memref<128x2048xbf16, #tpu.memory_space<vmem>>, %arg3: memref<16x1xf32, #tpu.memory_space<vmem>>, %arg4: memref<16x1xf32, #tpu.memory_space<vmem>>, %arg5: memref<16x2048xbf16, #tpu.memory_space<vmem>>) attributes {dimension_semantics = [#tpu.dimension_semantics<arbitrary>], iteration_bounds = array<i64: 1>, scalar_prefetch = 0 : i64, scratch_operands = 0 : i64, tpu.core_type = #tpu.core_type<tc>, window_params = [{pipeline_mode = #tpu.pipeline_mode<synchronous>, transform_indices = @transform_0, window_bounds = array<i64: 16, 128>}, {pipeline_mode = #tpu.pipeline_mode<synchronous>, transform_indices = @transform_1, window_bounds = array<i64: 128, 2048>}, {pipeline_mode = #tpu.pipeline_mode<synchronous>, transform_indices = @transform_2, window_bounds = array<i64: 16, 1>}, {pipeline_mode = #tpu.pipeline_mode<synchronous>, transform_indices = @transform_3, window_bounds = array<i64: 16, 1>}, {pipeline_mode = #tpu.pipeline_mode<synchronous>, transform_indices = @transform_4, window_bounds = array<i64: 16, 2048>}]} {
    %c0 = arith.constant 0 : index
    %c0_0 = arith.constant 0 : index
    %0 = vector.load %arg1[%c0, %c0_0] : memref<16x128xbf16, #tpu.memory_space<vmem>>, vector<16x128xbf16>
    %c0_1 = arith.constant 0 : index
    %c0_2 = arith.constant 0 : index
    %1 = vector.load %arg2[%c0_1, %c0_2] : memref<128x2048xbf16, #tpu.memory_space<vmem>>, vector<128x2048xbf16>
    %cst = arith.constant dense<0.000000e+00> : vector<16x2048xf32>
    %2 = tpu.matmul %0, %1, %cst {dimension_numbers = #tpu.dot_dimension_numbers<[1], [0], [0], [1], [0, 0, 1, 1], [], []>} : vector<16x128xbf16>, vector<128x2048xbf16>, vector<16x2048xf32> -> vector<16x2048xf32>
    %cst_3 = arith.constant dense<0.000000e+00> : vector<16xf32>
    %3 = vector.multi_reduction <add>, %2, %cst_3 [1] : vector<16x2048xf32> to vector<16xf32>
    %4 = vector.shape_cast %3 : vector<16xf32> to vector<16x1xf32>
    %cst_4 = arith.constant 2.048000e+03 : f32
    %5 = vector.broadcast %cst_4 : f32 to vector<16x1xf32>
    %6 = arith.divf %4, %5 : vector<16x1xf32>
    %7 = vector.broadcast %6 : vector<16x1xf32> to vector<16x2048xf32>
    %8 = arith.subf %2, %7 : vector<16x2048xf32>
    %9 = arith.mulf %8, %8 : vector<16x2048xf32>
    %cst_5 = arith.constant dense<0.000000e+00> : vector<16xf32>
    %10 = vector.multi_reduction <add>, %9, %cst_5 [1] : vector<16x2048xf32> to vector<16xf32>
    %11 = vector.shape_cast %10 : vector<16xf32> to vector<16x1xf32>
    %cst_6 = arith.constant 2.048000e+03 : f32
    %12 = vector.broadcast %cst_6 : f32 to vector<16x1xf32>
    %13 = arith.divf %11, %12 : vector<16x1xf32>
    %14 = vector.broadcast %6 : vector<16x1xf32> to vector<16x2048xf32>
    %15 = arith.subf %2, %14 : vector<16x2048xf32>
    %cst_7 = arith.constant 9.99999974E-6 : f32
    %16 = vector.broadcast %cst_7 : f32 to vector<16x1xf32>
    %17 = arith.addf %13, %16 : vector<16x1xf32>
    %18 = math.rsqrt %17 : vector<16x1xf32>
    %19 = vector.broadcast %18 : vector<16x1xf32> to vector<16x2048xf32>
    %20 = arith.mulf %15, %19 : vector<16x2048xf32>
    %c0_8 = arith.constant 0 : index
    %c0_9 = arith.constant 0 : index
    %21 = vector.load %arg3[%c0_8, %c0_9] : memref<16x1xf32, #tpu.memory_space<vmem>>, vector<16x1xf32>
    %22 = vector.broadcast %21 : vector<16x1xf32> to vector<16x2048xf32>
    %23 = arith.mulf %20, %22 : vector<16x2048xf32>
    %c0_10 = arith.constant 0 : index
    %c0_11 = arith.constant 0 : index
    %24 = vector.load %arg4[%c0_10, %c0_11] : memref<16x1xf32, #tpu.memory_space<vmem>>, vector<16x1xf32>
    %25 = vector.broadcast %24 : vector<16x1xf32> to vector<16x2048xf32>
    %26 = arith.addf %23, %25 : vector<16x2048xf32>
    %cst_12 = arith.constant 0.000000e+00 : f32
    %27 = vector.broadcast %cst_12 : f32 to vector<16x2048xf32>
    %28 = arith.cmpf oge, %26, %27 : vector<16x2048xf32>
    %cst_13 = arith.constant 2.000000e-01 : f32
    %29 = vector.broadcast %cst_13 : f32 to vector<16x2048xf32>
    %30 = arith.mulf %29, %26 : vector<16x2048xf32>
    %31 = arith.select %28, %26, %30 : vector<16x2048xi1>, vector<16x2048xf32>
    %32 = arith.truncf %31 : vector<16x2048xf32> to vector<16x2048xbf16>
    %c0_14 = arith.constant 0 : index
    %c0_15 = arith.constant 0 : index
    %33 = vector.load %arg5[%c0_14, %c0_15] : memref<16x2048xbf16, #tpu.memory_space<vmem>>, vector<16x2048xbf16>
    tpu.vector_store %arg5[%c0_14, %c0_15], %32 {strides = array<i32>} : memref<16x2048xbf16, #tpu.memory_space<vmem>>, vector<16x2048xbf16>,
    return
  }
  func.func @transform_0(%arg0: i32) -> (i32, i32) {
    %c0_i32 = arith.constant 0 : i32
    %c0_i32_0 = arith.constant 0 : i32
    %c0_i32_1 = arith.constant 0 : i32
    return %c0_i32, %c0_i32_0 : i32, i32
  }
  func.func @transform_1(%arg0: i32) -> (i32, i32) {
    %c0_i32 = arith.constant 0 : i32
    %c0_i32_0 = arith.constant 0 : i32
    %c0_i32_1 = arith.constant 0 : i32
    return %c0_i32, %c0_i32_0 : i32, i32
  }
  func.func @transform_2(%arg0: i32) -> (i32, i32) {
    %c0_i32 = arith.constant 0 : i32
    %c0_i32_0 = arith.constant 0 : i32
    %c0_i32_1 = arith.constant 0 : i32
    return %c0_i32, %c0_i32_0 : i32, i32
  }
  func.func @transform_3(%arg0: i32) -> (i32, i32) {
    %c0_i32 = arith.constant 0 : i32
    %c0_i32_0 = arith.constant 0 : i32
    %c0_i32_1 = arith.constant 0 : i32
    return %c0_i32, %c0_i32_0 : i32, i32
  }
  func.func @transform_4(%arg0: i32) -> (i32, i32) {
    %c0_i32 = arith.constant 0 : i32
    %c0_i32_0 = arith.constant 0 : i32
    %c0_i32_1 = arith.constant 0 : i32
    return %c0_i32, %c0_i32_0 : i32, i32
  }
}

module attributes {stable_mosaic.version = 11 : i64} {
  func.func @gemm_bn_lrelu_kernel(%arg0: i32, %arg1: memref<32x256xbf16, #tpu.memory_space<vmem>>, %arg2: memref<256x512xbf16, #tpu.memory_space<vmem>>, %arg3: memref<32x1xf32, #tpu.memory_space<vmem>>, %arg4: memref<32x1xf32, #tpu.memory_space<vmem>>, %arg5: memref<32x512xbf16, #tpu.memory_space<vmem>>) attributes {dimension_semantics = [#tpu.dimension_semantics<arbitrary>], iteration_bounds = array<i64: 1>, scalar_prefetch = 0 : i64, scratch_operands = 0 : i64, tpu.core_type = #tpu.core_type<tc>, window_params = [{pipeline_mode = #tpu.pipeline_mode<synchronous>, transform_indices = @transform_0, window_bounds = array<i64: 32, 256>}, {pipeline_mode = #tpu.pipeline_mode<synchronous>, transform_indices = @transform_1, window_bounds = array<i64: 256, 512>}, {pipeline_mode = #tpu.pipeline_mode<synchronous>, transform_indices = @transform_2, window_bounds = array<i64: 32, 1>}, {pipeline_mode = #tpu.pipeline_mode<synchronous>, transform_indices = @transform_3, window_bounds = array<i64: 32, 1>}, {pipeline_mode = #tpu.pipeline_mode<synchronous>, transform_indices = @transform_4, window_bounds = array<i64: 32, 512>}]} {
    %c0 = arith.constant 0 : index
    %c0_0 = arith.constant 0 : index
    %0 = vector.load %arg1[%c0, %c0_0] : memref<32x256xbf16, #tpu.memory_space<vmem>>, vector<32x256xbf16>
    %c0_1 = arith.constant 0 : index
    %c0_2 = arith.constant 0 : index
    %1 = vector.load %arg2[%c0_1, %c0_2] : memref<256x512xbf16, #tpu.memory_space<vmem>>, vector<256x512xbf16>
    %cst = arith.constant dense<0.000000e+00> : vector<32x512xf32>
    %2 = tpu.matmul %0, %1, %cst {dimension_numbers = #tpu.dot_dimension_numbers<[1], [0], [0], [1], [0, 0, 1, 1], [], []>} : vector<32x256xbf16>, vector<256x512xbf16>, vector<32x512xf32> -> vector<32x512xf32>
    %cst_3 = arith.constant dense<0.000000e+00> : vector<32xf32>
    %3 = vector.multi_reduction <add>, %2, %cst_3 [1] : vector<32x512xf32> to vector<32xf32>
    %4 = vector.shape_cast %3 : vector<32xf32> to vector<32x1xf32>
    %cst_4 = arith.constant 5.120000e+02 : f32
    %5 = vector.broadcast %cst_4 : f32 to vector<32x1xf32>
    %6 = arith.divf %4, %5 : vector<32x1xf32>
    %7 = vector.broadcast %6 : vector<32x1xf32> to vector<32x512xf32>
    %8 = arith.subf %2, %7 : vector<32x512xf32>
    %9 = arith.mulf %8, %8 : vector<32x512xf32>
    %cst_5 = arith.constant dense<0.000000e+00> : vector<32xf32>
    %10 = vector.multi_reduction <add>, %9, %cst_5 [1] : vector<32x512xf32> to vector<32xf32>
    %11 = vector.shape_cast %10 : vector<32xf32> to vector<32x1xf32>
    %cst_6 = arith.constant 5.120000e+02 : f32
    %12 = vector.broadcast %cst_6 : f32 to vector<32x1xf32>
    %13 = arith.divf %11, %12 : vector<32x1xf32>
    %14 = vector.broadcast %6 : vector<32x1xf32> to vector<32x512xf32>
    %15 = arith.subf %2, %14 : vector<32x512xf32>
    %cst_7 = arith.constant 9.99999974E-6 : f32
    %16 = vector.broadcast %cst_7 : f32 to vector<32x1xf32>
    %17 = arith.addf %13, %16 : vector<32x1xf32>
    %18 = math.rsqrt %17 : vector<32x1xf32>
    %19 = vector.broadcast %18 : vector<32x1xf32> to vector<32x512xf32>
    %20 = arith.mulf %15, %19 : vector<32x512xf32>
    %c0_8 = arith.constant 0 : index
    %c0_9 = arith.constant 0 : index
    %21 = vector.load %arg3[%c0_8, %c0_9] : memref<32x1xf32, #tpu.memory_space<vmem>>, vector<32x1xf32>
    %22 = vector.broadcast %21 : vector<32x1xf32> to vector<32x512xf32>
    %23 = arith.mulf %20, %22 : vector<32x512xf32>
    %c0_10 = arith.constant 0 : index
    %c0_11 = arith.constant 0 : index
    %24 = vector.load %arg4[%c0_10, %c0_11] : memref<32x1xf32, #tpu.memory_space<vmem>>, vector<32x1xf32>
    %25 = vector.broadcast %24 : vector<32x1xf32> to vector<32x512xf32>
    %26 = arith.addf %23, %25 : vector<32x512xf32>
    %cst_12 = arith.constant 0.000000e+00 : f32
    %27 = vector.broadcast %cst_12 : f32 to vector<32x512xf32>
    %28 = arith.cmpf oge, %26, %27 : vector<32x512xf32>
    %cst_13 = arith.constant 2.000000e-01 : f32
    %29 = vector.broadcast %cst_13 : f32 to vector<32x512xf32>
    %30 = arith.mulf %29, %26 : vector<32x512xf32>
    %31 = arith.select %28, %26, %30 : vector<32x512xi1>, vector<32x512xf32>
    %32 = arith.truncf %31 : vector<32x512xf32> to vector<32x512xbf16>
    %c0_14 = arith.constant 0 : index
    %c0_15 = arith.constant 0 : index
    %33 = vector.load %arg5[%c0_14, %c0_15] : memref<32x512xbf16, #tpu.memory_space<vmem>>, vector<32x512xbf16>
    tpu.vector_store %arg5[%c0_14, %c0_15], %32 {strides = array<i32>} : memref<32x512xbf16, #tpu.memory_space<vmem>>, vector<32x512xbf16>,
    return
  }
  func.func @transform_0(%arg0: i32) -> (i32, i32) {
    %c0_i32 = arith.constant 0 : i32
    %c0_i32_0 = arith.constant 0 : i32
    %c0_i32_1 = arith.constant 0 : i32
    return %c0_i32, %c0_i32_0 : i32, i32
  }
  func.func @transform_1(%arg0: i32) -> (i32, i32) {
    %c0_i32 = arith.constant 0 : i32
    %c0_i32_0 = arith.constant 0 : i32
    %c0_i32_1 = arith.constant 0 : i32
    return %c0_i32, %c0_i32_0 : i32, i32
  }
  func.func @transform_2(%arg0: i32) -> (i32, i32) {
    %c0_i32 = arith.constant 0 : i32
    %c0_i32_0 = arith.constant 0 : i32
    %c0_i32_1 = arith.constant 0 : i32
    return %c0_i32, %c0_i32_0 : i32, i32
  }
  func.func @transform_3(%arg0: i32) -> (i32, i32) {
    %c0_i32 = arith.constant 0 : i32
    %c0_i32_0 = arith.constant 0 : i32
    %c0_i32_1 = arith.constant 0 : i32
    return %c0_i32, %c0_i32_0 : i32, i32
  }
  func.func @transform_4(%arg0: i32) -> (i32, i32) {
    %c0_i32 = arith.constant 0 : i32
    %c0_i32_0 = arith.constant 0 : i32
    %c0_i32_1 = arith.constant 0 : i32
    return %c0_i32, %c0_i32_0 : i32, i32
  }
}

module attributes {stable_mosaic.version = 11 : i64} {
  func.func @gemm_bn_lrelu_kernel(%arg0: i32, %arg1: memref<64x512xbf16, #tpu.memory_space<vmem>>, %arg2: memref<512x128xbf16, #tpu.memory_space<vmem>>, %arg3: memref<64x1xf32, #tpu.memory_space<vmem>>, %arg4: memref<64x1xf32, #tpu.memory_space<vmem>>, %arg5: memref<64x128xbf16, #tpu.memory_space<vmem>>) attributes {dimension_semantics = [#tpu.dimension_semantics<arbitrary>], iteration_bounds = array<i64: 1>, scalar_prefetch = 0 : i64, scratch_operands = 0 : i64, tpu.core_type = #tpu.core_type<tc>, window_params = [{pipeline_mode = #tpu.pipeline_mode<synchronous>, transform_indices = @transform_0, window_bounds = array<i64: 64, 512>}, {pipeline_mode = #tpu.pipeline_mode<synchronous>, transform_indices = @transform_1, window_bounds = array<i64: 512, 128>}, {pipeline_mode = #tpu.pipeline_mode<synchronous>, transform_indices = @transform_2, window_bounds = array<i64: 64, 1>}, {pipeline_mode = #tpu.pipeline_mode<synchronous>, transform_indices = @transform_3, window_bounds = array<i64: 64, 1>}, {pipeline_mode = #tpu.pipeline_mode<synchronous>, transform_indices = @transform_4, window_bounds = array<i64: 64, 128>}]} {
    %c0 = arith.constant 0 : index
    %c0_0 = arith.constant 0 : index
    %0 = vector.load %arg1[%c0, %c0_0] : memref<64x512xbf16, #tpu.memory_space<vmem>>, vector<64x512xbf16>
    %c0_1 = arith.constant 0 : index
    %c0_2 = arith.constant 0 : index
    %1 = vector.load %arg2[%c0_1, %c0_2] : memref<512x128xbf16, #tpu.memory_space<vmem>>, vector<512x128xbf16>
    %cst = arith.constant dense<0.000000e+00> : vector<64x128xf32>
    %2 = tpu.matmul %0, %1, %cst {dimension_numbers = #tpu.dot_dimension_numbers<[1], [0], [0], [1], [0, 0, 1, 1], [], []>} : vector<64x512xbf16>, vector<512x128xbf16>, vector<64x128xf32> -> vector<64x128xf32>
    %cst_3 = arith.constant dense<0.000000e+00> : vector<64xf32>
    %3 = vector.multi_reduction <add>, %2, %cst_3 [1] : vector<64x128xf32> to vector<64xf32>
    %4 = vector.shape_cast %3 : vector<64xf32> to vector<64x1xf32>
    %cst_4 = arith.constant 1.280000e+02 : f32
    %5 = vector.broadcast %cst_4 : f32 to vector<64x1xf32>
    %6 = arith.divf %4, %5 : vector<64x1xf32>
    %7 = vector.broadcast %6 : vector<64x1xf32> to vector<64x128xf32>
    %8 = arith.subf %2, %7 : vector<64x128xf32>
    %9 = arith.mulf %8, %8 : vector<64x128xf32>
    %cst_5 = arith.constant dense<0.000000e+00> : vector<64xf32>
    %10 = vector.multi_reduction <add>, %9, %cst_5 [1] : vector<64x128xf32> to vector<64xf32>
    %11 = vector.shape_cast %10 : vector<64xf32> to vector<64x1xf32>
    %cst_6 = arith.constant 1.280000e+02 : f32
    %12 = vector.broadcast %cst_6 : f32 to vector<64x1xf32>
    %13 = arith.divf %11, %12 : vector<64x1xf32>
    %14 = vector.broadcast %6 : vector<64x1xf32> to vector<64x128xf32>
    %15 = arith.subf %2, %14 : vector<64x128xf32>
    %cst_7 = arith.constant 9.99999974E-6 : f32
    %16 = vector.broadcast %cst_7 : f32 to vector<64x1xf32>
    %17 = arith.addf %13, %16 : vector<64x1xf32>
    %18 = math.rsqrt %17 : vector<64x1xf32>
    %19 = vector.broadcast %18 : vector<64x1xf32> to vector<64x128xf32>
    %20 = arith.mulf %15, %19 : vector<64x128xf32>
    %c0_8 = arith.constant 0 : index
    %c0_9 = arith.constant 0 : index
    %21 = vector.load %arg3[%c0_8, %c0_9] : memref<64x1xf32, #tpu.memory_space<vmem>>, vector<64x1xf32>
    %22 = vector.broadcast %21 : vector<64x1xf32> to vector<64x128xf32>
    %23 = arith.mulf %20, %22 : vector<64x128xf32>
    %c0_10 = arith.constant 0 : index
    %c0_11 = arith.constant 0 : index
    %24 = vector.load %arg4[%c0_10, %c0_11] : memref<64x1xf32, #tpu.memory_space<vmem>>, vector<64x1xf32>
    %25 = vector.broadcast %24 : vector<64x1xf32> to vector<64x128xf32>
    %26 = arith.addf %23, %25 : vector<64x128xf32>
    %cst_12 = arith.constant 0.000000e+00 : f32
    %27 = vector.broadcast %cst_12 : f32 to vector<64x128xf32>
    %28 = arith.cmpf oge, %26, %27 : vector<64x128xf32>
    %cst_13 = arith.constant 2.000000e-01 : f32
    %29 = vector.broadcast %cst_13 : f32 to vector<64x128xf32>
    %30 = arith.mulf %29, %26 : vector<64x128xf32>
    %31 = arith.select %28, %26, %30 : vector<64x128xi1>, vector<64x128xf32>
    %32 = arith.truncf %31 : vector<64x128xf32> to vector<64x128xbf16>
    %c0_14 = arith.constant 0 : index
    %c0_15 = arith.constant 0 : index
    %33 = vector.load %arg5[%c0_14, %c0_15] : memref<64x128xbf16, #tpu.memory_space<vmem>>, vector<64x128xbf16>
    tpu.vector_store %arg5[%c0_14, %c0_15], %32 {strides = array<i32>} : memref<64x128xbf16, #tpu.memory_space<vmem>>, vector<64x128xbf16>,
    return
  }
  func.func @transform_0(%arg0: i32) -> (i32, i32) {
    %c0_i32 = arith.constant 0 : i32
    %c0_i32_0 = arith.constant 0 : i32
    %c0_i32_1 = arith.constant 0 : i32
    return %c0_i32, %c0_i32_0 : i32, i32
  }
  func.func @transform_1(%arg0: i32) -> (i32, i32) {
    %c0_i32 = arith.constant 0 : i32
    %c0_i32_0 = arith.constant 0 : i32
    %c0_i32_1 = arith.constant 0 : i32
    return %c0_i32, %c0_i32_0 : i32, i32
  }
  func.func @transform_2(%arg0: i32) -> (i32, i32) {
    %c0_i32 = arith.constant 0 : i32
    %c0_i32_0 = arith.constant 0 : i32
    %c0_i32_1 = arith.constant 0 : i32
    return %c0_i32, %c0_i32_0 : i32, i32
  }
  func.func @transform_3(%arg0: i32) -> (i32, i32) {
    %c0_i32 = arith.constant 0 : i32
    %c0_i32_0 = arith.constant 0 : i32
    %c0_i32_1 = arith.constant 0 : i32
    return %c0_i32, %c0_i32_0 : i32, i32
  }
  func.func @transform_4(%arg0: i32) -> (i32, i32) {
    %c0_i32 = arith.constant 0 : i32
    %c0_i32_0 = arith.constant 0 : i32
    %c0_i32_1 = arith.constant 0 : i32
    return %c0_i32, %c0_i32_0 : i32, i32
  }
}

module attributes {stable_mosaic.version = 11 : i64} {
  func.func @gemm_bn_lrelu_kernel(%arg0: i32, %arg1: memref<128x1024xbf16, #tpu.memory_space<vmem>>, %arg2: memref<1024x32xbf16, #tpu.memory_space<vmem>>, %arg3: memref<128x1xf32, #tpu.memory_space<vmem>>, %arg4: memref<128x1xf32, #tpu.memory_space<vmem>>, %arg5: memref<128x32xbf16, #tpu.memory_space<vmem>>) attributes {dimension_semantics = [#tpu.dimension_semantics<arbitrary>], iteration_bounds = array<i64: 1>, scalar_prefetch = 0 : i64, scratch_operands = 0 : i64, tpu.core_type = #tpu.core_type<tc>, window_params = [{pipeline_mode = #tpu.pipeline_mode<synchronous>, transform_indices = @transform_0, window_bounds = array<i64: 128, 1024>}, {pipeline_mode = #tpu.pipeline_mode<synchronous>, transform_indices = @transform_1, window_bounds = array<i64: 1024, 32>}, {pipeline_mode = #tpu.pipeline_mode<synchronous>, transform_indices = @transform_2, window_bounds = array<i64: 128, 1>}, {pipeline_mode = #tpu.pipeline_mode<synchronous>, transform_indices = @transform_3, window_bounds = array<i64: 128, 1>}, {pipeline_mode = #tpu.pipeline_mode<synchronous>, transform_indices = @transform_4, window_bounds = array<i64: 128, 32>}]} {
    %c0 = arith.constant 0 : index
    %c0_0 = arith.constant 0 : index
    %0 = vector.load %arg1[%c0, %c0_0] : memref<128x1024xbf16, #tpu.memory_space<vmem>>, vector<128x1024xbf16>
    %c0_1 = arith.constant 0 : index
    %c0_2 = arith.constant 0 : index
    %1 = vector.load %arg2[%c0_1, %c0_2] : memref<1024x32xbf16, #tpu.memory_space<vmem>>, vector<1024x32xbf16>
    %cst = arith.constant dense<0.000000e+00> : vector<128x32xf32>
    %2 = tpu.matmul %0, %1, %cst {dimension_numbers = #tpu.dot_dimension_numbers<[1], [0], [0], [1], [0, 0, 1, 1], [], []>} : vector<128x1024xbf16>, vector<1024x32xbf16>, vector<128x32xf32> -> vector<128x32xf32>
    %cst_3 = arith.constant dense<0.000000e+00> : vector<128xf32>
    %3 = vector.multi_reduction <add>, %2, %cst_3 [1] : vector<128x32xf32> to vector<128xf32>
    %4 = vector.shape_cast %3 : vector<128xf32> to vector<128x1xf32>
    %cst_4 = arith.constant 3.200000e+01 : f32
    %5 = vector.broadcast %cst_4 : f32 to vector<128x1xf32>
    %6 = arith.divf %4, %5 : vector<128x1xf32>
    %7 = vector.broadcast %6 : vector<128x1xf32> to vector<128x32xf32>
    %8 = arith.subf %2, %7 : vector<128x32xf32>
    %9 = arith.mulf %8, %8 : vector<128x32xf32>
    %cst_5 = arith.constant dense<0.000000e+00> : vector<128xf32>
    %10 = vector.multi_reduction <add>, %9, %cst_5 [1] : vector<128x32xf32> to vector<128xf32>
    %11 = vector.shape_cast %10 : vector<128xf32> to vector<128x1xf32>
    %cst_6 = arith.constant 3.200000e+01 : f32
    %12 = vector.broadcast %cst_6 : f32 to vector<128x1xf32>
    %13 = arith.divf %11, %12 : vector<128x1xf32>
    %14 = vector.broadcast %6 : vector<128x1xf32> to vector<128x32xf32>
    %15 = arith.subf %2, %14 : vector<128x32xf32>
    %cst_7 = arith.constant 9.99999974E-6 : f32
    %16 = vector.broadcast %cst_7 : f32 to vector<128x1xf32>
    %17 = arith.addf %13, %16 : vector<128x1xf32>
    %18 = math.rsqrt %17 : vector<128x1xf32>
    %19 = vector.broadcast %18 : vector<128x1xf32> to vector<128x32xf32>
    %20 = arith.mulf %15, %19 : vector<128x32xf32>
    %c0_8 = arith.constant 0 : index
    %c0_9 = arith.constant 0 : index
    %21 = vector.load %arg3[%c0_8, %c0_9] : memref<128x1xf32, #tpu.memory_space<vmem>>, vector<128x1xf32>
    %22 = vector.broadcast %21 : vector<128x1xf32> to vector<128x32xf32>
    %23 = arith.mulf %20, %22 : vector<128x32xf32>
    %c0_10 = arith.constant 0 : index
    %c0_11 = arith.constant 0 : index
    %24 = vector.load %arg4[%c0_10, %c0_11] : memref<128x1xf32, #tpu.memory_space<vmem>>, vector<128x1xf32>
    %25 = vector.broadcast %24 : vector<128x1xf32> to vector<128x32xf32>
    %26 = arith.addf %23, %25 : vector<128x32xf32>
    %cst_12 = arith.constant 0.000000e+00 : f32
    %27 = vector.broadcast %cst_12 : f32 to vector<128x32xf32>
    %28 = arith.cmpf oge, %26, %27 : vector<128x32xf32>
    %cst_13 = arith.constant 2.000000e-01 : f32
    %29 = vector.broadcast %cst_13 : f32 to vector<128x32xf32>
    %30 = arith.mulf %29, %26 : vector<128x32xf32>
    %31 = arith.select %28, %26, %30 : vector<128x32xi1>, vector<128x32xf32>
    %32 = arith.truncf %31 : vector<128x32xf32> to vector<128x32xbf16>
    %c0_14 = arith.constant 0 : index
    %c0_15 = arith.constant 0 : index
    %33 = vector.load %arg5[%c0_14, %c0_15] : memref<128x32xbf16, #tpu.memory_space<vmem>>, vector<128x32xbf16>
    tpu.vector_store %arg5[%c0_14, %c0_15], %32 {strides = array<i32>} : memref<128x32xbf16, #tpu.memory_space<vmem>>, vector<128x32xbf16>,
    return
  }
  func.func @transform_0(%arg0: i32) -> (i32, i32) {
    %c0_i32 = arith.constant 0 : i32
    %c0_i32_0 = arith.constant 0 : i32
    %c0_i32_1 = arith.constant 0 : i32
    return %c0_i32, %c0_i32_0 : i32, i32
  }
  func.func @transform_1(%arg0: i32) -> (i32, i32) {
    %c0_i32 = arith.constant 0 : i32
    %c0_i32_0 = arith.constant 0 : i32
    %c0_i32_1 = arith.constant 0 : i32
    return %c0_i32, %c0_i32_0 : i32, i32
  }
  func.func @transform_2(%arg0: i32) -> (i32, i32) {
    %c0_i32 = arith.constant 0 : i32
    %c0_i32_0 = arith.constant 0 : i32
    %c0_i32_1 = arith.constant 0 : i32
    return %c0_i32, %c0_i32_0 : i32, i32
  }
  func.func @transform_3(%arg0: i32) -> (i32, i32) {
    %c0_i32 = arith.constant 0 : i32
    %c0_i32_0 = arith.constant 0 : i32
    %c0_i32_1 = arith.constant 0 : i32
    return %c0_i32, %c0_i32_0 : i32, i32
  }
  func.func @transform_4(%arg0: i32) -> (i32, i32) {
    %c0_i32 = arith.constant 0 : i32
    %c0_i32_0 = arith.constant 0 : i32
    %c0_i32_1 = arith.constant 0 : i32
    return %c0_i32, %c0_i32_0 : i32, i32
  }
}

module attributes {stable_mosaic.version = 11 : i64} {
  func.func @gemm_act_kernel(%arg0: i32, %arg1: memref<1x2048xbf16, #tpu.memory_space<vmem>>, %arg2: memref<2048x2xbf16, #tpu.memory_space<vmem>>, %arg3: memref<1x2xf32, #tpu.memory_space<vmem>>) attributes {dimension_semantics = [#tpu.dimension_semantics<parallel>], iteration_bounds = array<i64: 1>, scalar_prefetch = 0 : i64, scratch_operands = 0 : i64, tpu.core_type = #tpu.core_type<tc>, window_params = [{pipeline_mode = #tpu.pipeline_mode<synchronous>, transform_indices = @transform_0, window_bounds = array<i64: 1, 2048>}, {transform_indices = @transform_1, window_bounds = array<i64: 2048, 2>}, {transform_indices = @transform_2, window_bounds = array<i64: 1, 2>}]} {
    %c0 = arith.constant 0 : index
    %c0_0 = arith.constant 0 : index
    %0 = vector.load %arg1[%c0, %c0_0] : memref<1x2048xbf16, #tpu.memory_space<vmem>>, vector<1x2048xbf16>
    %c0_1 = arith.constant 0 : index
    %c0_2 = arith.constant 0 : index
    %1 = vector.load %arg2[%c0_1, %c0_2] : memref<2048x2xbf16, #tpu.memory_space<vmem>>, vector<2048x2xbf16>
    %cst = arith.constant dense<0.000000e+00> : vector<1x2xf32>
    %2 = tpu.matmul %0, %1, %cst {dimension_numbers = #tpu.dot_dimension_numbers<[1], [0], [0], [1], [0, 0, 1, 1], [], []>} : vector<1x2048xbf16>, vector<2048x2xbf16>, vector<1x2xf32> -> vector<1x2xf32>
    %cst_3 = arith.constant 5.000000e-01 : f32
    %3 = vector.broadcast %cst_3 : f32 to vector<1x2xf32>
    %4 = arith.mulf %3, %2 : vector<1x2xf32>
    %5 = math.tanh %4 : vector<1x2xf32>
    %cst_4 = arith.constant 1.000000e+00 : f32
    %6 = vector.broadcast %cst_4 : f32 to vector<1x2xf32>
    %7 = arith.addf %5, %6 : vector<1x2xf32>
    %cst_5 = arith.constant 5.000000e-01 : f32
    %8 = vector.broadcast %cst_5 : f32 to vector<1x2xf32>
    %9 = arith.mulf %8, %7 : vector<1x2xf32>
    %c0_6 = arith.constant 0 : index
    %c0_7 = arith.constant 0 : index
    %10 = vector.load %arg3[%c0_6, %c0_7] : memref<1x2xf32, #tpu.memory_space<vmem>>, vector<1x2xf32>
    tpu.vector_store %arg3[%c0_6, %c0_7], %9 {strides = array<i32>} : memref<1x2xf32, #tpu.memory_space<vmem>>, vector<1x2xf32>,
    return
  }
  func.func @transform_0(%arg0: i32) -> (i32, i32) {
    %c0_i32 = arith.constant 0 : i32
    %c0_i32_0 = arith.constant 0 : i32
    %c0_i32_1 = arith.constant 0 : i32
    return %c0_i32, %c0_i32_0 : i32, i32
  }
  func.func @transform_1(%arg0: i32) -> (i32, i32) {
    %c0_i32 = arith.constant 0 : i32
    %c0_i32_0 = arith.constant 0 : i32
    return %c0_i32, %arg0 : i32, i32
  }
  func.func @transform_2(%arg0: i32) -> (i32, i32) {
    %c0_i32 = arith.constant 0 : i32
    %c0_i32_0 = arith.constant 0 : i32
    return %c0_i32, %arg0 : i32, i32
  }
}

</mosaic_0001>

<llo_original>
// kernel: discriminator_forward.6
$region0: #{discriminator_forward.6}
  #allocation0 [shape = 'u32[]', space=smem, size = 0x4, offset = 0x4, fixed_abs, tag = 'smem constant byte address 0x4 - core index']
  #allocation1 [shape = 'u32[144,128]{1,0:T(1,128)}', space=vmem, size = 0x12000, scoped, tag = 'internal scratch']
  %s0 = inlined_call_operand.vmem [shape: bf16[8,48], index: 0, kind: input, shape index: {}]
  %s1 = inlined_call_operand.vmem [shape: bf16[48,8192], index: 1, kind: input, shape index: {}]
  %s2 = inlined_call_operand.vmem [shape: bf16[8,8192], index: 2, kind: output, shape index: {}]
  %s3 = sld [smem:[#allocation0]]
  $region64: #{discriminator_forward.6} parent=0
    _
  %s5 = ssub.s32 1, %s3
  %s6 = scalar_select 0, %s5, %s3
  $region1: #{discriminator_forward.6} parent=0
    #allocation2 [shape = 'u8[393216]{0}', space=vmem, size = 0x60000, scoped, tag = 'input window, operand 1']
    loop: start=0, step=1, limit=6
    $region2: #{discriminator_forward.6} parent=1 // loop_pre_header
      _
    $region3: #{discriminator_forward.6} parent=1 // loop_header
      %s8 = sphi 0, %s12
      %p9 = scmp.ge.s32.totalorder %s8, 6
      %s16 = sphi 0, %s16
      %s18 = sphi 0, %s16
      %s19 = sphi 0, %s18
      %s33 = sphi 0, %s19
      %s39 = sphi 0, %s41
      %s42 = sphi 0, %s39
      %s43 = sphi 0, %s42
      %s59 = sphi 0, %s43
      %s65 = sphi 0, %s67
      %s68 = sphi 0, %s65
      %s69 = sphi 0, %s68
      %s85 = sphi 0, %s69
    $region4: #{discriminator_forward.6} parent=1 // loop_header_branch
      %11 = sbr.rel (%p9) target = $region8
    $region5: #{discriminator_forward.6} parent=1 // loop_body
      %s13 = ssub.s32 %s8, 1
      %s14 = ssub.s32 %s8, 2
      %s15 = sadd.s32 %s8, 1
      %s17 = sadd.s32 %s16, 1
      %p20 = scmp.eq.s32.totalorder %s8, 3
      %p21 = scmp.ne.s32.totalorder %s16, %s18
      %p22 = scmp.eq.s32.totalorder %s8, 0
      %p23 = por %p21, %p22
      %p24 = scmp.ne.s32.totalorder %s16, %s18
      %p25 = scmp.eq.s32.totalorder %s13, 3
      %p26 = por %p24, %p25
      %p27 = scmp.ne.s32.totalorder %s18, %s19
      %p28 = scmp.eq.s32.totalorder %s13, 0
      %p29 = por %p27, %p28
      %p30 = scmp.ne.s32.totalorder %s18, %s19
      %p31 = scmp.eq.s32.totalorder %s14, 3
      %p32 = por %p30, %p31
      %p34 = scmp.ne.s32.totalorder %s19, %s33
      %p35 = scmp.eq.s32.totalorder %s14, 0
      %p36 = por %p34, %p35
      %s37 = ssub.s32 %s8, %s15
      %p38 = scmp.eq.s32.totalorder %s37, 0
      %s40 = sadd.s32 %s39, 1
      %s41 = scalar_select %p38, %s39, %s40
      %p44 = pneg %p38
      %p45 = scmp.eq.s32.totalorder %s8, 3
      %p46 = por %p44, %p45
      %p47 = scmp.ne.s32.totalorder %s39, %s42
      %p48 = scmp.eq.s32.totalorder %s8, 0
      %p49 = por %p47, %p48
      %p50 = scmp.ne.s32.totalorder %s39, %s42
      %p51 = scmp.eq.s32.totalorder %s13, 3
      %p52 = por %p50, %p51
      %p53 = scmp.ne.s32.totalorder %s42, %s43
      %p54 = scmp.eq.s32.totalorder %s13, 0
      %p55 = por %p53, %p54
      %p56 = scmp.ne.s32.totalorder %s42, %s43
      %p57 = scmp.eq.s32.totalorder %s14, 3
      %p58 = por %p56, %p57
      %p60 = scmp.ne.s32.totalorder %s43, %s59
      %p61 = scmp.eq.s32.totalorder %s14, 0
      %p62 = por %p60, %p61
      %s63 = ssub.s32 %s8, %s15
      %p64 = scmp.eq.s32.totalorder %s63, 0
      %s66 = sadd.s32 %s65, 1
      %s67 = scalar_select %p64, %s65, %s66
      %p70 = pneg %p64
      %p71 = scmp.eq.s32.totalorder %s8, 3
      %p72 = por %p70, %p71
      %p73 = scmp.ne.s32.totalorder %s65, %s68
      %p74 = scmp.eq.s32.totalorder %s8, 0
      %p75 = por %p73, %p74
      %p76 = scmp.ne.s32.totalorder %s65, %s68
      %p77 = scmp.eq.s32.totalorder %s13, 3
      %p78 = por %p76, %p77
      %p79 = scmp.ne.s32.totalorder %s68, %s69
      %p80 = scmp.eq.s32.totalorder %s13, 0
      %p81 = por %p79, %p80
      %p82 = scmp.ne.s32.totalorder %s68, %s69
      %p83 = scmp.eq.s32.totalorder %s14, 3
      %p84 = por %p82, %p83
      %p86 = scmp.ne.s32.totalorder %s69, %s85
      %p87 = scmp.eq.s32.totalorder %s14, 0
      %p88 = por %p86, %p87
      %p89 = scmp.le.s32.totalorder 1, %s8
      %p90 = scmp.lt.s32.totalorder %s8, 5
      %p91 = pnand %p89, %p90
      %p92 = pneg %p91
      // Predicated region
      $region9: #{discriminator_forward.6} parent=5 // pred_check
        _
      $region10: #{discriminator_forward.6} parent=5 // pred_check_branch
        %94 = sbr.rel (%p91) target = $region12
      $region11: #{discriminator_forward.6} parent=5 // pred_region
        %s95 = ssub.s32 %s8, 1
        // Predicated region
        $region13: #{discriminator_forward.6} parent=11 // pred_check
          %p96 = pneg %p29
        $region14: #{discriminator_forward.6} parent=11 // pred_check_branch
          %98 = sbr.rel (%p96) target = $region16
        $region15: #{discriminator_forward.6} parent=11 // pred_region
          _
        $region16: #{discriminator_forward.6} parent=11 // pred_fallthru
          _
      $region12: #{discriminator_forward.6} parent=5 // pred_fallthru
        _
      %p99 = scmp.lt.s32.totalorder %s8, 4
      // Predicated region
      $region17: #{discriminator_forward.6} parent=5 // pred_check
        %p100 = pneg %p99
      $region18: #{discriminator_forward.6} parent=5 // pred_check_branch
        %102 = sbr.rel (%p100) target = $region20
      $region19: #{discriminator_forward.6} parent=5 // pred_region
        // Predicated region
        $region21: #{discriminator_forward.6} parent=19 // pred_check
          %p103 = pneg %p49
        $region22: #{discriminator_forward.6} parent=19 // pred_check_branch
          %105 = sbr.rel (%p103) target = $region24
        $region23: #{discriminator_forward.6} parent=19 // pred_region
          %s106 = sand.u32 %s39, 1
          %s107 = sand.u32 %s39, 1
          %s108 = smul.addr %s107, 384
          %s109 = scalar_lea.vmem [#allocation2], %s108
          %s110 = smul.u32 16, %s8
          %s111 = smul.addr %s110, 4
          %s112 = scalar_lea.vmem %s1, %s111
          // Predicated region
          $region25: #{discriminator_forward.6} parent=23 // pred_check
            _
          $region26: #{discriminator_forward.6} parent=23 // pred_check_branch
            %114 = sbr.rel (0) target = $region28
          $region27: #{discriminator_forward.6} parent=23 // pred_region
            // Predicated region
            $region29: #{discriminator_forward.6} parent=27 // pred_check
              _
            $region30: #{discriminator_forward.6} parent=27 // pred_check_branch
              %116 = sbr.rel (0) target = $region32
            $region31: #{discriminator_forward.6} parent=27 // pred_region
              loop: start=0, step=1, limit=1
              $region33: #{discriminator_forward.6} parent=31 // loop_pre_header
                _
              $region34: #{discriminator_forward.6} parent=31 // loop_header
                %s118 = sphi 0, %s122
                %p119 = scmp.ge.s32.totalorder %s118, 1
                %s123 = sphi %s112, %s112
                %s124 = sphi %s109, %s109
              $region35: #{discriminator_forward.6} parent=31 // loop_header_branch
                %121 = sbr.rel (%p119) target = $region39
              $region36: #{discriminator_forward.6} parent=31 // loop_body
                %v125 = vld [vmem:[%s123] sm:$0xff]
                %126 = vst [vmem:[%s124] sm:$0xff] %v125
                %v127 = vld [vmem:[%s123 + $0x8] sm:$0xff]
                %128 = vst [vmem:[%s124 + $0x8] sm:$0xff] %v127
                %v129 = vld [vmem:[%s123 + $0x10] sm:$0xff]
                %130 = vst [vmem:[%s124 + $0x10] sm:$0xff] %v129
                %v131 = vld [vmem:[%s123 + $0x18] sm:$0xff]
                %132 = vst [vmem:[%s124 + $0x18] sm:$0xff] %v131
                %v133 = vld [vmem:[%s123 + $0x20] sm:$0xff]
                %134 = vst [vmem:[%s124 + $0x20] sm:$0xff] %v133
                %v135 = vld [vmem:[%s123 + $0x28] sm:$0xff]
                %136 = vst [vmem:[%s124 + $0x28] sm:$0xff] %v135
                %v137 = vld [vmem:[%s123 + $0x30] sm:$0xff]
                %138 = vst [vmem:[%s124 + $0x30] sm:$0xff] %v137
                %v139 = vld [vmem:[%s123 + $0x38] sm:$0xff]
                %140 = vst [vmem:[%s124 + $0x38] sm:$0xff] %v139
                %v141 = vld [vmem:[%s123 + $0x100] sm:$0xff]
                %142 = vst [vmem:[%s124 + $0x40] sm:$0xff] %v141
                %v143 = vld [vmem:[%s123 + $0x108] sm:$0xff]
                %144 = vst [vmem:[%s124 + $0x48] sm:$0xff] %v143
                %v145 = vld [vmem:[%s123 + $0x110] sm:$0xff]
                %146 = vst [vmem:[%s124 + $0x50] sm:$0xff] %v145
                %v147 = vld [vmem:[%s123 + $0x118] sm:$0xff]
                %148 = vst [vmem:[%s124 + $0x58] sm:$0xff] %v147
                %v149 = vld [vmem:[%s123 + $0x120] sm:$0xff]
                %150 = vst [vmem:[%s124 + $0x60] sm:$0xff] %v149
                %v151 = vld [vmem:[%s123 + $0x128] sm:$0xff]
                %152 = vst [vmem:[%s124 + $0x68] sm:$0xff] %v151
                %v153 = vld [vmem:[%s123 + $0x130] sm:$0xff]
                %154 = vst [vmem:[%s124 + $0x70] sm:$0xff] %v153
                %v155 = vld [vmem:[%s123 + $0x138] sm:$0xff]
                %156 = vst [vmem:[%s124 + $0x78] sm:$0xff] %v155
                %v157 = vld [vmem:[%s123 + $0x200] sm:$0xff]
                %158 = vst [vmem:[%s124 + $0x80] sm:$0xff] %v157
                %v159 = vld [vmem:[%s123 + $0x208] sm:$0xff]
                %160 = vst [vmem:[%s124 + $0x88] sm:$0xff] %v159
                %v161 = vld [vmem:[%s123 + $0x210] sm:$0xff]
                %162 = vst [vmem:[%s124 + $0x90] sm:$0xff] %v161
                %v163 = vld [vmem:[%s123 + $0x218] sm:$0xff]
                %164 = vst [vmem:[%s124 + $0x98] sm:$0xff] %v163
                %v165 = vld [vmem:[%s123 + $0x220] sm:$0xff]
                %166 = vst [vmem:[%s124 + $0xa0] sm:$0xff] %v165
                %v167 = vld [vmem:[%s123 + $0x228] sm:$0xff]
                %168 = vst [vmem:[%s124 + $0xa8] sm:$0xff] %v167
                %v169 = vld [vmem:[%s123 + $0x230] sm:$0xff]
                %170 = vst [vmem:[%s124 + $0xb0] sm:$0xff] %v169
                %v171 = vld [vmem:[%s123 + $0x238] sm:$0xff]
                %172 = vst [vmem:[%s124 + $0xb8] sm:$0xff] %v171
                %v173 = vld [vmem:[%s123 + $0x300] sm:$0xff]
                %174 = vst [vmem:[%s124 + $0xc0] sm:$0xff] %v173
                %v175 = vld [vmem:[%s123 + $0x308] sm:$0xff]
                %176 = vst [vmem:[%s124 + $0xc8] sm:$0xff] %v175
                %v177 = vld [vmem:[%s123 + $0x310] sm:$0xff]
                %178 = vst [vmem:[%s124 + $0xd0] sm:$0xff] %v177
                %v179 = vld [vmem:[%s123 + $0x318] sm:$0xff]
                %180 = vst [vmem:[%s124 + $0xd8] sm:$0xff] %v179
                %v181 = vld [vmem:[%s123 + $0x320] sm:$0xff]
                %182 = vst [vmem:[%s124 + $0xe0] sm:$0xff] %v181
                %v183 = vld [vmem:[%s123 + $0x328] sm:$0xff]
                %184 = vst [vmem:[%s124 + $0xe8] sm:$0xff] %v183
                %v185 = vld [vmem:[%s123 + $0x330] sm:$0xff]
                %186 = vst [vmem:[%s124 + $0xf0] sm:$0xff] %v185
                %v187 = vld [vmem:[%s123 + $0x338] sm:$0xff]
                %188 = vst [vmem:[%s124 + $0xf8] sm:$0xff] %v187
                %v189 = vld [vmem:[%s123 + $0x400] sm:$0xff]
                %190 = vst [vmem:[%s124 + $0x100] sm:$0xff] %v189
                %v191 = vld [vmem:[%s123 + $0x408] sm:$0xff]
                %192 = vst [vmem:[%s124 + $0x108] sm:$0xff] %v191
                %v193 = vld [vmem:[%s123 + $0x410] sm:$0xff]
                %194 = vst [vmem:[%s124 + $0x110] sm:$0xff] %v193
                %v195 = vld [vmem:[%s123 + $0x418] sm:$0xff]
                %196 = vst [vmem:[%s124 + $0x118] sm:$0xff] %v195
                %v197 = vld [vmem:[%s123 + $0x420] sm:$0xff]
                %198 = vst [vmem:[%s124 + $0x120] sm:$0xff] %v197
                %v199 = vld [vmem:[%s123 + $0x428] sm:$0xff]
                %200 = vst [vmem:[%s124 + $0x128] sm:$0xff] %v199
                %v201 = vld [vmem:[%s123 + $0x430] sm:$0xff]
                %202 = vst [vmem:[%s124 + $0x130] sm:$0xff] %v201
                %v203 = vld [vmem:[%s123 + $0x438] sm:$0xff]
                %204 = vst [vmem:[%s124 + $0x138] sm:$0xff] %v203
                %v205 = vld [vmem:[%s123 + $0x500] sm:$0xff]
                %206 = vst [vmem:[%s124 + $0x140] sm:$0xff] %v205
                %v207 = vld [vmem:[%s123 + $0x508] sm:$0xff]
                %208 = vst [vmem:[%s124 + $0x148] sm:$0xff] %v207
                %v209 = vld [vmem:[%s123 + $0x510] sm:$0xff]
                %210 = vst [vmem:[%s124 + $0x150] sm:$0xff] %v209
                %v211 = vld [vmem:[%s123 + $0x518] sm:$0xff]
                %212 = vst [vmem:[%s124 + $0x158] sm:$0xff] %v211
                %v213 = vld [vmem:[%s123 + $0x520] sm:$0xff]
                %214 = vst [vmem:[%s124 + $0x160] sm:$0xff] %v213
                %v215 = vld [vmem:[%s123 + $0x528] sm:$0xff]
                %216 = vst [vmem:[%s124 + $0x168] sm:$0xff] %v215
                %v217 = vld [vmem:[%s123 + $0x530] sm:$0xff]
                %218 = vst [vmem:[%s124 + $0x170] sm:$0xff] %v217
                %v219 = vld [vmem:[%s123 + $0x538] sm:$0xff]
                %220 = vst [vmem:[%s124 + $0x178] sm:$0xff] %v219
              $region37: #{discriminator_forward.6} parent=31 // loop_footer
                %s122 = sadd.s32 1, %s118
              $region38: #{discriminator_forward.6} parent=31 // loop_footer_branch
                %117 = sbr.rel target = $region34
              $region39: #{discriminator_forward.6} parent=31 // loop_exit
                _
            $region32: #{discriminator_forward.6} parent=27 // pred_fallthru
              _
            // Predicated region
            $region40: #{discriminator_forward.6} parent=27 // pred_check
              _
            $region41: #{discriminator_forward.6} parent=27 // pred_check_branch
              %222 = sbr.rel target = $region43
            $region42: #{discriminator_forward.6} parent=27 // pred_region
              _
            $region43: #{discriminator_forward.6} parent=27 // pred_fallthru
              _
          $region28: #{discriminator_forward.6} parent=23 // pred_fallthru
            _
          %223 = vnop
        $region24: #{discriminator_forward.6} parent=19 // pred_fallthru
          _
      $region20: #{discriminator_forward.6} parent=5 // pred_fallthru
        _
      %p224 = scmp.le.s32.totalorder 1, %s8
      %p225 = scmp.lt.s32.totalorder %s8, 5
      %p226 = pnand %p224, %p225
      %p227 = pneg %p226
      // Predicated region
      $region44: #{discriminator_forward.6} parent=5 // pred_check
        _
      $region45: #{discriminator_forward.6} parent=5 // pred_check_branch
        %229 = sbr.rel (%p226) target = $region47
      $region46: #{discriminator_forward.6} parent=5 // pred_region
        %s230 = ssub.s32 %s8, 1
        %s231 = sand.u32 %s42, 1
        %s232 = sand.u32 %s42, 1
        %s233 = smul.addr %s232, 384
        %s234 = scalar_lea.vmem [#allocation2], %s233
        // Predicated region
        $region48: #{discriminator_forward.6} parent=46 // pred_check
          %p235 = pneg %p55
        $region49: #{discriminator_forward.6} parent=46 // pred_check_branch
          %237 = sbr.rel (%p235) target = $region51
        $region50: #{discriminator_forward.6} parent=46 // pred_region
          _
        $region51: #{discriminator_forward.6} parent=46 // pred_fallthru
          _
        %p238 = pneg %p29
        %p239 = pneg %p26
        %s240 = sand.u32 %s42, 1
        %s241 = sand.u32 %s42, 1
        %s242 = smul.addr %s241, 384
        %s243 = scalar_lea.vmem [#allocation2], %s242
        %p244 = pneg %p55
        %p245 = pneg %p52
        %p246 = pneg %p81
        %p247 = pneg %p78
        %s248 = smul.u32 16, %s13
        %p249 = scmp.lt.s32.totalorder %s248, 63
        %s250 = scalar_select %p249, %s248, 63
        %s251 = smul.addr %s250, 4
        %s252 = scalar_lea.vmem %s2, %s251
        %s253 = smul.u32 16, %s13
        %s254 = smul.u32 16, %s13
        %p255 = scmp.lt.s32.totalorder %s254, 63
        %s256 = scalar_select %p255, %s254, 63
        %s257 = smul.addr %s256, 4
        %s258 = scalar_lea.vmem %s2, %s257
        %s259 = smul.u32 16, %s13
        %v261 = vld [vmem:[%s0] sm:$0xf]
        %v262 = vld [vmem:[%s234] sm:$0xff]
        %v263 = vld [vmem:[%s234 + $0x8] sm:$0xff]
        %v264 = vld [vmem:[%s234 + $0x10] sm:$0xff]
        %v265 = vld [vmem:[%s234 + $0x18] sm:$0xff]
        %v266 = vld [vmem:[%s234 + $0x20] sm:$0xff]
        %v267 = vld [vmem:[%s234 + $0x28] sm:$0xff]
        %v268 = vld [vmem:[%s234 + $0x30] sm:$0xff]
        %v269 = vld [vmem:[%s234 + $0x38] sm:$0xff]
        %v270 = vld [vmem:[%s234 + $0x40] sm:$0xff]
        %v271 = vld [vmem:[%s234 + $0x48] sm:$0xff]
        %v272 = vld [vmem:[%s234 + $0x50] sm:$0xff]
        %v273 = vld [vmem:[%s234 + $0x58] sm:$0xff]
        %v274 = vld [vmem:[%s234 + $0x60] sm:$0xff]
        %v275 = vld [vmem:[%s234 + $0x68] sm:$0xff]
        %v276 = vld [vmem:[%s234 + $0x70] sm:$0xff]
        %v277 = vld [vmem:[%s234 + $0x78] sm:$0xff]
        %v278 = vld [vmem:[%s234 + $0x80] sm:$0xff]
        %v279 = vld [vmem:[%s234 + $0x88] sm:$0xff]
        %v280 = vld [vmem:[%s234 + $0x90] sm:$0xff]
        %v281 = vld [vmem:[%s234 + $0x98] sm:$0xff]
        %v282 = vld [vmem:[%s234 + $0xa0] sm:$0xff]
        %v283 = vld [vmem:[%s234 + $0xa8] sm:$0xff]
        %v284 = vld [vmem:[%s234 + $0xb0] sm:$0xff]
        %v285 = vld [vmem:[%s234 + $0xb8] sm:$0xff]
        %v286 = vld [vmem:[%s234 + $0xc0] sm:$0xff]
        %v287 = vld [vmem:[%s234 + $0xc8] sm:$0xff]
        %v288 = vld [vmem:[%s234 + $0xd0] sm:$0xff]
        %v289 = vld [vmem:[%s234 + $0xd8] sm:$0xff]
        %v290 = vld [vmem:[%s234 + $0xe0] sm:$0xff]
        %v291 = vld [vmem:[%s234 + $0xe8] sm:$0xff]
        %v292 = vld [vmem:[%s234 + $0xf0] sm:$0xff]
        %v293 = vld [vmem:[%s234 + $0xf8] sm:$0xff]
        %v294 = vld [vmem:[%s234 + $0x100] sm:$0xff]
        %v295 = vld [vmem:[%s234 + $0x108] sm:$0xff]
        %v296 = vld [vmem:[%s234 + $0x110] sm:$0xff]
        %v297 = vld [vmem:[%s234 + $0x118] sm:$0xff]
        %v298 = vld [vmem:[%s234 + $0x120] sm:$0xff]
        %v299 = vld [vmem:[%s234 + $0x128] sm:$0xff]
        %v300 = vld [vmem:[%s234 + $0x130] sm:$0xff]
        %v301 = vld [vmem:[%s234 + $0x138] sm:$0xff]
        %v302 = vld [vmem:[%s234 + $0x140] sm:$0xff]
        %v303 = vld [vmem:[%s234 + $0x148] sm:$0xff]
        %v304 = vld [vmem:[%s234 + $0x150] sm:$0xff]
        %v305 = vld [vmem:[%s234 + $0x158] sm:$0xff]
        %v306 = vld [vmem:[%s234 + $0x160] sm:$0xff]
        %v307 = vld [vmem:[%s234 + $0x168] sm:$0xff]
        %v308 = vld [vmem:[%s234 + $0x170] sm:$0xff]
        %v309 = vld [vmem:[%s234 + $0x178] sm:$0xff]
        %v358 = vunpack.c.l.b16 %v262
        %v359 = vunpack.c.h.b16 %v262
        %v360 = vunpack.c.l.b16 %v263
        %v361 = vunpack.c.h.b16 %v263
        %v362 = vunpack.c.l.b16 %v264
        %v363 = vunpack.c.h.b16 %v264
        %v364 = vunpack.c.l.b16 %v265
        %v365 = vunpack.c.h.b16 %v265
        %v366 = vunpack.c.l.b16 %v266
        %v367 = vunpack.c.h.b16 %v266
        %v368 = vunpack.c.l.b16 %v267
        %v369 = vunpack.c.h.b16 %v267
        %v370 = vunpack.c.l.b16 %v268
        %v371 = vunpack.c.h.b16 %v268
        %v372 = vunpack.c.l.b16 %v269
        %v373 = vunpack.c.h.b16 %v269
        %v374 = vunpack.c.l.b16 %v270
        %v375 = vunpack.c.h.b16 %v270
        %v376 = vunpack.c.l.b16 %v271
        %v377 = vunpack.c.h.b16 %v271
        %v378 = vunpack.c.l.b16 %v272
        %v379 = vunpack.c.h.b16 %v272
        %v380 = vunpack.c.l.b16 %v273
        %v381 = vunpack.c.h.b16 %v273
        %v382 = vunpack.c.l.b16 %v274
        %v383 = vunpack.c.h.b16 %v274
        %v384 = vunpack.c.l.b16 %v275
        %v385 = vunpack.c.h.b16 %v275
        %v386 = vunpack.c.l.b16 %v276
        %v387 = vunpack.c.h.b16 %v276
        %v388 = vunpack.c.l.b16 %v277
        %v389 = vunpack.c.h.b16 %v277
        %v390 = vunpack.c.l.b16 %v278
        %v391 = vunpack.c.h.b16 %v278
        %v392 = vunpack.c.l.b16 %v279
        %v393 = vunpack.c.h.b16 %v279
        %v394 = vunpack.c.l.b16 %v280
        %v395 = vunpack.c.h.b16 %v280
        %v396 = vunpack.c.l.b16 %v281
        %v397 = vunpack.c.h.b16 %v281
        %v398 = vunpack.c.l.b16 %v282
        %v399 = vunpack.c.h.b16 %v282
        %v400 = vunpack.c.l.b16 %v283
        %v401 = vunpack.c.h.b16 %v283
        %v402 = vunpack.c.l.b16 %v284
        %v403 = vunpack.c.h.b16 %v284
        %v404 = vunpack.c.l.b16 %v285
        %v405 = vunpack.c.h.b16 %v285
        %v406 = vunpack.c.l.b16 %v286
        %v407 = vunpack.c.h.b16 %v286
        %v408 = vunpack.c.l.b16 %v287
        %v409 = vunpack.c.h.b16 %v287
        %v410 = vunpack.c.l.b16 %v288
        %v411 = vunpack.c.h.b16 %v288
        %v412 = vunpack.c.l.b16 %v289
        %v413 = vunpack.c.h.b16 %v289
        %v414 = vunpack.c.l.b16 %v290
        %v415 = vunpack.c.h.b16 %v290
        %v416 = vunpack.c.l.b16 %v291
        %v417 = vunpack.c.h.b16 %v291
        %v418 = vunpack.c.l.b16 %v292
        %v419 = vunpack.c.h.b16 %v292
        %v420 = vunpack.c.l.b16 %v293
        %v421 = vunpack.c.h.b16 %v293
        %v422 = vunpack.c.l.b16 %v294
        %v423 = vunpack.c.h.b16 %v294
        %v424 = vunpack.c.l.b16 %v295
        %v425 = vunpack.c.h.b16 %v295
        %v426 = vunpack.c.l.b16 %v296
        %v427 = vunpack.c.h.b16 %v296
        %v428 = vunpack.c.l.b16 %v297
        %v429 = vunpack.c.h.b16 %v297
        %v430 = vunpack.c.l.b16 %v298
        %v431 = vunpack.c.h.b16 %v298
        %v432 = vunpack.c.l.b16 %v299
        %v433 = vunpack.c.h.b16 %v299
        %v434 = vunpack.c.l.b16 %v300
        %v435 = vunpack.c.h.b16 %v300
        %v436 = vunpack.c.l.b16 %v301
        %v437 = vunpack.c.h.b16 %v301
        %v438 = vunpack.c.l.b16 %v302
        %v439 = vunpack.c.h.b16 %v302
        %v440 = vunpack.c.l.b16 %v303
        %v441 = vunpack.c.h.b16 %v303
        %v442 = vunpack.c.l.b16 %v304
        %v443 = vunpack.c.h.b16 %v304
        %v444 = vunpack.c.l.b16 %v305
        %v445 = vunpack.c.h.b16 %v305
        %v446 = vunpack.c.l.b16 %v306
        %v447 = vunpack.c.h.b16 %v306
        %v448 = vunpack.c.l.b16 %v307
        %v449 = vunpack.c.h.b16 %v307
        %v450 = vunpack.c.l.b16 %v308
        %v451 = vunpack.c.h.b16 %v308
        %v452 = vunpack.c.l.b16 %v309
        %v453 = vunpack.c.h.b16 %v309
        %v454 = vpack.c.b16 %v374, %v358
        %v455 = vpack.c.b16 %v375, %v359
        %v456 = vpack.c.b16 %v376, %v360
        %v457 = vpack.c.b16 %v377, %v361
        %v458 = vpack.c.b16 %v378, %v362
        %v459 = vpack.c.b16 %v379, %v363
        %v460 = vpack.c.b16 %v380, %v364
        %v461 = vpack.c.b16 %v381, %v365
        %v462 = vpack.c.b16 %v382, %v366
        %v463 = vpack.c.b16 %v383, %v367
        %v464 = vpack.c.b16 %v384, %v368
        %v465 = vpack.c.b16 %v385, %v369
        %v466 = vpack.c.b16 %v386, %v370
        %v467 = vpack.c.b16 %v387, %v371
        %v468 = vpack.c.b16 %v388, %v372
        %v469 = vpack.c.b16 %v389, %v373
        %v470 = vpack.c.b16 %v406, %v390
        %v471 = vpack.c.b16 %v407, %v391
        %v472 = vpack.c.b16 %v408, %v392
        %v473 = vpack.c.b16 %v409, %v393
        %v474 = vpack.c.b16 %v410, %v394
        %v475 = vpack.c.b16 %v411, %v395
        %v476 = vpack.c.b16 %v412, %v396
        %v477 = vpack.c.b16 %v413, %v397
        %v478 = vpack.c.b16 %v414, %v398
        %v479 = vpack.c.b16 %v415, %v399
        %v480 = vpack.c.b16 %v416, %v400
        %v481 = vpack.c.b16 %v417, %v401
        %v482 = vpack.c.b16 %v418, %v402
        %v483 = vpack.c.b16 %v419, %v403
        %v484 = vpack.c.b16 %v420, %v404
        %v485 = vpack.c.b16 %v421, %v405
        %v486 = vpack.c.b16 %v438, %v422
        %v487 = vpack.c.b16 %v439, %v423
        %v488 = vpack.c.b16 %v440, %v424
        %v489 = vpack.c.b16 %v441, %v425
        %v490 = vpack.c.b16 %v442, %v426
        %v491 = vpack.c.b16 %v443, %v427
        %v492 = vpack.c.b16 %v444, %v428
        %v493 = vpack.c.b16 %v445, %v429
        %v494 = vpack.c.b16 %v446, %v430
        %v495 = vpack.c.b16 %v447, %v431
        %v496 = vpack.c.b16 %v448, %v432
        %v497 = vpack.c.b16 %v449, %v433
        %v498 = vpack.c.b16 %v450, %v434
        %v499 = vpack.c.b16 %v451, %v435
        %v500 = vpack.c.b16 %v452, %v436
        %v501 = vpack.c.b16 %v453, %v437
        %vm550 = vcmask 392192
        %v552 = vsel %vm550, %v261, 0
        %554 = vmatprep.subr.bf16.mxu0 0
        %555 = vmatpush1.bf16.msra.mxu0 0
        %556 = vmatprep.subr.bf16.mxu0 0
        %557 = vmatpush1.bf16.msra.mxu0 0
        %558 = vmatprep.subr.bf16.mxu0 0
        %559 = vmatpush1.bf16.msra.mxu0 0
        %560 = vmatprep.subr.bf16.mxu0 0
        %561 = vmatpush1.bf16.msra.mxu0 0
        %562 = vmatprep.subr.bf16.mxu0 0
        %563 = vmatpush1.bf16.msra.mxu0 0
        %564 = vmatprep.subr.bf16.mxu0 %v487
        %565 = vmatpush1.bf16.msra.mxu0 %v486
        %566 = vmatprep.subr.bf16.mxu0 %v471
        %567 = vmatpush1.bf16.msra.mxu0 %v470
        %568 = vmatprep.subr.bf16.mxu0 %v455
        %569 = vmatpush1.bf16.msra.mxu0 %v454
        %570 = vmatprep.subr.bf16.mxu0 0
        %571 = vmatpush2.bf16.msra.mxu0 0
        %572 = vmatprep.subr.bf16.mxu0 0
        %573 = vmatpush2.bf16.msra.mxu0 0
        %574 = vmatprep.subr.bf16.mxu0 0
        %575 = vmatpush2.bf16.msra.mxu0 0
        %576 = vmatprep.subr.bf16.mxu0 0
        %577 = vmatpush2.bf16.msra.mxu0 0
        %578 = vmatprep.subr.bf16.mxu0 0
        %579 = vmatpush2.bf16.msra.mxu0 0
        %580 = vmatprep.subr.bf16.mxu0 0
        %581 = vmatpush2.bf16.msra.mxu0 0
        %582 = vmatprep.subr.bf16.mxu0 0
        %583 = vmatpush2.bf16.msra.mxu0 0
        %584 = vmatprep.subr.bf16.mxu0 0
        %585 = vmatpush2.bf16.msra.mxu0 0
        %586 = vmatprep.mubr.bf16.mxu0 0
        %587 = vmatmul.mubr.bf16.gmra.mxu0 %v552
        %v588 = vpop.f32.mrf.mxu0
        %v589 = vadd.f32 0.0, %v588
        %v590 = vpop.f32.mrf.mxu0
        %v591 = vadd.f32 0.0, %v590
        %v592 = vpop.f32.mrf.mxu0
        %v593 = vpop.f32.mrf.mxu0
        %594 = vdwg.mxu0
        %595 = vmatprep.subr.bf16.mxu0 0
        %596 = vmatpush1.bf16.msra.mxu0 0
        %597 = vmatprep.subr.bf16.mxu0 0
        %598 = vmatpush1.bf16.msra.mxu0 0
        %599 = vmatprep.subr.bf16.mxu0 0
        %600 = vmatpush1.bf16.msra.mxu0 0
        %601 = vmatprep.subr.bf16.mxu0 0
        %602 = vmatpush1.bf16.msra.mxu0 0
        %603 = vmatprep.subr.bf16.mxu0 0
        %604 = vmatpush1.bf16.msra.mxu0 0
        %605 = vmatprep.subr.bf16.mxu0 %v489
        %606 = vmatpush1.bf16.msra.mxu0 %v488
        %607 = vmatprep.subr.bf16.mxu0 %v473
        %608 = vmatpush1.bf16.msra.mxu0 %v472
        %609 = vmatprep.subr.bf16.mxu0 %v457
        %610 = vmatpush1.bf16.msra.mxu0 %v456
        %611 = vmatprep.subr.bf16.mxu0 0
        %612 = vmatpush2.bf16.msra.mxu0 0
        %613 = vmatprep.subr.bf16.mxu0 0
        %614 = vmatpush2.bf16.msra.mxu0 0
        %615 = vmatprep.subr.bf16.mxu0 0
        %616 = vmatpush2.bf16.msra.mxu0 0
        %617 = vmatprep.subr.bf16.mxu0 0
        %618 = vmatpush2.bf16.msra.mxu0 0
        %619 = vmatprep.subr.bf16.mxu0 0
        %620 = vmatpush2.bf16.msra.mxu0 0
        %621 = vmatprep.subr.bf16.mxu0 0
        %622 = vmatpush2.bf16.msra.mxu0 0
        %623 = vmatprep.subr.bf16.mxu0 0
        %624 = vmatpush2.bf16.msra.mxu0 0
        %625 = vmatprep.subr.bf16.mxu0 0
        %626 = vmatpush2.bf16.msra.mxu0 0
        %627 = vmatprep.mubr.bf16.mxu0 0
        %628 = vmatmul.mubr.bf16.gmra.mxu0 %v552
        %v629 = vpop.f32.mrf.mxu0
        %v630 = vadd.f32 0.0, %v629
        %v631 = vpop.f32.mrf.mxu0
        %v632 = vadd.f32 0.0, %v631
        %v633 = vpop.f32.mrf.mxu0
        %v634 = vpop.f32.mrf.mxu0
        %635 = vdwg.mxu0
        %636 = vmatprep.subr.bf16.mxu0 0
        %637 = vmatpush1.bf16.msra.mxu0 0
        %638 = vmatprep.subr.bf16.mxu0 0
        %639 = vmatpush1.bf16.msra.mxu0 0
        %640 = vmatprep.subr.bf16.mxu0 0
        %641 = vmatpush1.bf16.msra.mxu0 0
        %642 = vmatprep.subr.bf16.mxu0 0
        %643 = vmatpush1.bf16.msra.mxu0 0
        %644 = vmatprep.subr.bf16.mxu0 0
        %645 = vmatpush1.bf16.msra.mxu0 0
        %646 = vmatprep.subr.bf16.mxu0 %v491
        %647 = vmatpush1.bf16.msra.mxu0 %v490
        %648 = vmatprep.subr.bf16.mxu0 %v475
        %649 = vmatpush1.bf16.msra.mxu0 %v474
        %650 = vmatprep.subr.bf16.mxu0 %v459
        %651 = vmatpush1.bf16.msra.mxu0 %v458
        %652 = vmatprep.subr.bf16.mxu0 0
        %653 = vmatpush2.bf16.msra.mxu0 0
        %654 = vmatprep.subr.bf16.mxu0 0
        %655 = vmatpush2.bf16.msra.mxu0 0
        %656 = vmatprep.subr.bf16.mxu0 0
        %657 = vmatpush2.bf16.msra.mxu0 0
        %658 = vmatprep.subr.bf16.mxu0 0
        %659 = vmatpush2.bf16.msra.mxu0 0
        %660 = vmatprep.subr.bf16.mxu0 0
        %661 = vmatpush2.bf16.msra.mxu0 0
        %662 = vmatprep.subr.bf16.mxu0 0
        %663 = vmatpush2.bf16.msra.mxu0 0
        %664 = vmatprep.subr.bf16.mxu0 0
        %665 = vmatpush2.bf16.msra.mxu0 0
        %666 = vmatprep.subr.bf16.mxu0 0
        %667 = vmatpush2.bf16.msra.mxu0 0
        %668 = vmatprep.mubr.bf16.mxu0 0
        %669 = vmatmul.mubr.bf16.gmra.mxu0 %v552
        %v670 = vpop.f32.mrf.mxu0
        %v671 = vadd.f32 0.0, %v670
        %v672 = vpop.f32.mrf.mxu0
        %v673 = vadd.f32 0.0, %v672
        %v674 = vpop.f32.mrf.mxu0
        %v675 = vpop.f32.mrf.mxu0
        %676 = vdwg.mxu0
        %677 = vmatprep.subr.bf16.mxu0 0
        %678 = vmatpush1.bf16.msra.mxu0 0
        %679 = vmatprep.subr.bf16.mxu0 0
        %680 = vmatpush1.bf16.msra.mxu0 0
        %681 = vmatprep.subr.bf16.mxu0 0
        %682 = vmatpush1.bf16.msra.mxu0 0
        %683 = vmatprep.subr.bf16.mxu0 0
        %684 = vmatpush1.bf16.msra.mxu0 0
        %685 = vmatprep.subr.bf16.mxu0 0
        %686 = vmatpush1.bf16.msra.mxu0 0
        %687 = vmatprep.subr.bf16.mxu0 %v493
        %688 = vmatpush1.bf16.msra.mxu0 %v492
        %689 = vmatprep.subr.bf16.mxu0 %v477
        %690 = vmatpush1.bf16.msra.mxu0 %v476
        %691 = vmatprep.subr.bf16.mxu0 %v461
        %692 = vmatpush1.bf16.msra.mxu0 %v460
        %693 = vmatprep.subr.bf16.mxu0 0
        %694 = vmatpush2.bf16.msra.mxu0 0
        %695 = vmatprep.subr.bf16.mxu0 0
        %696 = vmatpush2.bf16.msra.mxu0 0
        %697 = vmatprep.subr.bf16.mxu0 0
        %698 = vmatpush2.bf16.msra.mxu0 0
        %699 = vmatprep.subr.bf16.mxu0 0
        %700 = vmatpush2.bf16.msra.mxu0 0
        %701 = vmatprep.subr.bf16.mxu0 0
        %702 = vmatpush2.bf16.msra.mxu0 0
        %703 = vmatprep.subr.bf16.mxu0 0
        %704 = vmatpush2.bf16.msra.mxu0 0
        %705 = vmatprep.subr.bf16.mxu0 0
        %706 = vmatpush2.bf16.msra.mxu0 0
        %707 = vmatprep.subr.bf16.mxu0 0
        %708 = vmatpush2.bf16.msra.mxu0 0
        %709 = vmatprep.mubr.bf16.mxu0 0
        %710 = vmatmul.mubr.bf16.gmra.mxu0 %v552
        %v711 = vpop.f32.mrf.mxu0
        %v712 = vadd.f32 0.0, %v711
        %v713 = vpop.f32.mrf.mxu0
        %v714 = vadd.f32 0.0, %v713
        %v715 = vpop.f32.mrf.mxu0
        %v716 = vpop.f32.mrf.mxu0
        %717 = vdwg.mxu0
        %718 = vmatprep.subr.bf16.mxu0 0
        %719 = vmatpush1.bf16.msra.mxu0 0
        %720 = vmatprep.subr.bf16.mxu0 0
        %721 = vmatpush1.bf16.msra.mxu0 0
        %722 = vmatprep.subr.bf16.mxu0 0
        %723 = vmatpush1.bf16.msra.mxu0 0
        %724 = vmatprep.subr.bf16.mxu0 0
        %725 = vmatpush1.bf16.msra.mxu0 0
        %726 = vmatprep.subr.bf16.mxu0 0
        %727 = vmatpush1.bf16.msra.mxu0 0
        %728 = vmatprep.subr.bf16.mxu0 %v495
        %729 = vmatpush1.bf16.msra.mxu0 %v494
        %730 = vmatprep.subr.bf16.mxu0 %v479
        %731 = vmatpush1.bf16.msra.mxu0 %v478
        %732 = vmatprep.subr.bf16.mxu0 %v463
        %733 = vmatpush1.bf16.msra.mxu0 %v462
        %734 = vmatprep.subr.bf16.mxu0 0
        %735 = vmatpush2.bf16.msra.mxu0 0
        %736 = vmatprep.subr.bf16.mxu0 0
        %737 = vmatpush2.bf16.msra.mxu0 0
        %738 = vmatprep.subr.bf16.mxu0 0
        %739 = vmatpush2.bf16.msra.mxu0 0
        %740 = vmatprep.subr.bf16.mxu0 0
        %741 = vmatpush2.bf16.msra.mxu0 0
        %742 = vmatprep.subr.bf16.mxu0 0
        %743 = vmatpush2.bf16.msra.mxu0 0
        %744 = vmatprep.subr.bf16.mxu0 0
        %745 = vmatpush2.bf16.msra.mxu0 0
        %746 = vmatprep.subr.bf16.mxu0 0
        %747 = vmatpush2.bf16.msra.mxu0 0
        %748 = vmatprep.subr.bf16.mxu0 0
        %749 = vmatpush2.bf16.msra.mxu0 0
        %750 = vmatprep.mubr.bf16.mxu0 0
        %751 = vmatmul.mubr.bf16.gmra.mxu0 %v552
        %v752 = vpop.f32.mrf.mxu0
        %v753 = vadd.f32 0.0, %v752
        %v754 = vpop.f32.mrf.mxu0
        %v755 = vadd.f32 0.0, %v754
        %v756 = vpop.f32.mrf.mxu0
        %v757 = vpop.f32.mrf.mxu0
        %758 = vdwg.mxu0
        %759 = vmatprep.subr.bf16.mxu0 0
        %760 = vmatpush1.bf16.msra.mxu0 0
        %761 = vmatprep.subr.bf16.mxu0 0
        %762 = vmatpush1.bf16.msra.mxu0 0
        %763 = vmatprep.subr.bf16.mxu0 0
        %764 = vmatpush1.bf16.msra.mxu0 0
        %765 = vmatprep.subr.bf16.mxu0 0
        %766 = vmatpush1.bf16.msra.mxu0 0
        %767 = vmatprep.subr.bf16.mxu0 0
        %768 = vmatpush1.bf16.msra.mxu0 0
        %769 = vmatprep.subr.bf16.mxu0 %v497
        %770 = vmatpush1.bf16.msra.mxu0 %v496
        %771 = vmatprep.subr.bf16.mxu0 %v481
        %772 = vmatpush1.bf16.msra.mxu0 %v480
        %773 = vmatprep.subr.bf16.mxu0 %v465
        %774 = vmatpush1.bf16.msra.mxu0 %v464
        %775 = vmatprep.subr.bf16.mxu0 0
        %776 = vmatpush2.bf16.msra.mxu0 0
        %777 = vmatprep.subr.bf16.mxu0 0
        %778 = vmatpush2.bf16.msra.mxu0 0
        %779 = vmatprep.subr.bf16.mxu0 0
        %780 = vmatpush2.bf16.msra.mxu0 0
        %781 = vmatprep.subr.bf16.mxu0 0
        %782 = vmatpush2.bf16.msra.mxu0 0
        %783 = vmatprep.subr.bf16.mxu0 0
        %784 = vmatpush2.bf16.msra.mxu0 0
        %785 = vmatprep.subr.bf16.mxu0 0
        %786 = vmatpush2.bf16.msra.mxu0 0
        %787 = vmatprep.subr.bf16.mxu0 0
        %788 = vmatpush2.bf16.msra.mxu0 0
        %789 = vmatprep.subr.bf16.mxu0 0
        %790 = vmatpush2.bf16.msra.mxu0 0
        %791 = vmatprep.mubr.bf16.mxu0 0
        %792 = vmatmul.mubr.bf16.gmra.mxu0 %v552
        %v793 = vpop.f32.mrf.mxu0
        %v794 = vadd.f32 0.0, %v793
        %v795 = vpop.f32.mrf.mxu0
        %v796 = vadd.f32 0.0, %v795
        %v797 = vpop.f32.mrf.mxu0
        %v798 = vpop.f32.mrf.mxu0
        %799 = vdwg.mxu0
        %800 = vmatprep.subr.bf16.mxu0 0
        %801 = vmatpush1.bf16.msra.mxu0 0
        %802 = vmatprep.subr.bf16.mxu0 0
        %803 = vmatpush1.bf16.msra.mxu0 0
        %804 = vmatprep.subr.bf16.mxu0 0
        %805 = vmatpush1.bf16.msra.mxu0 0
        %806 = vmatprep.subr.bf16.mxu0 0
        %807 = vmatpush1.bf16.msra.mxu0 0
        %808 = vmatprep.subr.bf16.mxu0 0
        %809 = vmatpush1.bf16.msra.mxu0 0
        %810 = vmatprep.subr.bf16.mxu0 %v499
        %811 = vmatpush1.bf16.msra.mxu0 %v498
        %812 = vmatprep.subr.bf16.mxu0 %v483
        %813 = vmatpush1.bf16.msra.mxu0 %v482
        %814 = vmatprep.subr.bf16.mxu0 %v467
        %815 = vmatpush1.bf16.msra.mxu0 %v466
        %816 = vmatprep.subr.bf16.mxu0 0
        %817 = vmatpush2.bf16.msra.mxu0 0
        %818 = vmatprep.subr.bf16.mxu0 0
        %819 = vmatpush2.bf16.msra.mxu0 0
        %820 = vmatprep.subr.bf16.mxu0 0
        %821 = vmatpush2.bf16.msra.mxu0 0
        %822 = vmatprep.subr.bf16.mxu0 0
        %823 = vmatpush2.bf16.msra.mxu0 0
        %824 = vmatprep.subr.bf16.mxu0 0
        %825 = vmatpush2.bf16.msra.mxu0 0
        %826 = vmatprep.subr.bf16.mxu0 0
        %827 = vmatpush2.bf16.msra.mxu0 0
        %828 = vmatprep.subr.bf16.mxu0 0
        %829 = vmatpush2.bf16.msra.mxu0 0
        %830 = vmatprep.subr.bf16.mxu0 0
        %831 = vmatpush2.bf16.msra.mxu0 0
        %832 = vmatprep.mubr.bf16.mxu0 0
        %833 = vmatmul.mubr.bf16.gmra.mxu0 %v552
        %v834 = vpop.f32.mrf.mxu0
        %v835 = vadd.f32 0.0, %v834
        %v836 = vpop.f32.mrf.mxu0
        %v837 = vadd.f32 0.0, %v836
        %v838 = vpop.f32.mrf.mxu0
        %v839 = vpop.f32.mrf.mxu0
        %840 = vdwg.mxu0
        %841 = vmatprep.subr.bf16.mxu0 0
        %842 = vmatpush1.bf16.msra.mxu0 0
        %843 = vmatprep.subr.bf16.mxu0 0
        %844 = vmatpush1.bf16.msra.mxu0 0
        %845 = vmatprep.subr.bf16.mxu0 0
        %846 = vmatpush1.bf16.msra.mxu0 0
        %847 = vmatprep.subr.bf16.mxu0 0
        %848 = vmatpush1.bf16.msra.mxu0 0
        %849 = vmatprep.subr.bf16.mxu0 0
        %850 = vmatpush1.bf16.msra.mxu0 0
        %851 = vmatprep.subr.bf16.mxu0 %v501
        %852 = vmatpush1.bf16.msra.mxu0 %v500
        %853 = vmatprep.subr.bf16.mxu0 %v485
        %854 = vmatpush1.bf16.msra.mxu0 %v484
        %855 = vmatprep.subr.bf16.mxu0 %v469
        %856 = vmatpush1.bf16.msra.mxu0 %v468
        %857 = vmatprep.subr.bf16.mxu0 0
        %858 = vmatpush2.bf16.msra.mxu0 0
        %859 = vmatprep.subr.bf16.mxu0 0
        %860 = vmatpush2.bf16.msra.mxu0 0
        %861 = vmatprep.subr.bf16.mxu0 0
        %862 = vmatpush2.bf16.msra.mxu0 0
        %863 = vmatprep.subr.bf16.mxu0 0
        %864 = vmatpush2.bf16.msra.mxu0 0
        %865 = vmatprep.subr.bf16.mxu0 0
        %866 = vmatpush2.bf16.msra.mxu0 0
        %867 = vmatprep.subr.bf16.mxu0 0
        %868 = vmatpush2.bf16.msra.mxu0 0
        %869 = vmatprep.subr.bf16.mxu0 0
        %870 = vmatpush2.bf16.msra.mxu0 0
        %871 = vmatprep.subr.bf16.mxu0 0
        %872 = vmatpush2.bf16.msra.mxu0 0
        %873 = vmatprep.mubr.bf16.mxu0 0
        %874 = vmatmul.mubr.bf16.gmra.mxu0 %v552
        %v875 = vpop.f32.mrf.mxu0
        %v876 = vadd.f32 0.0, %v875
        %v877 = vpop.f32.mrf.mxu0
        %v878 = vadd.f32 0.0, %v877
        %v879 = vpop.f32.mrf.mxu0
        %v880 = vpop.f32.mrf.mxu0
        %881 = vdwg.mxu0
        %vm882 = vcmp.ge.f32.partialorder %v589, 0.0
        %vm883 = vcmp.ge.f32.partialorder %v591, 0.0
        %vm884 = vcmp.ge.f32.partialorder %v630, 0.0
        %vm885 = vcmp.ge.f32.partialorder %v632, 0.0
        %vm886 = vcmp.ge.f32.partialorder %v671, 0.0
        %vm887 = vcmp.ge.f32.partialorder %v673, 0.0
        %vm888 = vcmp.ge.f32.partialorder %v712, 0.0
        %vm889 = vcmp.ge.f32.partialorder %v714, 0.0
        %vm890 = vcmp.ge.f32.partialorder %v753, 0.0
        %vm891 = vcmp.ge.f32.partialorder %v755, 0.0
        %vm892 = vcmp.ge.f32.partialorder %v794, 0.0
        %vm893 = vcmp.ge.f32.partialorder %v796, 0.0
        %vm894 = vcmp.ge.f32.partialorder %v835, 0.0
        %vm895 = vcmp.ge.f32.partialorder %v837, 0.0
        %vm896 = vcmp.ge.f32.partialorder %v876, 0.0
        %vm897 = vcmp.ge.f32.partialorder %v878, 0.0
        %v898 = vmul.f32 %v589, 0.2
        %v899 = vmul.f32 %v591, 0.2
        %v900 = vmul.f32 %v630, 0.2
        %v901 = vmul.f32 %v632, 0.2
        %v902 = vmul.f32 %v671, 0.2
        %v903 = vmul.f32 %v673, 0.2
        %v904 = vmul.f32 %v712, 0.2
        %v905 = vmul.f32 %v714, 0.2
        %v906 = vmul.f32 %v753, 0.2
        %v907 = vmul.f32 %v755, 0.2
        %v908 = vmul.f32 %v794, 0.2
        %v909 = vmul.f32 %v796, 0.2
        %v910 = vmul.f32 %v835, 0.2
        %v911 = vmul.f32 %v837, 0.2
        %v912 = vmul.f32 %v876, 0.2
        %v913 = vmul.f32 %v878, 0.2
        %v914 = vsel %vm882, %v589, %v898
        %v915 = vsel %vm883, %v591, %v899
        %v916 = vsel %vm884, %v630, %v900
        %v917 = vsel %vm885, %v632, %v901
        %v918 = vsel %vm886, %v671, %v902
        %v919 = vsel %vm887, %v673, %v903
        %v920 = vsel %vm888, %v712, %v904
        %v921 = vsel %vm889, %v714, %v905
        %v922 = vsel %vm890, %v753, %v906
        %v923 = vsel %vm891, %v755, %v907
        %v924 = vsel %vm892, %v794, %v908
        %v925 = vsel %vm893, %v796, %v909
        %v926 = vsel %vm894, %v835, %v910
        %v927 = vsel %vm895, %v837, %v911
        %v928 = vsel %vm896, %v876, %v912
        %v929 = vsel %vm897, %v878, %v913
        %v930 = vpack.c.bf16 %v914, %v914
        %v931 = vpack.c.bf16 %v915, %v915
        %v932 = vpack.c.bf16 %v916, %v916
        %v933 = vpack.c.bf16 %v917, %v917
        %v934 = vpack.c.bf16 %v918, %v918
        %v935 = vpack.c.bf16 %v919, %v919
        %v936 = vpack.c.bf16 %v920, %v920
        %v937 = vpack.c.bf16 %v921, %v921
        %v938 = vpack.c.bf16 %v922, %v922
        %v939 = vpack.c.bf16 %v923, %v923
        %v940 = vpack.c.bf16 %v924, %v924
        %v941 = vpack.c.bf16 %v925, %v925
        %v942 = vpack.c.bf16 %v926, %v926
        %v943 = vpack.c.bf16 %v927, %v927
        %v944 = vpack.c.bf16 %v928, %v928
        %v945 = vpack.c.bf16 %v929, %v929
        %v962 = vunpack.c.l.b16 %v930
        %v963 = vunpack.c.l.b16 %v931
        %v964 = vunpack.c.l.b16 %v932
        %v965 = vunpack.c.l.b16 %v933
        %v966 = vunpack.c.l.b16 %v934
        %v967 = vunpack.c.l.b16 %v935
        %v968 = vunpack.c.l.b16 %v936
        %v969 = vunpack.c.l.b16 %v937
        %v970 = vunpack.c.l.b16 %v938
        %v971 = vunpack.c.l.b16 %v939
        %v972 = vunpack.c.l.b16 %v940
        %v973 = vunpack.c.l.b16 %v941
        %v974 = vunpack.c.l.b16 %v942
        %v975 = vunpack.c.l.b16 %v943
        %v976 = vunpack.c.l.b16 %v944
        %v977 = vunpack.c.l.b16 %v945
        %v978 = vpack.c.b16 %v963, %v962
        %v979 = vpack.c.b16 %v965, %v964
        %v980 = vpack.c.b16 %v967, %v966
        %v981 = vpack.c.b16 %v969, %v968
        %v982 = vpack.c.b16 %v971, %v970
        %v983 = vpack.c.b16 %v973, %v972
        %v984 = vpack.c.b16 %v975, %v974
        %v985 = vpack.c.b16 %v977, %v976
        %994 = vst [vmem:[%s258] sm:$0xff] %v978
        %995 = vst [vmem:[%s258 + $0x8] sm:$0xff] %v979
        %996 = vst [vmem:[%s258 + $0x10] sm:$0xff] %v980
        %997 = vst [vmem:[%s258 + $0x18] sm:$0xff] %v981
        %998 = vst [vmem:[%s258 + $0x20] sm:$0xff] %v982
        %999 = vst [vmem:[%s258 + $0x28] sm:$0xff] %v983
        %1000 = vst [vmem:[%s258 + $0x30] sm:$0xff] %v984
        %1001 = vst [vmem:[%s258 + $0x38] sm:$0xff] %v985
        %s1002 = smul.u32 16, %s13
        %p1003 = scmp.lt.s32.totalorder %s1002, 63
        %s1004 = scalar_select %p1003, %s1002, 63
        %s1005 = smul.addr %s1004, 4
        %s1006 = scalar_lea.vmem %s2, %s1005
        // Predicated region
        $region52: #{discriminator_forward.6} parent=46 // pred_check
          %p1007 = pneg %p78
        $region53: #{discriminator_forward.6} parent=46 // pred_check_branch
          %1009 = sbr.rel (%p1007) target = $region55
        $region54: #{discriminator_forward.6} parent=46 // pred_region
          %s1010 = smul.u32 16, %s13
        $region55: #{discriminator_forward.6} parent=46 // pred_fallthru
          _
      $region47: #{discriminator_forward.6} parent=5 // pred_fallthru
        _
      %p1011 = scmp.le.s32.totalorder 2, %s8
      // Predicated region
      $region56: #{discriminator_forward.6} parent=5 // pred_check
        %p1012 = pneg %p1011
      $region57: #{discriminator_forward.6} parent=5 // pred_check_branch
        %1014 = sbr.rel (%p1012) target = $region59
      $region58: #{discriminator_forward.6} parent=5 // pred_region
        %s1015 = ssub.s32 %s8, 2
        // Predicated region
        $region60: #{discriminator_forward.6} parent=58 // pred_check
          %p1016 = pneg %p84
        $region61: #{discriminator_forward.6} parent=58 // pred_check_branch
          %1018 = sbr.rel (%p1016) target = $region63
        $region62: #{discriminator_forward.6} parent=58 // pred_region
          %s1019 = smul.u32 16, %s14
          %p1020 = scmp.lt.s32.totalorder %s1019, 63
          %s1021 = scalar_select %p1020, %s1019, 63
          %s1022 = smul.addr %s1021, 4
          %s1023 = scalar_lea.vmem %s2, %s1022
        $region63: #{discriminator_forward.6} parent=58 // pred_fallthru
          _
      $region59: #{discriminator_forward.6} parent=5 // pred_fallthru
        _
    $region6: #{discriminator_forward.6} parent=1 // loop_footer
      %s12 = sadd.s32 1, %s8
    $region7: #{discriminator_forward.6} parent=1 // loop_footer_branch
      %7 = sbr.rel target = $region3
    $region8: #{discriminator_forward.6} parent=1 // loop_exit
      _

// kernel: discriminator_forward.7
$region0: #{discriminator_forward.7}
  #allocation0 [shape = 'u32[]', space=smem, size = 0x4, offset = 0x4, fixed_abs, tag = 'smem constant byte address 0x4 - core index']
  #allocation1 [shape = 'u32[144,128]{1,0:T(1,128)}', space=vmem, size = 0x12000, scoped, tag = 'internal scratch']
  %s0 = inlined_call_operand.vmem [shape: bf16[16,128], index: 0, kind: input, shape index: {}]
  %s1 = inlined_call_operand.vmem [shape: bf16[128,2048], index: 1, kind: input, shape index: {}]
  %s2 = inlined_call_operand.vmem [shape: f32[16,1], index: 2, kind: input, shape index: {}]
  %s3 = inlined_call_operand.vmem [shape: f32[16,1], index: 3, kind: input, shape index: {}]
  %s4 = inlined_call_operand.vmem [shape: bf16[16,2048], index: 4, kind: output, shape index: {}]
  %s5 = sld [smem:[#allocation0]]
  $region26: #{discriminator_forward.7} parent=0
    _
  %s7 = ssub.s32 1, %s5
  %s8 = scalar_select 0, %s7, %s5
  // Predicated region
  $region2: #{discriminator_forward.7} parent=0 // pred_check
    _
  $region3: #{discriminator_forward.7} parent=0 // pred_check_branch
    %10 = sbr.rel (0) target = $region5
  $region4: #{discriminator_forward.7} parent=0 // pred_region
    _
  $region5: #{discriminator_forward.7} parent=0 // pred_fallthru
    _
  // Predicated region
  $region6: #{discriminator_forward.7} parent=0 // pred_check
    _
  $region7: #{discriminator_forward.7} parent=0 // pred_check_branch
    %12 = sbr.rel (0) target = $region9
  $region8: #{discriminator_forward.7} parent=0 // pred_region
    _
  $region9: #{discriminator_forward.7} parent=0 // pred_fallthru
    _
  // Predicated region
  $region10: #{discriminator_forward.7} parent=0 // pred_check
    _
  $region11: #{discriminator_forward.7} parent=0 // pred_check_branch
    %14 = sbr.rel (0) target = $region13
  $region12: #{discriminator_forward.7} parent=0 // pred_region
    _
  $region13: #{discriminator_forward.7} parent=0 // pred_fallthru
    _
  // Predicated region
  $region14: #{discriminator_forward.7} parent=0 // pred_check
    _
  $region15: #{discriminator_forward.7} parent=0 // pred_check_branch
    %16 = sbr.rel (0) target = $region17
  $region16: #{discriminator_forward.7} parent=0 // pred_region
    _
  $region17: #{discriminator_forward.7} parent=0 // pred_fallthru
    _
  %v18 = vld [vmem:[%s0] sm:$0xf]
  %v19 = vld [vmem:[%s0 + $0x4] sm:$0xf]
  %v20 = vld [vmem:[%s1] sm:$0xff]
  %v21 = vld [vmem:[%s1 + $0x8] sm:$0xff]
  %v22 = vld [vmem:[%s1 + $0x10] sm:$0xff]
  %v23 = vld [vmem:[%s1 + $0x18] sm:$0xff]
  %v24 = vld [vmem:[%s1 + $0x20] sm:$0xff]
  %v25 = vld [vmem:[%s1 + $0x28] sm:$0xff]
  %v26 = vld [vmem:[%s1 + $0x30] sm:$0xff]
  %v27 = vld [vmem:[%s1 + $0x38] sm:$0xff]
  %v28 = vld [vmem:[%s1 + $0x40] sm:$0xff]
  %v29 = vld [vmem:[%s1 + $0x48] sm:$0xff]
  %v30 = vld [vmem:[%s1 + $0x50] sm:$0xff]
  %v31 = vld [vmem:[%s1 + $0x58] sm:$0xff]
  %v32 = vld [vmem:[%s1 + $0x60] sm:$0xff]
  %v33 = vld [vmem:[%s1 + $0x68] sm:$0xff]
  %v34 = vld [vmem:[%s1 + $0x70] sm:$0xff]
  %v35 = vld [vmem:[%s1 + $0x78] sm:$0xff]
  %v36 = vld [vmem:[%s1 + $0x80] sm:$0xff]
  %v37 = vld [vmem:[%s1 + $0x88] sm:$0xff]
  %v38 = vld [vmem:[%s1 + $0x90] sm:$0xff]
  %v39 = vld [vmem:[%s1 + $0x98] sm:$0xff]
  %v40 = vld [vmem:[%s1 + $0xa0] sm:$0xff]
  %v41 = vld [vmem:[%s1 + $0xa8] sm:$0xff]
  %v42 = vld [vmem:[%s1 + $0xb0] sm:$0xff]
  %v43 = vld [vmem:[%s1 + $0xb8] sm:$0xff]
  %v44 = vld [vmem:[%s1 + $0xc0] sm:$0xff]
  %v45 = vld [vmem:[%s1 + $0xc8] sm:$0xff]
  %v46 = vld [vmem:[%s1 + $0xd0] sm:$0xff]
  %v47 = vld [vmem:[%s1 + $0xd8] sm:$0xff]
  %v48 = vld [vmem:[%s1 + $0xe0] sm:$0xff]
  %v49 = vld [vmem:[%s1 + $0xe8] sm:$0xff]
  %v50 = vld [vmem:[%s1 + $0xf0] sm:$0xff]
  %v51 = vld [vmem:[%s1 + $0xf8] sm:$0xff]
  %v52 = vld [vmem:[%s1 + $0x100] sm:$0xff]
  %v53 = vld [vmem:[%s1 + $0x108] sm:$0xff]
  %v54 = vld [vmem:[%s1 + $0x110] sm:$0xff]
  %v55 = vld [vmem:[%s1 + $0x118] sm:$0xff]
  %v56 = vld [vmem:[%s1 + $0x120] sm:$0xff]
  %v57 = vld [vmem:[%s1 + $0x128] sm:$0xff]
  %v58 = vld [vmem:[%s1 + $0x130] sm:$0xff]
  %v59 = vld [vmem:[%s1 + $0x138] sm:$0xff]
  %v60 = vld [vmem:[%s1 + $0x140] sm:$0xff]
  %v61 = vld [vmem:[%s1 + $0x148] sm:$0xff]
  %v62 = vld [vmem:[%s1 + $0x150] sm:$0xff]
  %v63 = vld [vmem:[%s1 + $0x158] sm:$0xff]
  %v64 = vld [vmem:[%s1 + $0x160] sm:$0xff]
  %v65 = vld [vmem:[%s1 + $0x168] sm:$0xff]
  %v66 = vld [vmem:[%s1 + $0x170] sm:$0xff]
  %v67 = vld [vmem:[%s1 + $0x178] sm:$0xff]
  %v68 = vld [vmem:[%s1 + $0x180] sm:$0xff]
  %v69 = vld [vmem:[%s1 + $0x188] sm:$0xff]
  %v70 = vld [vmem:[%s1 + $0x190] sm:$0xff]
  %v71 = vld [vmem:[%s1 + $0x198] sm:$0xff]
  %v72 = vld [vmem:[%s1 + $0x1a0] sm:$0xff]
  %v73 = vld [vmem:[%s1 + $0x1a8] sm:$0xff]
  %v74 = vld [vmem:[%s1 + $0x1b0] sm:$0xff]
  %v75 = vld [vmem:[%s1 + $0x1b8] sm:$0xff]
  %v76 = vld [vmem:[%s1 + $0x1c0] sm:$0xff]
  %v77 = vld [vmem:[%s1 + $0x1c8] sm:$0xff]
  %v78 = vld [vmem:[%s1 + $0x1d0] sm:$0xff]
  %v79 = vld [vmem:[%s1 + $0x1d8] sm:$0xff]
  %v80 = vld [vmem:[%s1 + $0x1e0] sm:$0xff]
  %v81 = vld [vmem:[%s1 + $0x1e8] sm:$0xff]
  %v82 = vld [vmem:[%s1 + $0x1f0] sm:$0xff]
  %v83 = vld [vmem:[%s1 + $0x1f8] sm:$0xff]
  %v84 = vld [vmem:[%s1 + $0x200] sm:$0xff]
  %v85 = vld [vmem:[%s1 + $0x208] sm:$0xff]
  %v86 = vld [vmem:[%s1 + $0x210] sm:$0xff]
  %v87 = vld [vmem:[%s1 + $0x218] sm:$0xff]
  %v88 = vld [vmem:[%s1 + $0x220] sm:$0xff]
  %v89 = vld [vmem:[%s1 + $0x228] sm:$0xff]
  %v90 = vld [vmem:[%s1 + $0x230] sm:$0xff]
  %v91 = vld [vmem:[%s1 + $0x238] sm:$0xff]
  %v92 = vld [vmem:[%s1 + $0x240] sm:$0xff]
  %v93 = vld [vmem:[%s1 + $0x248] sm:$0xff]
  %v94 = vld [vmem:[%s1 + $0x250] sm:$0xff]
  %v95 = vld [vmem:[%s1 + $0x258] sm:$0xff]
  %v96 = vld [vmem:[%s1 + $0x260] sm:$0xff]
  %v97 = vld [vmem:[%s1 + $0x268] sm:$0xff]
  %v98 = vld [vmem:[%s1 + $0x270] sm:$0xff]
  %v99 = vld [vmem:[%s1 + $0x278] sm:$0xff]
  %v100 = vld [vmem:[%s1 + $0x280] sm:$0xff]
  %v101 = vld [vmem:[%s1 + $0x288] sm:$0xff]
  %v102 = vld [vmem:[%s1 + $0x290] sm:$0xff]
  %v103 = vld [vmem:[%s1 + $0x298] sm:$0xff]
  %v104 = vld [vmem:[%s1 + $0x2a0] sm:$0xff]
  %v105 = vld [vmem:[%s1 + $0x2a8] sm:$0xff]
  %v106 = vld [vmem:[%s1 + $0x2b0] sm:$0xff]
  %v107 = vld [vmem:[%s1 + $0x2b8] sm:$0xff]
  %v108 = vld [vmem:[%s1 + $0x2c0] sm:$0xff]
  %v109 = vld [vmem:[%s1 + $0x2c8] sm:$0xff]
  %v110 = vld [vmem:[%s1 + $0x2d0] sm:$0xff]
  %v111 = vld [vmem:[%s1 + $0x2d8] sm:$0xff]
  %v112 = vld [vmem:[%s1 + $0x2e0] sm:$0xff]
  %v113 = vld [vmem:[%s1 + $0x2e8] sm:$0xff]
  %v114 = vld [vmem:[%s1 + $0x2f0] sm:$0xff]
  %v115 = vld [vmem:[%s1 + $0x2f8] sm:$0xff]
  %v116 = vld [vmem:[%s1 + $0x300] sm:$0xff]
  %v117 = vld [vmem:[%s1 + $0x308] sm:$0xff]
  %v118 = vld [vmem:[%s1 + $0x310] sm:$0xff]
  %v119 = vld [vmem:[%s1 + $0x318] sm:$0xff]
  %v120 = vld [vmem:[%s1 + $0x320] sm:$0xff]
  %v121 = vld [vmem:[%s1 + $0x328] sm:$0xff]
  %v122 = vld [vmem:[%s1 + $0x330] sm:$0xff]
  %v123 = vld [vmem:[%s1 + $0x338] sm:$0xff]
  %v124 = vld [vmem:[%s1 + $0x340] sm:$0xff]
  %v125 = vld [vmem:[%s1 + $0x348] sm:$0xff]
  %v126 = vld [vmem:[%s1 + $0x350] sm:$0xff]
  %v127 = vld [vmem:[%s1 + $0x358] sm:$0xff]
  %v128 = vld [vmem:[%s1 + $0x360] sm:$0xff]
  %v129 = vld [vmem:[%s1 + $0x368] sm:$0xff]
  %v130 = vld [vmem:[%s1 + $0x370] sm:$0xff]
  %v131 = vld [vmem:[%s1 + $0x378] sm:$0xff]
  %v132 = vld [vmem:[%s1 + $0x380] sm:$0xff]
  %v133 = vld [vmem:[%s1 + $0x388] sm:$0xff]
  %v134 = vld [vmem:[%s1 + $0x390] sm:$0xff]
  %v135 = vld [vmem:[%s1 + $0x398] sm:$0xff]
  %v136 = vld [vmem:[%s1 + $0x3a0] sm:$0xff]
  %v137 = vld [vmem:[%s1 + $0x3a8] sm:$0xff]
  %v138 = vld [vmem:[%s1 + $0x3b0] sm:$0xff]
  %v139 = vld [vmem:[%s1 + $0x3b8] sm:$0xff]
  %v140 = vld [vmem:[%s1 + $0x3c0] sm:$0xff]
  %v141 = vld [vmem:[%s1 + $0x3c8] sm:$0xff]
  %v142 = vld [vmem:[%s1 + $0x3d0] sm:$0xff]
  %v143 = vld [vmem:[%s1 + $0x3d8] sm:$0xff]
  %v144 = vld [vmem:[%s1 + $0x3e0] sm:$0xff]
  %v145 = vld [vmem:[%s1 + $0x3e8] sm:$0xff]
  %v146 = vld [vmem:[%s1 + $0x3f0] sm:$0xff]
  %v147 = vld [vmem:[%s1 + $0x3f8] sm:$0xff]
  %v150 = vunpack.c.l.b16 %v18
  %v151 = vunpack.c.l.b16 %v19
  %v152 = vpack.c.b16 %v151, %v150
  %v282 = vunpack.c.l.b16 %v20
  %v283 = vunpack.c.h.b16 %v20
  %v284 = vunpack.c.l.b16 %v21
  %v285 = vunpack.c.h.b16 %v21
  %v286 = vunpack.c.l.b16 %v22
  %v287 = vunpack.c.h.b16 %v22
  %v288 = vunpack.c.l.b16 %v23
  %v289 = vunpack.c.h.b16 %v23
  %v290 = vunpack.c.l.b16 %v24
  %v291 = vunpack.c.h.b16 %v24
  %v292 = vunpack.c.l.b16 %v25
  %v293 = vunpack.c.h.b16 %v25
  %v294 = vunpack.c.l.b16 %v26
  %v295 = vunpack.c.h.b16 %v26
  %v296 = vunpack.c.l.b16 %v27
  %v297 = vunpack.c.h.b16 %v27
  %v298 = vunpack.c.l.b16 %v28
  %v299 = vunpack.c.h.b16 %v28
  %v300 = vunpack.c.l.b16 %v29
  %v301 = vunpack.c.h.b16 %v29
  %v302 = vunpack.c.l.b16 %v30
  %v303 = vunpack.c.h.b16 %v30
  %v304 = vunpack.c.l.b16 %v31
  %v305 = vunpack.c.h.b16 %v31
  %v306 = vunpack.c.l.b16 %v32
  %v307 = vunpack.c.h.b16 %v32
  %v308 = vunpack.c.l.b16 %v33
  %v309 = vunpack.c.h.b16 %v33
  %v310 = vunpack.c.l.b16 %v34
  %v311 = vunpack.c.h.b16 %v34
  %v312 = vunpack.c.l.b16 %v35
  %v313 = vunpack.c.h.b16 %v35
  %v314 = vunpack.c.l.b16 %v36
  %v315 = vunpack.c.h.b16 %v36
  %v316 = vunpack.c.l.b16 %v37
  %v317 = vunpack.c.h.b16 %v37
  %v318 = vunpack.c.l.b16 %v38
  %v319 = vunpack.c.h.b16 %v38
  %v320 = vunpack.c.l.b16 %v39
  %v321 = vunpack.c.h.b16 %v39
  %v322 = vunpack.c.l.b16 %v40
  %v323 = vunpack.c.h.b16 %v40
  %v324 = vunpack.c.l.b16 %v41
  %v325 = vunpack.c.h.b16 %v41
  %v326 = vunpack.c.l.b16 %v42
  %v327 = vunpack.c.h.b16 %v42
  %v328 = vunpack.c.l.b16 %v43
  %v329 = vunpack.c.h.b16 %v43
  %v330 = vunpack.c.l.b16 %v44
  %v331 = vunpack.c.h.b16 %v44
  %v332 = vunpack.c.l.b16 %v45
  %v333 = vunpack.c.h.b16 %v45
  %v334 = vunpack.c.l.b16 %v46
  %v335 = vunpack.c.h.b16 %v46
  %v336 = vunpack.c.l.b16 %v47
  %v337 = vunpack.c.h.b16 %v47
  %v338 = vunpack.c.l.b16 %v48
  %v339 = vunpack.c.h.b16 %v48
  %v340 = vunpack.c.l.b16 %v49
  %v341 = vunpack.c.h.b16 %v49
  %v342 = vunpack.c.l.b16 %v50
  %v343 = vunpack.c.h.b16 %v50
  %v344 = vunpack.c.l.b16 %v51
  %v345 = vunpack.c.h.b16 %v51
  %v346 = vunpack.c.l.b16 %v52
  %v347 = vunpack.c.h.b16 %v52
  %v348 = vunpack.c.l.b16 %v53
  %v349 = vunpack.c.h.b16 %v53
  %v350 = vunpack.c.l.b16 %v54
  %v351 = vunpack.c.h.b16 %v54
  %v352 = vunpack.c.l.b16 %v55
  %v353 = vunpack.c.h.b16 %v55
  %v354 = vunpack.c.l.b16 %v56
  %v355 = vunpack.c.h.b16 %v56
  %v356 = vunpack.c.l.b16 %v57
  %v357 = vunpack.c.h.b16 %v57
  %v358 = vunpack.c.l.b16 %v58
  %v359 = vunpack.c.h.b16 %v58
  %v360 = vunpack.c.l.b16 %v59
  %v361 = vunpack.c.h.b16 %v59
  %v362 = vunpack.c.l.b16 %v60
  %v363 = vunpack.c.h.b16 %v60
  %v364 = vunpack.c.l.b16 %v61
  %v365 = vunpack.c.h.b16 %v61
  %v366 = vunpack.c.l.b16 %v62
  %v367 = vunpack.c.h.b16 %v62
  %v368 = vunpack.c.l.b16 %v63
  %v369 = vunpack.c.h.b16 %v63
  %v370 = vunpack.c.l.b16 %v64
  %v371 = vunpack.c.h.b16 %v64
  %v372 = vunpack.c.l.b16 %v65
  %v373 = vunpack.c.h.b16 %v65
  %v374 = vunpack.c.l.b16 %v66
  %v375 = vunpack.c.h.b16 %v66
  %v376 = vunpack.c.l.b16 %v67
  %v377 = vunpack.c.h.b16 %v67
  %v378 = vunpack.c.l.b16 %v68
  %v379 = vunpack.c.h.b16 %v68
  %v380 = vunpack.c.l.b16 %v69
  %v381 = vunpack.c.h.b16 %v69
  %v382 = vunpack.c.l.b16 %v70
  %v383 = vunpack.c.h.b16 %v70
  %v384 = vunpack.c.l.b16 %v71
  %v385 = vunpack.c.h.b16 %v71
  %v386 = vunpack.c.l.b16 %v72
  %v387 = vunpack.c.h.b16 %v72
  %v388 = vunpack.c.l.b16 %v73
  %v389 = vunpack.c.h.b16 %v73
  %v390 = vunpack.c.l.b16 %v74
  %v391 = vunpack.c.h.b16 %v74
  %v392 = vunpack.c.l.b16 %v75
  %v393 = vunpack.c.h.b16 %v75
  %v394 = vunpack.c.l.b16 %v76
  %v395 = vunpack.c.h.b16 %v76
  %v396 = vunpack.c.l.b16 %v77
  %v397 = vunpack.c.h.b16 %v77
  %v398 = vunpack.c.l.b16 %v78
  %v399 = vunpack.c.h.b16 %v78
  %v400 = vunpack.c.l.b16 %v79
  %v401 = vunpack.c.h.b16 %v79
  %v402 = vunpack.c.l.b16 %v80
  %v403 = vunpack.c.h.b16 %v80
  %v404 = vunpack.c.l.b16 %v81
  %v405 = vunpack.c.h.b16 %v81
  %v406 = vunpack.c.l.b16 %v82
  %v407 = vunpack.c.h.b16 %v82
  %v408 = vunpack.c.l.b16 %v83
  %v409 = vunpack.c.h.b16 %v83
  %v410 = vunpack.c.l.b16 %v84
  %v411 = vunpack.c.h.b16 %v84
  %v412 = vunpack.c.l.b16 %v85
  %v413 = vunpack.c.h.b16 %v85
  %v414 = vunpack.c.l.b16 %v86
  %v415 = vunpack.c.h.b16 %v86
  %v416 = vunpack.c.l.b16 %v87
  %v417 = vunpack.c.h.b16 %v87
  %v418 = vunpack.c.l.b16 %v88
  %v419 = vunpack.c.h.b16 %v88
  %v420 = vunpack.c.l.b16 %v89
  %v421 = vunpack.c.h.b16 %v89
  %v422 = vunpack.c.l.b16 %v90
  %v423 = vunpack.c.h.b16 %v90
  %v424 = vunpack.c.l.b16 %v91
  %v425 = vunpack.c.h.b16 %v91
  %v426 = vunpack.c.l.b16 %v92
  %v427 = vunpack.c.h.b16 %v92
  %v428 = vunpack.c.l.b16 %v93
  %v429 = vunpack.c.h.b16 %v93
  %v430 = vunpack.c.l.b16 %v94
  %v431 = vunpack.c.h.b16 %v94
  %v432 = vunpack.c.l.b16 %v95
  %v433 = vunpack.c.h.b16 %v95
  %v434 = vunpack.c.l.b16 %v96
  %v435 = vunpack.c.h.b16 %v96
  %v436 = vunpack.c.l.b16 %v97
  %v437 = vunpack.c.h.b16 %v97
  %v438 = vunpack.c.l.b16 %v98
  %v439 = vunpack.c.h.b16 %v98
  %v440 = vunpack.c.l.b16 %v99
  %v441 = vunpack.c.h.b16 %v99
  %v442 = vunpack.c.l.b16 %v100
  %v443 = vunpack.c.h.b16 %v100
  %v444 = vunpack.c.l.b16 %v101
  %v445 = vunpack.c.h.b16 %v101
  %v446 = vunpack.c.l.b16 %v102
  %v447 = vunpack.c.h.b16 %v102
  %v448 = vunpack.c.l.b16 %v103
  %v449 = vunpack.c.h.b16 %v103
  %v450 = vunpack.c.l.b16 %v104
  %v451 = vunpack.c.h.b16 %v104
  %v452 = vunpack.c.l.b16 %v105
  %v453 = vunpack.c.h.b16 %v105
  %v454 = vunpack.c.l.b16 %v106
  %v455 = vunpack.c.h.b16 %v106
  %v456 = vunpack.c.l.b16 %v107
  %v457 = vunpack.c.h.b16 %v107
  %v458 = vunpack.c.l.b16 %v108
  %v459 = vunpack.c.h.b16 %v108
  %v460 = vunpack.c.l.b16 %v109
  %v461 = vunpack.c.h.b16 %v109
  %v462 = vunpack.c.l.b16 %v110
  %v463 = vunpack.c.h.b16 %v110
  %v464 = vunpack.c.l.b16 %v111
  %v465 = vunpack.c.h.b16 %v111
  %v466 = vunpack.c.l.b16 %v112
  %v467 = vunpack.c.h.b16 %v112
  %v468 = vunpack.c.l.b16 %v113
  %v469 = vunpack.c.h.b16 %v113
  %v470 = vunpack.c.l.b16 %v114
  %v471 = vunpack.c.h.b16 %v114
  %v472 = vunpack.c.l.b16 %v115
  %v473 = vunpack.c.h.b16 %v115
  %v474 = vunpack.c.l.b16 %v116
  %v475 = vunpack.c.h.b16 %v116
  %v476 = vunpack.c.l.b16 %v117
  %v477 = vunpack.c.h.b16 %v117
  %v478 = vunpack.c.l.b16 %v118
  %v479 = vunpack.c.h.b16 %v118
  %v480 = vunpack.c.l.b16 %v119
  %v481 = vunpack.c.h.b16 %v119
  %v482 = vunpack.c.l.b16 %v120
  %v483 = vunpack.c.h.b16 %v120
  %v484 = vunpack.c.l.b16 %v121
  %v485 = vunpack.c.h.b16 %v121
  %v486 = vunpack.c.l.b16 %v122
  %v487 = vunpack.c.h.b16 %v122
  %v488 = vunpack.c.l.b16 %v123
  %v489 = vunpack.c.h.b16 %v123
  %v490 = vunpack.c.l.b16 %v124
  %v491 = vunpack.c.h.b16 %v124
  %v492 = vunpack.c.l.b16 %v125
  %v493 = vunpack.c.h.b16 %v125
  %v494 = vunpack.c.l.b16 %v126
  %v495 = vunpack.c.h.b16 %v126
  %v496 = vunpack.c.l.b16 %v127
  %v497 = vunpack.c.h.b16 %v127
  %v498 = vunpack.c.l.b16 %v128
  %v499 = vunpack.c.h.b16 %v128
  %v500 = vunpack.c.l.b16 %v129
  %v501 = vunpack.c.h.b16 %v129
  %v502 = vunpack.c.l.b16 %v130
  %v503 = vunpack.c.h.b16 %v130
  %v504 = vunpack.c.l.b16 %v131
  %v505 = vunpack.c.h.b16 %v131
  %v506 = vunpack.c.l.b16 %v132
  %v507 = vunpack.c.h.b16 %v132
  %v508 = vunpack.c.l.b16 %v133
  %v509 = vunpack.c.h.b16 %v133
  %v510 = vunpack.c.l.b16 %v134
  %v511 = vunpack.c.h.b16 %v134
  %v512 = vunpack.c.l.b16 %v135
  %v513 = vunpack.c.h.b16 %v135
  %v514 = vunpack.c.l.b16 %v136
  %v515 = vunpack.c.h.b16 %v136
  %v516 = vunpack.c.l.b16 %v137
  %v517 = vunpack.c.h.b16 %v137
  %v518 = vunpack.c.l.b16 %v138
  %v519 = vunpack.c.h.b16 %v138
  %v520 = vunpack.c.l.b16 %v139
  %v521 = vunpack.c.h.b16 %v139
  %v522 = vunpack.c.l.b16 %v140
  %v523 = vunpack.c.h.b16 %v140
  %v524 = vunpack.c.l.b16 %v141
  %v525 = vunpack.c.h.b16 %v141
  %v526 = vunpack.c.l.b16 %v142
  %v527 = vunpack.c.h.b16 %v142
  %v528 = vunpack.c.l.b16 %v143
  %v529 = vunpack.c.h.b16 %v143
  %v530 = vunpack.c.l.b16 %v144
  %v531 = vunpack.c.h.b16 %v144
  %v532 = vunpack.c.l.b16 %v145
  %v533 = vunpack.c.h.b16 %v145
  %v534 = vunpack.c.l.b16 %v146
  %v535 = vunpack.c.h.b16 %v146
  %v536 = vunpack.c.l.b16 %v147
  %v537 = vunpack.c.h.b16 %v147
  %v538 = vpack.c.b16 %v298, %v282
  %v539 = vpack.c.b16 %v299, %v283
  %v540 = vpack.c.b16 %v300, %v284
  %v541 = vpack.c.b16 %v301, %v285
  %v542 = vpack.c.b16 %v302, %v286
  %v543 = vpack.c.b16 %v303, %v287
  %v544 = vpack.c.b16 %v304, %v288
  %v545 = vpack.c.b16 %v305, %v289
  %v546 = vpack.c.b16 %v306, %v290
  %v547 = vpack.c.b16 %v307, %v291
  %v548 = vpack.c.b16 %v308, %v292
  %v549 = vpack.c.b16 %v309, %v293
  %v550 = vpack.c.b16 %v310, %v294
  %v551 = vpack.c.b16 %v311, %v295
  %v552 = vpack.c.b16 %v312, %v296
  %v553 = vpack.c.b16 %v313, %v297
  %v554 = vpack.c.b16 %v330, %v314
  %v555 = vpack.c.b16 %v331, %v315
  %v556 = vpack.c.b16 %v332, %v316
  %v557 = vpack.c.b16 %v333, %v317
  %v558 = vpack.c.b16 %v334, %v318
  %v559 = vpack.c.b16 %v335, %v319
  %v560 = vpack.c.b16 %v336, %v320
  %v561 = vpack.c.b16 %v337, %v321
  %v562 = vpack.c.b16 %v338, %v322
  %v563 = vpack.c.b16 %v339, %v323
  %v564 = vpack.c.b16 %v340, %v324
  %v565 = vpack.c.b16 %v341, %v325
  %v566 = vpack.c.b16 %v342, %v326
  %v567 = vpack.c.b16 %v343, %v327
  %v568 = vpack.c.b16 %v344, %v328
  %v569 = vpack.c.b16 %v345, %v329
  %v570 = vpack.c.b16 %v362, %v346
  %v571 = vpack.c.b16 %v363, %v347
  %v572 = vpack.c.b16 %v364, %v348
  %v573 = vpack.c.b16 %v365, %v349
  %v574 = vpack.c.b16 %v366, %v350
  %v575 = vpack.c.b16 %v367, %v351
  %v576 = vpack.c.b16 %v368, %v352
  %v577 = vpack.c.b16 %v369, %v353
  %v578 = vpack.c.b16 %v370, %v354
  %v579 = vpack.c.b16 %v371, %v355
  %v580 = vpack.c.b16 %v372, %v356
  %v581 = vpack.c.b16 %v373, %v357
  %v582 = vpack.c.b16 %v374, %v358
  %v583 = vpack.c.b16 %v375, %v359
  %v584 = vpack.c.b16 %v376, %v360
  %v585 = vpack.c.b16 %v377, %v361
  %v586 = vpack.c.b16 %v394, %v378
  %v587 = vpack.c.b16 %v395, %v379
  %v588 = vpack.c.b16 %v396, %v380
  %v589 = vpack.c.b16 %v397, %v381
  %v590 = vpack.c.b16 %v398, %v382
  %v591 = vpack.c.b16 %v399, %v383
  %v592 = vpack.c.b16 %v400, %v384
  %v593 = vpack.c.b16 %v401, %v385
  %v594 = vpack.c.b16 %v402, %v386
  %v595 = vpack.c.b16 %v403, %v387
  %v596 = vpack.c.b16 %v404, %v388
  %v597 = vpack.c.b16 %v405, %v389
  %v598 = vpack.c.b16 %v406, %v390
  %v599 = vpack.c.b16 %v407, %v391
  %v600 = vpack.c.b16 %v408, %v392
  %v601 = vpack.c.b16 %v409, %v393
  %v602 = vpack.c.b16 %v426, %v410
  %v603 = vpack.c.b16 %v427, %v411
  %v604 = vpack.c.b16 %v428, %v412
  %v605 = vpack.c.b16 %v429, %v413
  %v606 = vpack.c.b16 %v430, %v414
  %v607 = vpack.c.b16 %v431, %v415
  %v608 = vpack.c.b16 %v432, %v416
  %v609 = vpack.c.b16 %v433, %v417
  %v610 = vpack.c.b16 %v434, %v418
  %v611 = vpack.c.b16 %v435, %v419
  %v612 = vpack.c.b16 %v436, %v420
  %v613 = vpack.c.b16 %v437, %v421
  %v614 = vpack.c.b16 %v438, %v422
  %v615 = vpack.c.b16 %v439, %v423
  %v616 = vpack.c.b16 %v440, %v424
  %v617 = vpack.c.b16 %v441, %v425
  %v618 = vpack.c.b16 %v458, %v442
  %v619 = vpack.c.b16 %v459, %v443
  %v620 = vpack.c.b16 %v460, %v444
  %v621 = vpack.c.b16 %v461, %v445
  %v622 = vpack.c.b16 %v462, %v446
  %v623 = vpack.c.b16 %v463, %v447
  %v624 = vpack.c.b16 %v464, %v448
  %v625 = vpack.c.b16 %v465, %v449
  %v626 = vpack.c.b16 %v466, %v450
  %v627 = vpack.c.b16 %v467, %v451
  %v628 = vpack.c.b16 %v468, %v452
  %v629 = vpack.c.b16 %v469, %v453
  %v630 = vpack.c.b16 %v470, %v454
  %v631 = vpack.c.b16 %v471, %v455
  %v632 = vpack.c.b16 %v472, %v456
  %v633 = vpack.c.b16 %v473, %v457
  %v634 = vpack.c.b16 %v490, %v474
  %v635 = vpack.c.b16 %v491, %v475
  %v636 = vpack.c.b16 %v492, %v476
  %v637 = vpack.c.b16 %v493, %v477
  %v638 = vpack.c.b16 %v494, %v478
  %v639 = vpack.c.b16 %v495, %v479
  %v640 = vpack.c.b16 %v496, %v480
  %v641 = vpack.c.b16 %v497, %v481
  %v642 = vpack.c.b16 %v498, %v482
  %v643 = vpack.c.b16 %v499, %v483
  %v644 = vpack.c.b16 %v500, %v484
  %v645 = vpack.c.b16 %v501, %v485
  %v646 = vpack.c.b16 %v502, %v486
  %v647 = vpack.c.b16 %v503, %v487
  %v648 = vpack.c.b16 %v504, %v488
  %v649 = vpack.c.b16 %v505, %v489
  %v650 = vpack.c.b16 %v522, %v506
  %v651 = vpack.c.b16 %v523, %v507
  %v652 = vpack.c.b16 %v524, %v508
  %v653 = vpack.c.b16 %v525, %v509
  %v654 = vpack.c.b16 %v526, %v510
  %v655 = vpack.c.b16 %v527, %v511
  %v656 = vpack.c.b16 %v528, %v512
  %v657 = vpack.c.b16 %v529, %v513
  %v658 = vpack.c.b16 %v530, %v514
  %v659 = vpack.c.b16 %v531, %v515
  %v660 = vpack.c.b16 %v532, %v516
  %v661 = vpack.c.b16 %v533, %v517
  %v662 = vpack.c.b16 %v534, %v518
  %v663 = vpack.c.b16 %v535, %v519
  %v664 = vpack.c.b16 %v536, %v520
  %v665 = vpack.c.b16 %v537, %v521
  %794 = vmatprep.subr.bf16.mxu0 %v651
  %795 = vmatpush1.bf16.msra.mxu0 %v650
  %796 = vmatprep.subr.bf16.mxu0 %v635
  %797 = vmatpush1.bf16.msra.mxu0 %v634
  %798 = vmatprep.subr.bf16.mxu0 %v619
  %799 = vmatpush1.bf16.msra.mxu0 %v618
  %800 = vmatprep.subr.bf16.mxu0 %v603
  %801 = vmatpush1.bf16.msra.mxu0 %v602
  %802 = vmatprep.subr.bf16.mxu0 %v587
  %803 = vmatpush1.bf16.msra.mxu0 %v586
  %804 = vmatprep.subr.bf16.mxu0 %v571
  %805 = vmatpush1.bf16.msra.mxu0 %v570
  %806 = vmatprep.subr.bf16.mxu0 %v555
  %807 = vmatpush1.bf16.msra.mxu0 %v554
  %808 = vmatprep.subr.bf16.mxu0 %v539
  %809 = vmatpush1.bf16.msra.mxu0 %v538
  %810 = vmatprep.subr.bf16.mxu0 0
  %811 = vmatpush2.bf16.msra.mxu0 0
  %812 = vmatprep.subr.bf16.mxu0 0
  %813 = vmatpush2.bf16.msra.mxu0 0
  %814 = vmatprep.subr.bf16.mxu0 0
  %815 = vmatpush2.bf16.msra.mxu0 0
  %816 = vmatprep.subr.bf16.mxu0 0
  %817 = vmatpush2.bf16.msra.mxu0 0
  %818 = vmatprep.subr.bf16.mxu0 0
  %819 = vmatpush2.bf16.msra.mxu0 0
  %820 = vmatprep.subr.bf16.mxu0 0
  %821 = vmatpush2.bf16.msra.mxu0 0
  %822 = vmatprep.subr.bf16.mxu0 0
  %823 = vmatpush2.bf16.msra.mxu0 0
  %824 = vmatprep.subr.bf16.mxu0 0
  %825 = vmatpush2.bf16.msra.mxu0 0
  %826 = vmatprep.mubr.bf16.mxu0 0
  %827 = vmatmul.mubr.bf16.gmra.mxu0 %v152
  %v828 = vpop.f32.mrf.mxu0
  %v829 = vadd.f32 0.0, %v828
  %v830 = vpop.f32.mrf.mxu0
  %v831 = vadd.f32 0.0, %v830
  %v832 = vpop.f32.mrf.mxu0
  %v833 = vadd.f32 0.0, %v832
  %v834 = vpop.f32.mrf.mxu0
  %v835 = vadd.f32 0.0, %v834
  %836 = vdwg.mxu0
  %837 = vmatprep.subr.bf16.mxu0 %v653
  %838 = vmatpush1.bf16.msra.mxu0 %v652
  %839 = vmatprep.subr.bf16.mxu0 %v637
  %840 = vmatpush1.bf16.msra.mxu0 %v636
  %841 = vmatprep.subr.bf16.mxu0 %v621
  %842 = vmatpush1.bf16.msra.mxu0 %v620
  %843 = vmatprep.subr.bf16.mxu0 %v605
  %844 = vmatpush1.bf16.msra.mxu0 %v604
  %845 = vmatprep.subr.bf16.mxu0 %v589
  %846 = vmatpush1.bf16.msra.mxu0 %v588
  %847 = vmatprep.subr.bf16.mxu0 %v573
  %848 = vmatpush1.bf16.msra.mxu0 %v572
  %849 = vmatprep.subr.bf16.mxu0 %v557
  %850 = vmatpush1.bf16.msra.mxu0 %v556
  %851 = vmatprep.subr.bf16.mxu0 %v541
  %852 = vmatpush1.bf16.msra.mxu0 %v540
  %853 = vmatprep.subr.bf16.mxu0 0
  %854 = vmatpush2.bf16.msra.mxu0 0
  %855 = vmatprep.subr.bf16.mxu0 0
  %856 = vmatpush2.bf16.msra.mxu0 0
  %857 = vmatprep.subr.bf16.mxu0 0
  %858 = vmatpush2.bf16.msra.mxu0 0
  %859 = vmatprep.subr.bf16.mxu0 0
  %860 = vmatpush2.bf16.msra.mxu0 0
  %861 = vmatprep.subr.bf16.mxu0 0
  %862 = vmatpush2.bf16.msra.mxu0 0
  %863 = vmatprep.subr.bf16.mxu0 0
  %864 = vmatpush2.bf16.msra.mxu0 0
  %865 = vmatprep.subr.bf16.mxu0 0
  %866 = vmatpush2.bf16.msra.mxu0 0
  %867 = vmatprep.subr.bf16.mxu0 0
  %868 = vmatpush2.bf16.msra.mxu0 0
  %869 = vmatprep.mubr.bf16.mxu0 0
  %870 = vmatmul.mubr.bf16.gmra.mxu0 %v152
  %v871 = vpop.f32.mrf.mxu0
  %v872 = vadd.f32 0.0, %v871
  %v873 = vpop.f32.mrf.mxu0
  %v874 = vadd.f32 0.0, %v873
  %v875 = vpop.f32.mrf.mxu0
  %v876 = vadd.f32 0.0, %v875
  %v877 = vpop.f32.mrf.mxu0
  %v878 = vadd.f32 0.0, %v877
  %879 = vdwg.mxu0
  %880 = vmatprep.subr.bf16.mxu0 %v655
  %881 = vmatpush1.bf16.msra.mxu0 %v654
  %882 = vmatprep.subr.bf16.mxu0 %v639
  %883 = vmatpush1.bf16.msra.mxu0 %v638
  %884 = vmatprep.subr.bf16.mxu0 %v623
  %885 = vmatpush1.bf16.msra.mxu0 %v622
  %886 = vmatprep.subr.bf16.mxu0 %v607
  %887 = vmatpush1.bf16.msra.mxu0 %v606
  %888 = vmatprep.subr.bf16.mxu0 %v591
  %889 = vmatpush1.bf16.msra.mxu0 %v590
  %890 = vmatprep.subr.bf16.mxu0 %v575
  %891 = vmatpush1.bf16.msra.mxu0 %v574
  %892 = vmatprep.subr.bf16.mxu0 %v559
  %893 = vmatpush1.bf16.msra.mxu0 %v558
  %894 = vmatprep.subr.bf16.mxu0 %v543
  %895 = vmatpush1.bf16.msra.mxu0 %v542
  %896 = vmatprep.subr.bf16.mxu0 0
  %897 = vmatpush2.bf16.msra.mxu0 0
  %898 = vmatprep.subr.bf16.mxu0 0
  %899 = vmatpush2.bf16.msra.mxu0 0
  %900 = vmatprep.subr.bf16.mxu0 0
  %901 = vmatpush2.bf16.msra.mxu0 0
  %902 = vmatprep.subr.bf16.mxu0 0
  %903 = vmatpush2.bf16.msra.mxu0 0
  %904 = vmatprep.subr.bf16.mxu0 0
  %905 = vmatpush2.bf16.msra.mxu0 0
  %906 = vmatprep.subr.bf16.mxu0 0
  %907 = vmatpush2.bf16.msra.mxu0 0
  %908 = vmatprep.subr.bf16.mxu0 0
  %909 = vmatpush2.bf16.msra.mxu0 0
  %910 = vmatprep.subr.bf16.mxu0 0
  %911 = vmatpush2.bf16.msra.mxu0 0
  %912 = vmatprep.mubr.bf16.mxu0 0
  %913 = vmatmul.mubr.bf16.gmra.mxu0 %v152
  %v914 = vpop.f32.mrf.mxu0
  %v915 = vadd.f32 0.0, %v914
  %v916 = vpop.f32.mrf.mxu0
  %v917 = vadd.f32 0.0, %v916
  %v918 = vpop.f32.mrf.mxu0
  %v919 = vadd.f32 0.0, %v918
  %v920 = vpop.f32.mrf.mxu0
  %v921 = vadd.f32 0.0, %v920
  %922 = vdwg.mxu0
  %923 = vmatprep.subr.bf16.mxu0 %v657
  %924 = vmatpush1.bf16.msra.mxu0 %v656
  %925 = vmatprep.subr.bf16.mxu0 %v641
  %926 = vmatpush1.bf16.msra.mxu0 %v640
  %927 = vmatprep.subr.bf16.mxu0 %v625
  %928 = vmatpush1.bf16.msra.mxu0 %v624
  %929 = vmatprep.subr.bf16.mxu0 %v609
  %930 = vmatpush1.bf16.msra.mxu0 %v608
  %931 = vmatprep.subr.bf16.mxu0 %v593
  %932 = vmatpush1.bf16.msra.mxu0 %v592
  %933 = vmatprep.subr.bf16.mxu0 %v577
  %934 = vmatpush1.bf16.msra.mxu0 %v576
  %935 = vmatprep.subr.bf16.mxu0 %v561
  %936 = vmatpush1.bf16.msra.mxu0 %v560
  %937 = vmatprep.subr.bf16.mxu0 %v545
  %938 = vmatpush1.bf16.msra.mxu0 %v544
  %939 = vmatprep.subr.bf16.mxu0 0
  %940 = vmatpush2.bf16.msra.mxu0 0
  %941 = vmatprep.subr.bf16.mxu0 0
  %942 = vmatpush2.bf16.msra.mxu0 0
  %943 = vmatprep.subr.bf16.mxu0 0
  %944 = vmatpush2.bf16.msra.mxu0 0
  %945 = vmatprep.subr.bf16.mxu0 0
  %946 = vmatpush2.bf16.msra.mxu0 0
  %947 = vmatprep.subr.bf16.mxu0 0
  %948 = vmatpush2.bf16.msra.mxu0 0
  %949 = vmatprep.subr.bf16.mxu0 0
  %950 = vmatpush2.bf16.msra.mxu0 0
  %951 = vmatprep.subr.bf16.mxu0 0
  %952 = vmatpush2.bf16.msra.mxu0 0
  %953 = vmatprep.subr.bf16.mxu0 0
  %954 = vmatpush2.bf16.msra.mxu0 0
  %955 = vmatprep.mubr.bf16.mxu0 0
  %956 = vmatmul.mubr.bf16.gmra.mxu0 %v152
  %v957 = vpop.f32.mrf.mxu0
  %v958 = vadd.f32 0.0, %v957
  %v959 = vpop.f32.mrf.mxu0
  %v960 = vadd.f32 0.0, %v959
  %v961 = vpop.f32.mrf.mxu0
  %v962 = vadd.f32 0.0, %v961
  %v963 = vpop.f32.mrf.mxu0
  %v964 = vadd.f32 0.0, %v963
  %965 = vdwg.mxu0
  %966 = vmatprep.subr.bf16.mxu0 %v659
  %967 = vmatpush1.bf16.msra.mxu0 %v658
  %968 = vmatprep.subr.bf16.mxu0 %v643
  %969 = vmatpush1.bf16.msra.mxu0 %v642
  %970 = vmatprep.subr.bf16.mxu0 %v627
  %971 = vmatpush1.bf16.msra.mxu0 %v626
  %972 = vmatprep.subr.bf16.mxu0 %v611
  %973 = vmatpush1.bf16.msra.mxu0 %v610
  %974 = vmatprep.subr.bf16.mxu0 %v595
  %975 = vmatpush1.bf16.msra.mxu0 %v594
  %976 = vmatprep.subr.bf16.mxu0 %v579
  %977 = vmatpush1.bf16.msra.mxu0 %v578
  %978 = vmatprep.subr.bf16.mxu0 %v563
  %979 = vmatpush1.bf16.msra.mxu0 %v562
  %980 = vmatprep.subr.bf16.mxu0 %v547
  %981 = vmatpush1.bf16.msra.mxu0 %v546
  %982 = vmatprep.subr.bf16.mxu0 0
  %983 = vmatpush2.bf16.msra.mxu0 0
  %984 = vmatprep.subr.bf16.mxu0 0
  %985 = vmatpush2.bf16.msra.mxu0 0
  %986 = vmatprep.subr.bf16.mxu0 0
  %987 = vmatpush2.bf16.msra.mxu0 0
  %988 = vmatprep.subr.bf16.mxu0 0
  %989 = vmatpush2.bf16.msra.mxu0 0
  %990 = vmatprep.subr.bf16.mxu0 0
  %991 = vmatpush2.bf16.msra.mxu0 0
  %992 = vmatprep.subr.bf16.mxu0 0
  %993 = vmatpush2.bf16.msra.mxu0 0
  %994 = vmatprep.subr.bf16.mxu0 0
  %995 = vmatpush2.bf16.msra.mxu0 0
  %996 = vmatprep.subr.bf16.mxu0 0
  %997 = vmatpush2.bf16.msra.mxu0 0
  %998 = vmatprep.mubr.bf16.mxu0 0
  %999 = vmatmul.mubr.bf16.gmra.mxu0 %v152
  %v1000 = vpop.f32.mrf.mxu0
  %v1001 = vadd.f32 0.0, %v1000
  %v1002 = vpop.f32.mrf.mxu0
  %v1003 = vadd.f32 0.0, %v1002
  %v1004 = vpop.f32.mrf.mxu0
  %v1005 = vadd.f32 0.0, %v1004
  %v1006 = vpop.f32.mrf.mxu0
  %v1007 = vadd.f32 0.0, %v1006
  %1008 = vdwg.mxu0
  %1009 = vmatprep.subr.bf16.mxu0 %v661
  %1010 = vmatpush1.bf16.msra.mxu0 %v660
  %1011 = vmatprep.subr.bf16.mxu0 %v645
  %1012 = vmatpush1.bf16.msra.mxu0 %v644
  %1013 = vmatprep.subr.bf16.mxu0 %v629
  %1014 = vmatpush1.bf16.msra.mxu0 %v628
  %1015 = vmatprep.subr.bf16.mxu0 %v613
  %1016 = vmatpush1.bf16.msra.mxu0 %v612
  %1017 = vmatprep.subr.bf16.mxu0 %v597
  %1018 = vmatpush1.bf16.msra.mxu0 %v596
  %1019 = vmatprep.subr.bf16.mxu0 %v581
  %1020 = vmatpush1.bf16.msra.mxu0 %v580
  %1021 = vmatprep.subr.bf16.mxu0 %v565
  %1022 = vmatpush1.bf16.msra.mxu0 %v564
  %1023 = vmatprep.subr.bf16.mxu0 %v549
  %1024 = vmatpush1.bf16.msra.mxu0 %v548
  %1025 = vmatprep.subr.bf16.mxu0 0
  %1026 = vmatpush2.bf16.msra.mxu0 0
  %1027 = vmatprep.subr.bf16.mxu0 0
  %1028 = vmatpush2.bf16.msra.mxu0 0
  %1029 = vmatprep.subr.bf16.mxu0 0
  %1030 = vmatpush2.bf16.msra.mxu0 0
  %1031 = vmatprep.subr.bf16.mxu0 0
  %1032 = vmatpush2.bf16.msra.mxu0 0
  %1033 = vmatprep.subr.bf16.mxu0 0
  %1034 = vmatpush2.bf16.msra.mxu0 0
  %1035 = vmatprep.subr.bf16.mxu0 0
  %1036 = vmatpush2.bf16.msra.mxu0 0
  %1037 = vmatprep.subr.bf16.mxu0 0
  %1038 = vmatpush2.bf16.msra.mxu0 0
  %1039 = vmatprep.subr.bf16.mxu0 0
  %1040 = vmatpush2.bf16.msra.mxu0 0
  %1041 = vmatprep.mubr.bf16.mxu0 0
  %1042 = vmatmul.mubr.bf16.gmra.mxu0 %v152
  %v1043 = vpop.f32.mrf.mxu0
  %v1044 = vadd.f32 0.0, %v1043
  %v1045 = vpop.f32.mrf.mxu0
  %v1046 = vadd.f32 0.0, %v1045
  %v1047 = vpop.f32.mrf.mxu0
  %v1048 = vadd.f32 0.0, %v1047
  %v1049 = vpop.f32.mrf.mxu0
  %v1050 = vadd.f32 0.0, %v1049
  %1051 = vdwg.mxu0
  %1052 = vmatprep.subr.bf16.mxu0 %v663
  %1053 = vmatpush1.bf16.msra.mxu0 %v662
  %1054 = vmatprep.subr.bf16.mxu0 %v647
  %1055 = vmatpush1.bf16.msra.mxu0 %v646
  %1056 = vmatprep.subr.bf16.mxu0 %v631
  %1057 = vmatpush1.bf16.msra.mxu0 %v630
  %1058 = vmatprep.subr.bf16.mxu0 %v615
  %1059 = vmatpush1.bf16.msra.mxu0 %v614
  %1060 = vmatprep.subr.bf16.mxu0 %v599
  %1061 = vmatpush1.bf16.msra.mxu0 %v598
  %1062 = vmatprep.subr.bf16.mxu0 %v583
  %1063 = vmatpush1.bf16.msra.mxu0 %v582
  %1064 = vmatprep.subr.bf16.mxu0 %v567
  %1065 = vmatpush1.bf16.msra.mxu0 %v566
  %1066 = vmatprep.subr.bf16.mxu0 %v551
  %1067 = vmatpush1.bf16.msra.mxu0 %v550
  %1068 = vmatprep.subr.bf16.mxu0 0
  %1069 = vmatpush2.bf16.msra.mxu0 0
  %1070 = vmatprep.subr.bf16.mxu0 0
  %1071 = vmatpush2.bf16.msra.mxu0 0
  %1072 = vmatprep.subr.bf16.mxu0 0
  %1073 = vmatpush2.bf16.msra.mxu0 0
  %1074 = vmatprep.subr.bf16.mxu0 0
  %1075 = vmatpush2.bf16.msra.mxu0 0
  %1076 = vmatprep.subr.bf16.mxu0 0
  %1077 = vmatpush2.bf16.msra.mxu0 0
  %1078 = vmatprep.subr.bf16.mxu0 0
  %1079 = vmatpush2.bf16.msra.mxu0 0
  %1080 = vmatprep.subr.bf16.mxu0 0
  %1081 = vmatpush2.bf16.msra.mxu0 0
  %1082 = vmatprep.subr.bf16.mxu0 0
  %1083 = vmatpush2.bf16.msra.mxu0 0
  %1084 = vmatprep.mubr.bf16.mxu0 0
  %1085 = vmatmul.mubr.bf16.gmra.mxu0 %v152
  %v1086 = vpop.f32.mrf.mxu0
  %v1087 = vadd.f32 0.0, %v1086
  %v1088 = vpop.f32.mrf.mxu0
  %v1089 = vadd.f32 0.0, %v1088
  %v1090 = vpop.f32.mrf.mxu0
  %v1091 = vadd.f32 0.0, %v1090
  %v1092 = vpop.f32.mrf.mxu0
  %v1093 = vadd.f32 0.0, %v1092
  %1094 = vdwg.mxu0
  %1095 = vmatprep.subr.bf16.mxu0 %v665
  %1096 = vmatpush1.bf16.msra.mxu0 %v664
  %1097 = vmatprep.subr.bf16.mxu0 %v649
  %1098 = vmatpush1.bf16.msra.mxu0 %v648
  %1099 = vmatprep.subr.bf16.mxu0 %v633
  %1100 = vmatpush1.bf16.msra.mxu0 %v632
  %1101 = vmatprep.subr.bf16.mxu0 %v617
  %1102 = vmatpush1.bf16.msra.mxu0 %v616
  %1103 = vmatprep.subr.bf16.mxu0 %v601
  %1104 = vmatpush1.bf16.msra.mxu0 %v600
  %1105 = vmatprep.subr.bf16.mxu0 %v585
  %1106 = vmatpush1.bf16.msra.mxu0 %v584
  %1107 = vmatprep.subr.bf16.mxu0 %v569
  %1108 = vmatpush1.bf16.msra.mxu0 %v568
  %1109 = vmatprep.subr.bf16.mxu0 %v553
  %1110 = vmatpush1.bf16.msra.mxu0 %v552
  %1111 = vmatprep.subr.bf16.mxu0 0
  %1112 = vmatpush2.bf16.msra.mxu0 0
  %1113 = vmatprep.subr.bf16.mxu0 0
  %1114 = vmatpush2.bf16.msra.mxu0 0
  %1115 = vmatprep.subr.bf16.mxu0 0
  %1116 = vmatpush2.bf16.msra.mxu0 0
  %1117 = vmatprep.subr.bf16.mxu0 0
  %1118 = vmatpush2.bf16.msra.mxu0 0
  %1119 = vmatprep.subr.bf16.mxu0 0
  %1120 = vmatpush2.bf16.msra.mxu0 0
  %1121 = vmatprep.subr.bf16.mxu0 0
  %1122 = vmatpush2.bf16.msra.mxu0 0
  %1123 = vmatprep.subr.bf16.mxu0 0
  %1124 = vmatpush2.bf16.msra.mxu0 0
  %1125 = vmatprep.subr.bf16.mxu0 0
  %1126 = vmatpush2.bf16.msra.mxu0 0
  %1127 = vmatprep.mubr.bf16.mxu0 0
  %1128 = vmatmul.mubr.bf16.gmra.mxu0 %v152
  %v1129 = vpop.f32.mrf.mxu0
  %v1130 = vadd.f32 0.0, %v1129
  %v1131 = vpop.f32.mrf.mxu0
  %v1132 = vadd.f32 0.0, %v1131
  %v1133 = vpop.f32.mrf.mxu0
  %v1134 = vadd.f32 0.0, %v1133
  %v1135 = vpop.f32.mrf.mxu0
  %v1136 = vadd.f32 0.0, %v1135
  %1137 = vdwg.mxu0
  %v1138 = vadd.f32 %v829, %v831
  %v1139 = vadd.f32 %v1138, %v872
  %v1140 = vadd.f32 %v1139, %v874
  %v1141 = vadd.f32 %v1140, %v915
  %v1142 = vadd.f32 %v1141, %v917
  %v1143 = vadd.f32 %v1142, %v958
  %v1144 = vadd.f32 %v1143, %v960
  %v1145 = vadd.f32 %v1144, %v1001
  %v1146 = vadd.f32 %v1145, %v1003
  %v1147 = vadd.f32 %v1146, %v1044
  %v1148 = vadd.f32 %v1147, %v1046
  %v1149 = vadd.f32 %v1148, %v1087
  %v1150 = vadd.f32 %v1149, %v1089
  %v1151 = vadd.f32 %v1150, %v1130
  %v1152 = vadd.f32 %v1151, %v1132
  %1153 = vadd.xlane.f32.xlu0 %v1152
  %v1154 = vpop.xlane.xlu0 %1153
  %v1155 = vadd.f32 %v833, %v835
  %v1156 = vadd.f32 %v1155, %v876
  %v1157 = vadd.f32 %v1156, %v878
  %v1158 = vadd.f32 %v1157, %v919
  %v1159 = vadd.f32 %v1158, %v921
  %v1160 = vadd.f32 %v1159, %v962
  %v1161 = vadd.f32 %v1160, %v964
  %v1162 = vadd.f32 %v1161, %v1005
  %v1163 = vadd.f32 %v1162, %v1007
  %v1164 = vadd.f32 %v1163, %v1048
  %v1165 = vadd.f32 %v1164, %v1050
  %v1166 = vadd.f32 %v1165, %v1091
  %v1167 = vadd.f32 %v1166, %v1093
  %v1168 = vadd.f32 %v1167, %v1134
  %v1169 = vadd.f32 %v1168, %v1136
  %1170 = vadd.xlane.f32.xlu0 %v1169
  %v1171 = vpop.xlane.xlu0 %1170
  %v1172 = vrcp.pop 2048.0
  %v1173 = vmul.f32 %v1154, %v1172
  %v1174 = vmul.f32 %v1171, %v1172
  %v1175 = vsub.f32 %v829, %v1173
  %v1176 = vsub.f32 %v831, %v1173
  %v1177 = vsub.f32 %v872, %v1173
  %v1178 = vsub.f32 %v874, %v1173
  %v1179 = vsub.f32 %v915, %v1173
  %v1180 = vsub.f32 %v917, %v1173
  %v1181 = vsub.f32 %v958, %v1173
  %v1182 = vsub.f32 %v960, %v1173
  %v1183 = vsub.f32 %v1001, %v1173
  %v1184 = vsub.f32 %v1003, %v1173
  %v1185 = vsub.f32 %v1044, %v1173
  %v1186 = vsub.f32 %v1046, %v1173
  %v1187 = vsub.f32 %v1087, %v1173
  %v1188 = vsub.f32 %v1089, %v1173
  %v1189 = vsub.f32 %v1130, %v1173
  %v1190 = vsub.f32 %v1132, %v1173
  %v1191 = vsub.f32 %v833, %v1174
  %v1192 = vsub.f32 %v835, %v1174
  %v1193 = vsub.f32 %v876, %v1174
  %v1194 = vsub.f32 %v878, %v1174
  %v1195 = vsub.f32 %v919, %v1174
  %v1196 = vsub.f32 %v921, %v1174
  %v1197 = vsub.f32 %v962, %v1174
  %v1198 = vsub.f32 %v964, %v1174
  %v1199 = vsub.f32 %v1005, %v1174
  %v1200 = vsub.f32 %v1007, %v1174
  %v1201 = vsub.f32 %v1048, %v1174
  %v1202 = vsub.f32 %v1050, %v1174
  %v1203 = vsub.f32 %v1091, %v1174
  %v1204 = vsub.f32 %v1093, %v1174
  %v1205 = vsub.f32 %v1134, %v1174
  %v1206 = vsub.f32 %v1136, %v1174
  %v1207 = vmul.f32 %v1175, %v1175
  %v1208 = vmul.f32 %v1176, %v1176
  %v1209 = vmul.f32 %v1177, %v1177
  %v1210 = vmul.f32 %v1178, %v1178
  %v1211 = vmul.f32 %v1179, %v1179
  %v1212 = vmul.f32 %v1180, %v1180
  %v1213 = vmul.f32 %v1181, %v1181
  %v1214 = vmul.f32 %v1182, %v1182
  %v1215 = vmul.f32 %v1183, %v1183
  %v1216 = vmul.f32 %v1184, %v1184
  %v1217 = vmul.f32 %v1185, %v1185
  %v1218 = vmul.f32 %v1186, %v1186
  %v1219 = vmul.f32 %v1187, %v1187
  %v1220 = vmul.f32 %v1188, %v1188
  %v1221 = vmul.f32 %v1189, %v1189
  %v1222 = vmul.f32 %v1190, %v1190
  %v1223 = vmul.f32 %v1191, %v1191
  %v1224 = vmul.f32 %v1192, %v1192
  %v1225 = vmul.f32 %v1193, %v1193
  %v1226 = vmul.f32 %v1194, %v1194
  %v1227 = vmul.f32 %v1195, %v1195
  %v1228 = vmul.f32 %v1196, %v1196
  %v1229 = vmul.f32 %v1197, %v1197
  %v1230 = vmul.f32 %v1198, %v1198
  %v1231 = vmul.f32 %v1199, %v1199
  %v1232 = vmul.f32 %v1200, %v1200
  %v1233 = vmul.f32 %v1201, %v1201
  %v1234 = vmul.f32 %v1202, %v1202
  %v1235 = vmul.f32 %v1203, %v1203
  %v1236 = vmul.f32 %v1204, %v1204
  %v1237 = vmul.f32 %v1205, %v1205
  %v1238 = vmul.f32 %v1206, %v1206
  %v1239 = vadd.f32 %v1207, %v1208
  %v1240 = vadd.f32 %v1239, %v1209
  %v1241 = vadd.f32 %v1240, %v1210
  %v1242 = vadd.f32 %v1241, %v1211
  %v1243 = vadd.f32 %v1242, %v1212
  %v1244 = vadd.f32 %v1243, %v1213
  %v1245 = vadd.f32 %v1244, %v1214
  %v1246 = vadd.f32 %v1245, %v1215
  %v1247 = vadd.f32 %v1246, %v1216
  %v1248 = vadd.f32 %v1247, %v1217
  %v1249 = vadd.f32 %v1248, %v1218
  %v1250 = vadd.f32 %v1249, %v1219
  %v1251 = vadd.f32 %v1250, %v1220
  %v1252 = vadd.f32 %v1251, %v1221
  %v1253 = vadd.f32 %v1252, %v1222
  %1254 = vadd.xlane.f32.xlu0 %v1253
  %v1255 = vpop.xlane.xlu0 %1254
  %v1256 = vadd.f32 %v1223, %v1224
  %v1257 = vadd.f32 %v1256, %v1225
  %v1258 = vadd.f32 %v1257, %v1226
  %v1259 = vadd.f32 %v1258, %v1227
  %v1260 = vadd.f32 %v1259, %v1228
  %v1261 = vadd.f32 %v1260, %v1229
  %v1262 = vadd.f32 %v1261, %v1230
  %v1263 = vadd.f32 %v1262, %v1231
  %v1264 = vadd.f32 %v1263, %v1232
  %v1265 = vadd.f32 %v1264, %v1233
  %v1266 = vadd.f32 %v1265, %v1234
  %v1267 = vadd.f32 %v1266, %v1235
  %v1268 = vadd.f32 %v1267, %v1236
  %v1269 = vadd.f32 %v1268, %v1237
  %v1270 = vadd.f32 %v1269, %v1238
  %1271 = vadd.xlane.f32.xlu0 %v1270
  %v1272 = vpop.xlane.xlu0 %1271
  %v1273 = vmul.f32 %v1255, %v1172
  %v1274 = vmul.f32 %v1272, %v1172
  %v1275 = vadd.f32 %v1273, 1e-05
  %v1276 = vadd.f32 %v1274, 1e-05
  %v1277 = vrsqrt.pop %v1275
  %v1278 = vrsqrt.pop %v1276
  %v1279 = vmul.f32 %v1175, %v1277
  %v1280 = vmul.f32 %v1176, %v1277
  %v1281 = vmul.f32 %v1177, %v1277
  %v1282 = vmul.f32 %v1178, %v1277
  %v1283 = vmul.f32 %v1179, %v1277
  %v1284 = vmul.f32 %v1180, %v1277
  %v1285 = vmul.f32 %v1181, %v1277
  %v1286 = vmul.f32 %v1182, %v1277
  %v1287 = vmul.f32 %v1183, %v1277
  %v1288 = vmul.f32 %v1184, %v1277
  %v1289 = vmul.f32 %v1185, %v1277
  %v1290 = vmul.f32 %v1186, %v1277
  %v1291 = vmul.f32 %v1187, %v1277
  %v1292 = vmul.f32 %v1188, %v1277
  %v1293 = vmul.f32 %v1189, %v1277
  %v1294 = vmul.f32 %v1190, %v1277
  %v1295 = vmul.f32 %v1191, %v1278
  %v1296 = vmul.f32 %v1192, %v1278
  %v1297 = vmul.f32 %v1193, %v1278
  %v1298 = vmul.f32 %v1194, %v1278
  %v1299 = vmul.f32 %v1195, %v1278
  %v1300 = vmul.f32 %v1196, %v1278
  %v1301 = vmul.f32 %v1197, %v1278
  %v1302 = vmul.f32 %v1198, %v1278
  %v1303 = vmul.f32 %v1199, %v1278
  %v1304 = vmul.f32 %v1200, %v1278
  %v1305 = vmul.f32 %v1201, %v1278
  %v1306 = vmul.f32 %v1202, %v1278
  %v1307 = vmul.f32 %v1203, %v1278
  %v1308 = vmul.f32 %v1204, %v1278
  %v1309 = vmul.f32 %v1205, %v1278
  %v1310 = vmul.f32 %v1206, %v1278
  %v1311 = vld [vmem:[%s2] sm:$0xff]
  %v1312 = vld [vmem:[%s2 + $0x8] sm:$0xff]
  %1314 = vset.pattern.permute.xlu0 0
  %1315 = vperm.xlu0 %1314, %v1311
  %v1316 = vpop.permute.xlu0 %1315
  %1319 = vset.pattern.permute.xlu0 0
  %1320 = vperm.xlu0 %1319, %v1312
  %v1321 = vpop.permute.xlu0 %1320
  %v1323 = vmul.f32 %v1279, %v1316
  %v1324 = vmul.f32 %v1280, %v1316
  %v1325 = vmul.f32 %v1281, %v1316
  %v1326 = vmul.f32 %v1282, %v1316
  %v1327 = vmul.f32 %v1283, %v1316
  %v1328 = vmul.f32 %v1284, %v1316
  %v1329 = vmul.f32 %v1285, %v1316
  %v1330 = vmul.f32 %v1286, %v1316
  %v1331 = vmul.f32 %v1287, %v1316
  %v1332 = vmul.f32 %v1288, %v1316
  %v1333 = vmul.f32 %v1289, %v1316
  %v1334 = vmul.f32 %v1290, %v1316
  %v1335 = vmul.f32 %v1291, %v1316
  %v1336 = vmul.f32 %v1292, %v1316
  %v1337 = vmul.f32 %v1293, %v1316
  %v1338 = vmul.f32 %v1294, %v1316
  %v1339 = vmul.f32 %v1295, %v1321
  %v1340 = vmul.f32 %v1296, %v1321
  %v1341 = vmul.f32 %v1297, %v1321
  %v1342 = vmul.f32 %v1298, %v1321
  %v1343 = vmul.f32 %v1299, %v1321
  %v1344 = vmul.f32 %v1300, %v1321
  %v1345 = vmul.f32 %v1301, %v1321
  %v1346 = vmul.f32 %v1302, %v1321
  %v1347 = vmul.f32 %v1303, %v1321
  %v1348 = vmul.f32 %v1304, %v1321
  %v1349 = vmul.f32 %v1305, %v1321
  %v1350 = vmul.f32 %v1306, %v1321
  %v1351 = vmul.f32 %v1307, %v1321
  %v1352 = vmul.f32 %v1308, %v1321
  %v1353 = vmul.f32 %v1309, %v1321
  %v1354 = vmul.f32 %v1310, %v1321
  %v1355 = vld [vmem:[%s3] sm:$0xff]
  %v1356 = vld [vmem:[%s3 + $0x8] sm:$0xff]
  %1358 = vset.pattern.permute.xlu0 0
  %1359 = vperm.xlu0 %1358, %v1355
  %v1360 = vpop.permute.xlu0 %1359
  %1363 = vset.pattern.permute.xlu0 0
  %1364 = vperm.xlu0 %1363, %v1356
  %v1365 = vpop.permute.xlu0 %1364
  %v1367 = vadd.f32 %v1323, %v1360
  %v1368 = vadd.f32 %v1324, %v1360
  %v1369 = vadd.f32 %v1325, %v1360
  %v1370 = vadd.f32 %v1326, %v1360
  %v1371 = vadd.f32 %v1327, %v1360
  %v1372 = vadd.f32 %v1328, %v1360
  %v1373 = vadd.f32 %v1329, %v1360
  %v1374 = vadd.f32 %v1330, %v1360
  %v1375 = vadd.f32 %v1331, %v1360
  %v1376 = vadd.f32 %v1332, %v1360
  %v1377 = vadd.f32 %v1333, %v1360
  %v1378 = vadd.f32 %v1334, %v1360
  %v1379 = vadd.f32 %v1335, %v1360
  %v1380 = vadd.f32 %v1336, %v1360
  %v1381 = vadd.f32 %v1337, %v1360
  %v1382 = vadd.f32 %v1338, %v1360
  %v1383 = vadd.f32 %v1339, %v1365
  %v1384 = vadd.f32 %v1340, %v1365
  %v1385 = vadd.f32 %v1341, %v1365
  %v1386 = vadd.f32 %v1342, %v1365
  %v1387 = vadd.f32 %v1343, %v1365
  %v1388 = vadd.f32 %v1344, %v1365
  %v1389 = vadd.f32 %v1345, %v1365
  %v1390 = vadd.f32 %v1346, %v1365
  %v1391 = vadd.f32 %v1347, %v1365
  %v1392 = vadd.f32 %v1348, %v1365
  %v1393 = vadd.f32 %v1349, %v1365
  %v1394 = vadd.f32 %v1350, %v1365
  %v1395 = vadd.f32 %v1351, %v1365
  %v1396 = vadd.f32 %v1352, %v1365
  %v1397 = vadd.f32 %v1353, %v1365
  %v1398 = vadd.f32 %v1354, %v1365
  %vm1399 = vcmp.ge.f32.partialorder %v1367, 0.0
  %vm1400 = vcmp.ge.f32.partialorder %v1368, 0.0
  %vm1401 = vcmp.ge.f32.partialorder %v1369, 0.0
  %vm1402 = vcmp.ge.f32.partialorder %v1370, 0.0
  %vm1403 = vcmp.ge.f32.partialorder %v1371, 0.0
  %vm1404 = vcmp.ge.f32.partialorder %v1372, 0.0
  %vm1405 = vcmp.ge.f32.partialorder %v1373, 0.0
  %vm1406 = vcmp.ge.f32.partialorder %v1374, 0.0
  %vm1407 = vcmp.ge.f32.partialorder %v1375, 0.0
  %vm1408 = vcmp.ge.f32.partialorder %v1376, 0.0
  %vm1409 = vcmp.ge.f32.partialorder %v1377, 0.0
  %vm1410 = vcmp.ge.f32.partialorder %v1378, 0.0
  %vm1411 = vcmp.ge.f32.partialorder %v1379, 0.0
  %vm1412 = vcmp.ge.f32.partialorder %v1380, 0.0
  %vm1413 = vcmp.ge.f32.partialorder %v1381, 0.0
  %vm1414 = vcmp.ge.f32.partialorder %v1382, 0.0
  %vm1415 = vcmp.ge.f32.partialorder %v1383, 0.0
  %vm1416 = vcmp.ge.f32.partialorder %v1384, 0.0
  %vm1417 = vcmp.ge.f32.partialorder %v1385, 0.0
  %vm1418 = vcmp.ge.f32.partialorder %v1386, 0.0
  %vm1419 = vcmp.ge.f32.partialorder %v1387, 0.0
  %vm1420 = vcmp.ge.f32.partialorder %v1388, 0.0
  %vm1421 = vcmp.ge.f32.partialorder %v1389, 0.0
  %vm1422 = vcmp.ge.f32.partialorder %v1390, 0.0
  %vm1423 = vcmp.ge.f32.partialorder %v1391, 0.0
  %vm1424 = vcmp.ge.f32.partialorder %v1392, 0.0
  %vm1425 = vcmp.ge.f32.partialorder %v1393, 0.0
  %vm1426 = vcmp.ge.f32.partialorder %v1394, 0.0
  %vm1427 = vcmp.ge.f32.partialorder %v1395, 0.0
  %vm1428 = vcmp.ge.f32.partialorder %v1396, 0.0
  %vm1429 = vcmp.ge.f32.partialorder %v1397, 0.0
  %vm1430 = vcmp.ge.f32.partialorder %v1398, 0.0
  %v1431 = vmul.f32 %v1367, 0.2
  %v1432 = vmul.f32 %v1368, 0.2
  %v1433 = vmul.f32 %v1369, 0.2
  %v1434 = vmul.f32 %v1370, 0.2
  %v1435 = vmul.f32 %v1371, 0.2
  %v1436 = vmul.f32 %v1372, 0.2
  %v1437 = vmul.f32 %v1373, 0.2
  %v1438 = vmul.f32 %v1374, 0.2
  %v1439 = vmul.f32 %v1375, 0.2
  %v1440 = vmul.f32 %v1376, 0.2
  %v1441 = vmul.f32 %v1377, 0.2
  %v1442 = vmul.f32 %v1378, 0.2
  %v1443 = vmul.f32 %v1379, 0.2
  %v1444 = vmul.f32 %v1380, 0.2
  %v1445 = vmul.f32 %v1381, 0.2
  %v1446 = vmul.f32 %v1382, 0.2
  %v1447 = vmul.f32 %v1383, 0.2
  %v1448 = vmul.f32 %v1384, 0.2
  %v1449 = vmul.f32 %v1385, 0.2
  %v1450 = vmul.f32 %v1386, 0.2
  %v1451 = vmul.f32 %v1387, 0.2
  %v1452 = vmul.f32 %v1388, 0.2
  %v1453 = vmul.f32 %v1389, 0.2
  %v1454 = vmul.f32 %v1390, 0.2
  %v1455 = vmul.f32 %v1391, 0.2
  %v1456 = vmul.f32 %v1392, 0.2
  %v1457 = vmul.f32 %v1393, 0.2
  %v1458 = vmul.f32 %v1394, 0.2
  %v1459 = vmul.f32 %v1395, 0.2
  %v1460 = vmul.f32 %v1396, 0.2
  %v1461 = vmul.f32 %v1397, 0.2
  %v1462 = vmul.f32 %v1398, 0.2
  %v1463 = vsel %vm1399, %v1367, %v1431
  %v1464 = vsel %vm1400, %v1368, %v1432
  %v1465 = vsel %vm1401, %v1369, %v1433
  %v1466 = vsel %vm1402, %v1370, %v1434
  %v1467 = vsel %vm1403, %v1371, %v1435
  %v1468 = vsel %vm1404, %v1372, %v1436
  %v1469 = vsel %vm1405, %v1373, %v1437
  %v1470 = vsel %vm1406, %v1374, %v1438
  %v1471 = vsel %vm1407, %v1375, %v1439
  %v1472 = vsel %vm1408, %v1376, %v1440
  %v1473 = vsel %vm1409, %v1377, %v1441
  %v1474 = vsel %vm1410, %v1378, %v1442
  %v1475 = vsel %vm1411, %v1379, %v1443
  %v1476 = vsel %vm1412, %v1380, %v1444
  %v1477 = vsel %vm1413, %v1381, %v1445
  %v1478 = vsel %vm1414, %v1382, %v1446
  %v1479 = vsel %vm1415, %v1383, %v1447
  %v1480 = vsel %vm1416, %v1384, %v1448
  %v1481 = vsel %vm1417, %v1385, %v1449
  %v1482 = vsel %vm1418, %v1386, %v1450
  %v1483 = vsel %vm1419, %v1387, %v1451
  %v1484 = vsel %vm1420, %v1388, %v1452
  %v1485 = vsel %vm1421, %v1389, %v1453
  %v1486 = vsel %vm1422, %v1390, %v1454
  %v1487 = vsel %vm1423, %v1391, %v1455
  %v1488 = vsel %vm1424, %v1392, %v1456
  %v1489 = vsel %vm1425, %v1393, %v1457
  %v1490 = vsel %vm1426, %v1394, %v1458
  %v1491 = vsel %vm1427, %v1395, %v1459
  %v1492 = vsel %vm1428, %v1396, %v1460
  %v1493 = vsel %vm1429, %v1397, %v1461
  %v1494 = vsel %vm1430, %v1398, %v1462
  %v1495 = vpack.c.bf16 %v1479, %v1463
  %v1496 = vpack.c.bf16 %v1480, %v1464
  %v1497 = vpack.c.bf16 %v1481, %v1465
  %v1498 = vpack.c.bf16 %v1482, %v1466
  %v1499 = vpack.c.bf16 %v1483, %v1467
  %v1500 = vpack.c.bf16 %v1484, %v1468
  %v1501 = vpack.c.bf16 %v1485, %v1469
  %v1502 = vpack.c.bf16 %v1486, %v1470
  %v1503 = vpack.c.bf16 %v1487, %v1471
  %v1504 = vpack.c.bf16 %v1488, %v1472
  %v1505 = vpack.c.bf16 %v1489, %v1473
  %v1506 = vpack.c.bf16 %v1490, %v1474
  %v1507 = vpack.c.bf16 %v1491, %v1475
  %v1508 = vpack.c.bf16 %v1492, %v1476
  %v1509 = vpack.c.bf16 %v1493, %v1477
  %v1510 = vpack.c.bf16 %v1494, %v1478
  %v1527 = vunpack.c.l.b16 %v1495
  %v1528 = vunpack.c.l.b16 %v1496
  %v1529 = vunpack.c.l.b16 %v1497
  %v1530 = vunpack.c.l.b16 %v1498
  %v1531 = vunpack.c.l.b16 %v1499
  %v1532 = vunpack.c.l.b16 %v1500
  %v1533 = vunpack.c.l.b16 %v1501
  %v1534 = vunpack.c.l.b16 %v1502
  %v1535 = vunpack.c.l.b16 %v1503
  %v1536 = vunpack.c.l.b16 %v1504
  %v1537 = vunpack.c.l.b16 %v1505
  %v1538 = vunpack.c.l.b16 %v1506
  %v1539 = vunpack.c.l.b16 %v1507
  %v1540 = vunpack.c.l.b16 %v1508
  %v1541 = vunpack.c.l.b16 %v1509
  %v1542 = vunpack.c.l.b16 %v1510
  %v1543 = vunpack.c.h.b16 %v1495
  %v1544 = vunpack.c.h.b16 %v1496
  %v1545 = vunpack.c.h.b16 %v1497
  %v1546 = vunpack.c.h.b16 %v1498
  %v1547 = vunpack.c.h.b16 %v1499
  %v1548 = vunpack.c.h.b16 %v1500
  %v1549 = vunpack.c.h.b16 %v1501
  %v1550 = vunpack.c.h.b16 %v1502
  %v1551 = vunpack.c.h.b16 %v1503
  %v1552 = vunpack.c.h.b16 %v1504
  %v1553 = vunpack.c.h.b16 %v1505
  %v1554 = vunpack.c.h.b16 %v1506
  %v1555 = vunpack.c.h.b16 %v1507
  %v1556 = vunpack.c.h.b16 %v1508
  %v1557 = vunpack.c.h.b16 %v1509
  %v1558 = vunpack.c.h.b16 %v1510
  %v1559 = vpack.c.b16 %v1528, %v1527
  %v1560 = vpack.c.b16 %v1530, %v1529
  %v1561 = vpack.c.b16 %v1532, %v1531
  %v1562 = vpack.c.b16 %v1534, %v1533
  %v1563 = vpack.c.b16 %v1536, %v1535
  %v1564 = vpack.c.b16 %v1538, %v1537
  %v1565 = vpack.c.b16 %v1540, %v1539
  %v1566 = vpack.c.b16 %v1542, %v1541
  %v1567 = vpack.c.b16 %v1544, %v1543
  %v1568 = vpack.c.b16 %v1546, %v1545
  %v1569 = vpack.c.b16 %v1548, %v1547
  %v1570 = vpack.c.b16 %v1550, %v1549
  %v1571 = vpack.c.b16 %v1552, %v1551
  %v1572 = vpack.c.b16 %v1554, %v1553
  %v1573 = vpack.c.b16 %v1556, %v1555
  %v1574 = vpack.c.b16 %v1558, %v1557
  %1591 = vst [vmem:[%s4] sm:$0xff] %v1559
  %1592 = vst [vmem:[%s4 + $0x8] sm:$0xff] %v1560
  %1593 = vst [vmem:[%s4 + $0x10] sm:$0xff] %v1561
  %1594 = vst [vmem:[%s4 + $0x18] sm:$0xff] %v1562
  %1595 = vst [vmem:[%s4 + $0x20] sm:$0xff] %v1563
  %1596 = vst [vmem:[%s4 + $0x28] sm:$0xff] %v1564
  %1597 = vst [vmem:[%s4 + $0x30] sm:$0xff] %v1565
  %1598 = vst [vmem:[%s4 + $0x38] sm:$0xff] %v1566
  %1599 = vst [vmem:[%s4 + $0x40] sm:$0xff] %v1567
  %1600 = vst [vmem:[%s4 + $0x48] sm:$0xff] %v1568
  %1601 = vst [vmem:[%s4 + $0x50] sm:$0xff] %v1569
  %1602 = vst [vmem:[%s4 + $0x58] sm:$0xff] %v1570
  %1603 = vst [vmem:[%s4 + $0x60] sm:$0xff] %v1571
  %1604 = vst [vmem:[%s4 + $0x68] sm:$0xff] %v1572
  %1605 = vst [vmem:[%s4 + $0x70] sm:$0xff] %v1573
  %1606 = vst [vmem:[%s4 + $0x78] sm:$0xff] %v1574
  // Predicated region
  $region18: #{discriminator_forward.7} parent=0 // pred_check
    _
  $region19: #{discriminator_forward.7} parent=0 // pred_check_branch
    %1608 = sbr.rel (0) target = $region21
  $region20: #{discriminator_forward.7} parent=0 // pred_region
    _
  $region21: #{discriminator_forward.7} parent=0 // pred_fallthru
    _
  // Predicated region
  $region22: #{discriminator_forward.7} parent=0 // pred_check
    _
  $region23: #{discriminator_forward.7} parent=0 // pred_check_branch
    %1610 = sbr.rel (0) target = $region25
  $region24: #{discriminator_forward.7} parent=0 // pred_region
    _
  $region25: #{discriminator_forward.7} parent=0 // pred_fallthru
    _

// kernel: discriminator_forward.8
$region0: #{discriminator_forward.8}
  #allocation0 [shape = 'u32[]', space=smem, size = 0x4, offset = 0x4, fixed_abs, tag = 'smem constant byte address 0x4 - core index']
  #allocation1 [shape = 'u32[144,128]{1,0:T(1,128)}', space=vmem, size = 0x12000, scoped, tag = 'internal scratch']
  %s0 = inlined_call_operand.vmem [shape: bf16[32,256], index: 0, kind: input, shape index: {}]
  %s1 = inlined_call_operand.vmem [shape: bf16[256,512], index: 1, kind: input, shape index: {}]
  %s2 = inlined_call_operand.vmem [shape: f32[32,1], index: 2, kind: input, shape index: {}]
  %s3 = inlined_call_operand.vmem [shape: f32[32,1], index: 3, kind: input, shape index: {}]
  %s4 = inlined_call_operand.vmem [shape: bf16[32,512], index: 4, kind: output, shape index: {}]
  %s5 = sld [smem:[#allocation0]]
  $region26: #{discriminator_forward.8} parent=0
    _
  %s7 = ssub.s32 1, %s5
  %s8 = scalar_select 0, %s7, %s5
  // Predicated region
  $region2: #{discriminator_forward.8} parent=0 // pred_check
    _
  $region3: #{discriminator_forward.8} parent=0 // pred_check_branch
    %10 = sbr.rel (0) target = $region5
  $region4: #{discriminator_forward.8} parent=0 // pred_region
    _
  $region5: #{discriminator_forward.8} parent=0 // pred_fallthru
    _
  // Predicated region
  $region6: #{discriminator_forward.8} parent=0 // pred_check
    _
  $region7: #{discriminator_forward.8} parent=0 // pred_check_branch
    %12 = sbr.rel (0) target = $region9
  $region8: #{discriminator_forward.8} parent=0 // pred_region
    _
  $region9: #{discriminator_forward.8} parent=0 // pred_fallthru
    _
  // Predicated region
  $region10: #{discriminator_forward.8} parent=0 // pred_check
    _
  $region11: #{discriminator_forward.8} parent=0 // pred_check_branch
    %14 = sbr.rel (0) target = $region13
  $region12: #{discriminator_forward.8} parent=0 // pred_region
    _
  $region13: #{discriminator_forward.8} parent=0 // pred_fallthru
    _
  // Predicated region
  $region14: #{discriminator_forward.8} parent=0 // pred_check
    _
  $region15: #{discriminator_forward.8} parent=0 // pred_check_branch
    %16 = sbr.rel (0) target = $region17
  $region16: #{discriminator_forward.8} parent=0 // pred_region
    _
  $region17: #{discriminator_forward.8} parent=0 // pred_fallthru
    _
  %v17 = vld [vmem:[%s0] sm:$0xff]
  %v18 = vld [vmem:[%s0 + $0x8] sm:$0xff]
  %v19 = vld [vmem:[%s0 + $0x10] sm:$0xff]
  %v20 = vld [vmem:[%s0 + $0x18] sm:$0xff]
  %v21 = vld [vmem:[%s1] sm:$0xff]
  %v22 = vld [vmem:[%s1 + $0x8] sm:$0xff]
  %v23 = vld [vmem:[%s1 + $0x10] sm:$0xff]
  %v24 = vld [vmem:[%s1 + $0x18] sm:$0xff]
  %v25 = vld [vmem:[%s1 + $0x20] sm:$0xff]
  %v26 = vld [vmem:[%s1 + $0x28] sm:$0xff]
  %v27 = vld [vmem:[%s1 + $0x30] sm:$0xff]
  %v28 = vld [vmem:[%s1 + $0x38] sm:$0xff]
  %v29 = vld [vmem:[%s1 + $0x40] sm:$0xff]
  %v30 = vld [vmem:[%s1 + $0x48] sm:$0xff]
  %v31 = vld [vmem:[%s1 + $0x50] sm:$0xff]
  %v32 = vld [vmem:[%s1 + $0x58] sm:$0xff]
  %v33 = vld [vmem:[%s1 + $0x60] sm:$0xff]
  %v34 = vld [vmem:[%s1 + $0x68] sm:$0xff]
  %v35 = vld [vmem:[%s1 + $0x70] sm:$0xff]
  %v36 = vld [vmem:[%s1 + $0x78] sm:$0xff]
  %v37 = vld [vmem:[%s1 + $0x80] sm:$0xff]
  %v38 = vld [vmem:[%s1 + $0x88] sm:$0xff]
  %v39 = vld [vmem:[%s1 + $0x90] sm:$0xff]
  %v40 = vld [vmem:[%s1 + $0x98] sm:$0xff]
  %v41 = vld [vmem:[%s1 + $0xa0] sm:$0xff]
  %v42 = vld [vmem:[%s1 + $0xa8] sm:$0xff]
  %v43 = vld [vmem:[%s1 + $0xb0] sm:$0xff]
  %v44 = vld [vmem:[%s1 + $0xb8] sm:$0xff]
  %v45 = vld [vmem:[%s1 + $0xc0] sm:$0xff]
  %v46 = vld [vmem:[%s1 + $0xc8] sm:$0xff]
  %v47 = vld [vmem:[%s1 + $0xd0] sm:$0xff]
  %v48 = vld [vmem:[%s1 + $0xd8] sm:$0xff]
  %v49 = vld [vmem:[%s1 + $0xe0] sm:$0xff]
  %v50 = vld [vmem:[%s1 + $0xe8] sm:$0xff]
  %v51 = vld [vmem:[%s1 + $0xf0] sm:$0xff]
  %v52 = vld [vmem:[%s1 + $0xf8] sm:$0xff]
  %v53 = vld [vmem:[%s1 + $0x100] sm:$0xff]
  %v54 = vld [vmem:[%s1 + $0x108] sm:$0xff]
  %v55 = vld [vmem:[%s1 + $0x110] sm:$0xff]
  %v56 = vld [vmem:[%s1 + $0x118] sm:$0xff]
  %v57 = vld [vmem:[%s1 + $0x120] sm:$0xff]
  %v58 = vld [vmem:[%s1 + $0x128] sm:$0xff]
  %v59 = vld [vmem:[%s1 + $0x130] sm:$0xff]
  %v60 = vld [vmem:[%s1 + $0x138] sm:$0xff]
  %v61 = vld [vmem:[%s1 + $0x140] sm:$0xff]
  %v62 = vld [vmem:[%s1 + $0x148] sm:$0xff]
  %v63 = vld [vmem:[%s1 + $0x150] sm:$0xff]
  %v64 = vld [vmem:[%s1 + $0x158] sm:$0xff]
  %v65 = vld [vmem:[%s1 + $0x160] sm:$0xff]
  %v66 = vld [vmem:[%s1 + $0x168] sm:$0xff]
  %v67 = vld [vmem:[%s1 + $0x170] sm:$0xff]
  %v68 = vld [vmem:[%s1 + $0x178] sm:$0xff]
  %v69 = vld [vmem:[%s1 + $0x180] sm:$0xff]
  %v70 = vld [vmem:[%s1 + $0x188] sm:$0xff]
  %v71 = vld [vmem:[%s1 + $0x190] sm:$0xff]
  %v72 = vld [vmem:[%s1 + $0x198] sm:$0xff]
  %v73 = vld [vmem:[%s1 + $0x1a0] sm:$0xff]
  %v74 = vld [vmem:[%s1 + $0x1a8] sm:$0xff]
  %v75 = vld [vmem:[%s1 + $0x1b0] sm:$0xff]
  %v76 = vld [vmem:[%s1 + $0x1b8] sm:$0xff]
  %v77 = vld [vmem:[%s1 + $0x1c0] sm:$0xff]
  %v78 = vld [vmem:[%s1 + $0x1c8] sm:$0xff]
  %v79 = vld [vmem:[%s1 + $0x1d0] sm:$0xff]
  %v80 = vld [vmem:[%s1 + $0x1d8] sm:$0xff]
  %v81 = vld [vmem:[%s1 + $0x1e0] sm:$0xff]
  %v82 = vld [vmem:[%s1 + $0x1e8] sm:$0xff]
  %v83 = vld [vmem:[%s1 + $0x1f0] sm:$0xff]
  %v84 = vld [vmem:[%s1 + $0x1f8] sm:$0xff]
  %v89 = vunpack.c.l.b16 %v17
  %v90 = vunpack.c.h.b16 %v17
  %v91 = vunpack.c.l.b16 %v18
  %v92 = vunpack.c.h.b16 %v18
  %v93 = vunpack.c.l.b16 %v19
  %v94 = vunpack.c.h.b16 %v19
  %v95 = vunpack.c.l.b16 %v20
  %v96 = vunpack.c.h.b16 %v20
  %v97 = vpack.c.b16 %v91, %v89
  %v98 = vpack.c.b16 %v92, %v90
  %v99 = vpack.c.b16 %v95, %v93
  %v100 = vpack.c.b16 %v96, %v94
  %v169 = vunpack.c.l.b16 %v21
  %v170 = vunpack.c.h.b16 %v21
  %v171 = vunpack.c.l.b16 %v22
  %v172 = vunpack.c.h.b16 %v22
  %v173 = vunpack.c.l.b16 %v23
  %v174 = vunpack.c.h.b16 %v23
  %v175 = vunpack.c.l.b16 %v24
  %v176 = vunpack.c.h.b16 %v24
  %v177 = vunpack.c.l.b16 %v25
  %v178 = vunpack.c.h.b16 %v25
  %v179 = vunpack.c.l.b16 %v26
  %v180 = vunpack.c.h.b16 %v26
  %v181 = vunpack.c.l.b16 %v27
  %v182 = vunpack.c.h.b16 %v27
  %v183 = vunpack.c.l.b16 %v28
  %v184 = vunpack.c.h.b16 %v28
  %v185 = vunpack.c.l.b16 %v29
  %v186 = vunpack.c.h.b16 %v29
  %v187 = vunpack.c.l.b16 %v30
  %v188 = vunpack.c.h.b16 %v30
  %v189 = vunpack.c.l.b16 %v31
  %v190 = vunpack.c.h.b16 %v31
  %v191 = vunpack.c.l.b16 %v32
  %v192 = vunpack.c.h.b16 %v32
  %v193 = vunpack.c.l.b16 %v33
  %v194 = vunpack.c.h.b16 %v33
  %v195 = vunpack.c.l.b16 %v34
  %v196 = vunpack.c.h.b16 %v34
  %v197 = vunpack.c.l.b16 %v35
  %v198 = vunpack.c.h.b16 %v35
  %v199 = vunpack.c.l.b16 %v36
  %v200 = vunpack.c.h.b16 %v36
  %v201 = vunpack.c.l.b16 %v37
  %v202 = vunpack.c.h.b16 %v37
  %v203 = vunpack.c.l.b16 %v38
  %v204 = vunpack.c.h.b16 %v38
  %v205 = vunpack.c.l.b16 %v39
  %v206 = vunpack.c.h.b16 %v39
  %v207 = vunpack.c.l.b16 %v40
  %v208 = vunpack.c.h.b16 %v40
  %v209 = vunpack.c.l.b16 %v41
  %v210 = vunpack.c.h.b16 %v41
  %v211 = vunpack.c.l.b16 %v42
  %v212 = vunpack.c.h.b16 %v42
  %v213 = vunpack.c.l.b16 %v43
  %v214 = vunpack.c.h.b16 %v43
  %v215 = vunpack.c.l.b16 %v44
  %v216 = vunpack.c.h.b16 %v44
  %v217 = vunpack.c.l.b16 %v45
  %v218 = vunpack.c.h.b16 %v45
  %v219 = vunpack.c.l.b16 %v46
  %v220 = vunpack.c.h.b16 %v46
  %v221 = vunpack.c.l.b16 %v47
  %v222 = vunpack.c.h.b16 %v47
  %v223 = vunpack.c.l.b16 %v48
  %v224 = vunpack.c.h.b16 %v48
  %v225 = vunpack.c.l.b16 %v49
  %v226 = vunpack.c.h.b16 %v49
  %v227 = vunpack.c.l.b16 %v50
  %v228 = vunpack.c.h.b16 %v50
  %v229 = vunpack.c.l.b16 %v51
  %v230 = vunpack.c.h.b16 %v51
  %v231 = vunpack.c.l.b16 %v52
  %v232 = vunpack.c.h.b16 %v52
  %v233 = vunpack.c.l.b16 %v53
  %v234 = vunpack.c.h.b16 %v53
  %v235 = vunpack.c.l.b16 %v54
  %v236 = vunpack.c.h.b16 %v54
  %v237 = vunpack.c.l.b16 %v55
  %v238 = vunpack.c.h.b16 %v55
  %v239 = vunpack.c.l.b16 %v56
  %v240 = vunpack.c.h.b16 %v56
  %v241 = vunpack.c.l.b16 %v57
  %v242 = vunpack.c.h.b16 %v57
  %v243 = vunpack.c.l.b16 %v58
  %v244 = vunpack.c.h.b16 %v58
  %v245 = vunpack.c.l.b16 %v59
  %v246 = vunpack.c.h.b16 %v59
  %v247 = vunpack.c.l.b16 %v60
  %v248 = vunpack.c.h.b16 %v60
  %v249 = vunpack.c.l.b16 %v61
  %v250 = vunpack.c.h.b16 %v61
  %v251 = vunpack.c.l.b16 %v62
  %v252 = vunpack.c.h.b16 %v62
  %v253 = vunpack.c.l.b16 %v63
  %v254 = vunpack.c.h.b16 %v63
  %v255 = vunpack.c.l.b16 %v64
  %v256 = vunpack.c.h.b16 %v64
  %v257 = vunpack.c.l.b16 %v65
  %v258 = vunpack.c.h.b16 %v65
  %v259 = vunpack.c.l.b16 %v66
  %v260 = vunpack.c.h.b16 %v66
  %v261 = vunpack.c.l.b16 %v67
  %v262 = vunpack.c.h.b16 %v67
  %v263 = vunpack.c.l.b16 %v68
  %v264 = vunpack.c.h.b16 %v68
  %v265 = vunpack.c.l.b16 %v69
  %v266 = vunpack.c.h.b16 %v69
  %v267 = vunpack.c.l.b16 %v70
  %v268 = vunpack.c.h.b16 %v70
  %v269 = vunpack.c.l.b16 %v71
  %v270 = vunpack.c.h.b16 %v71
  %v271 = vunpack.c.l.b16 %v72
  %v272 = vunpack.c.h.b16 %v72
  %v273 = vunpack.c.l.b16 %v73
  %v274 = vunpack.c.h.b16 %v73
  %v275 = vunpack.c.l.b16 %v74
  %v276 = vunpack.c.h.b16 %v74
  %v277 = vunpack.c.l.b16 %v75
  %v278 = vunpack.c.h.b16 %v75
  %v279 = vunpack.c.l.b16 %v76
  %v280 = vunpack.c.h.b16 %v76
  %v281 = vunpack.c.l.b16 %v77
  %v282 = vunpack.c.h.b16 %v77
  %v283 = vunpack.c.l.b16 %v78
  %v284 = vunpack.c.h.b16 %v78
  %v285 = vunpack.c.l.b16 %v79
  %v286 = vunpack.c.h.b16 %v79
  %v287 = vunpack.c.l.b16 %v80
  %v288 = vunpack.c.h.b16 %v80
  %v289 = vunpack.c.l.b16 %v81
  %v290 = vunpack.c.h.b16 %v81
  %v291 = vunpack.c.l.b16 %v82
  %v292 = vunpack.c.h.b16 %v82
  %v293 = vunpack.c.l.b16 %v83
  %v294 = vunpack.c.h.b16 %v83
  %v295 = vunpack.c.l.b16 %v84
  %v296 = vunpack.c.h.b16 %v84
  %v297 = vpack.c.b16 %v173, %v169
  %v298 = vpack.c.b16 %v174, %v170
  %v299 = vpack.c.b16 %v175, %v171
  %v300 = vpack.c.b16 %v176, %v172
  %v301 = vpack.c.b16 %v181, %v177
  %v302 = vpack.c.b16 %v182, %v178
  %v303 = vpack.c.b16 %v183, %v179
  %v304 = vpack.c.b16 %v184, %v180
  %v305 = vpack.c.b16 %v189, %v185
  %v306 = vpack.c.b16 %v190, %v186
  %v307 = vpack.c.b16 %v191, %v187
  %v308 = vpack.c.b16 %v192, %v188
  %v309 = vpack.c.b16 %v197, %v193
  %v310 = vpack.c.b16 %v198, %v194
  %v311 = vpack.c.b16 %v199, %v195
  %v312 = vpack.c.b16 %v200, %v196
  %v313 = vpack.c.b16 %v205, %v201
  %v314 = vpack.c.b16 %v206, %v202
  %v315 = vpack.c.b16 %v207, %v203
  %v316 = vpack.c.b16 %v208, %v204
  %v317 = vpack.c.b16 %v213, %v209
  %v318 = vpack.c.b16 %v214, %v210
  %v319 = vpack.c.b16 %v215, %v211
  %v320 = vpack.c.b16 %v216, %v212
  %v321 = vpack.c.b16 %v221, %v217
  %v322 = vpack.c.b16 %v222, %v218
  %v323 = vpack.c.b16 %v223, %v219
  %v324 = vpack.c.b16 %v224, %v220
  %v325 = vpack.c.b16 %v229, %v225
  %v326 = vpack.c.b16 %v230, %v226
  %v327 = vpack.c.b16 %v231, %v227
  %v328 = vpack.c.b16 %v232, %v228
  %v329 = vpack.c.b16 %v237, %v233
  %v330 = vpack.c.b16 %v238, %v234
  %v331 = vpack.c.b16 %v239, %v235
  %v332 = vpack.c.b16 %v240, %v236
  %v333 = vpack.c.b16 %v245, %v241
  %v334 = vpack.c.b16 %v246, %v242
  %v335 = vpack.c.b16 %v247, %v243
  %v336 = vpack.c.b16 %v248, %v244
  %v337 = vpack.c.b16 %v253, %v249
  %v338 = vpack.c.b16 %v254, %v250
  %v339 = vpack.c.b16 %v255, %v251
  %v340 = vpack.c.b16 %v256, %v252
  %v341 = vpack.c.b16 %v261, %v257
  %v342 = vpack.c.b16 %v262, %v258
  %v343 = vpack.c.b16 %v263, %v259
  %v344 = vpack.c.b16 %v264, %v260
  %v345 = vpack.c.b16 %v269, %v265
  %v346 = vpack.c.b16 %v270, %v266
  %v347 = vpack.c.b16 %v271, %v267
  %v348 = vpack.c.b16 %v272, %v268
  %v349 = vpack.c.b16 %v277, %v273
  %v350 = vpack.c.b16 %v278, %v274
  %v351 = vpack.c.b16 %v279, %v275
  %v352 = vpack.c.b16 %v280, %v276
  %v353 = vpack.c.b16 %v285, %v281
  %v354 = vpack.c.b16 %v286, %v282
  %v355 = vpack.c.b16 %v287, %v283
  %v356 = vpack.c.b16 %v288, %v284
  %v357 = vpack.c.b16 %v293, %v289
  %v358 = vpack.c.b16 %v294, %v290
  %v359 = vpack.c.b16 %v295, %v291
  %v360 = vpack.c.b16 %v296, %v292
  %425 = vmatprep.subr.bf16.mxu0 %v326
  %426 = vmatpush1.bf16.msra.mxu0 %v325
  %427 = vmatprep.subr.bf16.mxu0 %v322
  %428 = vmatpush1.bf16.msra.mxu0 %v321
  %429 = vmatprep.subr.bf16.mxu0 %v318
  %430 = vmatpush1.bf16.msra.mxu0 %v317
  %431 = vmatprep.subr.bf16.mxu0 %v314
  %432 = vmatpush1.bf16.msra.mxu0 %v313
  %433 = vmatprep.subr.bf16.mxu0 %v310
  %434 = vmatpush1.bf16.msra.mxu0 %v309
  %435 = vmatprep.subr.bf16.mxu0 %v306
  %436 = vmatpush1.bf16.msra.mxu0 %v305
  %437 = vmatprep.subr.bf16.mxu0 %v302
  %438 = vmatpush1.bf16.msra.mxu0 %v301
  %439 = vmatprep.subr.bf16.mxu0 %v298
  %440 = vmatpush1.bf16.msra.mxu0 %v297
  %441 = vmatprep.subr.bf16.mxu0 %v358
  %442 = vmatpush2.bf16.msra.mxu0 %v357
  %443 = vmatprep.subr.bf16.mxu0 %v354
  %444 = vmatpush2.bf16.msra.mxu0 %v353
  %445 = vmatprep.subr.bf16.mxu0 %v350
  %446 = vmatpush2.bf16.msra.mxu0 %v349
  %447 = vmatprep.subr.bf16.mxu0 %v346
  %448 = vmatpush2.bf16.msra.mxu0 %v345
  %449 = vmatprep.subr.bf16.mxu0 %v342
  %450 = vmatpush2.bf16.msra.mxu0 %v341
  %451 = vmatprep.subr.bf16.mxu0 %v338
  %452 = vmatpush2.bf16.msra.mxu0 %v337
  %453 = vmatprep.subr.bf16.mxu0 %v334
  %454 = vmatpush2.bf16.msra.mxu0 %v333
  %455 = vmatprep.subr.bf16.mxu0 %v330
  %456 = vmatpush2.bf16.msra.mxu0 %v329
  %457 = vmatprep.mubr.bf16.mxu0 %v98
  %458 = vmatmul.mubr.bf16.gmra.mxu0 %v97
  %v459 = vpop.f32.mrf.mxu0
  %v460 = vadd.f32 0.0, %v459
  %v461 = vpop.f32.mrf.mxu0
  %v462 = vadd.f32 0.0, %v461
  %v463 = vpop.f32.mrf.mxu0
  %v464 = vadd.f32 0.0, %v463
  %v465 = vpop.f32.mrf.mxu0
  %v466 = vadd.f32 0.0, %v465
  %467 = vmatprep.mubr.bf16.mxu0 %v100
  %468 = vmatmul.mubr.bf16.gmra.mxu0 %v99
  %v469 = vpop.f32.mrf.mxu0
  %v470 = vadd.f32 0.0, %v469
  %v471 = vpop.f32.mrf.mxu0
  %v472 = vadd.f32 0.0, %v471
  %v473 = vpop.f32.mrf.mxu0
  %v474 = vadd.f32 0.0, %v473
  %v475 = vpop.f32.mrf.mxu0
  %v476 = vadd.f32 0.0, %v475
  %477 = vdwg.mxu0
  %478 = vmatprep.subr.bf16.mxu0 %v328
  %479 = vmatpush1.bf16.msra.mxu0 %v327
  %480 = vmatprep.subr.bf16.mxu0 %v324
  %481 = vmatpush1.bf16.msra.mxu0 %v323
  %482 = vmatprep.subr.bf16.mxu0 %v320
  %483 = vmatpush1.bf16.msra.mxu0 %v319
  %484 = vmatprep.subr.bf16.mxu0 %v316
  %485 = vmatpush1.bf16.msra.mxu0 %v315
  %486 = vmatprep.subr.bf16.mxu0 %v312
  %487 = vmatpush1.bf16.msra.mxu0 %v311
  %488 = vmatprep.subr.bf16.mxu0 %v308
  %489 = vmatpush1.bf16.msra.mxu0 %v307
  %490 = vmatprep.subr.bf16.mxu0 %v304
  %491 = vmatpush1.bf16.msra.mxu0 %v303
  %492 = vmatprep.subr.bf16.mxu0 %v300
  %493 = vmatpush1.bf16.msra.mxu0 %v299
  %494 = vmatprep.subr.bf16.mxu0 %v360
  %495 = vmatpush2.bf16.msra.mxu0 %v359
  %496 = vmatprep.subr.bf16.mxu0 %v356
  %497 = vmatpush2.bf16.msra.mxu0 %v355
  %498 = vmatprep.subr.bf16.mxu0 %v352
  %499 = vmatpush2.bf16.msra.mxu0 %v351
  %500 = vmatprep.subr.bf16.mxu0 %v348
  %501 = vmatpush2.bf16.msra.mxu0 %v347
  %502 = vmatprep.subr.bf16.mxu0 %v344
  %503 = vmatpush2.bf16.msra.mxu0 %v343
  %504 = vmatprep.subr.bf16.mxu0 %v340
  %505 = vmatpush2.bf16.msra.mxu0 %v339
  %506 = vmatprep.subr.bf16.mxu0 %v336
  %507 = vmatpush2.bf16.msra.mxu0 %v335
  %508 = vmatprep.subr.bf16.mxu0 %v332
  %509 = vmatpush2.bf16.msra.mxu0 %v331
  %510 = vmatprep.mubr.bf16.mxu0 %v98
  %511 = vmatmul.mubr.bf16.gmra.mxu0 %v97
  %v512 = vpop.f32.mrf.mxu0
  %v513 = vadd.f32 0.0, %v512
  %v514 = vpop.f32.mrf.mxu0
  %v515 = vadd.f32 0.0, %v514
  %v516 = vpop.f32.mrf.mxu0
  %v517 = vadd.f32 0.0, %v516
  %v518 = vpop.f32.mrf.mxu0
  %v519 = vadd.f32 0.0, %v518
  %520 = vmatprep.mubr.bf16.mxu0 %v100
  %521 = vmatmul.mubr.bf16.gmra.mxu0 %v99
  %v522 = vpop.f32.mrf.mxu0
  %v523 = vadd.f32 0.0, %v522
  %v524 = vpop.f32.mrf.mxu0
  %v525 = vadd.f32 0.0, %v524
  %v526 = vpop.f32.mrf.mxu0
  %v527 = vadd.f32 0.0, %v526
  %v528 = vpop.f32.mrf.mxu0
  %v529 = vadd.f32 0.0, %v528
  %530 = vdwg.mxu0
  %v531 = vadd.f32 %v460, %v462
  %v532 = vadd.f32 %v531, %v513
  %v533 = vadd.f32 %v532, %v515
  %534 = vadd.xlane.f32.xlu0 %v533
  %v535 = vpop.xlane.xlu0 %534
  %v536 = vadd.f32 %v464, %v466
  %v537 = vadd.f32 %v536, %v517
  %v538 = vadd.f32 %v537, %v519
  %539 = vadd.xlane.f32.xlu0 %v538
  %v540 = vpop.xlane.xlu0 %539
  %v541 = vadd.f32 %v470, %v472
  %v542 = vadd.f32 %v541, %v523
  %v543 = vadd.f32 %v542, %v525
  %544 = vadd.xlane.f32.xlu0 %v543
  %v545 = vpop.xlane.xlu0 %544
  %v546 = vadd.f32 %v474, %v476
  %v547 = vadd.f32 %v546, %v527
  %v548 = vadd.f32 %v547, %v529
  %549 = vadd.xlane.f32.xlu0 %v548
  %v550 = vpop.xlane.xlu0 %549
  %v551 = vrcp.pop 512.0
  %v552 = vmul.f32 %v535, %v551
  %v553 = vmul.f32 %v540, %v551
  %v554 = vmul.f32 %v545, %v551
  %v555 = vmul.f32 %v550, %v551
  %v556 = vsub.f32 %v460, %v552
  %v557 = vsub.f32 %v462, %v552
  %v558 = vsub.f32 %v513, %v552
  %v559 = vsub.f32 %v515, %v552
  %v560 = vsub.f32 %v464, %v553
  %v561 = vsub.f32 %v466, %v553
  %v562 = vsub.f32 %v517, %v553
  %v563 = vsub.f32 %v519, %v553
  %v564 = vsub.f32 %v470, %v554
  %v565 = vsub.f32 %v472, %v554
  %v566 = vsub.f32 %v523, %v554
  %v567 = vsub.f32 %v525, %v554
  %v568 = vsub.f32 %v474, %v555
  %v569 = vsub.f32 %v476, %v555
  %v570 = vsub.f32 %v527, %v555
  %v571 = vsub.f32 %v529, %v555
  %v572 = vmul.f32 %v556, %v556
  %v573 = vmul.f32 %v557, %v557
  %v574 = vmul.f32 %v558, %v558
  %v575 = vmul.f32 %v559, %v559
  %v576 = vmul.f32 %v560, %v560
  %v577 = vmul.f32 %v561, %v561
  %v578 = vmul.f32 %v562, %v562
  %v579 = vmul.f32 %v563, %v563
  %v580 = vmul.f32 %v564, %v564
  %v581 = vmul.f32 %v565, %v565
  %v582 = vmul.f32 %v566, %v566
  %v583 = vmul.f32 %v567, %v567
  %v584 = vmul.f32 %v568, %v568
  %v585 = vmul.f32 %v569, %v569
  %v586 = vmul.f32 %v570, %v570
  %v587 = vmul.f32 %v571, %v571
  %v588 = vadd.f32 %v572, %v573
  %v589 = vadd.f32 %v588, %v574
  %v590 = vadd.f32 %v589, %v575
  %591 = vadd.xlane.f32.xlu0 %v590
  %v592 = vpop.xlane.xlu0 %591
  %v593 = vadd.f32 %v576, %v577
  %v594 = vadd.f32 %v593, %v578
  %v595 = vadd.f32 %v594, %v579
  %596 = vadd.xlane.f32.xlu0 %v595
  %v597 = vpop.xlane.xlu0 %596
  %v598 = vadd.f32 %v580, %v581
  %v599 = vadd.f32 %v598, %v582
  %v600 = vadd.f32 %v599, %v583
  %601 = vadd.xlane.f32.xlu0 %v600
  %v602 = vpop.xlane.xlu0 %601
  %v603 = vadd.f32 %v584, %v585
  %v604 = vadd.f32 %v603, %v586
  %v605 = vadd.f32 %v604, %v587
  %606 = vadd.xlane.f32.xlu0 %v605
  %v607 = vpop.xlane.xlu0 %606
  %v608 = vmul.f32 %v592, %v551
  %v609 = vmul.f32 %v597, %v551
  %v610 = vmul.f32 %v602, %v551
  %v611 = vmul.f32 %v607, %v551
  %v612 = vadd.f32 %v608, 1e-05
  %v613 = vadd.f32 %v609, 1e-05
  %v614 = vadd.f32 %v610, 1e-05
  %v615 = vadd.f32 %v611, 1e-05
  %v616 = vrsqrt.pop %v612
  %v617 = vrsqrt.pop %v613
  %v618 = vrsqrt.pop %v614
  %v619 = vrsqrt.pop %v615
  %v620 = vmul.f32 %v556, %v616
  %v621 = vmul.f32 %v557, %v616
  %v622 = vmul.f32 %v558, %v616
  %v623 = vmul.f32 %v559, %v616
  %v624 = vmul.f32 %v560, %v617
  %v625 = vmul.f32 %v561, %v617
  %v626 = vmul.f32 %v562, %v617
  %v627 = vmul.f32 %v563, %v617
  %v628 = vmul.f32 %v564, %v618
  %v629 = vmul.f32 %v565, %v618
  %v630 = vmul.f32 %v566, %v618
  %v631 = vmul.f32 %v567, %v618
  %v632 = vmul.f32 %v568, %v619
  %v633 = vmul.f32 %v569, %v619
  %v634 = vmul.f32 %v570, %v619
  %v635 = vmul.f32 %v571, %v619
  %v636 = vld [vmem:[%s2] sm:$0xff]
  %v637 = vld [vmem:[%s2 + $0x8] sm:$0xff]
  %v638 = vld [vmem:[%s2 + $0x10] sm:$0xff]
  %v639 = vld [vmem:[%s2 + $0x18] sm:$0xff]
  %641 = vset.pattern.permute.xlu0 0
  %642 = vperm.xlu0 %641, %v636
  %v643 = vpop.permute.xlu0 %642
  %646 = vset.pattern.permute.xlu0 0
  %647 = vperm.xlu0 %646, %v637
  %v648 = vpop.permute.xlu0 %647
  %651 = vset.pattern.permute.xlu0 0
  %652 = vperm.xlu0 %651, %v638
  %v653 = vpop.permute.xlu0 %652
  %656 = vset.pattern.permute.xlu0 0
  %657 = vperm.xlu0 %656, %v639
  %v658 = vpop.permute.xlu0 %657
  %v660 = vmul.f32 %v620, %v643
  %v661 = vmul.f32 %v621, %v643
  %v662 = vmul.f32 %v622, %v643
  %v663 = vmul.f32 %v623, %v643
  %v664 = vmul.f32 %v624, %v648
  %v665 = vmul.f32 %v625, %v648
  %v666 = vmul.f32 %v626, %v648
  %v667 = vmul.f32 %v627, %v648
  %v668 = vmul.f32 %v628, %v653
  %v669 = vmul.f32 %v629, %v653
  %v670 = vmul.f32 %v630, %v653
  %v671 = vmul.f32 %v631, %v653
  %v672 = vmul.f32 %v632, %v658
  %v673 = vmul.f32 %v633, %v658
  %v674 = vmul.f32 %v634, %v658
  %v675 = vmul.f32 %v635, %v658
  %v676 = vld [vmem:[%s3] sm:$0xff]
  %v677 = vld [vmem:[%s3 + $0x8] sm:$0xff]
  %v678 = vld [vmem:[%s3 + $0x10] sm:$0xff]
  %v679 = vld [vmem:[%s3 + $0x18] sm:$0xff]
  %681 = vset.pattern.permute.xlu0 0
  %682 = vperm.xlu0 %681, %v676
  %v683 = vpop.permute.xlu0 %682
  %686 = vset.pattern.permute.xlu0 0
  %687 = vperm.xlu0 %686, %v677
  %v688 = vpop.permute.xlu0 %687
  %691 = vset.pattern.permute.xlu0 0
  %692 = vperm.xlu0 %691, %v678
  %v693 = vpop.permute.xlu0 %692
  %696 = vset.pattern.permute.xlu0 0
  %697 = vperm.xlu0 %696, %v679
  %v698 = vpop.permute.xlu0 %697
  %v700 = vadd.f32 %v660, %v683
  %v701 = vadd.f32 %v661, %v683
  %v702 = vadd.f32 %v662, %v683
  %v703 = vadd.f32 %v663, %v683
  %v704 = vadd.f32 %v664, %v688
  %v705 = vadd.f32 %v665, %v688
  %v706 = vadd.f32 %v666, %v688
  %v707 = vadd.f32 %v667, %v688
  %v708 = vadd.f32 %v668, %v693
  %v709 = vadd.f32 %v669, %v693
  %v710 = vadd.f32 %v670, %v693
  %v711 = vadd.f32 %v671, %v693
  %v712 = vadd.f32 %v672, %v698
  %v713 = vadd.f32 %v673, %v698
  %v714 = vadd.f32 %v674, %v698
  %v715 = vadd.f32 %v675, %v698
  %vm716 = vcmp.ge.f32.partialorder %v700, 0.0
  %vm717 = vcmp.ge.f32.partialorder %v701, 0.0
  %vm718 = vcmp.ge.f32.partialorder %v702, 0.0
  %vm719 = vcmp.ge.f32.partialorder %v703, 0.0
  %vm720 = vcmp.ge.f32.partialorder %v704, 0.0
  %vm721 = vcmp.ge.f32.partialorder %v705, 0.0
  %vm722 = vcmp.ge.f32.partialorder %v706, 0.0
  %vm723 = vcmp.ge.f32.partialorder %v707, 0.0
  %vm724 = vcmp.ge.f32.partialorder %v708, 0.0
  %vm725 = vcmp.ge.f32.partialorder %v709, 0.0
  %vm726 = vcmp.ge.f32.partialorder %v710, 0.0
  %vm727 = vcmp.ge.f32.partialorder %v711, 0.0
  %vm728 = vcmp.ge.f32.partialorder %v712, 0.0
  %vm729 = vcmp.ge.f32.partialorder %v713, 0.0
  %vm730 = vcmp.ge.f32.partialorder %v714, 0.0
  %vm731 = vcmp.ge.f32.partialorder %v715, 0.0
  %v732 = vmul.f32 %v700, 0.2
  %v733 = vmul.f32 %v701, 0.2
  %v734 = vmul.f32 %v702, 0.2
  %v735 = vmul.f32 %v703, 0.2
  %v736 = vmul.f32 %v704, 0.2
  %v737 = vmul.f32 %v705, 0.2
  %v738 = vmul.f32 %v706, 0.2
  %v739 = vmul.f32 %v707, 0.2
  %v740 = vmul.f32 %v708, 0.2
  %v741 = vmul.f32 %v709, 0.2
  %v742 = vmul.f32 %v710, 0.2
  %v743 = vmul.f32 %v711, 0.2
  %v744 = vmul.f32 %v712, 0.2
  %v745 = vmul.f32 %v713, 0.2
  %v746 = vmul.f32 %v714, 0.2
  %v747 = vmul.f32 %v715, 0.2
  %v748 = vsel %vm716, %v700, %v732
  %v749 = vsel %vm717, %v701, %v733
  %v750 = vsel %vm718, %v702, %v734
  %v751 = vsel %vm719, %v703, %v735
  %v752 = vsel %vm720, %v704, %v736
  %v753 = vsel %vm721, %v705, %v737
  %v754 = vsel %vm722, %v706, %v738
  %v755 = vsel %vm723, %v707, %v739
  %v756 = vsel %vm724, %v708, %v740
  %v757 = vsel %vm725, %v709, %v741
  %v758 = vsel %vm726, %v710, %v742
  %v759 = vsel %vm727, %v711, %v743
  %v760 = vsel %vm728, %v712, %v744
  %v761 = vsel %vm729, %v713, %v745
  %v762 = vsel %vm730, %v714, %v746
  %v763 = vsel %vm731, %v715, %v747
  %v764 = vpack.c.bf16 %v752, %v748
  %v765 = vpack.c.bf16 %v753, %v749
  %v766 = vpack.c.bf16 %v754, %v750
  %v767 = vpack.c.bf16 %v755, %v751
  %v768 = vpack.c.bf16 %v760, %v756
  %v769 = vpack.c.bf16 %v761, %v757
  %v770 = vpack.c.bf16 %v762, %v758
  %v771 = vpack.c.bf16 %v763, %v759
  %v780 = vunpack.c.l.b16 %v764
  %v781 = vunpack.c.l.b16 %v765
  %v782 = vunpack.c.l.b16 %v766
  %v783 = vunpack.c.l.b16 %v767
  %v784 = vunpack.c.h.b16 %v764
  %v785 = vunpack.c.h.b16 %v765
  %v786 = vunpack.c.h.b16 %v766
  %v787 = vunpack.c.h.b16 %v767
  %v788 = vunpack.c.l.b16 %v768
  %v789 = vunpack.c.l.b16 %v769
  %v790 = vunpack.c.l.b16 %v770
  %v791 = vunpack.c.l.b16 %v771
  %v792 = vunpack.c.h.b16 %v768
  %v793 = vunpack.c.h.b16 %v769
  %v794 = vunpack.c.h.b16 %v770
  %v795 = vunpack.c.h.b16 %v771
  %v796 = vpack.c.b16 %v781, %v780
  %v797 = vpack.c.b16 %v783, %v782
  %v798 = vpack.c.b16 %v785, %v784
  %v799 = vpack.c.b16 %v787, %v786
  %v800 = vpack.c.b16 %v789, %v788
  %v801 = vpack.c.b16 %v791, %v790
  %v802 = vpack.c.b16 %v793, %v792
  %v803 = vpack.c.b16 %v795, %v794
  %812 = vst [vmem:[%s4] sm:$0xff] %v796
  %813 = vst [vmem:[%s4 + $0x8] sm:$0xff] %v797
  %814 = vst [vmem:[%s4 + $0x10] sm:$0xff] %v798
  %815 = vst [vmem:[%s4 + $0x18] sm:$0xff] %v799
  %816 = vst [vmem:[%s4 + $0x20] sm:$0xff] %v800
  %817 = vst [vmem:[%s4 + $0x28] sm:$0xff] %v801
  %818 = vst [vmem:[%s4 + $0x30] sm:$0xff] %v802
  %819 = vst [vmem:[%s4 + $0x38] sm:$0xff] %v803
  // Predicated region
  $region18: #{discriminator_forward.8} parent=0 // pred_check
    _
  $region19: #{discriminator_forward.8} parent=0 // pred_check_branch
    %821 = sbr.rel (0) target = $region21
  $region20: #{discriminator_forward.8} parent=0 // pred_region
    _
  $region21: #{discriminator_forward.8} parent=0 // pred_fallthru
    _
  // Predicated region
  $region22: #{discriminator_forward.8} parent=0 // pred_check
    _
  $region23: #{discriminator_forward.8} parent=0 // pred_check_branch
    %823 = sbr.rel (0) target = $region25
  $region24: #{discriminator_forward.8} parent=0 // pred_region
    _
  $region25: #{discriminator_forward.8} parent=0 // pred_fallthru
    _

// kernel: discriminator_forward.9
$region0: #{discriminator_forward.9}
  #allocation0 [shape = 'u32[]', space=smem, size = 0x4, offset = 0x4, fixed_abs, tag = 'smem constant byte address 0x4 - core index']
  #allocation1 [shape = 'u32[144,128]{1,0:T(1,128)}', space=vmem, size = 0x12000, scoped, tag = 'internal scratch']
  %s0 = inlined_call_operand.vmem [shape: bf16[64,512], index: 0, kind: input, shape index: {}]
  %s1 = inlined_call_operand.vmem [shape: bf16[512,128], index: 1, kind: input, shape index: {}]
  %s2 = inlined_call_operand.vmem [shape: f32[64,1], index: 2, kind: input, shape index: {}]
  %s3 = inlined_call_operand.vmem [shape: f32[64,1], index: 3, kind: input, shape index: {}]
  %s4 = inlined_call_operand.vmem [shape: bf16[64,128], index: 4, kind: output, shape index: {}]
  %s5 = sld [smem:[#allocation0]]
  $region26: #{discriminator_forward.9} parent=0
    _
  %s7 = ssub.s32 1, %s5
  %s8 = scalar_select 0, %s7, %s5
  // Predicated region
  $region2: #{discriminator_forward.9} parent=0 // pred_check
    _
  $region3: #{discriminator_forward.9} parent=0 // pred_check_branch
    %10 = sbr.rel (0) target = $region5
  $region4: #{discriminator_forward.9} parent=0 // pred_region
    _
  $region5: #{discriminator_forward.9} parent=0 // pred_fallthru
    _
  // Predicated region
  $region6: #{discriminator_forward.9} parent=0 // pred_check
    _
  $region7: #{discriminator_forward.9} parent=0 // pred_check_branch
    %12 = sbr.rel (0) target = $region9
  $region8: #{discriminator_forward.9} parent=0 // pred_region
    _
  $region9: #{discriminator_forward.9} parent=0 // pred_fallthru
    _
  // Predicated region
  $region10: #{discriminator_forward.9} parent=0 // pred_check
    _
  $region11: #{discriminator_forward.9} parent=0 // pred_check_branch
    %14 = sbr.rel (0) target = $region13
  $region12: #{discriminator_forward.9} parent=0 // pred_region
    _
  $region13: #{discriminator_forward.9} parent=0 // pred_fallthru
    _
  // Predicated region
  $region14: #{discriminator_forward.9} parent=0 // pred_check
    _
  $region15: #{discriminator_forward.9} parent=0 // pred_check_branch
    %16 = sbr.rel (0) target = $region17
  $region16: #{discriminator_forward.9} parent=0 // pred_region
    _
  $region17: #{discriminator_forward.9} parent=0 // pred_fallthru
    _
  %v18 = vld [vmem:[%s0] sm:$0xff]
  %v19 = vld [vmem:[%s0 + $0x8] sm:$0xff]
  %v20 = vld [vmem:[%s0 + $0x10] sm:$0xff]
  %v21 = vld [vmem:[%s0 + $0x18] sm:$0xff]
  %v22 = vld [vmem:[%s0 + $0x20] sm:$0xff]
  %v23 = vld [vmem:[%s0 + $0x28] sm:$0xff]
  %v24 = vld [vmem:[%s0 + $0x30] sm:$0xff]
  %v25 = vld [vmem:[%s0 + $0x38] sm:$0xff]
  %v26 = vld [vmem:[%s0 + $0x40] sm:$0xff]
  %v27 = vld [vmem:[%s0 + $0x48] sm:$0xff]
  %v28 = vld [vmem:[%s0 + $0x50] sm:$0xff]
  %v29 = vld [vmem:[%s0 + $0x58] sm:$0xff]
  %v30 = vld [vmem:[%s0 + $0x60] sm:$0xff]
  %v31 = vld [vmem:[%s0 + $0x68] sm:$0xff]
  %v32 = vld [vmem:[%s0 + $0x70] sm:$0xff]
  %v33 = vld [vmem:[%s0 + $0x78] sm:$0xff]
  %v34 = vld [vmem:[%s1] sm:$0xf]
  %v35 = vld [vmem:[%s1 + $0x4] sm:$0xf]
  %v36 = vld [vmem:[%s1 + $0x8] sm:$0xf]
  %v37 = vld [vmem:[%s1 + $0xc] sm:$0xf]
  %v38 = vld [vmem:[%s1 + $0x10] sm:$0xf]
  %v39 = vld [vmem:[%s1 + $0x14] sm:$0xf]
  %v40 = vld [vmem:[%s1 + $0x18] sm:$0xf]
  %v41 = vld [vmem:[%s1 + $0x1c] sm:$0xf]
  %v42 = vld [vmem:[%s1 + $0x20] sm:$0xf]
  %v43 = vld [vmem:[%s1 + $0x24] sm:$0xf]
  %v44 = vld [vmem:[%s1 + $0x28] sm:$0xf]
  %v45 = vld [vmem:[%s1 + $0x2c] sm:$0xf]
  %v46 = vld [vmem:[%s1 + $0x30] sm:$0xf]
  %v47 = vld [vmem:[%s1 + $0x34] sm:$0xf]
  %v48 = vld [vmem:[%s1 + $0x38] sm:$0xf]
  %v49 = vld [vmem:[%s1 + $0x3c] sm:$0xf]
  %v50 = vld [vmem:[%s1 + $0x40] sm:$0xf]
  %v51 = vld [vmem:[%s1 + $0x44] sm:$0xf]
  %v52 = vld [vmem:[%s1 + $0x48] sm:$0xf]
  %v53 = vld [vmem:[%s1 + $0x4c] sm:$0xf]
  %v54 = vld [vmem:[%s1 + $0x50] sm:$0xf]
  %v55 = vld [vmem:[%s1 + $0x54] sm:$0xf]
  %v56 = vld [vmem:[%s1 + $0x58] sm:$0xf]
  %v57 = vld [vmem:[%s1 + $0x5c] sm:$0xf]
  %v58 = vld [vmem:[%s1 + $0x60] sm:$0xf]
  %v59 = vld [vmem:[%s1 + $0x64] sm:$0xf]
  %v60 = vld [vmem:[%s1 + $0x68] sm:$0xf]
  %v61 = vld [vmem:[%s1 + $0x6c] sm:$0xf]
  %v62 = vld [vmem:[%s1 + $0x70] sm:$0xf]
  %v63 = vld [vmem:[%s1 + $0x74] sm:$0xf]
  %v64 = vld [vmem:[%s1 + $0x78] sm:$0xf]
  %v65 = vld [vmem:[%s1 + $0x7c] sm:$0xf]
  %v66 = vld [vmem:[%s1 + $0x80] sm:$0xf]
  %v67 = vld [vmem:[%s1 + $0x84] sm:$0xf]
  %v68 = vld [vmem:[%s1 + $0x88] sm:$0xf]
  %v69 = vld [vmem:[%s1 + $0x8c] sm:$0xf]
  %v70 = vld [vmem:[%s1 + $0x90] sm:$0xf]
  %v71 = vld [vmem:[%s1 + $0x94] sm:$0xf]
  %v72 = vld [vmem:[%s1 + $0x98] sm:$0xf]
  %v73 = vld [vmem:[%s1 + $0x9c] sm:$0xf]
  %v74 = vld [vmem:[%s1 + $0xa0] sm:$0xf]
  %v75 = vld [vmem:[%s1 + $0xa4] sm:$0xf]
  %v76 = vld [vmem:[%s1 + $0xa8] sm:$0xf]
  %v77 = vld [vmem:[%s1 + $0xac] sm:$0xf]
  %v78 = vld [vmem:[%s1 + $0xb0] sm:$0xf]
  %v79 = vld [vmem:[%s1 + $0xb4] sm:$0xf]
  %v80 = vld [vmem:[%s1 + $0xb8] sm:$0xf]
  %v81 = vld [vmem:[%s1 + $0xbc] sm:$0xf]
  %v82 = vld [vmem:[%s1 + $0xc0] sm:$0xf]
  %v83 = vld [vmem:[%s1 + $0xc4] sm:$0xf]
  %v84 = vld [vmem:[%s1 + $0xc8] sm:$0xf]
  %v85 = vld [vmem:[%s1 + $0xcc] sm:$0xf]
  %v86 = vld [vmem:[%s1 + $0xd0] sm:$0xf]
  %v87 = vld [vmem:[%s1 + $0xd4] sm:$0xf]
  %v88 = vld [vmem:[%s1 + $0xd8] sm:$0xf]
  %v89 = vld [vmem:[%s1 + $0xdc] sm:$0xf]
  %v90 = vld [vmem:[%s1 + $0xe0] sm:$0xf]
  %v91 = vld [vmem:[%s1 + $0xe4] sm:$0xf]
  %v92 = vld [vmem:[%s1 + $0xe8] sm:$0xf]
  %v93 = vld [vmem:[%s1 + $0xec] sm:$0xf]
  %v94 = vld [vmem:[%s1 + $0xf0] sm:$0xf]
  %v95 = vld [vmem:[%s1 + $0xf4] sm:$0xf]
  %v96 = vld [vmem:[%s1 + $0xf8] sm:$0xf]
  %v97 = vld [vmem:[%s1 + $0xfc] sm:$0xf]
  %v114 = vunpack.c.l.b16 %v18
  %v115 = vunpack.c.h.b16 %v18
  %v116 = vunpack.c.l.b16 %v19
  %v117 = vunpack.c.h.b16 %v19
  %v118 = vunpack.c.l.b16 %v20
  %v119 = vunpack.c.h.b16 %v20
  %v120 = vunpack.c.l.b16 %v21
  %v121 = vunpack.c.h.b16 %v21
  %v122 = vunpack.c.l.b16 %v22
  %v123 = vunpack.c.h.b16 %v22
  %v124 = vunpack.c.l.b16 %v23
  %v125 = vunpack.c.h.b16 %v23
  %v126 = vunpack.c.l.b16 %v24
  %v127 = vunpack.c.h.b16 %v24
  %v128 = vunpack.c.l.b16 %v25
  %v129 = vunpack.c.h.b16 %v25
  %v130 = vunpack.c.l.b16 %v26
  %v131 = vunpack.c.h.b16 %v26
  %v132 = vunpack.c.l.b16 %v27
  %v133 = vunpack.c.h.b16 %v27
  %v134 = vunpack.c.l.b16 %v28
  %v135 = vunpack.c.h.b16 %v28
  %v136 = vunpack.c.l.b16 %v29
  %v137 = vunpack.c.h.b16 %v29
  %v138 = vunpack.c.l.b16 %v30
  %v139 = vunpack.c.h.b16 %v30
  %v140 = vunpack.c.l.b16 %v31
  %v141 = vunpack.c.h.b16 %v31
  %v142 = vunpack.c.l.b16 %v32
  %v143 = vunpack.c.h.b16 %v32
  %v144 = vunpack.c.l.b16 %v33
  %v145 = vunpack.c.h.b16 %v33
  %v146 = vpack.c.b16 %v118, %v114
  %v147 = vpack.c.b16 %v119, %v115
  %v148 = vpack.c.b16 %v120, %v116
  %v149 = vpack.c.b16 %v121, %v117
  %v150 = vpack.c.b16 %v126, %v122
  %v151 = vpack.c.b16 %v127, %v123
  %v152 = vpack.c.b16 %v128, %v124
  %v153 = vpack.c.b16 %v129, %v125
  %v154 = vpack.c.b16 %v134, %v130
  %v155 = vpack.c.b16 %v135, %v131
  %v156 = vpack.c.b16 %v136, %v132
  %v157 = vpack.c.b16 %v137, %v133
  %v158 = vpack.c.b16 %v142, %v138
  %v159 = vpack.c.b16 %v143, %v139
  %v160 = vpack.c.b16 %v144, %v140
  %v161 = vpack.c.b16 %v145, %v141
  %v242 = vunpack.c.l.b16 %v34
  %v243 = vunpack.c.l.b16 %v35
  %v244 = vunpack.c.l.b16 %v36
  %v245 = vunpack.c.l.b16 %v37
  %v246 = vunpack.c.l.b16 %v38
  %v247 = vunpack.c.l.b16 %v39
  %v248 = vunpack.c.l.b16 %v40
  %v249 = vunpack.c.l.b16 %v41
  %v250 = vunpack.c.l.b16 %v42
  %v251 = vunpack.c.l.b16 %v43
  %v252 = vunpack.c.l.b16 %v44
  %v253 = vunpack.c.l.b16 %v45
  %v254 = vunpack.c.l.b16 %v46
  %v255 = vunpack.c.l.b16 %v47
  %v256 = vunpack.c.l.b16 %v48
  %v257 = vunpack.c.l.b16 %v49
  %v258 = vunpack.c.l.b16 %v50
  %v259 = vunpack.c.l.b16 %v51
  %v260 = vunpack.c.l.b16 %v52
  %v261 = vunpack.c.l.b16 %v53
  %v262 = vunpack.c.l.b16 %v54
  %v263 = vunpack.c.l.b16 %v55
  %v264 = vunpack.c.l.b16 %v56
  %v265 = vunpack.c.l.b16 %v57
  %v266 = vunpack.c.l.b16 %v58
  %v267 = vunpack.c.l.b16 %v59
  %v268 = vunpack.c.l.b16 %v60
  %v269 = vunpack.c.l.b16 %v61
  %v270 = vunpack.c.l.b16 %v62
  %v271 = vunpack.c.l.b16 %v63
  %v272 = vunpack.c.l.b16 %v64
  %v273 = vunpack.c.l.b16 %v65
  %v274 = vunpack.c.l.b16 %v66
  %v275 = vunpack.c.l.b16 %v67
  %v276 = vunpack.c.l.b16 %v68
  %v277 = vunpack.c.l.b16 %v69
  %v278 = vunpack.c.l.b16 %v70
  %v279 = vunpack.c.l.b16 %v71
  %v280 = vunpack.c.l.b16 %v72
  %v281 = vunpack.c.l.b16 %v73
  %v282 = vunpack.c.l.b16 %v74
  %v283 = vunpack.c.l.b16 %v75
  %v284 = vunpack.c.l.b16 %v76
  %v285 = vunpack.c.l.b16 %v77
  %v286 = vunpack.c.l.b16 %v78
  %v287 = vunpack.c.l.b16 %v79
  %v288 = vunpack.c.l.b16 %v80
  %v289 = vunpack.c.l.b16 %v81
  %v290 = vunpack.c.l.b16 %v82
  %v291 = vunpack.c.l.b16 %v83
  %v292 = vunpack.c.l.b16 %v84
  %v293 = vunpack.c.l.b16 %v85
  %v294 = vunpack.c.l.b16 %v86
  %v295 = vunpack.c.l.b16 %v87
  %v296 = vunpack.c.l.b16 %v88
  %v297 = vunpack.c.l.b16 %v89
  %v298 = vunpack.c.l.b16 %v90
  %v299 = vunpack.c.l.b16 %v91
  %v300 = vunpack.c.l.b16 %v92
  %v301 = vunpack.c.l.b16 %v93
  %v302 = vunpack.c.l.b16 %v94
  %v303 = vunpack.c.l.b16 %v95
  %v304 = vunpack.c.l.b16 %v96
  %v305 = vunpack.c.l.b16 %v97
  %v306 = vpack.c.b16 %v243, %v242
  %v307 = vpack.c.b16 %v245, %v244
  %v308 = vpack.c.b16 %v247, %v246
  %v309 = vpack.c.b16 %v249, %v248
  %v310 = vpack.c.b16 %v251, %v250
  %v311 = vpack.c.b16 %v253, %v252
  %v312 = vpack.c.b16 %v255, %v254
  %v313 = vpack.c.b16 %v257, %v256
  %v314 = vpack.c.b16 %v259, %v258
  %v315 = vpack.c.b16 %v261, %v260
  %v316 = vpack.c.b16 %v263, %v262
  %v317 = vpack.c.b16 %v265, %v264
  %v318 = vpack.c.b16 %v267, %v266
  %v319 = vpack.c.b16 %v269, %v268
  %v320 = vpack.c.b16 %v271, %v270
  %v321 = vpack.c.b16 %v273, %v272
  %v322 = vpack.c.b16 %v275, %v274
  %v323 = vpack.c.b16 %v277, %v276
  %v324 = vpack.c.b16 %v279, %v278
  %v325 = vpack.c.b16 %v281, %v280
  %v326 = vpack.c.b16 %v283, %v282
  %v327 = vpack.c.b16 %v285, %v284
  %v328 = vpack.c.b16 %v287, %v286
  %v329 = vpack.c.b16 %v289, %v288
  %v330 = vpack.c.b16 %v291, %v290
  %v331 = vpack.c.b16 %v293, %v292
  %v332 = vpack.c.b16 %v295, %v294
  %v333 = vpack.c.b16 %v297, %v296
  %v334 = vpack.c.b16 %v299, %v298
  %v335 = vpack.c.b16 %v301, %v300
  %v336 = vpack.c.b16 %v303, %v302
  %v337 = vpack.c.b16 %v305, %v304
  %370 = vmatprep.subr.bf16.mxu0 0
  %371 = vmatpush1.bf16.msra.mxu0 %v313
  %372 = vmatprep.subr.bf16.mxu0 0
  %373 = vmatpush1.bf16.msra.mxu0 %v312
  %374 = vmatprep.subr.bf16.mxu0 0
  %375 = vmatpush1.bf16.msra.mxu0 %v311
  %376 = vmatprep.subr.bf16.mxu0 0
  %377 = vmatpush1.bf16.msra.mxu0 %v310
  %378 = vmatprep.subr.bf16.mxu0 0
  %379 = vmatpush1.bf16.msra.mxu0 %v309
  %380 = vmatprep.subr.bf16.mxu0 0
  %381 = vmatpush1.bf16.msra.mxu0 %v308
  %382 = vmatprep.subr.bf16.mxu0 0
  %383 = vmatpush1.bf16.msra.mxu0 %v307
  %384 = vmatprep.subr.bf16.mxu0 0
  %385 = vmatpush1.bf16.msra.mxu0 %v306
  %386 = vmatprep.subr.bf16.mxu0 0
  %387 = vmatpush2.bf16.msra.mxu0 %v321
  %388 = vmatprep.subr.bf16.mxu0 0
  %389 = vmatpush2.bf16.msra.mxu0 %v320
  %390 = vmatprep.subr.bf16.mxu0 0
  %391 = vmatpush2.bf16.msra.mxu0 %v319
  %392 = vmatprep.subr.bf16.mxu0 0
  %393 = vmatpush2.bf16.msra.mxu0 %v318
  %394 = vmatprep.subr.bf16.mxu0 0
  %395 = vmatpush2.bf16.msra.mxu0 %v317
  %396 = vmatprep.subr.bf16.mxu0 0
  %397 = vmatpush2.bf16.msra.mxu0 %v316
  %398 = vmatprep.subr.bf16.mxu0 0
  %399 = vmatpush2.bf16.msra.mxu0 %v315
  %400 = vmatprep.subr.bf16.mxu0 0
  %401 = vmatpush2.bf16.msra.mxu0 %v314
  %402 = vmatprep.mubr.bf16.mxu0 %v147
  %403 = vmatmul.mubr.bf16.gmra.mxu0 %v146
  %v404 = vpop.f32.mrf.mxu0
  %v405 = vadd.f32 0.0, %v404
  %v406 = vpop.f32.mrf.mxu0
  %v407 = vpop.f32.mrf.mxu0
  %v408 = vadd.f32 0.0, %v407
  %v409 = vpop.f32.mrf.mxu0
  %410 = vmatprep.mubr.bf16.mxu0 %v151
  %411 = vmatmul.mubr.bf16.gmra.mxu0 %v150
  %v412 = vpop.f32.mrf.mxu0
  %v413 = vadd.f32 0.0, %v412
  %v414 = vpop.f32.mrf.mxu0
  %v415 = vpop.f32.mrf.mxu0
  %v416 = vadd.f32 0.0, %v415
  %v417 = vpop.f32.mrf.mxu0
  %418 = vmatprep.mubr.bf16.mxu0 %v155
  %419 = vmatmul.mubr.bf16.gmra.mxu0 %v154
  %v420 = vpop.f32.mrf.mxu0
  %v421 = vadd.f32 0.0, %v420
  %v422 = vpop.f32.mrf.mxu0
  %v423 = vpop.f32.mrf.mxu0
  %v424 = vadd.f32 0.0, %v423
  %v425 = vpop.f32.mrf.mxu0
  %426 = vmatprep.mubr.bf16.mxu0 %v159
  %427 = vmatmul.mubr.bf16.gmra.mxu0 %v158
  %v428 = vpop.f32.mrf.mxu0
  %v429 = vadd.f32 0.0, %v428
  %v430 = vpop.f32.mrf.mxu0
  %v431 = vpop.f32.mrf.mxu0
  %v432 = vadd.f32 0.0, %v431
  %v433 = vpop.f32.mrf.mxu0
  %434 = vdwg.mxu0
  %435 = vmatprep.subr.bf16.mxu0 0
  %436 = vmatpush1.bf16.msra.mxu0 %v329
  %437 = vmatprep.subr.bf16.mxu0 0
  %438 = vmatpush1.bf16.msra.mxu0 %v328
  %439 = vmatprep.subr.bf16.mxu0 0
  %440 = vmatpush1.bf16.msra.mxu0 %v327
  %441 = vmatprep.subr.bf16.mxu0 0
  %442 = vmatpush1.bf16.msra.mxu0 %v326
  %443 = vmatprep.subr.bf16.mxu0 0
  %444 = vmatpush1.bf16.msra.mxu0 %v325
  %445 = vmatprep.subr.bf16.mxu0 0
  %446 = vmatpush1.bf16.msra.mxu0 %v324
  %447 = vmatprep.subr.bf16.mxu0 0
  %448 = vmatpush1.bf16.msra.mxu0 %v323
  %449 = vmatprep.subr.bf16.mxu0 0
  %450 = vmatpush1.bf16.msra.mxu0 %v322
  %451 = vmatprep.subr.bf16.mxu0 0
  %452 = vmatpush2.bf16.msra.mxu0 %v337
  %453 = vmatprep.subr.bf16.mxu0 0
  %454 = vmatpush2.bf16.msra.mxu0 %v336
  %455 = vmatprep.subr.bf16.mxu0 0
  %456 = vmatpush2.bf16.msra.mxu0 %v335
  %457 = vmatprep.subr.bf16.mxu0 0
  %458 = vmatpush2.bf16.msra.mxu0 %v334
  %459 = vmatprep.subr.bf16.mxu0 0
  %460 = vmatpush2.bf16.msra.mxu0 %v333
  %461 = vmatprep.subr.bf16.mxu0 0
  %462 = vmatpush2.bf16.msra.mxu0 %v332
  %463 = vmatprep.subr.bf16.mxu0 0
  %464 = vmatpush2.bf16.msra.mxu0 %v331
  %465 = vmatprep.subr.bf16.mxu0 0
  %466 = vmatpush2.bf16.msra.mxu0 %v330
  %467 = vmatprep.mubr.bf16.mxu0 %v149
  %468 = vmatmul.mubr.bf16.gmra.mxu0 %v148
  %v469 = vpop.f32.mrf.mxu0
  %v470 = vadd.f32 %v405, %v469
  %v471 = vpop.f32.mrf.mxu0
  %v472 = vpop.f32.mrf.mxu0
  %v473 = vadd.f32 %v408, %v472
  %v474 = vpop.f32.mrf.mxu0
  %475 = vmatprep.mubr.bf16.mxu0 %v153
  %476 = vmatmul.mubr.bf16.gmra.mxu0 %v152
  %v477 = vpop.f32.mrf.mxu0
  %v478 = vadd.f32 %v413, %v477
  %v479 = vpop.f32.mrf.mxu0
  %v480 = vpop.f32.mrf.mxu0
  %v481 = vadd.f32 %v416, %v480
  %v482 = vpop.f32.mrf.mxu0
  %483 = vmatprep.mubr.bf16.mxu0 %v157
  %484 = vmatmul.mubr.bf16.gmra.mxu0 %v156
  %v485 = vpop.f32.mrf.mxu0
  %v486 = vadd.f32 %v421, %v485
  %v487 = vpop.f32.mrf.mxu0
  %v488 = vpop.f32.mrf.mxu0
  %v489 = vadd.f32 %v424, %v488
  %v490 = vpop.f32.mrf.mxu0
  %491 = vmatprep.mubr.bf16.mxu0 %v161
  %492 = vmatmul.mubr.bf16.gmra.mxu0 %v160
  %v493 = vpop.f32.mrf.mxu0
  %v494 = vadd.f32 %v429, %v493
  %v495 = vpop.f32.mrf.mxu0
  %v496 = vpop.f32.mrf.mxu0
  %v497 = vadd.f32 %v432, %v496
  %v498 = vpop.f32.mrf.mxu0
  %499 = vdwg.mxu0
  %500 = vadd.xlane.f32.xlu0 %v470
  %v501 = vpop.xlane.xlu0 %500
  %502 = vadd.xlane.f32.xlu0 %v473
  %v503 = vpop.xlane.xlu0 %502
  %504 = vadd.xlane.f32.xlu0 %v478
  %v505 = vpop.xlane.xlu0 %504
  %506 = vadd.xlane.f32.xlu0 %v481
  %v507 = vpop.xlane.xlu0 %506
  %508 = vadd.xlane.f32.xlu0 %v486
  %v509 = vpop.xlane.xlu0 %508
  %510 = vadd.xlane.f32.xlu0 %v489
  %v511 = vpop.xlane.xlu0 %510
  %512 = vadd.xlane.f32.xlu0 %v494
  %v513 = vpop.xlane.xlu0 %512
  %514 = vadd.xlane.f32.xlu0 %v497
  %v515 = vpop.xlane.xlu0 %514
  %v516 = vrcp.pop 128.0
  %v517 = vmul.f32 %v501, %v516
  %v518 = vmul.f32 %v503, %v516
  %v519 = vmul.f32 %v505, %v516
  %v520 = vmul.f32 %v507, %v516
  %v521 = vmul.f32 %v509, %v516
  %v522 = vmul.f32 %v511, %v516
  %v523 = vmul.f32 %v513, %v516
  %v524 = vmul.f32 %v515, %v516
  %v525 = vsub.f32 %v470, %v517
  %v526 = vsub.f32 %v473, %v518
  %v527 = vsub.f32 %v478, %v519
  %v528 = vsub.f32 %v481, %v520
  %v529 = vsub.f32 %v486, %v521
  %v530 = vsub.f32 %v489, %v522
  %v531 = vsub.f32 %v494, %v523
  %v532 = vsub.f32 %v497, %v524
  %v533 = vmul.f32 %v525, %v525
  %v534 = vmul.f32 %v526, %v526
  %v535 = vmul.f32 %v527, %v527
  %v536 = vmul.f32 %v528, %v528
  %v537 = vmul.f32 %v529, %v529
  %v538 = vmul.f32 %v530, %v530
  %v539 = vmul.f32 %v531, %v531
  %v540 = vmul.f32 %v532, %v532
  %541 = vadd.xlane.f32.xlu0 %v533
  %v542 = vpop.xlane.xlu0 %541
  %543 = vadd.xlane.f32.xlu0 %v534
  %v544 = vpop.xlane.xlu0 %543
  %545 = vadd.xlane.f32.xlu0 %v535
  %v546 = vpop.xlane.xlu0 %545
  %547 = vadd.xlane.f32.xlu0 %v536
  %v548 = vpop.xlane.xlu0 %547
  %549 = vadd.xlane.f32.xlu0 %v537
  %v550 = vpop.xlane.xlu0 %549
  %551 = vadd.xlane.f32.xlu0 %v538
  %v552 = vpop.xlane.xlu0 %551
  %553 = vadd.xlane.f32.xlu0 %v539
  %v554 = vpop.xlane.xlu0 %553
  %555 = vadd.xlane.f32.xlu0 %v540
  %v556 = vpop.xlane.xlu0 %555
  %v557 = vmul.f32 %v542, %v516
  %v558 = vmul.f32 %v544, %v516
  %v559 = vmul.f32 %v546, %v516
  %v560 = vmul.f32 %v548, %v516
  %v561 = vmul.f32 %v550, %v516
  %v562 = vmul.f32 %v552, %v516
  %v563 = vmul.f32 %v554, %v516
  %v564 = vmul.f32 %v556, %v516
  %v565 = vadd.f32 %v557, 1e-05
  %v566 = vadd.f32 %v558, 1e-05
  %v567 = vadd.f32 %v559, 1e-05
  %v568 = vadd.f32 %v560, 1e-05
  %v569 = vadd.f32 %v561, 1e-05
  %v570 = vadd.f32 %v562, 1e-05
  %v571 = vadd.f32 %v563, 1e-05
  %v572 = vadd.f32 %v564, 1e-05
  %v573 = vrsqrt.pop %v565
  %v574 = vrsqrt.pop %v566
  %v575 = vrsqrt.pop %v567
  %v576 = vrsqrt.pop %v568
  %v577 = vrsqrt.pop %v569
  %v578 = vrsqrt.pop %v570
  %v579 = vrsqrt.pop %v571
  %v580 = vrsqrt.pop %v572
  %v581 = vmul.f32 %v525, %v573
  %v582 = vmul.f32 %v526, %v574
  %v583 = vmul.f32 %v527, %v575
  %v584 = vmul.f32 %v528, %v576
  %v585 = vmul.f32 %v529, %v577
  %v586 = vmul.f32 %v530, %v578
  %v587 = vmul.f32 %v531, %v579
  %v588 = vmul.f32 %v532, %v580
  %v589 = vld [vmem:[%s2] sm:$0xff]
  %v590 = vld [vmem:[%s2 + $0x8] sm:$0xff]
  %v591 = vld [vmem:[%s2 + $0x10] sm:$0xff]
  %v592 = vld [vmem:[%s2 + $0x18] sm:$0xff]
  %v593 = vld [vmem:[%s2 + $0x20] sm:$0xff]
  %v594 = vld [vmem:[%s2 + $0x28] sm:$0xff]
  %v595 = vld [vmem:[%s2 + $0x30] sm:$0xff]
  %v596 = vld [vmem:[%s2 + $0x38] sm:$0xff]
  %598 = vset.pattern.permute.xlu0 0
  %599 = vperm.xlu0 %598, %v589
  %v600 = vpop.permute.xlu0 %599
  %603 = vset.pattern.permute.xlu0 0
  %604 = vperm.xlu0 %603, %v590
  %v605 = vpop.permute.xlu0 %604
  %608 = vset.pattern.permute.xlu0 0
  %609 = vperm.xlu0 %608, %v591
  %v610 = vpop.permute.xlu0 %609
  %613 = vset.pattern.permute.xlu0 0
  %614 = vperm.xlu0 %613, %v592
  %v615 = vpop.permute.xlu0 %614
  %618 = vset.pattern.permute.xlu0 0
  %619 = vperm.xlu0 %618, %v593
  %v620 = vpop.permute.xlu0 %619
  %623 = vset.pattern.permute.xlu0 0
  %624 = vperm.xlu0 %623, %v594
  %v625 = vpop.permute.xlu0 %624
  %628 = vset.pattern.permute.xlu0 0
  %629 = vperm.xlu0 %628, %v595
  %v630 = vpop.permute.xlu0 %629
  %633 = vset.pattern.permute.xlu0 0
  %634 = vperm.xlu0 %633, %v596
  %v635 = vpop.permute.xlu0 %634
  %v637 = vmul.f32 %v581, %v600
  %v638 = vmul.f32 %v582, %v605
  %v639 = vmul.f32 %v583, %v610
  %v640 = vmul.f32 %v584, %v615
  %v641 = vmul.f32 %v585, %v620
  %v642 = vmul.f32 %v586, %v625
  %v643 = vmul.f32 %v587, %v630
  %v644 = vmul.f32 %v588, %v635
  %v645 = vld [vmem:[%s3] sm:$0xff]
  %v646 = vld [vmem:[%s3 + $0x8] sm:$0xff]
  %v647 = vld [vmem:[%s3 + $0x10] sm:$0xff]
  %v648 = vld [vmem:[%s3 + $0x18] sm:$0xff]
  %v649 = vld [vmem:[%s3 + $0x20] sm:$0xff]
  %v650 = vld [vmem:[%s3 + $0x28] sm:$0xff]
  %v651 = vld [vmem:[%s3 + $0x30] sm:$0xff]
  %v652 = vld [vmem:[%s3 + $0x38] sm:$0xff]
  %654 = vset.pattern.permute.xlu0 0
  %655 = vperm.xlu0 %654, %v645
  %v656 = vpop.permute.xlu0 %655
  %659 = vset.pattern.permute.xlu0 0
  %660 = vperm.xlu0 %659, %v646
  %v661 = vpop.permute.xlu0 %660
  %664 = vset.pattern.permute.xlu0 0
  %665 = vperm.xlu0 %664, %v647
  %v666 = vpop.permute.xlu0 %665
  %669 = vset.pattern.permute.xlu0 0
  %670 = vperm.xlu0 %669, %v648
  %v671 = vpop.permute.xlu0 %670
  %674 = vset.pattern.permute.xlu0 0
  %675 = vperm.xlu0 %674, %v649
  %v676 = vpop.permute.xlu0 %675
  %679 = vset.pattern.permute.xlu0 0
  %680 = vperm.xlu0 %679, %v650
  %v681 = vpop.permute.xlu0 %680
  %684 = vset.pattern.permute.xlu0 0
  %685 = vperm.xlu0 %684, %v651
  %v686 = vpop.permute.xlu0 %685
  %689 = vset.pattern.permute.xlu0 0
  %690 = vperm.xlu0 %689, %v652
  %v691 = vpop.permute.xlu0 %690
  %v693 = vadd.f32 %v637, %v656
  %v694 = vadd.f32 %v638, %v661
  %v695 = vadd.f32 %v639, %v666
  %v696 = vadd.f32 %v640, %v671
  %v697 = vadd.f32 %v641, %v676
  %v698 = vadd.f32 %v642, %v681
  %v699 = vadd.f32 %v643, %v686
  %v700 = vadd.f32 %v644, %v691
  %vm701 = vcmp.ge.f32.partialorder %v693, 0.0
  %vm702 = vcmp.ge.f32.partialorder %v694, 0.0
  %vm703 = vcmp.ge.f32.partialorder %v695, 0.0
  %vm704 = vcmp.ge.f32.partialorder %v696, 0.0
  %vm705 = vcmp.ge.f32.partialorder %v697, 0.0
  %vm706 = vcmp.ge.f32.partialorder %v698, 0.0
  %vm707 = vcmp.ge.f32.partialorder %v699, 0.0
  %vm708 = vcmp.ge.f32.partialorder %v700, 0.0
  %v709 = vmul.f32 %v693, 0.2
  %v710 = vmul.f32 %v694, 0.2
  %v711 = vmul.f32 %v695, 0.2
  %v712 = vmul.f32 %v696, 0.2
  %v713 = vmul.f32 %v697, 0.2
  %v714 = vmul.f32 %v698, 0.2
  %v715 = vmul.f32 %v699, 0.2
  %v716 = vmul.f32 %v700, 0.2
  %v717 = vsel %vm701, %v693, %v709
  %v718 = vsel %vm702, %v694, %v710
  %v719 = vsel %vm703, %v695, %v711
  %v720 = vsel %vm704, %v696, %v712
  %v721 = vsel %vm705, %v697, %v713
  %v722 = vsel %vm706, %v698, %v714
  %v723 = vsel %vm707, %v699, %v715
  %v724 = vsel %vm708, %v700, %v716
  %v725 = vpack.c.bf16 %v718, %v717
  %v726 = vpack.c.bf16 %v720, %v719
  %v727 = vpack.c.bf16 %v722, %v721
  %v728 = vpack.c.bf16 %v724, %v723
  %v733 = vunpack.c.l.b16 %v725
  %v734 = vunpack.c.h.b16 %v725
  %v735 = vunpack.c.l.b16 %v726
  %v736 = vunpack.c.h.b16 %v726
  %v737 = vunpack.c.l.b16 %v727
  %v738 = vunpack.c.h.b16 %v727
  %v739 = vunpack.c.l.b16 %v728
  %v740 = vunpack.c.h.b16 %v728
  %v741 = vpack.c.b16 %v733, %v733
  %v742 = vpack.c.b16 %v734, %v734
  %v743 = vpack.c.b16 %v735, %v735
  %v744 = vpack.c.b16 %v736, %v736
  %v745 = vpack.c.b16 %v737, %v737
  %v746 = vpack.c.b16 %v738, %v738
  %v747 = vpack.c.b16 %v739, %v739
  %v748 = vpack.c.b16 %v740, %v740
  %757 = vst [vmem:[%s4] sm:$0xf] %v741
  %758 = vst [vmem:[%s4 + $0x4] sm:$0xf] %v742
  %759 = vst [vmem:[%s4 + $0x8] sm:$0xf] %v743
  %760 = vst [vmem:[%s4 + $0xc] sm:$0xf] %v744
  %761 = vst [vmem:[%s4 + $0x10] sm:$0xf] %v745
  %762 = vst [vmem:[%s4 + $0x14] sm:$0xf] %v746
  %763 = vst [vmem:[%s4 + $0x18] sm:$0xf] %v747
  %764 = vst [vmem:[%s4 + $0x1c] sm:$0xf] %v748
  // Predicated region
  $region18: #{discriminator_forward.9} parent=0 // pred_check
    _
  $region19: #{discriminator_forward.9} parent=0 // pred_check_branch
    %766 = sbr.rel (0) target = $region21
  $region20: #{discriminator_forward.9} parent=0 // pred_region
    _
  $region21: #{discriminator_forward.9} parent=0 // pred_fallthru
    _
  // Predicated region
  $region22: #{discriminator_forward.9} parent=0 // pred_check
    _
  $region23: #{discriminator_forward.9} parent=0 // pred_check_branch
    %768 = sbr.rel (0) target = $region25
  $region24: #{discriminator_forward.9} parent=0 // pred_region
    _
  $region25: #{discriminator_forward.9} parent=0 // pred_fallthru
    _

// kernel: discriminator_forward.10
$region0: #{discriminator_forward.10}
  #allocation0 [shape = 'u32[]', space=smem, size = 0x4, offset = 0x4, fixed_abs, tag = 'smem constant byte address 0x4 - core index']
  #allocation1 [shape = 'u32[144,128]{1,0:T(1,128)}', space=vmem, size = 0x12000, scoped, tag = 'internal scratch']
  %s0 = inlined_call_operand.vmem [shape: bf16[128,1024], index: 0, kind: input, shape index: {}]
  %s1 = inlined_call_operand.vmem [shape: bf16[1024,32], index: 1, kind: input, shape index: {}]
  %s2 = inlined_call_operand.vmem [shape: f32[128,1], index: 2, kind: input, shape index: {}]
  %s3 = inlined_call_operand.vmem [shape: f32[128,1], index: 3, kind: input, shape index: {}]
  %s4 = inlined_call_operand.vmem [shape: bf16[128,32], index: 4, kind: output, shape index: {}]
  %s5 = sld [smem:[#allocation0]]
  $region26: #{discriminator_forward.10} parent=0
    _
  %s7 = ssub.s32 1, %s5
  %s8 = scalar_select 0, %s7, %s5
  // Predicated region
  $region2: #{discriminator_forward.10} parent=0 // pred_check
    _
  $region3: #{discriminator_forward.10} parent=0 // pred_check_branch
    %10 = sbr.rel (0) target = $region5
  $region4: #{discriminator_forward.10} parent=0 // pred_region
    _
  $region5: #{discriminator_forward.10} parent=0 // pred_fallthru
    _
  // Predicated region
  $region6: #{discriminator_forward.10} parent=0 // pred_check
    _
  $region7: #{discriminator_forward.10} parent=0 // pred_check_branch
    %12 = sbr.rel (0) target = $region9
  $region8: #{discriminator_forward.10} parent=0 // pred_region
    _
  $region9: #{discriminator_forward.10} parent=0 // pred_fallthru
    _
  // Predicated region
  $region10: #{discriminator_forward.10} parent=0 // pred_check
    _
  $region11: #{discriminator_forward.10} parent=0 // pred_check_branch
    %14 = sbr.rel (0) target = $region13
  $region12: #{discriminator_forward.10} parent=0 // pred_region
    _
  $region13: #{discriminator_forward.10} parent=0 // pred_fallthru
    _
  // Predicated region
  $region14: #{discriminator_forward.10} parent=0 // pred_check
    _
  $region15: #{discriminator_forward.10} parent=0 // pred_check_branch
    %16 = sbr.rel (0) target = $region17
  $region16: #{discriminator_forward.10} parent=0 // pred_region
    _
  $region17: #{discriminator_forward.10} parent=0 // pred_fallthru
    _
  %v18 = vld [vmem:[%s0] sm:$0xff]
  %v19 = vld [vmem:[%s0 + $0x8] sm:$0xff]
  %v20 = vld [vmem:[%s0 + $0x10] sm:$0xff]
  %v21 = vld [vmem:[%s0 + $0x18] sm:$0xff]
  %v22 = vld [vmem:[%s0 + $0x20] sm:$0xff]
  %v23 = vld [vmem:[%s0 + $0x28] sm:$0xff]
  %v24 = vld [vmem:[%s0 + $0x30] sm:$0xff]
  %v25 = vld [vmem:[%s0 + $0x38] sm:$0xff]
  %v26 = vld [vmem:[%s0 + $0x40] sm:$0xff]
  %v27 = vld [vmem:[%s0 + $0x48] sm:$0xff]
  %v28 = vld [vmem:[%s0 + $0x50] sm:$0xff]
  %v29 = vld [vmem:[%s0 + $0x58] sm:$0xff]
  %v30 = vld [vmem:[%s0 + $0x60] sm:$0xff]
  %v31 = vld [vmem:[%s0 + $0x68] sm:$0xff]
  %v32 = vld [vmem:[%s0 + $0x70] sm:$0xff]
  %v33 = vld [vmem:[%s0 + $0x78] sm:$0xff]
  %v34 = vld [vmem:[%s0 + $0x80] sm:$0xff]
  %v35 = vld [vmem:[%s0 + $0x88] sm:$0xff]
  %v36 = vld [vmem:[%s0 + $0x90] sm:$0xff]
  %v37 = vld [vmem:[%s0 + $0x98] sm:$0xff]
  %v38 = vld [vmem:[%s0 + $0xa0] sm:$0xff]
  %v39 = vld [vmem:[%s0 + $0xa8] sm:$0xff]
  %v40 = vld [vmem:[%s0 + $0xb0] sm:$0xff]
  %v41 = vld [vmem:[%s0 + $0xb8] sm:$0xff]
  %v42 = vld [vmem:[%s0 + $0xc0] sm:$0xff]
  %v43 = vld [vmem:[%s0 + $0xc8] sm:$0xff]
  %v44 = vld [vmem:[%s0 + $0xd0] sm:$0xff]
  %v45 = vld [vmem:[%s0 + $0xd8] sm:$0xff]
  %v46 = vld [vmem:[%s0 + $0xe0] sm:$0xff]
  %v47 = vld [vmem:[%s0 + $0xe8] sm:$0xff]
  %v48 = vld [vmem:[%s0 + $0xf0] sm:$0xff]
  %v49 = vld [vmem:[%s0 + $0xf8] sm:$0xff]
  %v50 = vld [vmem:[%s0 + $0x100] sm:$0xff]
  %v51 = vld [vmem:[%s0 + $0x108] sm:$0xff]
  %v52 = vld [vmem:[%s0 + $0x110] sm:$0xff]
  %v53 = vld [vmem:[%s0 + $0x118] sm:$0xff]
  %v54 = vld [vmem:[%s0 + $0x120] sm:$0xff]
  %v55 = vld [vmem:[%s0 + $0x128] sm:$0xff]
  %v56 = vld [vmem:[%s0 + $0x130] sm:$0xff]
  %v57 = vld [vmem:[%s0 + $0x138] sm:$0xff]
  %v58 = vld [vmem:[%s0 + $0x140] sm:$0xff]
  %v59 = vld [vmem:[%s0 + $0x148] sm:$0xff]
  %v60 = vld [vmem:[%s0 + $0x150] sm:$0xff]
  %v61 = vld [vmem:[%s0 + $0x158] sm:$0xff]
  %v62 = vld [vmem:[%s0 + $0x160] sm:$0xff]
  %v63 = vld [vmem:[%s0 + $0x168] sm:$0xff]
  %v64 = vld [vmem:[%s0 + $0x170] sm:$0xff]
  %v65 = vld [vmem:[%s0 + $0x178] sm:$0xff]
  %v66 = vld [vmem:[%s0 + $0x180] sm:$0xff]
  %v67 = vld [vmem:[%s0 + $0x188] sm:$0xff]
  %v68 = vld [vmem:[%s0 + $0x190] sm:$0xff]
  %v69 = vld [vmem:[%s0 + $0x198] sm:$0xff]
  %v70 = vld [vmem:[%s0 + $0x1a0] sm:$0xff]
  %v71 = vld [vmem:[%s0 + $0x1a8] sm:$0xff]
  %v72 = vld [vmem:[%s0 + $0x1b0] sm:$0xff]
  %v73 = vld [vmem:[%s0 + $0x1b8] sm:$0xff]
  %v74 = vld [vmem:[%s0 + $0x1c0] sm:$0xff]
  %v75 = vld [vmem:[%s0 + $0x1c8] sm:$0xff]
  %v76 = vld [vmem:[%s0 + $0x1d0] sm:$0xff]
  %v77 = vld [vmem:[%s0 + $0x1d8] sm:$0xff]
  %v78 = vld [vmem:[%s0 + $0x1e0] sm:$0xff]
  %v79 = vld [vmem:[%s0 + $0x1e8] sm:$0xff]
  %v80 = vld [vmem:[%s0 + $0x1f0] sm:$0xff]
  %v81 = vld [vmem:[%s0 + $0x1f8] sm:$0xff]
  %v82 = vld [vmem:[%s1] sm:$0xf]
  %v83 = vld [vmem:[%s1 + $0x4] sm:$0xf]
  %v84 = vld [vmem:[%s1 + $0x8] sm:$0xf]
  %v85 = vld [vmem:[%s1 + $0xc] sm:$0xf]
  %v86 = vld [vmem:[%s1 + $0x10] sm:$0xf]
  %v87 = vld [vmem:[%s1 + $0x14] sm:$0xf]
  %v88 = vld [vmem:[%s1 + $0x18] sm:$0xf]
  %v89 = vld [vmem:[%s1 + $0x1c] sm:$0xf]
  %v90 = vld [vmem:[%s1 + $0x20] sm:$0xf]
  %v91 = vld [vmem:[%s1 + $0x24] sm:$0xf]
  %v92 = vld [vmem:[%s1 + $0x28] sm:$0xf]
  %v93 = vld [vmem:[%s1 + $0x2c] sm:$0xf]
  %v94 = vld [vmem:[%s1 + $0x30] sm:$0xf]
  %v95 = vld [vmem:[%s1 + $0x34] sm:$0xf]
  %v96 = vld [vmem:[%s1 + $0x38] sm:$0xf]
  %v97 = vld [vmem:[%s1 + $0x3c] sm:$0xf]
  %v98 = vld [vmem:[%s1 + $0x40] sm:$0xf]
  %v99 = vld [vmem:[%s1 + $0x44] sm:$0xf]
  %v100 = vld [vmem:[%s1 + $0x48] sm:$0xf]
  %v101 = vld [vmem:[%s1 + $0x4c] sm:$0xf]
  %v102 = vld [vmem:[%s1 + $0x50] sm:$0xf]
  %v103 = vld [vmem:[%s1 + $0x54] sm:$0xf]
  %v104 = vld [vmem:[%s1 + $0x58] sm:$0xf]
  %v105 = vld [vmem:[%s1 + $0x5c] sm:$0xf]
  %v106 = vld [vmem:[%s1 + $0x60] sm:$0xf]
  %v107 = vld [vmem:[%s1 + $0x64] sm:$0xf]
  %v108 = vld [vmem:[%s1 + $0x68] sm:$0xf]
  %v109 = vld [vmem:[%s1 + $0x6c] sm:$0xf]
  %v110 = vld [vmem:[%s1 + $0x70] sm:$0xf]
  %v111 = vld [vmem:[%s1 + $0x74] sm:$0xf]
  %v112 = vld [vmem:[%s1 + $0x78] sm:$0xf]
  %v113 = vld [vmem:[%s1 + $0x7c] sm:$0xf]
  %v114 = vld [vmem:[%s1 + $0x80] sm:$0xf]
  %v115 = vld [vmem:[%s1 + $0x84] sm:$0xf]
  %v116 = vld [vmem:[%s1 + $0x88] sm:$0xf]
  %v117 = vld [vmem:[%s1 + $0x8c] sm:$0xf]
  %v118 = vld [vmem:[%s1 + $0x90] sm:$0xf]
  %v119 = vld [vmem:[%s1 + $0x94] sm:$0xf]
  %v120 = vld [vmem:[%s1 + $0x98] sm:$0xf]
  %v121 = vld [vmem:[%s1 + $0x9c] sm:$0xf]
  %v122 = vld [vmem:[%s1 + $0xa0] sm:$0xf]
  %v123 = vld [vmem:[%s1 + $0xa4] sm:$0xf]
  %v124 = vld [vmem:[%s1 + $0xa8] sm:$0xf]
  %v125 = vld [vmem:[%s1 + $0xac] sm:$0xf]
  %v126 = vld [vmem:[%s1 + $0xb0] sm:$0xf]
  %v127 = vld [vmem:[%s1 + $0xb4] sm:$0xf]
  %v128 = vld [vmem:[%s1 + $0xb8] sm:$0xf]
  %v129 = vld [vmem:[%s1 + $0xbc] sm:$0xf]
  %v130 = vld [vmem:[%s1 + $0xc0] sm:$0xf]
  %v131 = vld [vmem:[%s1 + $0xc4] sm:$0xf]
  %v132 = vld [vmem:[%s1 + $0xc8] sm:$0xf]
  %v133 = vld [vmem:[%s1 + $0xcc] sm:$0xf]
  %v134 = vld [vmem:[%s1 + $0xd0] sm:$0xf]
  %v135 = vld [vmem:[%s1 + $0xd4] sm:$0xf]
  %v136 = vld [vmem:[%s1 + $0xd8] sm:$0xf]
  %v137 = vld [vmem:[%s1 + $0xdc] sm:$0xf]
  %v138 = vld [vmem:[%s1 + $0xe0] sm:$0xf]
  %v139 = vld [vmem:[%s1 + $0xe4] sm:$0xf]
  %v140 = vld [vmem:[%s1 + $0xe8] sm:$0xf]
  %v141 = vld [vmem:[%s1 + $0xec] sm:$0xf]
  %v142 = vld [vmem:[%s1 + $0xf0] sm:$0xf]
  %v143 = vld [vmem:[%s1 + $0xf4] sm:$0xf]
  %v144 = vld [vmem:[%s1 + $0xf8] sm:$0xf]
  %v145 = vld [vmem:[%s1 + $0xfc] sm:$0xf]
  %v146 = vld [vmem:[%s1 + $0x100] sm:$0xf]
  %v147 = vld [vmem:[%s1 + $0x104] sm:$0xf]
  %v148 = vld [vmem:[%s1 + $0x108] sm:$0xf]
  %v149 = vld [vmem:[%s1 + $0x10c] sm:$0xf]
  %v150 = vld [vmem:[%s1 + $0x110] sm:$0xf]
  %v151 = vld [vmem:[%s1 + $0x114] sm:$0xf]
  %v152 = vld [vmem:[%s1 + $0x118] sm:$0xf]
  %v153 = vld [vmem:[%s1 + $0x11c] sm:$0xf]
  %v154 = vld [vmem:[%s1 + $0x120] sm:$0xf]
  %v155 = vld [vmem:[%s1 + $0x124] sm:$0xf]
  %v156 = vld [vmem:[%s1 + $0x128] sm:$0xf]
  %v157 = vld [vmem:[%s1 + $0x12c] sm:$0xf]
  %v158 = vld [vmem:[%s1 + $0x130] sm:$0xf]
  %v159 = vld [vmem:[%s1 + $0x134] sm:$0xf]
  %v160 = vld [vmem:[%s1 + $0x138] sm:$0xf]
  %v161 = vld [vmem:[%s1 + $0x13c] sm:$0xf]
  %v162 = vld [vmem:[%s1 + $0x140] sm:$0xf]
  %v163 = vld [vmem:[%s1 + $0x144] sm:$0xf]
  %v164 = vld [vmem:[%s1 + $0x148] sm:$0xf]
  %v165 = vld [vmem:[%s1 + $0x14c] sm:$0xf]
  %v166 = vld [vmem:[%s1 + $0x150] sm:$0xf]
  %v167 = vld [vmem:[%s1 + $0x154] sm:$0xf]
  %v168 = vld [vmem:[%s1 + $0x158] sm:$0xf]
  %v169 = vld [vmem:[%s1 + $0x15c] sm:$0xf]
  %v170 = vld [vmem:[%s1 + $0x160] sm:$0xf]
  %v171 = vld [vmem:[%s1 + $0x164] sm:$0xf]
  %v172 = vld [vmem:[%s1 + $0x168] sm:$0xf]
  %v173 = vld [vmem:[%s1 + $0x16c] sm:$0xf]
  %v174 = vld [vmem:[%s1 + $0x170] sm:$0xf]
  %v175 = vld [vmem:[%s1 + $0x174] sm:$0xf]
  %v176 = vld [vmem:[%s1 + $0x178] sm:$0xf]
  %v177 = vld [vmem:[%s1 + $0x17c] sm:$0xf]
  %v178 = vld [vmem:[%s1 + $0x180] sm:$0xf]
  %v179 = vld [vmem:[%s1 + $0x184] sm:$0xf]
  %v180 = vld [vmem:[%s1 + $0x188] sm:$0xf]
  %v181 = vld [vmem:[%s1 + $0x18c] sm:$0xf]
  %v182 = vld [vmem:[%s1 + $0x190] sm:$0xf]
  %v183 = vld [vmem:[%s1 + $0x194] sm:$0xf]
  %v184 = vld [vmem:[%s1 + $0x198] sm:$0xf]
  %v185 = vld [vmem:[%s1 + $0x19c] sm:$0xf]
  %v186 = vld [vmem:[%s1 + $0x1a0] sm:$0xf]
  %v187 = vld [vmem:[%s1 + $0x1a4] sm:$0xf]
  %v188 = vld [vmem:[%s1 + $0x1a8] sm:$0xf]
  %v189 = vld [vmem:[%s1 + $0x1ac] sm:$0xf]
  %v190 = vld [vmem:[%s1 + $0x1b0] sm:$0xf]
  %v191 = vld [vmem:[%s1 + $0x1b4] sm:$0xf]
  %v192 = vld [vmem:[%s1 + $0x1b8] sm:$0xf]
  %v193 = vld [vmem:[%s1 + $0x1bc] sm:$0xf]
  %v194 = vld [vmem:[%s1 + $0x1c0] sm:$0xf]
  %v195 = vld [vmem:[%s1 + $0x1c4] sm:$0xf]
  %v196 = vld [vmem:[%s1 + $0x1c8] sm:$0xf]
  %v197 = vld [vmem:[%s1 + $0x1cc] sm:$0xf]
  %v198 = vld [vmem:[%s1 + $0x1d0] sm:$0xf]
  %v199 = vld [vmem:[%s1 + $0x1d4] sm:$0xf]
  %v200 = vld [vmem:[%s1 + $0x1d8] sm:$0xf]
  %v201 = vld [vmem:[%s1 + $0x1dc] sm:$0xf]
  %v202 = vld [vmem:[%s1 + $0x1e0] sm:$0xf]
  %v203 = vld [vmem:[%s1 + $0x1e4] sm:$0xf]
  %v204 = vld [vmem:[%s1 + $0x1e8] sm:$0xf]
  %v205 = vld [vmem:[%s1 + $0x1ec] sm:$0xf]
  %v206 = vld [vmem:[%s1 + $0x1f0] sm:$0xf]
  %v207 = vld [vmem:[%s1 + $0x1f4] sm:$0xf]
  %v208 = vld [vmem:[%s1 + $0x1f8] sm:$0xf]
  %v209 = vld [vmem:[%s1 + $0x1fc] sm:$0xf]
  %v274 = vunpack.c.l.b16 %v18
  %v275 = vunpack.c.h.b16 %v18
  %v276 = vunpack.c.l.b16 %v19
  %v277 = vunpack.c.h.b16 %v19
  %v278 = vunpack.c.l.b16 %v20
  %v279 = vunpack.c.h.b16 %v20
  %v280 = vunpack.c.l.b16 %v21
  %v281 = vunpack.c.h.b16 %v21
  %v282 = vunpack.c.l.b16 %v22
  %v283 = vunpack.c.h.b16 %v22
  %v284 = vunpack.c.l.b16 %v23
  %v285 = vunpack.c.h.b16 %v23
  %v286 = vunpack.c.l.b16 %v24
  %v287 = vunpack.c.h.b16 %v24
  %v288 = vunpack.c.l.b16 %v25
  %v289 = vunpack.c.h.b16 %v25
  %v290 = vunpack.c.l.b16 %v26
  %v291 = vunpack.c.h.b16 %v26
  %v292 = vunpack.c.l.b16 %v27
  %v293 = vunpack.c.h.b16 %v27
  %v294 = vunpack.c.l.b16 %v28
  %v295 = vunpack.c.h.b16 %v28
  %v296 = vunpack.c.l.b16 %v29
  %v297 = vunpack.c.h.b16 %v29
  %v298 = vunpack.c.l.b16 %v30
  %v299 = vunpack.c.h.b16 %v30
  %v300 = vunpack.c.l.b16 %v31
  %v301 = vunpack.c.h.b16 %v31
  %v302 = vunpack.c.l.b16 %v32
  %v303 = vunpack.c.h.b16 %v32
  %v304 = vunpack.c.l.b16 %v33
  %v305 = vunpack.c.h.b16 %v33
  %v306 = vunpack.c.l.b16 %v34
  %v307 = vunpack.c.h.b16 %v34
  %v308 = vunpack.c.l.b16 %v35
  %v309 = vunpack.c.h.b16 %v35
  %v310 = vunpack.c.l.b16 %v36
  %v311 = vunpack.c.h.b16 %v36
  %v312 = vunpack.c.l.b16 %v37
  %v313 = vunpack.c.h.b16 %v37
  %v314 = vunpack.c.l.b16 %v38
  %v315 = vunpack.c.h.b16 %v38
  %v316 = vunpack.c.l.b16 %v39
  %v317 = vunpack.c.h.b16 %v39
  %v318 = vunpack.c.l.b16 %v40
  %v319 = vunpack.c.h.b16 %v40
  %v320 = vunpack.c.l.b16 %v41
  %v321 = vunpack.c.h.b16 %v41
  %v322 = vunpack.c.l.b16 %v42
  %v323 = vunpack.c.h.b16 %v42
  %v324 = vunpack.c.l.b16 %v43
  %v325 = vunpack.c.h.b16 %v43
  %v326 = vunpack.c.l.b16 %v44
  %v327 = vunpack.c.h.b16 %v44
  %v328 = vunpack.c.l.b16 %v45
  %v329 = vunpack.c.h.b16 %v45
  %v330 = vunpack.c.l.b16 %v46
  %v331 = vunpack.c.h.b16 %v46
  %v332 = vunpack.c.l.b16 %v47
  %v333 = vunpack.c.h.b16 %v47
  %v334 = vunpack.c.l.b16 %v48
  %v335 = vunpack.c.h.b16 %v48
  %v336 = vunpack.c.l.b16 %v49
  %v337 = vunpack.c.h.b16 %v49
  %v338 = vunpack.c.l.b16 %v50
  %v339 = vunpack.c.h.b16 %v50
  %v340 = vunpack.c.l.b16 %v51
  %v341 = vunpack.c.h.b16 %v51
  %v342 = vunpack.c.l.b16 %v52
  %v343 = vunpack.c.h.b16 %v52
  %v344 = vunpack.c.l.b16 %v53
  %v345 = vunpack.c.h.b16 %v53
  %v346 = vunpack.c.l.b16 %v54
  %v347 = vunpack.c.h.b16 %v54
  %v348 = vunpack.c.l.b16 %v55
  %v349 = vunpack.c.h.b16 %v55
  %v350 = vunpack.c.l.b16 %v56
  %v351 = vunpack.c.h.b16 %v56
  %v352 = vunpack.c.l.b16 %v57
  %v353 = vunpack.c.h.b16 %v57
  %v354 = vunpack.c.l.b16 %v58
  %v355 = vunpack.c.h.b16 %v58
  %v356 = vunpack.c.l.b16 %v59
  %v357 = vunpack.c.h.b16 %v59
  %v358 = vunpack.c.l.b16 %v60
  %v359 = vunpack.c.h.b16 %v60
  %v360 = vunpack.c.l.b16 %v61
  %v361 = vunpack.c.h.b16 %v61
  %v362 = vunpack.c.l.b16 %v62
  %v363 = vunpack.c.h.b16 %v62
  %v364 = vunpack.c.l.b16 %v63
  %v365 = vunpack.c.h.b16 %v63
  %v366 = vunpack.c.l.b16 %v64
  %v367 = vunpack.c.h.b16 %v64
  %v368 = vunpack.c.l.b16 %v65
  %v369 = vunpack.c.h.b16 %v65
  %v370 = vunpack.c.l.b16 %v66
  %v371 = vunpack.c.h.b16 %v66
  %v372 = vunpack.c.l.b16 %v67
  %v373 = vunpack.c.h.b16 %v67
  %v374 = vunpack.c.l.b16 %v68
  %v375 = vunpack.c.h.b16 %v68
  %v376 = vunpack.c.l.b16 %v69
  %v377 = vunpack.c.h.b16 %v69
  %v378 = vunpack.c.l.b16 %v70
  %v379 = vunpack.c.h.b16 %v70
  %v380 = vunpack.c.l.b16 %v71
  %v381 = vunpack.c.h.b16 %v71
  %v382 = vunpack.c.l.b16 %v72
  %v383 = vunpack.c.h.b16 %v72
  %v384 = vunpack.c.l.b16 %v73
  %v385 = vunpack.c.h.b16 %v73
  %v386 = vunpack.c.l.b16 %v74
  %v387 = vunpack.c.h.b16 %v74
  %v388 = vunpack.c.l.b16 %v75
  %v389 = vunpack.c.h.b16 %v75
  %v390 = vunpack.c.l.b16 %v76
  %v391 = vunpack.c.h.b16 %v76
  %v392 = vunpack.c.l.b16 %v77
  %v393 = vunpack.c.h.b16 %v77
  %v394 = vunpack.c.l.b16 %v78
  %v395 = vunpack.c.h.b16 %v78
  %v396 = vunpack.c.l.b16 %v79
  %v397 = vunpack.c.h.b16 %v79
  %v398 = vunpack.c.l.b16 %v80
  %v399 = vunpack.c.h.b16 %v80
  %v400 = vunpack.c.l.b16 %v81
  %v401 = vunpack.c.h.b16 %v81
  %v402 = vpack.c.b16 %v282, %v274
  %v403 = vpack.c.b16 %v283, %v275
  %v404 = vpack.c.b16 %v284, %v276
  %v405 = vpack.c.b16 %v285, %v277
  %v406 = vpack.c.b16 %v286, %v278
  %v407 = vpack.c.b16 %v287, %v279
  %v408 = vpack.c.b16 %v288, %v280
  %v409 = vpack.c.b16 %v289, %v281
  %v410 = vpack.c.b16 %v298, %v290
  %v411 = vpack.c.b16 %v299, %v291
  %v412 = vpack.c.b16 %v300, %v292
  %v413 = vpack.c.b16 %v301, %v293
  %v414 = vpack.c.b16 %v302, %v294
  %v415 = vpack.c.b16 %v303, %v295
  %v416 = vpack.c.b16 %v304, %v296
  %v417 = vpack.c.b16 %v305, %v297
  %v418 = vpack.c.b16 %v314, %v306
  %v419 = vpack.c.b16 %v315, %v307
  %v420 = vpack.c.b16 %v316, %v308
  %v421 = vpack.c.b16 %v317, %v309
  %v422 = vpack.c.b16 %v318, %v310
  %v423 = vpack.c.b16 %v319, %v311
  %v424 = vpack.c.b16 %v320, %v312
  %v425 = vpack.c.b16 %v321, %v313
  %v426 = vpack.c.b16 %v330, %v322
  %v427 = vpack.c.b16 %v331, %v323
  %v428 = vpack.c.b16 %v332, %v324
  %v429 = vpack.c.b16 %v333, %v325
  %v430 = vpack.c.b16 %v334, %v326
  %v431 = vpack.c.b16 %v335, %v327
  %v432 = vpack.c.b16 %v336, %v328
  %v433 = vpack.c.b16 %v337, %v329
  %v434 = vpack.c.b16 %v346, %v338
  %v435 = vpack.c.b16 %v347, %v339
  %v436 = vpack.c.b16 %v348, %v340
  %v437 = vpack.c.b16 %v349, %v341
  %v438 = vpack.c.b16 %v350, %v342
  %v439 = vpack.c.b16 %v351, %v343
  %v440 = vpack.c.b16 %v352, %v344
  %v441 = vpack.c.b16 %v353, %v345
  %v442 = vpack.c.b16 %v362, %v354
  %v443 = vpack.c.b16 %v363, %v355
  %v444 = vpack.c.b16 %v364, %v356
  %v445 = vpack.c.b16 %v365, %v357
  %v446 = vpack.c.b16 %v366, %v358
  %v447 = vpack.c.b16 %v367, %v359
  %v448 = vpack.c.b16 %v368, %v360
  %v449 = vpack.c.b16 %v369, %v361
  %v450 = vpack.c.b16 %v378, %v370
  %v451 = vpack.c.b16 %v379, %v371
  %v452 = vpack.c.b16 %v380, %v372
  %v453 = vpack.c.b16 %v381, %v373
  %v454 = vpack.c.b16 %v382, %v374
  %v455 = vpack.c.b16 %v383, %v375
  %v456 = vpack.c.b16 %v384, %v376
  %v457 = vpack.c.b16 %v385, %v377
  %v458 = vpack.c.b16 %v394, %v386
  %v459 = vpack.c.b16 %v395, %v387
  %v460 = vpack.c.b16 %v396, %v388
  %v461 = vpack.c.b16 %v397, %v389
  %v462 = vpack.c.b16 %v398, %v390
  %v463 = vpack.c.b16 %v399, %v391
  %v464 = vpack.c.b16 %v400, %v392
  %v465 = vpack.c.b16 %v401, %v393
  %v658 = vunpack.c.l.b16 %v82
  %v659 = vunpack.c.l.b16 %v83
  %v660 = vunpack.c.l.b16 %v84
  %v661 = vunpack.c.l.b16 %v85
  %v662 = vunpack.c.l.b16 %v86
  %v663 = vunpack.c.l.b16 %v87
  %v664 = vunpack.c.l.b16 %v88
  %v665 = vunpack.c.l.b16 %v89
  %v666 = vunpack.c.l.b16 %v90
  %v667 = vunpack.c.l.b16 %v91
  %v668 = vunpack.c.l.b16 %v92
  %v669 = vunpack.c.l.b16 %v93
  %v670 = vunpack.c.l.b16 %v94
  %v671 = vunpack.c.l.b16 %v95
  %v672 = vunpack.c.l.b16 %v96
  %v673 = vunpack.c.l.b16 %v97
  %v674 = vunpack.c.l.b16 %v98
  %v675 = vunpack.c.l.b16 %v99
  %v676 = vunpack.c.l.b16 %v100
  %v677 = vunpack.c.l.b16 %v101
  %v678 = vunpack.c.l.b16 %v102
  %v679 = vunpack.c.l.b16 %v103
  %v680 = vunpack.c.l.b16 %v104
  %v681 = vunpack.c.l.b16 %v105
  %v682 = vunpack.c.l.b16 %v106
  %v683 = vunpack.c.l.b16 %v107
  %v684 = vunpack.c.l.b16 %v108
  %v685 = vunpack.c.l.b16 %v109
  %v686 = vunpack.c.l.b16 %v110
  %v687 = vunpack.c.l.b16 %v111
  %v688 = vunpack.c.l.b16 %v112
  %v689 = vunpack.c.l.b16 %v113
  %v690 = vunpack.c.l.b16 %v114
  %v691 = vunpack.c.l.b16 %v115
  %v692 = vunpack.c.l.b16 %v116
  %v693 = vunpack.c.l.b16 %v117
  %v694 = vunpack.c.l.b16 %v118
  %v695 = vunpack.c.l.b16 %v119
  %v696 = vunpack.c.l.b16 %v120
  %v697 = vunpack.c.l.b16 %v121
  %v698 = vunpack.c.l.b16 %v122
  %v699 = vunpack.c.l.b16 %v123
  %v700 = vunpack.c.l.b16 %v124
  %v701 = vunpack.c.l.b16 %v125
  %v702 = vunpack.c.l.b16 %v126
  %v703 = vunpack.c.l.b16 %v127
  %v704 = vunpack.c.l.b16 %v128
  %v705 = vunpack.c.l.b16 %v129
  %v706 = vunpack.c.l.b16 %v130
  %v707 = vunpack.c.l.b16 %v131
  %v708 = vunpack.c.l.b16 %v132
  %v709 = vunpack.c.l.b16 %v133
  %v710 = vunpack.c.l.b16 %v134
  %v711 = vunpack.c.l.b16 %v135
  %v712 = vunpack.c.l.b16 %v136
  %v713 = vunpack.c.l.b16 %v137
  %v714 = vunpack.c.l.b16 %v138
  %v715 = vunpack.c.l.b16 %v139
  %v716 = vunpack.c.l.b16 %v140
  %v717 = vunpack.c.l.b16 %v141
  %v718 = vunpack.c.l.b16 %v142
  %v719 = vunpack.c.l.b16 %v143
  %v720 = vunpack.c.l.b16 %v144
  %v721 = vunpack.c.l.b16 %v145
  %v722 = vunpack.c.l.b16 %v146
  %v723 = vunpack.c.l.b16 %v147
  %v724 = vunpack.c.l.b16 %v148
  %v725 = vunpack.c.l.b16 %v149
  %v726 = vunpack.c.l.b16 %v150
  %v727 = vunpack.c.l.b16 %v151
  %v728 = vunpack.c.l.b16 %v152
  %v729 = vunpack.c.l.b16 %v153
  %v730 = vunpack.c.l.b16 %v154
  %v731 = vunpack.c.l.b16 %v155
  %v732 = vunpack.c.l.b16 %v156
  %v733 = vunpack.c.l.b16 %v157
  %v734 = vunpack.c.l.b16 %v158
  %v735 = vunpack.c.l.b16 %v159
  %v736 = vunpack.c.l.b16 %v160
  %v737 = vunpack.c.l.b16 %v161
  %v738 = vunpack.c.l.b16 %v162
  %v739 = vunpack.c.l.b16 %v163
  %v740 = vunpack.c.l.b16 %v164
  %v741 = vunpack.c.l.b16 %v165
  %v742 = vunpack.c.l.b16 %v166
  %v743 = vunpack.c.l.b16 %v167
  %v744 = vunpack.c.l.b16 %v168
  %v745 = vunpack.c.l.b16 %v169
  %v746 = vunpack.c.l.b16 %v170
  %v747 = vunpack.c.l.b16 %v171
  %v748 = vunpack.c.l.b16 %v172
  %v749 = vunpack.c.l.b16 %v173
  %v750 = vunpack.c.l.b16 %v174
  %v751 = vunpack.c.l.b16 %v175
  %v752 = vunpack.c.l.b16 %v176
  %v753 = vunpack.c.l.b16 %v177
  %v754 = vunpack.c.l.b16 %v178
  %v755 = vunpack.c.l.b16 %v179
  %v756 = vunpack.c.l.b16 %v180
  %v757 = vunpack.c.l.b16 %v181
  %v758 = vunpack.c.l.b16 %v182
  %v759 = vunpack.c.l.b16 %v183
  %v760 = vunpack.c.l.b16 %v184
  %v761 = vunpack.c.l.b16 %v185
  %v762 = vunpack.c.l.b16 %v186
  %v763 = vunpack.c.l.b16 %v187
  %v764 = vunpack.c.l.b16 %v188
  %v765 = vunpack.c.l.b16 %v189
  %v766 = vunpack.c.l.b16 %v190
  %v767 = vunpack.c.l.b16 %v191
  %v768 = vunpack.c.l.b16 %v192
  %v769 = vunpack.c.l.b16 %v193
  %v770 = vunpack.c.l.b16 %v194
  %v771 = vunpack.c.l.b16 %v195
  %v772 = vunpack.c.l.b16 %v196
  %v773 = vunpack.c.l.b16 %v197
  %v774 = vunpack.c.l.b16 %v198
  %v775 = vunpack.c.l.b16 %v199
  %v776 = vunpack.c.l.b16 %v200
  %v777 = vunpack.c.l.b16 %v201
  %v778 = vunpack.c.l.b16 %v202
  %v779 = vunpack.c.l.b16 %v203
  %v780 = vunpack.c.l.b16 %v204
  %v781 = vunpack.c.l.b16 %v205
  %v782 = vunpack.c.l.b16 %v206
  %v783 = vunpack.c.l.b16 %v207
  %v784 = vunpack.c.l.b16 %v208
  %v785 = vunpack.c.l.b16 %v209
  %v786 = vpack.c.b16 %v659, %v658
  %v787 = vpack.c.b16 %v661, %v660
  %v788 = vpack.c.b16 %v663, %v662
  %v789 = vpack.c.b16 %v665, %v664
  %v790 = vpack.c.b16 %v667, %v666
  %v791 = vpack.c.b16 %v669, %v668
  %v792 = vpack.c.b16 %v671, %v670
  %v793 = vpack.c.b16 %v673, %v672
  %v794 = vpack.c.b16 %v675, %v674
  %v795 = vpack.c.b16 %v677, %v676
  %v796 = vpack.c.b16 %v679, %v678
  %v797 = vpack.c.b16 %v681, %v680
  %v798 = vpack.c.b16 %v683, %v682
  %v799 = vpack.c.b16 %v685, %v684
  %v800 = vpack.c.b16 %v687, %v686
  %v801 = vpack.c.b16 %v689, %v688
  %v802 = vpack.c.b16 %v691, %v690
  %v803 = vpack.c.b16 %v693, %v692
  %v804 = vpack.c.b16 %v695, %v694
  %v805 = vpack.c.b16 %v697, %v696
  %v806 = vpack.c.b16 %v699, %v698
  %v807 = vpack.c.b16 %v701, %v700
  %v808 = vpack.c.b16 %v703, %v702
  %v809 = vpack.c.b16 %v705, %v704
  %v810 = vpack.c.b16 %v707, %v706
  %v811 = vpack.c.b16 %v709, %v708
  %v812 = vpack.c.b16 %v711, %v710
  %v813 = vpack.c.b16 %v713, %v712
  %v814 = vpack.c.b16 %v715, %v714
  %v815 = vpack.c.b16 %v717, %v716
  %v816 = vpack.c.b16 %v719, %v718
  %v817 = vpack.c.b16 %v721, %v720
  %v818 = vpack.c.b16 %v723, %v722
  %v819 = vpack.c.b16 %v725, %v724
  %v820 = vpack.c.b16 %v727, %v726
  %v821 = vpack.c.b16 %v729, %v728
  %v822 = vpack.c.b16 %v731, %v730
  %v823 = vpack.c.b16 %v733, %v732
  %v824 = vpack.c.b16 %v735, %v734
  %v825 = vpack.c.b16 %v737, %v736
  %v826 = vpack.c.b16 %v739, %v738
  %v827 = vpack.c.b16 %v741, %v740
  %v828 = vpack.c.b16 %v743, %v742
  %v829 = vpack.c.b16 %v745, %v744
  %v830 = vpack.c.b16 %v747, %v746
  %v831 = vpack.c.b16 %v749, %v748
  %v832 = vpack.c.b16 %v751, %v750
  %v833 = vpack.c.b16 %v753, %v752
  %v834 = vpack.c.b16 %v755, %v754
  %v835 = vpack.c.b16 %v757, %v756
  %v836 = vpack.c.b16 %v759, %v758
  %v837 = vpack.c.b16 %v761, %v760
  %v838 = vpack.c.b16 %v763, %v762
  %v839 = vpack.c.b16 %v765, %v764
  %v840 = vpack.c.b16 %v767, %v766
  %v841 = vpack.c.b16 %v769, %v768
  %v842 = vpack.c.b16 %v771, %v770
  %v843 = vpack.c.b16 %v773, %v772
  %v844 = vpack.c.b16 %v775, %v774
  %v845 = vpack.c.b16 %v777, %v776
  %v846 = vpack.c.b16 %v779, %v778
  %v847 = vpack.c.b16 %v781, %v780
  %v848 = vpack.c.b16 %v783, %v782
  %v849 = vpack.c.b16 %v785, %v784
  %914 = vmatprep.subr.bf16.mxu0 0
  %915 = vmatpush1.bf16.msra.mxu0 %v793
  %916 = vmatprep.subr.bf16.mxu0 0
  %917 = vmatpush1.bf16.msra.mxu0 %v792
  %918 = vmatprep.subr.bf16.mxu0 0
  %919 = vmatpush1.bf16.msra.mxu0 %v791
  %920 = vmatprep.subr.bf16.mxu0 0
  %921 = vmatpush1.bf16.msra.mxu0 %v790
  %922 = vmatprep.subr.bf16.mxu0 0
  %923 = vmatpush1.bf16.msra.mxu0 %v789
  %924 = vmatprep.subr.bf16.mxu0 0
  %925 = vmatpush1.bf16.msra.mxu0 %v788
  %926 = vmatprep.subr.bf16.mxu0 0
  %927 = vmatpush1.bf16.msra.mxu0 %v787
  %928 = vmatprep.subr.bf16.mxu0 0
  %929 = vmatpush1.bf16.msra.mxu0 %v786
  %930 = vmatprep.subr.bf16.mxu0 0
  %931 = vmatpush2.bf16.msra.mxu0 %v801
  %932 = vmatprep.subr.bf16.mxu0 0
  %933 = vmatpush2.bf16.msra.mxu0 %v800
  %934 = vmatprep.subr.bf16.mxu0 0
  %935 = vmatpush2.bf16.msra.mxu0 %v799
  %936 = vmatprep.subr.bf16.mxu0 0
  %937 = vmatpush2.bf16.msra.mxu0 %v798
  %938 = vmatprep.subr.bf16.mxu0 0
  %939 = vmatpush2.bf16.msra.mxu0 %v797
  %940 = vmatprep.subr.bf16.mxu0 0
  %941 = vmatpush2.bf16.msra.mxu0 %v796
  %942 = vmatprep.subr.bf16.mxu0 0
  %943 = vmatpush2.bf16.msra.mxu0 %v795
  %944 = vmatprep.subr.bf16.mxu0 0
  %945 = vmatpush2.bf16.msra.mxu0 %v794
  %946 = vmatprep.mubr.bf16.mxu0 %v403
  %947 = vmatmul.mubr.bf16.gmra.mxu0 %v402
  %v948 = vpop.f32.mrf.mxu0
  %v949 = vadd.f32 0.0, %v948
  %v950 = vpop.f32.mrf.mxu0
  %v951 = vpop.f32.mrf.mxu0
  %v952 = vadd.f32 0.0, %v951
  %v953 = vpop.f32.mrf.mxu0
  %954 = vmatprep.mubr.bf16.mxu0 %v411
  %955 = vmatmul.mubr.bf16.gmra.mxu0 %v410
  %v956 = vpop.f32.mrf.mxu0
  %v957 = vadd.f32 0.0, %v956
  %v958 = vpop.f32.mrf.mxu0
  %v959 = vpop.f32.mrf.mxu0
  %v960 = vadd.f32 0.0, %v959
  %v961 = vpop.f32.mrf.mxu0
  %962 = vmatprep.mubr.bf16.mxu0 %v419
  %963 = vmatmul.mubr.bf16.gmra.mxu0 %v418
  %v964 = vpop.f32.mrf.mxu0
  %v965 = vadd.f32 0.0, %v964
  %v966 = vpop.f32.mrf.mxu0
  %v967 = vpop.f32.mrf.mxu0
  %v968 = vadd.f32 0.0, %v967
  %v969 = vpop.f32.mrf.mxu0
  %970 = vmatprep.mubr.bf16.mxu0 %v427
  %971 = vmatmul.mubr.bf16.gmra.mxu0 %v426
  %v972 = vpop.f32.mrf.mxu0
  %v973 = vadd.f32 0.0, %v972
  %v974 = vpop.f32.mrf.mxu0
  %v975 = vpop.f32.mrf.mxu0
  %v976 = vadd.f32 0.0, %v975
  %v977 = vpop.f32.mrf.mxu0
  %978 = vmatprep.mubr.bf16.mxu0 %v435
  %979 = vmatmul.mubr.bf16.gmra.mxu0 %v434
  %v980 = vpop.f32.mrf.mxu0
  %v981 = vadd.f32 0.0, %v980
  %v982 = vpop.f32.mrf.mxu0
  %v983 = vpop.f32.mrf.mxu0
  %v984 = vadd.f32 0.0, %v983
  %v985 = vpop.f32.mrf.mxu0
  %986 = vmatprep.mubr.bf16.mxu0 %v443
  %987 = vmatmul.mubr.bf16.gmra.mxu0 %v442
  %v988 = vpop.f32.mrf.mxu0
  %v989 = vadd.f32 0.0, %v988
  %v990 = vpop.f32.mrf.mxu0
  %v991 = vpop.f32.mrf.mxu0
  %v992 = vadd.f32 0.0, %v991
  %v993 = vpop.f32.mrf.mxu0
  %994 = vmatprep.mubr.bf16.mxu0 %v451
  %995 = vmatmul.mubr.bf16.gmra.mxu0 %v450
  %v996 = vpop.f32.mrf.mxu0
  %v997 = vadd.f32 0.0, %v996
  %v998 = vpop.f32.mrf.mxu0
  %v999 = vpop.f32.mrf.mxu0
  %v1000 = vadd.f32 0.0, %v999
  %v1001 = vpop.f32.mrf.mxu0
  %1002 = vmatprep.mubr.bf16.mxu0 %v459
  %1003 = vmatmul.mubr.bf16.gmra.mxu0 %v458
  %v1004 = vpop.f32.mrf.mxu0
  %v1005 = vadd.f32 0.0, %v1004
  %v1006 = vpop.f32.mrf.mxu0
  %v1007 = vpop.f32.mrf.mxu0
  %v1008 = vadd.f32 0.0, %v1007
  %v1009 = vpop.f32.mrf.mxu0
  %1010 = vdwg.mxu0
  %1011 = vmatprep.subr.bf16.mxu0 0
  %1012 = vmatpush1.bf16.msra.mxu0 %v809
  %1013 = vmatprep.subr.bf16.mxu0 0
  %1014 = vmatpush1.bf16.msra.mxu0 %v808
  %1015 = vmatprep.subr.bf16.mxu0 0
  %1016 = vmatpush1.bf16.msra.mxu0 %v807
  %1017 = vmatprep.subr.bf16.mxu0 0
  %1018 = vmatpush1.bf16.msra.mxu0 %v806
  %1019 = vmatprep.subr.bf16.mxu0 0
  %1020 = vmatpush1.bf16.msra.mxu0 %v805
  %1021 = vmatprep.subr.bf16.mxu0 0
  %1022 = vmatpush1.bf16.msra.mxu0 %v804
  %1023 = vmatprep.subr.bf16.mxu0 0
  %1024 = vmatpush1.bf16.msra.mxu0 %v803
  %1025 = vmatprep.subr.bf16.mxu0 0
  %1026 = vmatpush1.bf16.msra.mxu0 %v802
  %1027 = vmatprep.subr.bf16.mxu0 0
  %1028 = vmatpush2.bf16.msra.mxu0 %v817
  %1029 = vmatprep.subr.bf16.mxu0 0
  %1030 = vmatpush2.bf16.msra.mxu0 %v816
  %1031 = vmatprep.subr.bf16.mxu0 0
  %1032 = vmatpush2.bf16.msra.mxu0 %v815
  %1033 = vmatprep.subr.bf16.mxu0 0
  %1034 = vmatpush2.bf16.msra.mxu0 %v814
  %1035 = vmatprep.subr.bf16.mxu0 0
  %1036 = vmatpush2.bf16.msra.mxu0 %v813
  %1037 = vmatprep.subr.bf16.mxu0 0
  %1038 = vmatpush2.bf16.msra.mxu0 %v812
  %1039 = vmatprep.subr.bf16.mxu0 0
  %1040 = vmatpush2.bf16.msra.mxu0 %v811
  %1041 = vmatprep.subr.bf16.mxu0 0
  %1042 = vmatpush2.bf16.msra.mxu0 %v810
  %1043 = vmatprep.mubr.bf16.mxu0 %v405
  %1044 = vmatmul.mubr.bf16.gmra.mxu0 %v404
  %v1045 = vpop.f32.mrf.mxu0
  %v1046 = vadd.f32 %v949, %v1045
  %v1047 = vpop.f32.mrf.mxu0
  %v1048 = vpop.f32.mrf.mxu0
  %v1049 = vadd.f32 %v952, %v1048
  %v1050 = vpop.f32.mrf.mxu0
  %1051 = vmatprep.mubr.bf16.mxu0 %v413
  %1052 = vmatmul.mubr.bf16.gmra.mxu0 %v412
  %v1053 = vpop.f32.mrf.mxu0
  %v1054 = vadd.f32 %v957, %v1053
  %v1055 = vpop.f32.mrf.mxu0
  %v1056 = vpop.f32.mrf.mxu0
  %v1057 = vadd.f32 %v960, %v1056
  %v1058 = vpop.f32.mrf.mxu0
  %1059 = vmatprep.mubr.bf16.mxu0 %v421
  %1060 = vmatmul.mubr.bf16.gmra.mxu0 %v420
  %v1061 = vpop.f32.mrf.mxu0
  %v1062 = vadd.f32 %v965, %v1061
  %v1063 = vpop.f32.mrf.mxu0
  %v1064 = vpop.f32.mrf.mxu0
  %v1065 = vadd.f32 %v968, %v1064
  %v1066 = vpop.f32.mrf.mxu0
  %1067 = vmatprep.mubr.bf16.mxu0 %v429
  %1068 = vmatmul.mubr.bf16.gmra.mxu0 %v428
  %v1069 = vpop.f32.mrf.mxu0
  %v1070 = vadd.f32 %v973, %v1069
  %v1071 = vpop.f32.mrf.mxu0
  %v1072 = vpop.f32.mrf.mxu0
  %v1073 = vadd.f32 %v976, %v1072
  %v1074 = vpop.f32.mrf.mxu0
  %1075 = vmatprep.mubr.bf16.mxu0 %v437
  %1076 = vmatmul.mubr.bf16.gmra.mxu0 %v436
  %v1077 = vpop.f32.mrf.mxu0
  %v1078 = vadd.f32 %v981, %v1077
  %v1079 = vpop.f32.mrf.mxu0
  %v1080 = vpop.f32.mrf.mxu0
  %v1081 = vadd.f32 %v984, %v1080
  %v1082 = vpop.f32.mrf.mxu0
  %1083 = vmatprep.mubr.bf16.mxu0 %v445
  %1084 = vmatmul.mubr.bf16.gmra.mxu0 %v444
  %v1085 = vpop.f32.mrf.mxu0
  %v1086 = vadd.f32 %v989, %v1085
  %v1087 = vpop.f32.mrf.mxu0
  %v1088 = vpop.f32.mrf.mxu0
  %v1089 = vadd.f32 %v992, %v1088
  %v1090 = vpop.f32.mrf.mxu0
  %1091 = vmatprep.mubr.bf16.mxu0 %v453
  %1092 = vmatmul.mubr.bf16.gmra.mxu0 %v452
  %v1093 = vpop.f32.mrf.mxu0
  %v1094 = vadd.f32 %v997, %v1093
  %v1095 = vpop.f32.mrf.mxu0
  %v1096 = vpop.f32.mrf.mxu0
  %v1097 = vadd.f32 %v1000, %v1096
  %v1098 = vpop.f32.mrf.mxu0
  %1099 = vmatprep.mubr.bf16.mxu0 %v461
  %1100 = vmatmul.mubr.bf16.gmra.mxu0 %v460
  %v1101 = vpop.f32.mrf.mxu0
  %v1102 = vadd.f32 %v1005, %v1101
  %v1103 = vpop.f32.mrf.mxu0
  %v1104 = vpop.f32.mrf.mxu0
  %v1105 = vadd.f32 %v1008, %v1104
  %v1106 = vpop.f32.mrf.mxu0
  %1107 = vdwg.mxu0
  %1108 = vmatprep.subr.bf16.mxu0 0
  %1109 = vmatpush1.bf16.msra.mxu0 %v825
  %1110 = vmatprep.subr.bf16.mxu0 0
  %1111 = vmatpush1.bf16.msra.mxu0 %v824
  %1112 = vmatprep.subr.bf16.mxu0 0
  %1113 = vmatpush1.bf16.msra.mxu0 %v823
  %1114 = vmatprep.subr.bf16.mxu0 0
  %1115 = vmatpush1.bf16.msra.mxu0 %v822
  %1116 = vmatprep.subr.bf16.mxu0 0
  %1117 = vmatpush1.bf16.msra.mxu0 %v821
  %1118 = vmatprep.subr.bf16.mxu0 0
  %1119 = vmatpush1.bf16.msra.mxu0 %v820
  %1120 = vmatprep.subr.bf16.mxu0 0
  %1121 = vmatpush1.bf16.msra.mxu0 %v819
  %1122 = vmatprep.subr.bf16.mxu0 0
  %1123 = vmatpush1.bf16.msra.mxu0 %v818
  %1124 = vmatprep.subr.bf16.mxu0 0
  %1125 = vmatpush2.bf16.msra.mxu0 %v833
  %1126 = vmatprep.subr.bf16.mxu0 0
  %1127 = vmatpush2.bf16.msra.mxu0 %v832
  %1128 = vmatprep.subr.bf16.mxu0 0
  %1129 = vmatpush2.bf16.msra.mxu0 %v831
  %1130 = vmatprep.subr.bf16.mxu0 0
  %1131 = vmatpush2.bf16.msra.mxu0 %v830
  %1132 = vmatprep.subr.bf16.mxu0 0
  %1133 = vmatpush2.bf16.msra.mxu0 %v829
  %1134 = vmatprep.subr.bf16.mxu0 0
  %1135 = vmatpush2.bf16.msra.mxu0 %v828
  %1136 = vmatprep.subr.bf16.mxu0 0
  %1137 = vmatpush2.bf16.msra.mxu0 %v827
  %1138 = vmatprep.subr.bf16.mxu0 0
  %1139 = vmatpush2.bf16.msra.mxu0 %v826
  %1140 = vmatprep.mubr.bf16.mxu0 %v407
  %1141 = vmatmul.mubr.bf16.gmra.mxu0 %v406
  %v1142 = vpop.f32.mrf.mxu0
  %v1143 = vadd.f32 %v1046, %v1142
  %v1144 = vpop.f32.mrf.mxu0
  %v1145 = vpop.f32.mrf.mxu0
  %v1146 = vadd.f32 %v1049, %v1145
  %v1147 = vpop.f32.mrf.mxu0
  %1148 = vmatprep.mubr.bf16.mxu0 %v415
  %1149 = vmatmul.mubr.bf16.gmra.mxu0 %v414
  %v1150 = vpop.f32.mrf.mxu0
  %v1151 = vadd.f32 %v1054, %v1150
  %v1152 = vpop.f32.mrf.mxu0
  %v1153 = vpop.f32.mrf.mxu0
  %v1154 = vadd.f32 %v1057, %v1153
  %v1155 = vpop.f32.mrf.mxu0
  %1156 = vmatprep.mubr.bf16.mxu0 %v423
  %1157 = vmatmul.mubr.bf16.gmra.mxu0 %v422
  %v1158 = vpop.f32.mrf.mxu0
  %v1159 = vadd.f32 %v1062, %v1158
  %v1160 = vpop.f32.mrf.mxu0
  %v1161 = vpop.f32.mrf.mxu0
  %v1162 = vadd.f32 %v1065, %v1161
  %v1163 = vpop.f32.mrf.mxu0
  %1164 = vmatprep.mubr.bf16.mxu0 %v431
  %1165 = vmatmul.mubr.bf16.gmra.mxu0 %v430
  %v1166 = vpop.f32.mrf.mxu0
  %v1167 = vadd.f32 %v1070, %v1166
  %v1168 = vpop.f32.mrf.mxu0
  %v1169 = vpop.f32.mrf.mxu0
  %v1170 = vadd.f32 %v1073, %v1169
  %v1171 = vpop.f32.mrf.mxu0
  %1172 = vmatprep.mubr.bf16.mxu0 %v439
  %1173 = vmatmul.mubr.bf16.gmra.mxu0 %v438
  %v1174 = vpop.f32.mrf.mxu0
  %v1175 = vadd.f32 %v1078, %v1174
  %v1176 = vpop.f32.mrf.mxu0
  %v1177 = vpop.f32.mrf.mxu0
  %v1178 = vadd.f32 %v1081, %v1177
  %v1179 = vpop.f32.mrf.mxu0
  %1180 = vmatprep.mubr.bf16.mxu0 %v447
  %1181 = vmatmul.mubr.bf16.gmra.mxu0 %v446
  %v1182 = vpop.f32.mrf.mxu0
  %v1183 = vadd.f32 %v1086, %v1182
  %v1184 = vpop.f32.mrf.mxu0
  %v1185 = vpop.f32.mrf.mxu0
  %v1186 = vadd.f32 %v1089, %v1185
  %v1187 = vpop.f32.mrf.mxu0
  %1188 = vmatprep.mubr.bf16.mxu0 %v455
  %1189 = vmatmul.mubr.bf16.gmra.mxu0 %v454
  %v1190 = vpop.f32.mrf.mxu0
  %v1191 = vadd.f32 %v1094, %v1190
  %v1192 = vpop.f32.mrf.mxu0
  %v1193 = vpop.f32.mrf.mxu0
  %v1194 = vadd.f32 %v1097, %v1193
  %v1195 = vpop.f32.mrf.mxu0
  %1196 = vmatprep.mubr.bf16.mxu0 %v463
  %1197 = vmatmul.mubr.bf16.gmra.mxu0 %v462
  %v1198 = vpop.f32.mrf.mxu0
  %v1199 = vadd.f32 %v1102, %v1198
  %v1200 = vpop.f32.mrf.mxu0
  %v1201 = vpop.f32.mrf.mxu0
  %v1202 = vadd.f32 %v1105, %v1201
  %v1203 = vpop.f32.mrf.mxu0
  %1204 = vdwg.mxu0
  %1205 = vmatprep.subr.bf16.mxu0 0
  %1206 = vmatpush1.bf16.msra.mxu0 %v841
  %1207 = vmatprep.subr.bf16.mxu0 0
  %1208 = vmatpush1.bf16.msra.mxu0 %v840
  %1209 = vmatprep.subr.bf16.mxu0 0
  %1210 = vmatpush1.bf16.msra.mxu0 %v839
  %1211 = vmatprep.subr.bf16.mxu0 0
  %1212 = vmatpush1.bf16.msra.mxu0 %v838
  %1213 = vmatprep.subr.bf16.mxu0 0
  %1214 = vmatpush1.bf16.msra.mxu0 %v837
  %1215 = vmatprep.subr.bf16.mxu0 0
  %1216 = vmatpush1.bf16.msra.mxu0 %v836
  %1217 = vmatprep.subr.bf16.mxu0 0
  %1218 = vmatpush1.bf16.msra.mxu0 %v835
  %1219 = vmatprep.subr.bf16.mxu0 0
  %1220 = vmatpush1.bf16.msra.mxu0 %v834
  %1221 = vmatprep.subr.bf16.mxu0 0
  %1222 = vmatpush2.bf16.msra.mxu0 %v849
  %1223 = vmatprep.subr.bf16.mxu0 0
  %1224 = vmatpush2.bf16.msra.mxu0 %v848
  %1225 = vmatprep.subr.bf16.mxu0 0
  %1226 = vmatpush2.bf16.msra.mxu0 %v847
  %1227 = vmatprep.subr.bf16.mxu0 0
  %1228 = vmatpush2.bf16.msra.mxu0 %v846
  %1229 = vmatprep.subr.bf16.mxu0 0
  %1230 = vmatpush2.bf16.msra.mxu0 %v845
  %1231 = vmatprep.subr.bf16.mxu0 0
  %1232 = vmatpush2.bf16.msra.mxu0 %v844
  %1233 = vmatprep.subr.bf16.mxu0 0
  %1234 = vmatpush2.bf16.msra.mxu0 %v843
  %1235 = vmatprep.subr.bf16.mxu0 0
  %1236 = vmatpush2.bf16.msra.mxu0 %v842
  %1237 = vmatprep.mubr.bf16.mxu0 %v409
  %1238 = vmatmul.mubr.bf16.gmra.mxu0 %v408
  %v1239 = vpop.f32.mrf.mxu0
  %v1240 = vadd.f32 %v1143, %v1239
  %v1241 = vpop.f32.mrf.mxu0
  %v1242 = vpop.f32.mrf.mxu0
  %v1243 = vadd.f32 %v1146, %v1242
  %v1244 = vpop.f32.mrf.mxu0
  %1245 = vmatprep.mubr.bf16.mxu0 %v417
  %1246 = vmatmul.mubr.bf16.gmra.mxu0 %v416
  %v1247 = vpop.f32.mrf.mxu0
  %v1248 = vadd.f32 %v1151, %v1247
  %v1249 = vpop.f32.mrf.mxu0
  %v1250 = vpop.f32.mrf.mxu0
  %v1251 = vadd.f32 %v1154, %v1250
  %v1252 = vpop.f32.mrf.mxu0
  %1253 = vmatprep.mubr.bf16.mxu0 %v425
  %1254 = vmatmul.mubr.bf16.gmra.mxu0 %v424
  %v1255 = vpop.f32.mrf.mxu0
  %v1256 = vadd.f32 %v1159, %v1255
  %v1257 = vpop.f32.mrf.mxu0
  %v1258 = vpop.f32.mrf.mxu0
  %v1259 = vadd.f32 %v1162, %v1258
  %v1260 = vpop.f32.mrf.mxu0
  %1261 = vmatprep.mubr.bf16.mxu0 %v433
  %1262 = vmatmul.mubr.bf16.gmra.mxu0 %v432
  %v1263 = vpop.f32.mrf.mxu0
  %v1264 = vadd.f32 %v1167, %v1263
  %v1265 = vpop.f32.mrf.mxu0
  %v1266 = vpop.f32.mrf.mxu0
  %v1267 = vadd.f32 %v1170, %v1266
  %v1268 = vpop.f32.mrf.mxu0
  %1269 = vmatprep.mubr.bf16.mxu0 %v441
  %1270 = vmatmul.mubr.bf16.gmra.mxu0 %v440
  %v1271 = vpop.f32.mrf.mxu0
  %v1272 = vadd.f32 %v1175, %v1271
  %v1273 = vpop.f32.mrf.mxu0
  %v1274 = vpop.f32.mrf.mxu0
  %v1275 = vadd.f32 %v1178, %v1274
  %v1276 = vpop.f32.mrf.mxu0
  %1277 = vmatprep.mubr.bf16.mxu0 %v449
  %1278 = vmatmul.mubr.bf16.gmra.mxu0 %v448
  %v1279 = vpop.f32.mrf.mxu0
  %v1280 = vadd.f32 %v1183, %v1279
  %v1281 = vpop.f32.mrf.mxu0
  %v1282 = vpop.f32.mrf.mxu0
  %v1283 = vadd.f32 %v1186, %v1282
  %v1284 = vpop.f32.mrf.mxu0
  %1285 = vmatprep.mubr.bf16.mxu0 %v457
  %1286 = vmatmul.mubr.bf16.gmra.mxu0 %v456
  %v1287 = vpop.f32.mrf.mxu0
  %v1288 = vadd.f32 %v1191, %v1287
  %v1289 = vpop.f32.mrf.mxu0
  %v1290 = vpop.f32.mrf.mxu0
  %v1291 = vadd.f32 %v1194, %v1290
  %v1292 = vpop.f32.mrf.mxu0
  %1293 = vmatprep.mubr.bf16.mxu0 %v465
  %1294 = vmatmul.mubr.bf16.gmra.mxu0 %v464
  %v1295 = vpop.f32.mrf.mxu0
  %v1296 = vadd.f32 %v1199, %v1295
  %v1297 = vpop.f32.mrf.mxu0
  %v1298 = vpop.f32.mrf.mxu0
  %v1299 = vadd.f32 %v1202, %v1298
  %v1300 = vpop.f32.mrf.mxu0
  %1301 = vdwg.mxu0
  %vm1302 = vcmask 261120
  %v1303 = vsel %vm1302, %v1240, 0.0
  %1304 = vadd.xlane.f32.xlu0 %v1303
  %v1305 = vpop.xlane.xlu0 %1304
  %v1306 = vsel %vm1302, %v1243, 0.0
  %1307 = vadd.xlane.f32.xlu0 %v1306
  %v1308 = vpop.xlane.xlu0 %1307
  %v1309 = vsel %vm1302, %v1248, 0.0
  %1310 = vadd.xlane.f32.xlu0 %v1309
  %v1311 = vpop.xlane.xlu0 %1310
  %v1312 = vsel %vm1302, %v1251, 0.0
  %1313 = vadd.xlane.f32.xlu0 %v1312
  %v1314 = vpop.xlane.xlu0 %1313
  %v1315 = vsel %vm1302, %v1256, 0.0
  %1316 = vadd.xlane.f32.xlu0 %v1315
  %v1317 = vpop.xlane.xlu0 %1316
  %v1318 = vsel %vm1302, %v1259, 0.0
  %1319 = vadd.xlane.f32.xlu0 %v1318
  %v1320 = vpop.xlane.xlu0 %1319
  %v1321 = vsel %vm1302, %v1264, 0.0
  %1322 = vadd.xlane.f32.xlu0 %v1321
  %v1323 = vpop.xlane.xlu0 %1322
  %v1324 = vsel %vm1302, %v1267, 0.0
  %1325 = vadd.xlane.f32.xlu0 %v1324
  %v1326 = vpop.xlane.xlu0 %1325
  %v1327 = vsel %vm1302, %v1272, 0.0
  %1328 = vadd.xlane.f32.xlu0 %v1327
  %v1329 = vpop.xlane.xlu0 %1328
  %v1330 = vsel %vm1302, %v1275, 0.0
  %1331 = vadd.xlane.f32.xlu0 %v1330
  %v1332 = vpop.xlane.xlu0 %1331
  %v1333 = vsel %vm1302, %v1280, 0.0
  %1334 = vadd.xlane.f32.xlu0 %v1333
  %v1335 = vpop.xlane.xlu0 %1334
  %v1336 = vsel %vm1302, %v1283, 0.0
  %1337 = vadd.xlane.f32.xlu0 %v1336
  %v1338 = vpop.xlane.xlu0 %1337
  %v1339 = vsel %vm1302, %v1288, 0.0
  %1340 = vadd.xlane.f32.xlu0 %v1339
  %v1341 = vpop.xlane.xlu0 %1340
  %v1342 = vsel %vm1302, %v1291, 0.0
  %1343 = vadd.xlane.f32.xlu0 %v1342
  %v1344 = vpop.xlane.xlu0 %1343
  %v1345 = vsel %vm1302, %v1296, 0.0
  %1346 = vadd.xlane.f32.xlu0 %v1345
  %v1347 = vpop.xlane.xlu0 %1346
  %v1348 = vsel %vm1302, %v1299, 0.0
  %1349 = vadd.xlane.f32.xlu0 %v1348
  %v1350 = vpop.xlane.xlu0 %1349
  %v1351 = vrcp.pop 32.0
  %v1352 = vmul.f32 %v1305, %v1351
  %v1353 = vmul.f32 %v1308, %v1351
  %v1354 = vmul.f32 %v1311, %v1351
  %v1355 = vmul.f32 %v1314, %v1351
  %v1356 = vmul.f32 %v1317, %v1351
  %v1357 = vmul.f32 %v1320, %v1351
  %v1358 = vmul.f32 %v1323, %v1351
  %v1359 = vmul.f32 %v1326, %v1351
  %v1360 = vmul.f32 %v1329, %v1351
  %v1361 = vmul.f32 %v1332, %v1351
  %v1362 = vmul.f32 %v1335, %v1351
  %v1363 = vmul.f32 %v1338, %v1351
  %v1364 = vmul.f32 %v1341, %v1351
  %v1365 = vmul.f32 %v1344, %v1351
  %v1366 = vmul.f32 %v1347, %v1351
  %v1367 = vmul.f32 %v1350, %v1351
  %v1368 = vsub.f32 %v1240, %v1352
  %v1369 = vsub.f32 %v1243, %v1353
  %v1370 = vsub.f32 %v1248, %v1354
  %v1371 = vsub.f32 %v1251, %v1355
  %v1372 = vsub.f32 %v1256, %v1356
  %v1373 = vsub.f32 %v1259, %v1357
  %v1374 = vsub.f32 %v1264, %v1358
  %v1375 = vsub.f32 %v1267, %v1359
  %v1376 = vsub.f32 %v1272, %v1360
  %v1377 = vsub.f32 %v1275, %v1361
  %v1378 = vsub.f32 %v1280, %v1362
  %v1379 = vsub.f32 %v1283, %v1363
  %v1380 = vsub.f32 %v1288, %v1364
  %v1381 = vsub.f32 %v1291, %v1365
  %v1382 = vsub.f32 %v1296, %v1366
  %v1383 = vsub.f32 %v1299, %v1367
  %v1384 = vmul.f32 %v1368, %v1368
  %v1385 = vmul.f32 %v1369, %v1369
  %v1386 = vmul.f32 %v1370, %v1370
  %v1387 = vmul.f32 %v1371, %v1371
  %v1388 = vmul.f32 %v1372, %v1372
  %v1389 = vmul.f32 %v1373, %v1373
  %v1390 = vmul.f32 %v1374, %v1374
  %v1391 = vmul.f32 %v1375, %v1375
  %v1392 = vmul.f32 %v1376, %v1376
  %v1393 = vmul.f32 %v1377, %v1377
  %v1394 = vmul.f32 %v1378, %v1378
  %v1395 = vmul.f32 %v1379, %v1379
  %v1396 = vmul.f32 %v1380, %v1380
  %v1397 = vmul.f32 %v1381, %v1381
  %v1398 = vmul.f32 %v1382, %v1382
  %v1399 = vmul.f32 %v1383, %v1383
  %v1400 = vsel %vm1302, %v1384, 0.0
  %1401 = vadd.xlane.f32.xlu0 %v1400
  %v1402 = vpop.xlane.xlu0 %1401
  %v1403 = vsel %vm1302, %v1385, 0.0
  %1404 = vadd.xlane.f32.xlu0 %v1403
  %v1405 = vpop.xlane.xlu0 %1404
  %v1406 = vsel %vm1302, %v1386, 0.0
  %1407 = vadd.xlane.f32.xlu0 %v1406
  %v1408 = vpop.xlane.xlu0 %1407
  %v1409 = vsel %vm1302, %v1387, 0.0
  %1410 = vadd.xlane.f32.xlu0 %v1409
  %v1411 = vpop.xlane.xlu0 %1410
  %v1412 = vsel %vm1302, %v1388, 0.0
  %1413 = vadd.xlane.f32.xlu0 %v1412
  %v1414 = vpop.xlane.xlu0 %1413
  %v1415 = vsel %vm1302, %v1389, 0.0
  %1416 = vadd.xlane.f32.xlu0 %v1415
  %v1417 = vpop.xlane.xlu0 %1416
  %v1418 = vsel %vm1302, %v1390, 0.0
  %1419 = vadd.xlane.f32.xlu0 %v1418
  %v1420 = vpop.xlane.xlu0 %1419
  %v1421 = vsel %vm1302, %v1391, 0.0
  %1422 = vadd.xlane.f32.xlu0 %v1421
  %v1423 = vpop.xlane.xlu0 %1422
  %v1424 = vsel %vm1302, %v1392, 0.0
  %1425 = vadd.xlane.f32.xlu0 %v1424
  %v1426 = vpop.xlane.xlu0 %1425
  %v1427 = vsel %vm1302, %v1393, 0.0
  %1428 = vadd.xlane.f32.xlu0 %v1427
  %v1429 = vpop.xlane.xlu0 %1428
  %v1430 = vsel %vm1302, %v1394, 0.0
  %1431 = vadd.xlane.f32.xlu0 %v1430
  %v1432 = vpop.xlane.xlu0 %1431
  %v1433 = vsel %vm1302, %v1395, 0.0
  %1434 = vadd.xlane.f32.xlu0 %v1433
  %v1435 = vpop.xlane.xlu0 %1434
  %v1436 = vsel %vm1302, %v1396, 0.0
  %1437 = vadd.xlane.f32.xlu0 %v1436
  %v1438 = vpop.xlane.xlu0 %1437
  %v1439 = vsel %vm1302, %v1397, 0.0
  %1440 = vadd.xlane.f32.xlu0 %v1439
  %v1441 = vpop.xlane.xlu0 %1440
  %v1442 = vsel %vm1302, %v1398, 0.0
  %1443 = vadd.xlane.f32.xlu0 %v1442
  %v1444 = vpop.xlane.xlu0 %1443
  %v1445 = vsel %vm1302, %v1399, 0.0
  %1446 = vadd.xlane.f32.xlu0 %v1445
  %v1447 = vpop.xlane.xlu0 %1446
  %v1448 = vmul.f32 %v1402, %v1351
  %v1449 = vmul.f32 %v1405, %v1351
  %v1450 = vmul.f32 %v1408, %v1351
  %v1451 = vmul.f32 %v1411, %v1351
  %v1452 = vmul.f32 %v1414, %v1351
  %v1453 = vmul.f32 %v1417, %v1351
  %v1454 = vmul.f32 %v1420, %v1351
  %v1455 = vmul.f32 %v1423, %v1351
  %v1456 = vmul.f32 %v1426, %v1351
  %v1457 = vmul.f32 %v1429, %v1351
  %v1458 = vmul.f32 %v1432, %v1351
  %v1459 = vmul.f32 %v1435, %v1351
  %v1460 = vmul.f32 %v1438, %v1351
  %v1461 = vmul.f32 %v1441, %v1351
  %v1462 = vmul.f32 %v1444, %v1351
  %v1463 = vmul.f32 %v1447, %v1351
  %v1464 = vadd.f32 %v1448, 1e-05
  %v1465 = vadd.f32 %v1449, 1e-05
  %v1466 = vadd.f32 %v1450, 1e-05
  %v1467 = vadd.f32 %v1451, 1e-05
  %v1468 = vadd.f32 %v1452, 1e-05
  %v1469 = vadd.f32 %v1453, 1e-05
  %v1470 = vadd.f32 %v1454, 1e-05
  %v1471 = vadd.f32 %v1455, 1e-05
  %v1472 = vadd.f32 %v1456, 1e-05
  %v1473 = vadd.f32 %v1457, 1e-05
  %v1474 = vadd.f32 %v1458, 1e-05
  %v1475 = vadd.f32 %v1459, 1e-05
  %v1476 = vadd.f32 %v1460, 1e-05
  %v1477 = vadd.f32 %v1461, 1e-05
  %v1478 = vadd.f32 %v1462, 1e-05
  %v1479 = vadd.f32 %v1463, 1e-05
  %v1480 = vrsqrt.pop %v1464
  %v1481 = vrsqrt.pop %v1465
  %v1482 = vrsqrt.pop %v1466
  %v1483 = vrsqrt.pop %v1467
  %v1484 = vrsqrt.pop %v1468
  %v1485 = vrsqrt.pop %v1469
  %v1486 = vrsqrt.pop %v1470
  %v1487 = vrsqrt.pop %v1471
  %v1488 = vrsqrt.pop %v1472
  %v1489 = vrsqrt.pop %v1473
  %v1490 = vrsqrt.pop %v1474
  %v1491 = vrsqrt.pop %v1475
  %v1492 = vrsqrt.pop %v1476
  %v1493 = vrsqrt.pop %v1477
  %v1494 = vrsqrt.pop %v1478
  %v1495 = vrsqrt.pop %v1479
  %v1496 = vmul.f32 %v1368, %v1480
  %v1497 = vmul.f32 %v1369, %v1481
  %v1498 = vmul.f32 %v1370, %v1482
  %v1499 = vmul.f32 %v1371, %v1483
  %v1500 = vmul.f32 %v1372, %v1484
  %v1501 = vmul.f32 %v1373, %v1485
  %v1502 = vmul.f32 %v1374, %v1486
  %v1503 = vmul.f32 %v1375, %v1487
  %v1504 = vmul.f32 %v1376, %v1488
  %v1505 = vmul.f32 %v1377, %v1489
  %v1506 = vmul.f32 %v1378, %v1490
  %v1507 = vmul.f32 %v1379, %v1491
  %v1508 = vmul.f32 %v1380, %v1492
  %v1509 = vmul.f32 %v1381, %v1493
  %v1510 = vmul.f32 %v1382, %v1494
  %v1511 = vmul.f32 %v1383, %v1495
  %v1512 = vld [vmem:[%s2] sm:$0xff]
  %v1513 = vld [vmem:[%s2 + $0x8] sm:$0xff]
  %v1514 = vld [vmem:[%s2 + $0x10] sm:$0xff]
  %v1515 = vld [vmem:[%s2 + $0x18] sm:$0xff]
  %v1516 = vld [vmem:[%s2 + $0x20] sm:$0xff]
  %v1517 = vld [vmem:[%s2 + $0x28] sm:$0xff]
  %v1518 = vld [vmem:[%s2 + $0x30] sm:$0xff]
  %v1519 = vld [vmem:[%s2 + $0x38] sm:$0xff]
  %v1520 = vld [vmem:[%s2 + $0x40] sm:$0xff]
  %v1521 = vld [vmem:[%s2 + $0x48] sm:$0xff]
  %v1522 = vld [vmem:[%s2 + $0x50] sm:$0xff]
  %v1523 = vld [vmem:[%s2 + $0x58] sm:$0xff]
  %v1524 = vld [vmem:[%s2 + $0x60] sm:$0xff]
  %v1525 = vld [vmem:[%s2 + $0x68] sm:$0xff]
  %v1526 = vld [vmem:[%s2 + $0x70] sm:$0xff]
  %v1527 = vld [vmem:[%s2 + $0x78] sm:$0xff]
  %1529 = vset.pattern.permute.xlu0 0
  %1530 = vperm.xlu0 %1529, %v1512
  %v1531 = vpop.permute.xlu0 %1530
  %1534 = vset.pattern.permute.xlu0 0
  %1535 = vperm.xlu0 %1534, %v1513
  %v1536 = vpop.permute.xlu0 %1535
  %1539 = vset.pattern.permute.xlu0 0
  %1540 = vperm.xlu0 %1539, %v1514
  %v1541 = vpop.permute.xlu0 %1540
  %1544 = vset.pattern.permute.xlu0 0
  %1545 = vperm.xlu0 %1544, %v1515
  %v1546 = vpop.permute.xlu0 %1545
  %1549 = vset.pattern.permute.xlu0 0
  %1550 = vperm.xlu0 %1549, %v1516
  %v1551 = vpop.permute.xlu0 %1550
  %1554 = vset.pattern.permute.xlu0 0
  %1555 = vperm.xlu0 %1554, %v1517
  %v1556 = vpop.permute.xlu0 %1555
  %1559 = vset.pattern.permute.xlu0 0
  %1560 = vperm.xlu0 %1559, %v1518
  %v1561 = vpop.permute.xlu0 %1560
  %1564 = vset.pattern.permute.xlu0 0
  %1565 = vperm.xlu0 %1564, %v1519
  %v1566 = vpop.permute.xlu0 %1565
  %1569 = vset.pattern.permute.xlu0 0
  %1570 = vperm.xlu0 %1569, %v1520
  %v1571 = vpop.permute.xlu0 %1570
  %1574 = vset.pattern.permute.xlu0 0
  %1575 = vperm.xlu0 %1574, %v1521
  %v1576 = vpop.permute.xlu0 %1575
  %1579 = vset.pattern.permute.xlu0 0
  %1580 = vperm.xlu0 %1579, %v1522
  %v1581 = vpop.permute.xlu0 %1580
  %1584 = vset.pattern.permute.xlu0 0
  %1585 = vperm.xlu0 %1584, %v1523
  %v1586 = vpop.permute.xlu0 %1585
  %1589 = vset.pattern.permute.xlu0 0
  %1590 = vperm.xlu0 %1589, %v1524
  %v1591 = vpop.permute.xlu0 %1590
  %1594 = vset.pattern.permute.xlu0 0
  %1595 = vperm.xlu0 %1594, %v1525
  %v1596 = vpop.permute.xlu0 %1595
  %1599 = vset.pattern.permute.xlu0 0
  %1600 = vperm.xlu0 %1599, %v1526
  %v1601 = vpop.permute.xlu0 %1600
  %1604 = vset.pattern.permute.xlu0 0
  %1605 = vperm.xlu0 %1604, %v1527
  %v1606 = vpop.permute.xlu0 %1605
  %v1608 = vmul.f32 %v1496, %v1531
  %v1609 = vmul.f32 %v1497, %v1536
  %v1610 = vmul.f32 %v1498, %v1541
  %v1611 = vmul.f32 %v1499, %v1546
  %v1612 = vmul.f32 %v1500, %v1551
  %v1613 = vmul.f32 %v1501, %v1556
  %v1614 = vmul.f32 %v1502, %v1561
  %v1615 = vmul.f32 %v1503, %v1566
  %v1616 = vmul.f32 %v1504, %v1571
  %v1617 = vmul.f32 %v1505, %v1576
  %v1618 = vmul.f32 %v1506, %v1581
  %v1619 = vmul.f32 %v1507, %v1586
  %v1620 = vmul.f32 %v1508, %v1591
  %v1621 = vmul.f32 %v1509, %v1596
  %v1622 = vmul.f32 %v1510, %v1601
  %v1623 = vmul.f32 %v1511, %v1606
  %v1624 = vld [vmem:[%s3] sm:$0xff]
  %v1625 = vld [vmem:[%s3 + $0x8] sm:$0xff]
  %v1626 = vld [vmem:[%s3 + $0x10] sm:$0xff]
  %v1627 = vld [vmem:[%s3 + $0x18] sm:$0xff]
  %v1628 = vld [vmem:[%s3 + $0x20] sm:$0xff]
  %v1629 = vld [vmem:[%s3 + $0x28] sm:$0xff]
  %v1630 = vld [vmem:[%s3 + $0x30] sm:$0xff]
  %v1631 = vld [vmem:[%s3 + $0x38] sm:$0xff]
  %v1632 = vld [vmem:[%s3 + $0x40] sm:$0xff]
  %v1633 = vld [vmem:[%s3 + $0x48] sm:$0xff]
  %v1634 = vld [vmem:[%s3 + $0x50] sm:$0xff]
  %v1635 = vld [vmem:[%s3 + $0x58] sm:$0xff]
  %v1636 = vld [vmem:[%s3 + $0x60] sm:$0xff]
  %v1637 = vld [vmem:[%s3 + $0x68] sm:$0xff]
  %v1638 = vld [vmem:[%s3 + $0x70] sm:$0xff]
  %v1639 = vld [vmem:[%s3 + $0x78] sm:$0xff]
  %1641 = vset.pattern.permute.xlu0 0
  %1642 = vperm.xlu0 %1641, %v1624
  %v1643 = vpop.permute.xlu0 %1642
  %1646 = vset.pattern.permute.xlu0 0
  %1647 = vperm.xlu0 %1646, %v1625
  %v1648 = vpop.permute.xlu0 %1647
  %1651 = vset.pattern.permute.xlu0 0
  %1652 = vperm.xlu0 %1651, %v1626
  %v1653 = vpop.permute.xlu0 %1652
  %1656 = vset.pattern.permute.xlu0 0
  %1657 = vperm.xlu0 %1656, %v1627
  %v1658 = vpop.permute.xlu0 %1657
  %1661 = vset.pattern.permute.xlu0 0
  %1662 = vperm.xlu0 %1661, %v1628
  %v1663 = vpop.permute.xlu0 %1662
  %1666 = vset.pattern.permute.xlu0 0
  %1667 = vperm.xlu0 %1666, %v1629
  %v1668 = vpop.permute.xlu0 %1667
  %1671 = vset.pattern.permute.xlu0 0
  %1672 = vperm.xlu0 %1671, %v1630
  %v1673 = vpop.permute.xlu0 %1672
  %1676 = vset.pattern.permute.xlu0 0
  %1677 = vperm.xlu0 %1676, %v1631
  %v1678 = vpop.permute.xlu0 %1677
  %1681 = vset.pattern.permute.xlu0 0
  %1682 = vperm.xlu0 %1681, %v1632
  %v1683 = vpop.permute.xlu0 %1682
  %1686 = vset.pattern.permute.xlu0 0
  %1687 = vperm.xlu0 %1686, %v1633
  %v1688 = vpop.permute.xlu0 %1687
  %1691 = vset.pattern.permute.xlu0 0
  %1692 = vperm.xlu0 %1691, %v1634
  %v1693 = vpop.permute.xlu0 %1692
  %1696 = vset.pattern.permute.xlu0 0
  %1697 = vperm.xlu0 %1696, %v1635
  %v1698 = vpop.permute.xlu0 %1697
  %1701 = vset.pattern.permute.xlu0 0
  %1702 = vperm.xlu0 %1701, %v1636
  %v1703 = vpop.permute.xlu0 %1702
  %1706 = vset.pattern.permute.xlu0 0
  %1707 = vperm.xlu0 %1706, %v1637
  %v1708 = vpop.permute.xlu0 %1707
  %1711 = vset.pattern.permute.xlu0 0
  %1712 = vperm.xlu0 %1711, %v1638
  %v1713 = vpop.permute.xlu0 %1712
  %1716 = vset.pattern.permute.xlu0 0
  %1717 = vperm.xlu0 %1716, %v1639
  %v1718 = vpop.permute.xlu0 %1717
  %v1720 = vadd.f32 %v1608, %v1643
  %v1721 = vadd.f32 %v1609, %v1648
  %v1722 = vadd.f32 %v1610, %v1653
  %v1723 = vadd.f32 %v1611, %v1658
  %v1724 = vadd.f32 %v1612, %v1663
  %v1725 = vadd.f32 %v1613, %v1668
  %v1726 = vadd.f32 %v1614, %v1673
  %v1727 = vadd.f32 %v1615, %v1678
  %v1728 = vadd.f32 %v1616, %v1683
  %v1729 = vadd.f32 %v1617, %v1688
  %v1730 = vadd.f32 %v1618, %v1693
  %v1731 = vadd.f32 %v1619, %v1698
  %v1732 = vadd.f32 %v1620, %v1703
  %v1733 = vadd.f32 %v1621, %v1708
  %v1734 = vadd.f32 %v1622, %v1713
  %v1735 = vadd.f32 %v1623, %v1718
  %vm1736 = vcmp.ge.f32.partialorder %v1720, 0.0
  %vm1737 = vcmp.ge.f32.partialorder %v1721, 0.0
  %vm1738 = vcmp.ge.f32.partialorder %v1722, 0.0
  %vm1739 = vcmp.ge.f32.partialorder %v1723, 0.0
  %vm1740 = vcmp.ge.f32.partialorder %v1724, 0.0
  %vm1741 = vcmp.ge.f32.partialorder %v1725, 0.0
  %vm1742 = vcmp.ge.f32.partialorder %v1726, 0.0
  %vm1743 = vcmp.ge.f32.partialorder %v1727, 0.0
  %vm1744 = vcmp.ge.f32.partialorder %v1728, 0.0
  %vm1745 = vcmp.ge.f32.partialorder %v1729, 0.0
  %vm1746 = vcmp.ge.f32.partialorder %v1730, 0.0
  %vm1747 = vcmp.ge.f32.partialorder %v1731, 0.0
  %vm1748 = vcmp.ge.f32.partialorder %v1732, 0.0
  %vm1749 = vcmp.ge.f32.partialorder %v1733, 0.0
  %vm1750 = vcmp.ge.f32.partialorder %v1734, 0.0
  %vm1751 = vcmp.ge.f32.partialorder %v1735, 0.0
  %v1752 = vmul.f32 %v1720, 0.2
  %v1753 = vmul.f32 %v1721, 0.2
  %v1754 = vmul.f32 %v1722, 0.2
  %v1755 = vmul.f32 %v1723, 0.2
  %v1756 = vmul.f32 %v1724, 0.2
  %v1757 = vmul.f32 %v1725, 0.2
  %v1758 = vmul.f32 %v1726, 0.2
  %v1759 = vmul.f32 %v1727, 0.2
  %v1760 = vmul.f32 %v1728, 0.2
  %v1761 = vmul.f32 %v1729, 0.2
  %v1762 = vmul.f32 %v1730, 0.2
  %v1763 = vmul.f32 %v1731, 0.2
  %v1764 = vmul.f32 %v1732, 0.2
  %v1765 = vmul.f32 %v1733, 0.2
  %v1766 = vmul.f32 %v1734, 0.2
  %v1767 = vmul.f32 %v1735, 0.2
  %v1768 = vsel %vm1736, %v1720, %v1752
  %v1769 = vsel %vm1737, %v1721, %v1753
  %v1770 = vsel %vm1738, %v1722, %v1754
  %v1771 = vsel %vm1739, %v1723, %v1755
  %v1772 = vsel %vm1740, %v1724, %v1756
  %v1773 = vsel %vm1741, %v1725, %v1757
  %v1774 = vsel %vm1742, %v1726, %v1758
  %v1775 = vsel %vm1743, %v1727, %v1759
  %v1776 = vsel %vm1744, %v1728, %v1760
  %v1777 = vsel %vm1745, %v1729, %v1761
  %v1778 = vsel %vm1746, %v1730, %v1762
  %v1779 = vsel %vm1747, %v1731, %v1763
  %v1780 = vsel %vm1748, %v1732, %v1764
  %v1781 = vsel %vm1749, %v1733, %v1765
  %v1782 = vsel %vm1750, %v1734, %v1766
  %v1783 = vsel %vm1751, %v1735, %v1767
  %v1784 = vpack.c.bf16 %v1769, %v1768
  %v1785 = vpack.c.bf16 %v1771, %v1770
  %v1786 = vpack.c.bf16 %v1773, %v1772
  %v1787 = vpack.c.bf16 %v1775, %v1774
  %v1788 = vpack.c.bf16 %v1777, %v1776
  %v1789 = vpack.c.bf16 %v1779, %v1778
  %v1790 = vpack.c.bf16 %v1781, %v1780
  %v1791 = vpack.c.bf16 %v1783, %v1782
  %v1800 = vunpack.c.l.b16 %v1784
  %v1801 = vunpack.c.h.b16 %v1784
  %v1802 = vunpack.c.l.b16 %v1785
  %v1803 = vunpack.c.h.b16 %v1785
  %v1804 = vunpack.c.l.b16 %v1786
  %v1805 = vunpack.c.h.b16 %v1786
  %v1806 = vunpack.c.l.b16 %v1787
  %v1807 = vunpack.c.h.b16 %v1787
  %v1808 = vunpack.c.l.b16 %v1788
  %v1809 = vunpack.c.h.b16 %v1788
  %v1810 = vunpack.c.l.b16 %v1789
  %v1811 = vunpack.c.h.b16 %v1789
  %v1812 = vunpack.c.l.b16 %v1790
  %v1813 = vunpack.c.h.b16 %v1790
  %v1814 = vunpack.c.l.b16 %v1791
  %v1815 = vunpack.c.h.b16 %v1791
  %v1816 = vpack.c.b16 %v1800, %v1800
  %v1817 = vpack.c.b16 %v1801, %v1801
  %v1818 = vpack.c.b16 %v1802, %v1802
  %v1819 = vpack.c.b16 %v1803, %v1803
  %v1820 = vpack.c.b16 %v1804, %v1804
  %v1821 = vpack.c.b16 %v1805, %v1805
  %v1822 = vpack.c.b16 %v1806, %v1806
  %v1823 = vpack.c.b16 %v1807, %v1807
  %v1824 = vpack.c.b16 %v1808, %v1808
  %v1825 = vpack.c.b16 %v1809, %v1809
  %v1826 = vpack.c.b16 %v1810, %v1810
  %v1827 = vpack.c.b16 %v1811, %v1811
  %v1828 = vpack.c.b16 %v1812, %v1812
  %v1829 = vpack.c.b16 %v1813, %v1813
  %v1830 = vpack.c.b16 %v1814, %v1814
  %v1831 = vpack.c.b16 %v1815, %v1815
  %vm1848 = vcmask 257024
  %1849 = vst.msk [vmem:[%s4] sm:$0xf] %vm1848, %v1816
  %1850 = vst.msk [vmem:[%s4 + $0x4] sm:$0xf] %vm1848, %v1817
  %1851 = vst.msk [vmem:[%s4 + $0x8] sm:$0xf] %vm1848, %v1818
  %1852 = vst.msk [vmem:[%s4 + $0xc] sm:$0xf] %vm1848, %v1819
  %1853 = vst.msk [vmem:[%s4 + $0x10] sm:$0xf] %vm1848, %v1820
  %1854 = vst.msk [vmem:[%s4 + $0x14] sm:$0xf] %vm1848, %v1821
  %1855 = vst.msk [vmem:[%s4 + $0x18] sm:$0xf] %vm1848, %v1822
  %1856 = vst.msk [vmem:[%s4 + $0x1c] sm:$0xf] %vm1848, %v1823
  %1857 = vst.msk [vmem:[%s4 + $0x20] sm:$0xf] %vm1848, %v1824
  %1858 = vst.msk [vmem:[%s4 + $0x24] sm:$0xf] %vm1848, %v1825
  %1859 = vst.msk [vmem:[%s4 + $0x28] sm:$0xf] %vm1848, %v1826
  %1860 = vst.msk [vmem:[%s4 + $0x2c] sm:$0xf] %vm1848, %v1827
  %1861 = vst.msk [vmem:[%s4 + $0x30] sm:$0xf] %vm1848, %v1828
  %1862 = vst.msk [vmem:[%s4 + $0x34] sm:$0xf] %vm1848, %v1829
  %1863 = vst.msk [vmem:[%s4 + $0x38] sm:$0xf] %vm1848, %v1830
  %1864 = vst.msk [vmem:[%s4 + $0x3c] sm:$0xf] %vm1848, %v1831
  // Predicated region
  $region18: #{discriminator_forward.10} parent=0 // pred_check
    _
  $region19: #{discriminator_forward.10} parent=0 // pred_check_branch
    %1866 = sbr.rel (0) target = $region21
  $region20: #{discriminator_forward.10} parent=0 // pred_region
    _
  $region21: #{discriminator_forward.10} parent=0 // pred_fallthru
    _
  // Predicated region
  $region22: #{discriminator_forward.10} parent=0 // pred_check
    _
  $region23: #{discriminator_forward.10} parent=0 // pred_check_branch
    %1868 = sbr.rel (0) target = $region25
  $region24: #{discriminator_forward.10} parent=0 // pred_region
    _
  $region25: #{discriminator_forward.10} parent=0 // pred_fallthru
    _

// kernel: discriminator_forward.11
$region0: #{discriminator_forward.11}
  #allocation0 [shape = 'u32[]', space=smem, size = 0x4, offset = 0x4, fixed_abs, tag = 'smem constant byte address 0x4 - core index']
  #allocation1 [shape = 'u32[144,128]{1,0:T(1,128)}', space=vmem, size = 0x12000, scoped, tag = 'internal scratch']
  %s0 = inlined_call_operand.vmem [shape: bf16[1,2048], index: 0, kind: input, shape index: {}]
  %s1 = inlined_call_operand.vmem [shape: bf16[2048,2], index: 1, kind: input, shape index: {}]
  %s2 = inlined_call_operand.hbm [shape: f32[1,2], index: 2, kind: output, shape index: {}]
  %s3 = sld [smem:[#allocation0]]
  $region18: #{discriminator_forward.11} parent=0
    _
  %s5 = ssub.s32 1, %s3
  %s6 = scalar_select 0, %s5, %s3
  $region1: #{discriminator_forward.11} parent=0
    #allocation2 [shape = 'u8[512]{0}', space=vmem, size = 0x400, scoped, tag = 'output window, operand 0, single buffered']
    #allocation3 [shape = 's32[1]{0}', space=sflag, size = 0x4, scoped, tag = 'scoped memory for discriminator_forward.11']
    %7 = vsyncpa [#allocation3], 0
    // Predicated region
    $region2: #{discriminator_forward.11} parent=1 // pred_check
      _
    $region3: #{discriminator_forward.11} parent=1 // pred_check_branch
      %9 = sbr.rel (0) target = $region5
    $region4: #{discriminator_forward.11} parent=1 // pred_region
      _
    $region5: #{discriminator_forward.11} parent=1 // pred_fallthru
      _
    // Predicated region
    $region6: #{discriminator_forward.11} parent=1 // pred_check
      _
    $region7: #{discriminator_forward.11} parent=1 // pred_check_branch
      %11 = sbr.rel (0) target = $region9
    $region8: #{discriminator_forward.11} parent=1 // pred_region
      _
    $region9: #{discriminator_forward.11} parent=1 // pred_fallthru
      _
    %v13 = vld [vmem:[%s0] sm:$0xff]
    %v14 = vld [vmem:[%s0 + $0x8] sm:$0xff]
    %v15 = vld [vmem:[%s1] sm:$0xf]
    %v16 = vld [vmem:[%s1 + $0x4] sm:$0xf]
    %v17 = vld [vmem:[%s1 + $0x8] sm:$0xf]
    %v18 = vld [vmem:[%s1 + $0xc] sm:$0xf]
    %v19 = vld [vmem:[%s1 + $0x10] sm:$0xf]
    %v20 = vld [vmem:[%s1 + $0x14] sm:$0xf]
    %v21 = vld [vmem:[%s1 + $0x18] sm:$0xf]
    %v22 = vld [vmem:[%s1 + $0x1c] sm:$0xf]
    %v23 = vld [vmem:[%s1 + $0x20] sm:$0xf]
    %v24 = vld [vmem:[%s1 + $0x24] sm:$0xf]
    %v25 = vld [vmem:[%s1 + $0x28] sm:$0xf]
    %v26 = vld [vmem:[%s1 + $0x2c] sm:$0xf]
    %v27 = vld [vmem:[%s1 + $0x30] sm:$0xf]
    %v28 = vld [vmem:[%s1 + $0x34] sm:$0xf]
    %v29 = vld [vmem:[%s1 + $0x38] sm:$0xf]
    %v30 = vld [vmem:[%s1 + $0x3c] sm:$0xf]
    %v31 = vld [vmem:[%s1 + $0x40] sm:$0xf]
    %v32 = vld [vmem:[%s1 + $0x44] sm:$0xf]
    %v33 = vld [vmem:[%s1 + $0x48] sm:$0xf]
    %v34 = vld [vmem:[%s1 + $0x4c] sm:$0xf]
    %v35 = vld [vmem:[%s1 + $0x50] sm:$0xf]
    %v36 = vld [vmem:[%s1 + $0x54] sm:$0xf]
    %v37 = vld [vmem:[%s1 + $0x58] sm:$0xf]
    %v38 = vld [vmem:[%s1 + $0x5c] sm:$0xf]
    %v39 = vld [vmem:[%s1 + $0x60] sm:$0xf]
    %v40 = vld [vmem:[%s1 + $0x64] sm:$0xf]
    %v41 = vld [vmem:[%s1 + $0x68] sm:$0xf]
    %v42 = vld [vmem:[%s1 + $0x6c] sm:$0xf]
    %v43 = vld [vmem:[%s1 + $0x70] sm:$0xf]
    %v44 = vld [vmem:[%s1 + $0x74] sm:$0xf]
    %v45 = vld [vmem:[%s1 + $0x78] sm:$0xf]
    %v46 = vld [vmem:[%s1 + $0x7c] sm:$0xf]
    %v47 = vld [vmem:[%s1 + $0x80] sm:$0xf]
    %v48 = vld [vmem:[%s1 + $0x84] sm:$0xf]
    %v49 = vld [vmem:[%s1 + $0x88] sm:$0xf]
    %v50 = vld [vmem:[%s1 + $0x8c] sm:$0xf]
    %v51 = vld [vmem:[%s1 + $0x90] sm:$0xf]
    %v52 = vld [vmem:[%s1 + $0x94] sm:$0xf]
    %v53 = vld [vmem:[%s1 + $0x98] sm:$0xf]
    %v54 = vld [vmem:[%s1 + $0x9c] sm:$0xf]
    %v55 = vld [vmem:[%s1 + $0xa0] sm:$0xf]
    %v56 = vld [vmem:[%s1 + $0xa4] sm:$0xf]
    %v57 = vld [vmem:[%s1 + $0xa8] sm:$0xf]
    %v58 = vld [vmem:[%s1 + $0xac] sm:$0xf]
    %v59 = vld [vmem:[%s1 + $0xb0] sm:$0xf]
    %v60 = vld [vmem:[%s1 + $0xb4] sm:$0xf]
    %v61 = vld [vmem:[%s1 + $0xb8] sm:$0xf]
    %v62 = vld [vmem:[%s1 + $0xbc] sm:$0xf]
    %v63 = vld [vmem:[%s1 + $0xc0] sm:$0xf]
    %v64 = vld [vmem:[%s1 + $0xc4] sm:$0xf]
    %v65 = vld [vmem:[%s1 + $0xc8] sm:$0xf]
    %v66 = vld [vmem:[%s1 + $0xcc] sm:$0xf]
    %v67 = vld [vmem:[%s1 + $0xd0] sm:$0xf]
    %v68 = vld [vmem:[%s1 + $0xd4] sm:$0xf]
    %v69 = vld [vmem:[%s1 + $0xd8] sm:$0xf]
    %v70 = vld [vmem:[%s1 + $0xdc] sm:$0xf]
    %v71 = vld [vmem:[%s1 + $0xe0] sm:$0xf]
    %v72 = vld [vmem:[%s1 + $0xe4] sm:$0xf]
    %v73 = vld [vmem:[%s1 + $0xe8] sm:$0xf]
    %v74 = vld [vmem:[%s1 + $0xec] sm:$0xf]
    %v75 = vld [vmem:[%s1 + $0xf0] sm:$0xf]
    %v76 = vld [vmem:[%s1 + $0xf4] sm:$0xf]
    %v77 = vld [vmem:[%s1 + $0xf8] sm:$0xf]
    %v78 = vld [vmem:[%s1 + $0xfc] sm:$0xf]
    %v79 = vld [vmem:[%s1 + $0x100] sm:$0xf]
    %v80 = vld [vmem:[%s1 + $0x104] sm:$0xf]
    %v81 = vld [vmem:[%s1 + $0x108] sm:$0xf]
    %v82 = vld [vmem:[%s1 + $0x10c] sm:$0xf]
    %v83 = vld [vmem:[%s1 + $0x110] sm:$0xf]
    %v84 = vld [vmem:[%s1 + $0x114] sm:$0xf]
    %v85 = vld [vmem:[%s1 + $0x118] sm:$0xf]
    %v86 = vld [vmem:[%s1 + $0x11c] sm:$0xf]
    %v87 = vld [vmem:[%s1 + $0x120] sm:$0xf]
    %v88 = vld [vmem:[%s1 + $0x124] sm:$0xf]
    %v89 = vld [vmem:[%s1 + $0x128] sm:$0xf]
    %v90 = vld [vmem:[%s1 + $0x12c] sm:$0xf]
    %v91 = vld [vmem:[%s1 + $0x130] sm:$0xf]
    %v92 = vld [vmem:[%s1 + $0x134] sm:$0xf]
    %v93 = vld [vmem:[%s1 + $0x138] sm:$0xf]
    %v94 = vld [vmem:[%s1 + $0x13c] sm:$0xf]
    %v95 = vld [vmem:[%s1 + $0x140] sm:$0xf]
    %v96 = vld [vmem:[%s1 + $0x144] sm:$0xf]
    %v97 = vld [vmem:[%s1 + $0x148] sm:$0xf]
    %v98 = vld [vmem:[%s1 + $0x14c] sm:$0xf]
    %v99 = vld [vmem:[%s1 + $0x150] sm:$0xf]
    %v100 = vld [vmem:[%s1 + $0x154] sm:$0xf]
    %v101 = vld [vmem:[%s1 + $0x158] sm:$0xf]
    %v102 = vld [vmem:[%s1 + $0x15c] sm:$0xf]
    %v103 = vld [vmem:[%s1 + $0x160] sm:$0xf]
    %v104 = vld [vmem:[%s1 + $0x164] sm:$0xf]
    %v105 = vld [vmem:[%s1 + $0x168] sm:$0xf]
    %v106 = vld [vmem:[%s1 + $0x16c] sm:$0xf]
    %v107 = vld [vmem:[%s1 + $0x170] sm:$0xf]
    %v108 = vld [vmem:[%s1 + $0x174] sm:$0xf]
    %v109 = vld [vmem:[%s1 + $0x178] sm:$0xf]
    %v110 = vld [vmem:[%s1 + $0x17c] sm:$0xf]
    %v111 = vld [vmem:[%s1 + $0x180] sm:$0xf]
    %v112 = vld [vmem:[%s1 + $0x184] sm:$0xf]
    %v113 = vld [vmem:[%s1 + $0x188] sm:$0xf]
    %v114 = vld [vmem:[%s1 + $0x18c] sm:$0xf]
    %v115 = vld [vmem:[%s1 + $0x190] sm:$0xf]
    %v116 = vld [vmem:[%s1 + $0x194] sm:$0xf]
    %v117 = vld [vmem:[%s1 + $0x198] sm:$0xf]
    %v118 = vld [vmem:[%s1 + $0x19c] sm:$0xf]
    %v119 = vld [vmem:[%s1 + $0x1a0] sm:$0xf]
    %v120 = vld [vmem:[%s1 + $0x1a4] sm:$0xf]
    %v121 = vld [vmem:[%s1 + $0x1a8] sm:$0xf]
    %v122 = vld [vmem:[%s1 + $0x1ac] sm:$0xf]
    %v123 = vld [vmem:[%s1 + $0x1b0] sm:$0xf]
    %v124 = vld [vmem:[%s1 + $0x1b4] sm:$0xf]
    %v125 = vld [vmem:[%s1 + $0x1b8] sm:$0xf]
    %v126 = vld [vmem:[%s1 + $0x1bc] sm:$0xf]
    %v127 = vld [vmem:[%s1 + $0x1c0] sm:$0xf]
    %v128 = vld [vmem:[%s1 + $0x1c4] sm:$0xf]
    %v129 = vld [vmem:[%s1 + $0x1c8] sm:$0xf]
    %v130 = vld [vmem:[%s1 + $0x1cc] sm:$0xf]
    %v131 = vld [vmem:[%s1 + $0x1d0] sm:$0xf]
    %v132 = vld [vmem:[%s1 + $0x1d4] sm:$0xf]
    %v133 = vld [vmem:[%s1 + $0x1d8] sm:$0xf]
    %v134 = vld [vmem:[%s1 + $0x1dc] sm:$0xf]
    %v135 = vld [vmem:[%s1 + $0x1e0] sm:$0xf]
    %v136 = vld [vmem:[%s1 + $0x1e4] sm:$0xf]
    %v137 = vld [vmem:[%s1 + $0x1e8] sm:$0xf]
    %v138 = vld [vmem:[%s1 + $0x1ec] sm:$0xf]
    %v139 = vld [vmem:[%s1 + $0x1f0] sm:$0xf]
    %v140 = vld [vmem:[%s1 + $0x1f4] sm:$0xf]
    %v141 = vld [vmem:[%s1 + $0x1f8] sm:$0xf]
    %v142 = vld [vmem:[%s1 + $0x1fc] sm:$0xf]
    %v143 = vld [vmem:[%s1 + $0x200] sm:$0xf]
    %v144 = vld [vmem:[%s1 + $0x204] sm:$0xf]
    %v145 = vld [vmem:[%s1 + $0x208] sm:$0xf]
    %v146 = vld [vmem:[%s1 + $0x20c] sm:$0xf]
    %v147 = vld [vmem:[%s1 + $0x210] sm:$0xf]
    %v148 = vld [vmem:[%s1 + $0x214] sm:$0xf]
    %v149 = vld [vmem:[%s1 + $0x218] sm:$0xf]
    %v150 = vld [vmem:[%s1 + $0x21c] sm:$0xf]
    %v151 = vld [vmem:[%s1 + $0x220] sm:$0xf]
    %v152 = vld [vmem:[%s1 + $0x224] sm:$0xf]
    %v153 = vld [vmem:[%s1 + $0x228] sm:$0xf]
    %v154 = vld [vmem:[%s1 + $0x22c] sm:$0xf]
    %v155 = vld [vmem:[%s1 + $0x230] sm:$0xf]
    %v156 = vld [vmem:[%s1 + $0x234] sm:$0xf]
    %v157 = vld [vmem:[%s1 + $0x238] sm:$0xf]
    %v158 = vld [vmem:[%s1 + $0x23c] sm:$0xf]
    %v159 = vld [vmem:[%s1 + $0x240] sm:$0xf]
    %v160 = vld [vmem:[%s1 + $0x244] sm:$0xf]
    %v161 = vld [vmem:[%s1 + $0x248] sm:$0xf]
    %v162 = vld [vmem:[%s1 + $0x24c] sm:$0xf]
    %v163 = vld [vmem:[%s1 + $0x250] sm:$0xf]
    %v164 = vld [vmem:[%s1 + $0x254] sm:$0xf]
    %v165 = vld [vmem:[%s1 + $0x258] sm:$0xf]
    %v166 = vld [vmem:[%s1 + $0x25c] sm:$0xf]
    %v167 = vld [vmem:[%s1 + $0x260] sm:$0xf]
    %v168 = vld [vmem:[%s1 + $0x264] sm:$0xf]
    %v169 = vld [vmem:[%s1 + $0x268] sm:$0xf]
    %v170 = vld [vmem:[%s1 + $0x26c] sm:$0xf]
    %v171 = vld [vmem:[%s1 + $0x270] sm:$0xf]
    %v172 = vld [vmem:[%s1 + $0x274] sm:$0xf]
    %v173 = vld [vmem:[%s1 + $0x278] sm:$0xf]
    %v174 = vld [vmem:[%s1 + $0x27c] sm:$0xf]
    %v175 = vld [vmem:[%s1 + $0x280] sm:$0xf]
    %v176 = vld [vmem:[%s1 + $0x284] sm:$0xf]
    %v177 = vld [vmem:[%s1 + $0x288] sm:$0xf]
    %v178 = vld [vmem:[%s1 + $0x28c] sm:$0xf]
    %v179 = vld [vmem:[%s1 + $0x290] sm:$0xf]
    %v180 = vld [vmem:[%s1 + $0x294] sm:$0xf]
    %v181 = vld [vmem:[%s1 + $0x298] sm:$0xf]
    %v182 = vld [vmem:[%s1 + $0x29c] sm:$0xf]
    %v183 = vld [vmem:[%s1 + $0x2a0] sm:$0xf]
    %v184 = vld [vmem:[%s1 + $0x2a4] sm:$0xf]
    %v185 = vld [vmem:[%s1 + $0x2a8] sm:$0xf]
    %v186 = vld [vmem:[%s1 + $0x2ac] sm:$0xf]
    %v187 = vld [vmem:[%s1 + $0x2b0] sm:$0xf]
    %v188 = vld [vmem:[%s1 + $0x2b4] sm:$0xf]
    %v189 = vld [vmem:[%s1 + $0x2b8] sm:$0xf]
    %v190 = vld [vmem:[%s1 + $0x2bc] sm:$0xf]
    %v191 = vld [vmem:[%s1 + $0x2c0] sm:$0xf]
    %v192 = vld [vmem:[%s1 + $0x2c4] sm:$0xf]
    %v193 = vld [vmem:[%s1 + $0x2c8] sm:$0xf]
    %v194 = vld [vmem:[%s1 + $0x2cc] sm:$0xf]
    %v195 = vld [vmem:[%s1 + $0x2d0] sm:$0xf]
    %v196 = vld [vmem:[%s1 + $0x2d4] sm:$0xf]
    %v197 = vld [vmem:[%s1 + $0x2d8] sm:$0xf]
    %v198 = vld [vmem:[%s1 + $0x2dc] sm:$0xf]
    %v199 = vld [vmem:[%s1 + $0x2e0] sm:$0xf]
    %v200 = vld [vmem:[%s1 + $0x2e4] sm:$0xf]
    %v201 = vld [vmem:[%s1 + $0x2e8] sm:$0xf]
    %v202 = vld [vmem:[%s1 + $0x2ec] sm:$0xf]
    %v203 = vld [vmem:[%s1 + $0x2f0] sm:$0xf]
    %v204 = vld [vmem:[%s1 + $0x2f4] sm:$0xf]
    %v205 = vld [vmem:[%s1 + $0x2f8] sm:$0xf]
    %v206 = vld [vmem:[%s1 + $0x2fc] sm:$0xf]
    %v207 = vld [vmem:[%s1 + $0x300] sm:$0xf]
    %v208 = vld [vmem:[%s1 + $0x304] sm:$0xf]
    %v209 = vld [vmem:[%s1 + $0x308] sm:$0xf]
    %v210 = vld [vmem:[%s1 + $0x30c] sm:$0xf]
    %v211 = vld [vmem:[%s1 + $0x310] sm:$0xf]
    %v212 = vld [vmem:[%s1 + $0x314] sm:$0xf]
    %v213 = vld [vmem:[%s1 + $0x318] sm:$0xf]
    %v214 = vld [vmem:[%s1 + $0x31c] sm:$0xf]
    %v215 = vld [vmem:[%s1 + $0x320] sm:$0xf]
    %v216 = vld [vmem:[%s1 + $0x324] sm:$0xf]
    %v217 = vld [vmem:[%s1 + $0x328] sm:$0xf]
    %v218 = vld [vmem:[%s1 + $0x32c] sm:$0xf]
    %v219 = vld [vmem:[%s1 + $0x330] sm:$0xf]
    %v220 = vld [vmem:[%s1 + $0x334] sm:$0xf]
    %v221 = vld [vmem:[%s1 + $0x338] sm:$0xf]
    %v222 = vld [vmem:[%s1 + $0x33c] sm:$0xf]
    %v223 = vld [vmem:[%s1 + $0x340] sm:$0xf]
    %v224 = vld [vmem:[%s1 + $0x344] sm:$0xf]
    %v225 = vld [vmem:[%s1 + $0x348] sm:$0xf]
    %v226 = vld [vmem:[%s1 + $0x34c] sm:$0xf]
    %v227 = vld [vmem:[%s1 + $0x350] sm:$0xf]
    %v228 = vld [vmem:[%s1 + $0x354] sm:$0xf]
    %v229 = vld [vmem:[%s1 + $0x358] sm:$0xf]
    %v230 = vld [vmem:[%s1 + $0x35c] sm:$0xf]
    %v231 = vld [vmem:[%s1 + $0x360] sm:$0xf]
    %v232 = vld [vmem:[%s1 + $0x364] sm:$0xf]
    %v233 = vld [vmem:[%s1 + $0x368] sm:$0xf]
    %v234 = vld [vmem:[%s1 + $0x36c] sm:$0xf]
    %v235 = vld [vmem:[%s1 + $0x370] sm:$0xf]
    %v236 = vld [vmem:[%s1 + $0x374] sm:$0xf]
    %v237 = vld [vmem:[%s1 + $0x378] sm:$0xf]
    %v238 = vld [vmem:[%s1 + $0x37c] sm:$0xf]
    %v239 = vld [vmem:[%s1 + $0x380] sm:$0xf]
    %v240 = vld [vmem:[%s1 + $0x384] sm:$0xf]
    %v241 = vld [vmem:[%s1 + $0x388] sm:$0xf]
    %v242 = vld [vmem:[%s1 + $0x38c] sm:$0xf]
    %v243 = vld [vmem:[%s1 + $0x390] sm:$0xf]
    %v244 = vld [vmem:[%s1 + $0x394] sm:$0xf]
    %v245 = vld [vmem:[%s1 + $0x398] sm:$0xf]
    %v246 = vld [vmem:[%s1 + $0x39c] sm:$0xf]
    %v247 = vld [vmem:[%s1 + $0x3a0] sm:$0xf]
    %v248 = vld [vmem:[%s1 + $0x3a4] sm:$0xf]
    %v249 = vld [vmem:[%s1 + $0x3a8] sm:$0xf]
    %v250 = vld [vmem:[%s1 + $0x3ac] sm:$0xf]
    %v251 = vld [vmem:[%s1 + $0x3b0] sm:$0xf]
    %v252 = vld [vmem:[%s1 + $0x3b4] sm:$0xf]
    %v253 = vld [vmem:[%s1 + $0x3b8] sm:$0xf]
    %v254 = vld [vmem:[%s1 + $0x3bc] sm:$0xf]
    %v255 = vld [vmem:[%s1 + $0x3c0] sm:$0xf]
    %v256 = vld [vmem:[%s1 + $0x3c4] sm:$0xf]
    %v257 = vld [vmem:[%s1 + $0x3c8] sm:$0xf]
    %v258 = vld [vmem:[%s1 + $0x3cc] sm:$0xf]
    %v259 = vld [vmem:[%s1 + $0x3d0] sm:$0xf]
    %v260 = vld [vmem:[%s1 + $0x3d4] sm:$0xf]
    %v261 = vld [vmem:[%s1 + $0x3d8] sm:$0xf]
    %v262 = vld [vmem:[%s1 + $0x3dc] sm:$0xf]
    %v263 = vld [vmem:[%s1 + $0x3e0] sm:$0xf]
    %v264 = vld [vmem:[%s1 + $0x3e4] sm:$0xf]
    %v265 = vld [vmem:[%s1 + $0x3e8] sm:$0xf]
    %v266 = vld [vmem:[%s1 + $0x3ec] sm:$0xf]
    %v267 = vld [vmem:[%s1 + $0x3f0] sm:$0xf]
    %v268 = vld [vmem:[%s1 + $0x3f4] sm:$0xf]
    %v269 = vld [vmem:[%s1 + $0x3f8] sm:$0xf]
    %v270 = vld [vmem:[%s1 + $0x3fc] sm:$0xf]
    %v273 = vcombine.high %v13, %v13
    %v275 = vunpack.c.l.s4 1966171168
    %v276 = vunpack.c.0.s8 %v275
    %v277 = vlaneseq
    %v278 = vshrl.u32 %v277, 7
    %v279 = vsub.s32 %v276, %v278
    %v280 = vrot.slane %v13, %v279
    %v282 = vunpack.c.l.s4 1966171168
    %v283 = vunpack.c.0.s8 %v282
    %v284 = vlaneseq
    %v285 = vshrl.u32 %v284, 7
    %v286 = vsub.s32 %v283, %v285
    %v287 = vrot.slane %v273, %v286
    %v288 = vcombine.high %v280, %v280
    %v289 = vcombine.high %v287, %v287
    %v291 = vunpack.c.l.s4 1966171168
    %v292 = vunpack.c.0.s8 %v291
    %v293 = vlaneseq
    %v294 = vshrl.u32 %v293, 7
    %v295 = vsub.s32 %v292, %v294
    %v296 = vrot.slane %v280, %v295
    %v298 = vunpack.c.l.s4 1966171168
    %v299 = vunpack.c.0.s8 %v298
    %v300 = vlaneseq
    %v301 = vshrl.u32 %v300, 7
    %v302 = vsub.s32 %v299, %v301
    %v303 = vrot.slane %v287, %v302
    %v305 = vunpack.c.l.s4 1966171168
    %v306 = vunpack.c.0.s8 %v305
    %v307 = vlaneseq
    %v308 = vshrl.u32 %v307, 7
    %v309 = vsub.s32 %v306, %v308
    %v310 = vrot.slane %v288, %v309
    %v312 = vunpack.c.l.s4 1966171168
    %v313 = vunpack.c.0.s8 %v312
    %v314 = vlaneseq
    %v315 = vshrl.u32 %v314, 7
    %v316 = vsub.s32 %v313, %v315
    %v317 = vrot.slane %v289, %v316
    %v318 = vcombine.high %v296, %v296
    %v319 = vcombine.high %v303, %v303
    %v320 = vcombine.high %v310, %v310
    %v321 = vcombine.high %v317, %v317
    %v322 = vcombine.high %v14, %v14
    %v324 = vunpack.c.l.s4 1966171168
    %v325 = vunpack.c.0.s8 %v324
    %v326 = vlaneseq
    %v327 = vshrl.u32 %v326, 7
    %v328 = vsub.s32 %v325, %v327
    %v329 = vrot.slane %v14, %v328
    %v331 = vunpack.c.l.s4 1966171168
    %v332 = vunpack.c.0.s8 %v331
    %v333 = vlaneseq
    %v334 = vshrl.u32 %v333, 7
    %v335 = vsub.s32 %v332, %v334
    %v336 = vrot.slane %v322, %v335
    %v337 = vcombine.high %v329, %v329
    %v338 = vcombine.high %v336, %v336
    %v340 = vunpack.c.l.s4 1966171168
    %v341 = vunpack.c.0.s8 %v340
    %v342 = vlaneseq
    %v343 = vshrl.u32 %v342, 7
    %v344 = vsub.s32 %v341, %v343
    %v345 = vrot.slane %v329, %v344
    %v347 = vunpack.c.l.s4 1966171168
    %v348 = vunpack.c.0.s8 %v347
    %v349 = vlaneseq
    %v350 = vshrl.u32 %v349, 7
    %v351 = vsub.s32 %v348, %v350
    %v352 = vrot.slane %v336, %v351
    %v354 = vunpack.c.l.s4 1966171168
    %v355 = vunpack.c.0.s8 %v354
    %v356 = vlaneseq
    %v357 = vshrl.u32 %v356, 7
    %v358 = vsub.s32 %v355, %v357
    %v359 = vrot.slane %v337, %v358
    %v361 = vunpack.c.l.s4 1966171168
    %v362 = vunpack.c.0.s8 %v361
    %v363 = vlaneseq
    %v364 = vshrl.u32 %v363, 7
    %v365 = vsub.s32 %v362, %v364
    %v366 = vrot.slane %v338, %v365
    %v367 = vcombine.high %v345, %v345
    %v368 = vcombine.high %v352, %v352
    %v369 = vcombine.high %v359, %v359
    %v370 = vcombine.high %v366, %v366
    %v643 = vunpack.c.l.b16 %v15
    %v644 = vunpack.c.l.b16 %v16
    %v645 = vunpack.c.l.b16 %v17
    %v646 = vunpack.c.l.b16 %v18
    %v647 = vunpack.c.l.b16 %v19
    %v648 = vunpack.c.l.b16 %v20
    %v649 = vunpack.c.l.b16 %v21
    %v650 = vunpack.c.l.b16 %v22
    %v651 = vunpack.c.l.b16 %v23
    %v652 = vunpack.c.l.b16 %v24
    %v653 = vunpack.c.l.b16 %v25
    %v654 = vunpack.c.l.b16 %v26
    %v655 = vunpack.c.l.b16 %v27
    %v656 = vunpack.c.l.b16 %v28
    %v657 = vunpack.c.l.b16 %v29
    %v658 = vunpack.c.l.b16 %v30
    %v659 = vunpack.c.l.b16 %v31
    %v660 = vunpack.c.l.b16 %v32
    %v661 = vunpack.c.l.b16 %v33
    %v662 = vunpack.c.l.b16 %v34
    %v663 = vunpack.c.l.b16 %v35
    %v664 = vunpack.c.l.b16 %v36
    %v665 = vunpack.c.l.b16 %v37
    %v666 = vunpack.c.l.b16 %v38
    %v667 = vunpack.c.l.b16 %v39
    %v668 = vunpack.c.l.b16 %v40
    %v669 = vunpack.c.l.b16 %v41
    %v670 = vunpack.c.l.b16 %v42
    %v671 = vunpack.c.l.b16 %v43
    %v672 = vunpack.c.l.b16 %v44
    %v673 = vunpack.c.l.b16 %v45
    %v674 = vunpack.c.l.b16 %v46
    %v675 = vunpack.c.l.b16 %v47
    %v676 = vunpack.c.l.b16 %v48
    %v677 = vunpack.c.l.b16 %v49
    %v678 = vunpack.c.l.b16 %v50
    %v679 = vunpack.c.l.b16 %v51
    %v680 = vunpack.c.l.b16 %v52
    %v681 = vunpack.c.l.b16 %v53
    %v682 = vunpack.c.l.b16 %v54
    %v683 = vunpack.c.l.b16 %v55
    %v684 = vunpack.c.l.b16 %v56
    %v685 = vunpack.c.l.b16 %v57
    %v686 = vunpack.c.l.b16 %v58
    %v687 = vunpack.c.l.b16 %v59
    %v688 = vunpack.c.l.b16 %v60
    %v689 = vunpack.c.l.b16 %v61
    %v690 = vunpack.c.l.b16 %v62
    %v691 = vunpack.c.l.b16 %v63
    %v692 = vunpack.c.l.b16 %v64
    %v693 = vunpack.c.l.b16 %v65
    %v694 = vunpack.c.l.b16 %v66
    %v695 = vunpack.c.l.b16 %v67
    %v696 = vunpack.c.l.b16 %v68
    %v697 = vunpack.c.l.b16 %v69
    %v698 = vunpack.c.l.b16 %v70
    %v699 = vunpack.c.l.b16 %v71
    %v700 = vunpack.c.l.b16 %v72
    %v701 = vunpack.c.l.b16 %v73
    %v702 = vunpack.c.l.b16 %v74
    %v703 = vunpack.c.l.b16 %v75
    %v704 = vunpack.c.l.b16 %v76
    %v705 = vunpack.c.l.b16 %v77
    %v706 = vunpack.c.l.b16 %v78
    %v707 = vunpack.c.l.b16 %v79
    %v708 = vunpack.c.l.b16 %v80
    %v709 = vunpack.c.l.b16 %v81
    %v710 = vunpack.c.l.b16 %v82
    %v711 = vunpack.c.l.b16 %v83
    %v712 = vunpack.c.l.b16 %v84
    %v713 = vunpack.c.l.b16 %v85
    %v714 = vunpack.c.l.b16 %v86
    %v715 = vunpack.c.l.b16 %v87
    %v716 = vunpack.c.l.b16 %v88
    %v717 = vunpack.c.l.b16 %v89
    %v718 = vunpack.c.l.b16 %v90
    %v719 = vunpack.c.l.b16 %v91
    %v720 = vunpack.c.l.b16 %v92
    %v721 = vunpack.c.l.b16 %v93
    %v722 = vunpack.c.l.b16 %v94
    %v723 = vunpack.c.l.b16 %v95
    %v724 = vunpack.c.l.b16 %v96
    %v725 = vunpack.c.l.b16 %v97
    %v726 = vunpack.c.l.b16 %v98
    %v727 = vunpack.c.l.b16 %v99
    %v728 = vunpack.c.l.b16 %v100
    %v729 = vunpack.c.l.b16 %v101
    %v730 = vunpack.c.l.b16 %v102
    %v731 = vunpack.c.l.b16 %v103
    %v732 = vunpack.c.l.b16 %v104
    %v733 = vunpack.c.l.b16 %v105
    %v734 = vunpack.c.l.b16 %v106
    %v735 = vunpack.c.l.b16 %v107
    %v736 = vunpack.c.l.b16 %v108
    %v737 = vunpack.c.l.b16 %v109
    %v738 = vunpack.c.l.b16 %v110
    %v739 = vunpack.c.l.b16 %v111
    %v740 = vunpack.c.l.b16 %v112
    %v741 = vunpack.c.l.b16 %v113
    %v742 = vunpack.c.l.b16 %v114
    %v743 = vunpack.c.l.b16 %v115
    %v744 = vunpack.c.l.b16 %v116
    %v745 = vunpack.c.l.b16 %v117
    %v746 = vunpack.c.l.b16 %v118
    %v747 = vunpack.c.l.b16 %v119
    %v748 = vunpack.c.l.b16 %v120
    %v749 = vunpack.c.l.b16 %v121
    %v750 = vunpack.c.l.b16 %v122
    %v751 = vunpack.c.l.b16 %v123
    %v752 = vunpack.c.l.b16 %v124
    %v753 = vunpack.c.l.b16 %v125
    %v754 = vunpack.c.l.b16 %v126
    %v755 = vunpack.c.l.b16 %v127
    %v756 = vunpack.c.l.b16 %v128
    %v757 = vunpack.c.l.b16 %v129
    %v758 = vunpack.c.l.b16 %v130
    %v759 = vunpack.c.l.b16 %v131
    %v760 = vunpack.c.l.b16 %v132
    %v761 = vunpack.c.l.b16 %v133
    %v762 = vunpack.c.l.b16 %v134
    %v763 = vunpack.c.l.b16 %v135
    %v764 = vunpack.c.l.b16 %v136
    %v765 = vunpack.c.l.b16 %v137
    %v766 = vunpack.c.l.b16 %v138
    %v767 = vunpack.c.l.b16 %v139
    %v768 = vunpack.c.l.b16 %v140
    %v769 = vunpack.c.l.b16 %v141
    %v770 = vunpack.c.l.b16 %v142
    %v771 = vunpack.c.l.b16 %v143
    %v772 = vunpack.c.l.b16 %v144
    %v773 = vunpack.c.l.b16 %v145
    %v774 = vunpack.c.l.b16 %v146
    %v775 = vunpack.c.l.b16 %v147
    %v776 = vunpack.c.l.b16 %v148
    %v777 = vunpack.c.l.b16 %v149
    %v778 = vunpack.c.l.b16 %v150
    %v779 = vunpack.c.l.b16 %v151
    %v780 = vunpack.c.l.b16 %v152
    %v781 = vunpack.c.l.b16 %v153
    %v782 = vunpack.c.l.b16 %v154
    %v783 = vunpack.c.l.b16 %v155
    %v784 = vunpack.c.l.b16 %v156
    %v785 = vunpack.c.l.b16 %v157
    %v786 = vunpack.c.l.b16 %v158
    %v787 = vunpack.c.l.b16 %v159
    %v788 = vunpack.c.l.b16 %v160
    %v789 = vunpack.c.l.b16 %v161
    %v790 = vunpack.c.l.b16 %v162
    %v791 = vunpack.c.l.b16 %v163
    %v792 = vunpack.c.l.b16 %v164
    %v793 = vunpack.c.l.b16 %v165
    %v794 = vunpack.c.l.b16 %v166
    %v795 = vunpack.c.l.b16 %v167
    %v796 = vunpack.c.l.b16 %v168
    %v797 = vunpack.c.l.b16 %v169
    %v798 = vunpack.c.l.b16 %v170
    %v799 = vunpack.c.l.b16 %v171
    %v800 = vunpack.c.l.b16 %v172
    %v801 = vunpack.c.l.b16 %v173
    %v802 = vunpack.c.l.b16 %v174
    %v803 = vunpack.c.l.b16 %v175
    %v804 = vunpack.c.l.b16 %v176
    %v805 = vunpack.c.l.b16 %v177
    %v806 = vunpack.c.l.b16 %v178
    %v807 = vunpack.c.l.b16 %v179
    %v808 = vunpack.c.l.b16 %v180
    %v809 = vunpack.c.l.b16 %v181
    %v810 = vunpack.c.l.b16 %v182
    %v811 = vunpack.c.l.b16 %v183
    %v812 = vunpack.c.l.b16 %v184
    %v813 = vunpack.c.l.b16 %v185
    %v814 = vunpack.c.l.b16 %v186
    %v815 = vunpack.c.l.b16 %v187
    %v816 = vunpack.c.l.b16 %v188
    %v817 = vunpack.c.l.b16 %v189
    %v818 = vunpack.c.l.b16 %v190
    %v819 = vunpack.c.l.b16 %v191
    %v820 = vunpack.c.l.b16 %v192
    %v821 = vunpack.c.l.b16 %v193
    %v822 = vunpack.c.l.b16 %v194
    %v823 = vunpack.c.l.b16 %v195
    %v824 = vunpack.c.l.b16 %v196
    %v825 = vunpack.c.l.b16 %v197
    %v826 = vunpack.c.l.b16 %v198
    %v827 = vunpack.c.l.b16 %v199
    %v828 = vunpack.c.l.b16 %v200
    %v829 = vunpack.c.l.b16 %v201
    %v830 = vunpack.c.l.b16 %v202
    %v831 = vunpack.c.l.b16 %v203
    %v832 = vunpack.c.l.b16 %v204
    %v833 = vunpack.c.l.b16 %v205
    %v834 = vunpack.c.l.b16 %v206
    %v835 = vunpack.c.l.b16 %v207
    %v836 = vunpack.c.l.b16 %v208
    %v837 = vunpack.c.l.b16 %v209
    %v838 = vunpack.c.l.b16 %v210
    %v839 = vunpack.c.l.b16 %v211
    %v840 = vunpack.c.l.b16 %v212
    %v841 = vunpack.c.l.b16 %v213
    %v842 = vunpack.c.l.b16 %v214
    %v843 = vunpack.c.l.b16 %v215
    %v844 = vunpack.c.l.b16 %v216
    %v845 = vunpack.c.l.b16 %v217
    %v846 = vunpack.c.l.b16 %v218
    %v847 = vunpack.c.l.b16 %v219
    %v848 = vunpack.c.l.b16 %v220
    %v849 = vunpack.c.l.b16 %v221
    %v850 = vunpack.c.l.b16 %v222
    %v851 = vunpack.c.l.b16 %v223
    %v852 = vunpack.c.l.b16 %v224
    %v853 = vunpack.c.l.b16 %v225
    %v854 = vunpack.c.l.b16 %v226
    %v855 = vunpack.c.l.b16 %v227
    %v856 = vunpack.c.l.b16 %v228
    %v857 = vunpack.c.l.b16 %v229
    %v858 = vunpack.c.l.b16 %v230
    %v859 = vunpack.c.l.b16 %v231
    %v860 = vunpack.c.l.b16 %v232
    %v861 = vunpack.c.l.b16 %v233
    %v862 = vunpack.c.l.b16 %v234
    %v863 = vunpack.c.l.b16 %v235
    %v864 = vunpack.c.l.b16 %v236
    %v865 = vunpack.c.l.b16 %v237
    %v866 = vunpack.c.l.b16 %v238
    %v867 = vunpack.c.l.b16 %v239
    %v868 = vunpack.c.l.b16 %v240
    %v869 = vunpack.c.l.b16 %v241
    %v870 = vunpack.c.l.b16 %v242
    %v871 = vunpack.c.l.b16 %v243
    %v872 = vunpack.c.l.b16 %v244
    %v873 = vunpack.c.l.b16 %v245
    %v874 = vunpack.c.l.b16 %v246
    %v875 = vunpack.c.l.b16 %v247
    %v876 = vunpack.c.l.b16 %v248
    %v877 = vunpack.c.l.b16 %v249
    %v878 = vunpack.c.l.b16 %v250
    %v879 = vunpack.c.l.b16 %v251
    %v880 = vunpack.c.l.b16 %v252
    %v881 = vunpack.c.l.b16 %v253
    %v882 = vunpack.c.l.b16 %v254
    %v883 = vunpack.c.l.b16 %v255
    %v884 = vunpack.c.l.b16 %v256
    %v885 = vunpack.c.l.b16 %v257
    %v886 = vunpack.c.l.b16 %v258
    %v887 = vunpack.c.l.b16 %v259
    %v888 = vunpack.c.l.b16 %v260
    %v889 = vunpack.c.l.b16 %v261
    %v890 = vunpack.c.l.b16 %v262
    %v891 = vunpack.c.l.b16 %v263
    %v892 = vunpack.c.l.b16 %v264
    %v893 = vunpack.c.l.b16 %v265
    %v894 = vunpack.c.l.b16 %v266
    %v895 = vunpack.c.l.b16 %v267
    %v896 = vunpack.c.l.b16 %v268
    %v897 = vunpack.c.l.b16 %v269
    %v898 = vunpack.c.l.b16 %v270
    %v899 = vpack.c.b16 %v644, %v643
    %v900 = vpack.c.b16 %v646, %v645
    %v901 = vpack.c.b16 %v648, %v647
    %v902 = vpack.c.b16 %v650, %v649
    %v903 = vpack.c.b16 %v652, %v651
    %v904 = vpack.c.b16 %v654, %v653
    %v905 = vpack.c.b16 %v656, %v655
    %v906 = vpack.c.b16 %v658, %v657
    %v907 = vpack.c.b16 %v660, %v659
    %v908 = vpack.c.b16 %v662, %v661
    %v909 = vpack.c.b16 %v664, %v663
    %v910 = vpack.c.b16 %v666, %v665
    %v911 = vpack.c.b16 %v668, %v667
    %v912 = vpack.c.b16 %v670, %v669
    %v913 = vpack.c.b16 %v672, %v671
    %v914 = vpack.c.b16 %v674, %v673
    %v915 = vpack.c.b16 %v676, %v675
    %v916 = vpack.c.b16 %v678, %v677
    %v917 = vpack.c.b16 %v680, %v679
    %v918 = vpack.c.b16 %v682, %v681
    %v919 = vpack.c.b16 %v684, %v683
    %v920 = vpack.c.b16 %v686, %v685
    %v921 = vpack.c.b16 %v688, %v687
    %v922 = vpack.c.b16 %v690, %v689
    %v923 = vpack.c.b16 %v692, %v691
    %v924 = vpack.c.b16 %v694, %v693
    %v925 = vpack.c.b16 %v696, %v695
    %v926 = vpack.c.b16 %v698, %v697
    %v927 = vpack.c.b16 %v700, %v699
    %v928 = vpack.c.b16 %v702, %v701
    %v929 = vpack.c.b16 %v704, %v703
    %v930 = vpack.c.b16 %v706, %v705
    %v931 = vpack.c.b16 %v708, %v707
    %v932 = vpack.c.b16 %v710, %v709
    %v933 = vpack.c.b16 %v712, %v711
    %v934 = vpack.c.b16 %v714, %v713
    %v935 = vpack.c.b16 %v716, %v715
    %v936 = vpack.c.b16 %v718, %v717
    %v937 = vpack.c.b16 %v720, %v719
    %v938 = vpack.c.b16 %v722, %v721
    %v939 = vpack.c.b16 %v724, %v723
    %v940 = vpack.c.b16 %v726, %v725
    %v941 = vpack.c.b16 %v728, %v727
    %v942 = vpack.c.b16 %v730, %v729
    %v943 = vpack.c.b16 %v732, %v731
    %v944 = vpack.c.b16 %v734, %v733
    %v945 = vpack.c.b16 %v736, %v735
    %v946 = vpack.c.b16 %v738, %v737
    %v947 = vpack.c.b16 %v740, %v739
    %v948 = vpack.c.b16 %v742, %v741
    %v949 = vpack.c.b16 %v744, %v743
    %v950 = vpack.c.b16 %v746, %v745
    %v951 = vpack.c.b16 %v748, %v747
    %v952 = vpack.c.b16 %v750, %v749
    %v953 = vpack.c.b16 %v752, %v751
    %v954 = vpack.c.b16 %v754, %v753
    %v955 = vpack.c.b16 %v756, %v755
    %v956 = vpack.c.b16 %v758, %v757
    %v957 = vpack.c.b16 %v760, %v759
    %v958 = vpack.c.b16 %v762, %v761
    %v959 = vpack.c.b16 %v764, %v763
    %v960 = vpack.c.b16 %v766, %v765
    %v961 = vpack.c.b16 %v768, %v767
    %v962 = vpack.c.b16 %v770, %v769
    %v963 = vpack.c.b16 %v772, %v771
    %v964 = vpack.c.b16 %v774, %v773
    %v965 = vpack.c.b16 %v776, %v775
    %v966 = vpack.c.b16 %v778, %v777
    %v967 = vpack.c.b16 %v780, %v779
    %v968 = vpack.c.b16 %v782, %v781
    %v969 = vpack.c.b16 %v784, %v783
    %v970 = vpack.c.b16 %v786, %v785
    %v971 = vpack.c.b16 %v788, %v787
    %v972 = vpack.c.b16 %v790, %v789
    %v973 = vpack.c.b16 %v792, %v791
    %v974 = vpack.c.b16 %v794, %v793
    %v975 = vpack.c.b16 %v796, %v795
    %v976 = vpack.c.b16 %v798, %v797
    %v977 = vpack.c.b16 %v800, %v799
    %v978 = vpack.c.b16 %v802, %v801
    %v979 = vpack.c.b16 %v804, %v803
    %v980 = vpack.c.b16 %v806, %v805
    %v981 = vpack.c.b16 %v808, %v807
    %v982 = vpack.c.b16 %v810, %v809
    %v983 = vpack.c.b16 %v812, %v811
    %v984 = vpack.c.b16 %v814, %v813
    %v985 = vpack.c.b16 %v816, %v815
    %v986 = vpack.c.b16 %v818, %v817
    %v987 = vpack.c.b16 %v820, %v819
    %v988 = vpack.c.b16 %v822, %v821
    %v989 = vpack.c.b16 %v824, %v823
    %v990 = vpack.c.b16 %v826, %v825
    %v991 = vpack.c.b16 %v828, %v827
    %v992 = vpack.c.b16 %v830, %v829
    %v993 = vpack.c.b16 %v832, %v831
    %v994 = vpack.c.b16 %v834, %v833
    %v995 = vpack.c.b16 %v836, %v835
    %v996 = vpack.c.b16 %v838, %v837
    %v997 = vpack.c.b16 %v840, %v839
    %v998 = vpack.c.b16 %v842, %v841
    %v999 = vpack.c.b16 %v844, %v843
    %v1000 = vpack.c.b16 %v846, %v845
    %v1001 = vpack.c.b16 %v848, %v847
    %v1002 = vpack.c.b16 %v850, %v849
    %v1003 = vpack.c.b16 %v852, %v851
    %v1004 = vpack.c.b16 %v854, %v853
    %v1005 = vpack.c.b16 %v856, %v855
    %v1006 = vpack.c.b16 %v858, %v857
    %v1007 = vpack.c.b16 %v860, %v859
    %v1008 = vpack.c.b16 %v862, %v861
    %v1009 = vpack.c.b16 %v864, %v863
    %v1010 = vpack.c.b16 %v866, %v865
    %v1011 = vpack.c.b16 %v868, %v867
    %v1012 = vpack.c.b16 %v870, %v869
    %v1013 = vpack.c.b16 %v872, %v871
    %v1014 = vpack.c.b16 %v874, %v873
    %v1015 = vpack.c.b16 %v876, %v875
    %v1016 = vpack.c.b16 %v878, %v877
    %v1017 = vpack.c.b16 %v880, %v879
    %v1018 = vpack.c.b16 %v882, %v881
    %v1019 = vpack.c.b16 %v884, %v883
    %v1020 = vpack.c.b16 %v886, %v885
    %v1021 = vpack.c.b16 %v888, %v887
    %v1022 = vpack.c.b16 %v890, %v889
    %v1023 = vpack.c.b16 %v892, %v891
    %v1024 = vpack.c.b16 %v894, %v893
    %v1025 = vpack.c.b16 %v896, %v895
    %v1026 = vpack.c.b16 %v898, %v897
    %1155 = vmatprep.subr.bf16.mxu0 0
    %1156 = vmatpush1.bf16.msra.mxu0 %v906
    %1157 = vmatprep.subr.bf16.mxu0 0
    %1158 = vmatpush1.bf16.msra.mxu0 %v905
    %1159 = vmatprep.subr.bf16.mxu0 0
    %1160 = vmatpush1.bf16.msra.mxu0 %v904
    %1161 = vmatprep.subr.bf16.mxu0 0
    %1162 = vmatpush1.bf16.msra.mxu0 %v903
    %1163 = vmatprep.subr.bf16.mxu0 0
    %1164 = vmatpush1.bf16.msra.mxu0 %v902
    %1165 = vmatprep.subr.bf16.mxu0 0
    %1166 = vmatpush1.bf16.msra.mxu0 %v901
    %1167 = vmatprep.subr.bf16.mxu0 0
    %1168 = vmatpush1.bf16.msra.mxu0 %v900
    %1169 = vmatprep.subr.bf16.mxu0 0
    %1170 = vmatpush1.bf16.msra.mxu0 %v899
    %1171 = vmatprep.subr.bf16.mxu0 0
    %1172 = vmatpush2.bf16.msra.mxu0 %v914
    %1173 = vmatprep.subr.bf16.mxu0 0
    %1174 = vmatpush2.bf16.msra.mxu0 %v913
    %1175 = vmatprep.subr.bf16.mxu0 0
    %1176 = vmatpush2.bf16.msra.mxu0 %v912
    %1177 = vmatprep.subr.bf16.mxu0 0
    %1178 = vmatpush2.bf16.msra.mxu0 %v911
    %1179 = vmatprep.subr.bf16.mxu0 0
    %1180 = vmatpush2.bf16.msra.mxu0 %v910
    %1181 = vmatprep.subr.bf16.mxu0 0
    %1182 = vmatpush2.bf16.msra.mxu0 %v909
    %1183 = vmatprep.subr.bf16.mxu0 0
    %1184 = vmatpush2.bf16.msra.mxu0 %v908
    %1185 = vmatprep.subr.bf16.mxu0 0
    %1186 = vmatpush2.bf16.msra.mxu0 %v907
    %1187 = vmatprep.mubr.bf16.mxu0 %v310
    %1188 = vmatmul.mubr.bf16.gmra.mxu0 %v296
    %v1189 = vpop.f32.mrf.mxu0
    %v1190 = vadd.f32 0.0, %v1189
    %v1191 = vpop.f32.mrf.mxu0
    %v1192 = vpop.f32.mrf.mxu0
    %v1193 = vpop.f32.mrf.mxu0
    %1194 = vdwg.mxu0
    %1195 = vmatprep.subr.bf16.mxu0 0
    %1196 = vmatpush1.bf16.msra.mxu0 %v922
    %1197 = vmatprep.subr.bf16.mxu0 0
    %1198 = vmatpush1.bf16.msra.mxu0 %v921
    %1199 = vmatprep.subr.bf16.mxu0 0
    %1200 = vmatpush1.bf16.msra.mxu0 %v920
    %1201 = vmatprep.subr.bf16.mxu0 0
    %1202 = vmatpush1.bf16.msra.mxu0 %v919
    %1203 = vmatprep.subr.bf16.mxu0 0
    %1204 = vmatpush1.bf16.msra.mxu0 %v918
    %1205 = vmatprep.subr.bf16.mxu0 0
    %1206 = vmatpush1.bf16.msra.mxu0 %v917
    %1207 = vmatprep.subr.bf16.mxu0 0
    %1208 = vmatpush1.bf16.msra.mxu0 %v916
    %1209 = vmatprep.subr.bf16.mxu0 0
    %1210 = vmatpush1.bf16.msra.mxu0 %v915
    %1211 = vmatprep.subr.bf16.mxu0 0
    %1212 = vmatpush2.bf16.msra.mxu0 %v930
    %1213 = vmatprep.subr.bf16.mxu0 0
    %1214 = vmatpush2.bf16.msra.mxu0 %v929
    %1215 = vmatprep.subr.bf16.mxu0 0
    %1216 = vmatpush2.bf16.msra.mxu0 %v928
    %1217 = vmatprep.subr.bf16.mxu0 0
    %1218 = vmatpush2.bf16.msra.mxu0 %v927
    %1219 = vmatprep.subr.bf16.mxu0 0
    %1220 = vmatpush2.bf16.msra.mxu0 %v926
    %1221 = vmatprep.subr.bf16.mxu0 0
    %1222 = vmatpush2.bf16.msra.mxu0 %v925
    %1223 = vmatprep.subr.bf16.mxu0 0
    %1224 = vmatpush2.bf16.msra.mxu0 %v924
    %1225 = vmatprep.subr.bf16.mxu0 0
    %1226 = vmatpush2.bf16.msra.mxu0 %v923
    %1227 = vmatprep.mubr.bf16.mxu0 %v320
    %1228 = vmatmul.mubr.bf16.gmra.mxu0 %v318
    %v1229 = vpop.f32.mrf.mxu0
    %v1230 = vadd.f32 %v1190, %v1229
    %v1231 = vpop.f32.mrf.mxu0
    %v1232 = vpop.f32.mrf.mxu0
    %v1233 = vpop.f32.mrf.mxu0
    %1234 = vdwg.mxu0
    %1235 = vmatprep.subr.bf16.mxu0 0
    %1236 = vmatpush1.bf16.msra.mxu0 %v938
    %1237 = vmatprep.subr.bf16.mxu0 0
    %1238 = vmatpush1.bf16.msra.mxu0 %v937
    %1239 = vmatprep.subr.bf16.mxu0 0
    %1240 = vmatpush1.bf16.msra.mxu0 %v936
    %1241 = vmatprep.subr.bf16.mxu0 0
    %1242 = vmatpush1.bf16.msra.mxu0 %v935
    %1243 = vmatprep.subr.bf16.mxu0 0
    %1244 = vmatpush1.bf16.msra.mxu0 %v934
    %1245 = vmatprep.subr.bf16.mxu0 0
    %1246 = vmatpush1.bf16.msra.mxu0 %v933
    %1247 = vmatprep.subr.bf16.mxu0 0
    %1248 = vmatpush1.bf16.msra.mxu0 %v932
    %1249 = vmatprep.subr.bf16.mxu0 0
    %1250 = vmatpush1.bf16.msra.mxu0 %v931
    %1251 = vmatprep.subr.bf16.mxu0 0
    %1252 = vmatpush2.bf16.msra.mxu0 %v946
    %1253 = vmatprep.subr.bf16.mxu0 0
    %1254 = vmatpush2.bf16.msra.mxu0 %v945
    %1255 = vmatprep.subr.bf16.mxu0 0
    %1256 = vmatpush2.bf16.msra.mxu0 %v944
    %1257 = vmatprep.subr.bf16.mxu0 0
    %1258 = vmatpush2.bf16.msra.mxu0 %v943
    %1259 = vmatprep.subr.bf16.mxu0 0
    %1260 = vmatpush2.bf16.msra.mxu0 %v942
    %1261 = vmatprep.subr.bf16.mxu0 0
    %1262 = vmatpush2.bf16.msra.mxu0 %v941
    %1263 = vmatprep.subr.bf16.mxu0 0
    %1264 = vmatpush2.bf16.msra.mxu0 %v940
    %1265 = vmatprep.subr.bf16.mxu0 0
    %1266 = vmatpush2.bf16.msra.mxu0 %v939
    %1267 = vmatprep.mubr.bf16.mxu0 %v317
    %1268 = vmatmul.mubr.bf16.gmra.mxu0 %v303
    %v1269 = vpop.f32.mrf.mxu0
    %v1270 = vadd.f32 %v1230, %v1269
    %v1271 = vpop.f32.mrf.mxu0
    %v1272 = vpop.f32.mrf.mxu0
    %v1273 = vpop.f32.mrf.mxu0
    %1274 = vdwg.mxu0
    %1275 = vmatprep.subr.bf16.mxu0 0
    %1276 = vmatpush1.bf16.msra.mxu0 %v954
    %1277 = vmatprep.subr.bf16.mxu0 0
    %1278 = vmatpush1.bf16.msra.mxu0 %v953
    %1279 = vmatprep.subr.bf16.mxu0 0
    %1280 = vmatpush1.bf16.msra.mxu0 %v952
    %1281 = vmatprep.subr.bf16.mxu0 0
    %1282 = vmatpush1.bf16.msra.mxu0 %v951
    %1283 = vmatprep.subr.bf16.mxu0 0
    %1284 = vmatpush1.bf16.msra.mxu0 %v950
    %1285 = vmatprep.subr.bf16.mxu0 0
    %1286 = vmatpush1.bf16.msra.mxu0 %v949
    %1287 = vmatprep.subr.bf16.mxu0 0
    %1288 = vmatpush1.bf16.msra.mxu0 %v948
    %1289 = vmatprep.subr.bf16.mxu0 0
    %1290 = vmatpush1.bf16.msra.mxu0 %v947
    %1291 = vmatprep.subr.bf16.mxu0 0
    %1292 = vmatpush2.bf16.msra.mxu0 %v962
    %1293 = vmatprep.subr.bf16.mxu0 0
    %1294 = vmatpush2.bf16.msra.mxu0 %v961
    %1295 = vmatprep.subr.bf16.mxu0 0
    %1296 = vmatpush2.bf16.msra.mxu0 %v960
    %1297 = vmatprep.subr.bf16.mxu0 0
    %1298 = vmatpush2.bf16.msra.mxu0 %v959
    %1299 = vmatprep.subr.bf16.mxu0 0
    %1300 = vmatpush2.bf16.msra.mxu0 %v958
    %1301 = vmatprep.subr.bf16.mxu0 0
    %1302 = vmatpush2.bf16.msra.mxu0 %v957
    %1303 = vmatprep.subr.bf16.mxu0 0
    %1304 = vmatpush2.bf16.msra.mxu0 %v956
    %1305 = vmatprep.subr.bf16.mxu0 0
    %1306 = vmatpush2.bf16.msra.mxu0 %v955
    %1307 = vmatprep.mubr.bf16.mxu0 %v321
    %1308 = vmatmul.mubr.bf16.gmra.mxu0 %v319
    %v1309 = vpop.f32.mrf.mxu0
    %v1310 = vadd.f32 %v1270, %v1309
    %v1311 = vpop.f32.mrf.mxu0
    %v1312 = vpop.f32.mrf.mxu0
    %v1313 = vpop.f32.mrf.mxu0
    %1314 = vdwg.mxu0
    %1315 = vmatprep.subr.bf16.mxu0 0
    %1316 = vmatpush1.bf16.msra.mxu0 %v970
    %1317 = vmatprep.subr.bf16.mxu0 0
    %1318 = vmatpush1.bf16.msra.mxu0 %v969
    %1319 = vmatprep.subr.bf16.mxu0 0
    %1320 = vmatpush1.bf16.msra.mxu0 %v968
    %1321 = vmatprep.subr.bf16.mxu0 0
    %1322 = vmatpush1.bf16.msra.mxu0 %v967
    %1323 = vmatprep.subr.bf16.mxu0 0
    %1324 = vmatpush1.bf16.msra.mxu0 %v966
    %1325 = vmatprep.subr.bf16.mxu0 0
    %1326 = vmatpush1.bf16.msra.mxu0 %v965
    %1327 = vmatprep.subr.bf16.mxu0 0
    %1328 = vmatpush1.bf16.msra.mxu0 %v964
    %1329 = vmatprep.subr.bf16.mxu0 0
    %1330 = vmatpush1.bf16.msra.mxu0 %v963
    %1331 = vmatprep.subr.bf16.mxu0 0
    %1332 = vmatpush2.bf16.msra.mxu0 %v978
    %1333 = vmatprep.subr.bf16.mxu0 0
    %1334 = vmatpush2.bf16.msra.mxu0 %v977
    %1335 = vmatprep.subr.bf16.mxu0 0
    %1336 = vmatpush2.bf16.msra.mxu0 %v976
    %1337 = vmatprep.subr.bf16.mxu0 0
    %1338 = vmatpush2.bf16.msra.mxu0 %v975
    %1339 = vmatprep.subr.bf16.mxu0 0
    %1340 = vmatpush2.bf16.msra.mxu0 %v974
    %1341 = vmatprep.subr.bf16.mxu0 0
    %1342 = vmatpush2.bf16.msra.mxu0 %v973
    %1343 = vmatprep.subr.bf16.mxu0 0
    %1344 = vmatpush2.bf16.msra.mxu0 %v972
    %1345 = vmatprep.subr.bf16.mxu0 0
    %1346 = vmatpush2.bf16.msra.mxu0 %v971
    %1347 = vmatprep.mubr.bf16.mxu0 %v359
    %1348 = vmatmul.mubr.bf16.gmra.mxu0 %v345
    %v1349 = vpop.f32.mrf.mxu0
    %v1350 = vadd.f32 %v1310, %v1349
    %v1351 = vpop.f32.mrf.mxu0
    %v1352 = vpop.f32.mrf.mxu0
    %v1353 = vpop.f32.mrf.mxu0
    %1354 = vdwg.mxu0
    %1355 = vmatprep.subr.bf16.mxu0 0
    %1356 = vmatpush1.bf16.msra.mxu0 %v986
    %1357 = vmatprep.subr.bf16.mxu0 0
    %1358 = vmatpush1.bf16.msra.mxu0 %v985
    %1359 = vmatprep.subr.bf16.mxu0 0
    %1360 = vmatpush1.bf16.msra.mxu0 %v984
    %1361 = vmatprep.subr.bf16.mxu0 0
    %1362 = vmatpush1.bf16.msra.mxu0 %v983
    %1363 = vmatprep.subr.bf16.mxu0 0
    %1364 = vmatpush1.bf16.msra.mxu0 %v982
    %1365 = vmatprep.subr.bf16.mxu0 0
    %1366 = vmatpush1.bf16.msra.mxu0 %v981
    %1367 = vmatprep.subr.bf16.mxu0 0
    %1368 = vmatpush1.bf16.msra.mxu0 %v980
    %1369 = vmatprep.subr.bf16.mxu0 0
    %1370 = vmatpush1.bf16.msra.mxu0 %v979
    %1371 = vmatprep.subr.bf16.mxu0 0
    %1372 = vmatpush2.bf16.msra.mxu0 %v994
    %1373 = vmatprep.subr.bf16.mxu0 0
    %1374 = vmatpush2.bf16.msra.mxu0 %v993
    %1375 = vmatprep.subr.bf16.mxu0 0
    %1376 = vmatpush2.bf16.msra.mxu0 %v992
    %1377 = vmatprep.subr.bf16.mxu0 0
    %1378 = vmatpush2.bf16.msra.mxu0 %v991
    %1379 = vmatprep.subr.bf16.mxu0 0
    %1380 = vmatpush2.bf16.msra.mxu0 %v990
    %1381 = vmatprep.subr.bf16.mxu0 0
    %1382 = vmatpush2.bf16.msra.mxu0 %v989
    %1383 = vmatprep.subr.bf16.mxu0 0
    %1384 = vmatpush2.bf16.msra.mxu0 %v988
    %1385 = vmatprep.subr.bf16.mxu0 0
    %1386 = vmatpush2.bf16.msra.mxu0 %v987
    %1387 = vmatprep.mubr.bf16.mxu0 %v369
    %1388 = vmatmul.mubr.bf16.gmra.mxu0 %v367
    %v1389 = vpop.f32.mrf.mxu0
    %v1390 = vadd.f32 %v1350, %v1389
    %v1391 = vpop.f32.mrf.mxu0
    %v1392 = vpop.f32.mrf.mxu0
    %v1393 = vpop.f32.mrf.mxu0
    %1394 = vdwg.mxu0
    %1395 = vmatprep.subr.bf16.mxu0 0
    %1396 = vmatpush1.bf16.msra.mxu0 %v1002
    %1397 = vmatprep.subr.bf16.mxu0 0
    %1398 = vmatpush1.bf16.msra.mxu0 %v1001
    %1399 = vmatprep.subr.bf16.mxu0 0
    %1400 = vmatpush1.bf16.msra.mxu0 %v1000
    %1401 = vmatprep.subr.bf16.mxu0 0
    %1402 = vmatpush1.bf16.msra.mxu0 %v999
    %1403 = vmatprep.subr.bf16.mxu0 0
    %1404 = vmatpush1.bf16.msra.mxu0 %v998
    %1405 = vmatprep.subr.bf16.mxu0 0
    %1406 = vmatpush1.bf16.msra.mxu0 %v997
    %1407 = vmatprep.subr.bf16.mxu0 0
    %1408 = vmatpush1.bf16.msra.mxu0 %v996
    %1409 = vmatprep.subr.bf16.mxu0 0
    %1410 = vmatpush1.bf16.msra.mxu0 %v995
    %1411 = vmatprep.subr.bf16.mxu0 0
    %1412 = vmatpush2.bf16.msra.mxu0 %v1010
    %1413 = vmatprep.subr.bf16.mxu0 0
    %1414 = vmatpush2.bf16.msra.mxu0 %v1009
    %1415 = vmatprep.subr.bf16.mxu0 0
    %1416 = vmatpush2.bf16.msra.mxu0 %v1008
    %1417 = vmatprep.subr.bf16.mxu0 0
    %1418 = vmatpush2.bf16.msra.mxu0 %v1007
    %1419 = vmatprep.subr.bf16.mxu0 0
    %1420 = vmatpush2.bf16.msra.mxu0 %v1006
    %1421 = vmatprep.subr.bf16.mxu0 0
    %1422 = vmatpush2.bf16.msra.mxu0 %v1005
    %1423 = vmatprep.subr.bf16.mxu0 0
    %1424 = vmatpush2.bf16.msra.mxu0 %v1004
    %1425 = vmatprep.subr.bf16.mxu0 0
    %1426 = vmatpush2.bf16.msra.mxu0 %v1003
    %1427 = vmatprep.mubr.bf16.mxu0 %v366
    %1428 = vmatmul.mubr.bf16.gmra.mxu0 %v352
    %v1429 = vpop.f32.mrf.mxu0
    %v1430 = vadd.f32 %v1390, %v1429
    %v1431 = vpop.f32.mrf.mxu0
    %v1432 = vpop.f32.mrf.mxu0
    %v1433 = vpop.f32.mrf.mxu0
    %1434 = vdwg.mxu0
    %1435 = vmatprep.subr.bf16.mxu0 0
    %1436 = vmatpush1.bf16.msra.mxu0 %v1018
    %1437 = vmatprep.subr.bf16.mxu0 0
    %1438 = vmatpush1.bf16.msra.mxu0 %v1017
    %1439 = vmatprep.subr.bf16.mxu0 0
    %1440 = vmatpush1.bf16.msra.mxu0 %v1016
    %1441 = vmatprep.subr.bf16.mxu0 0
    %1442 = vmatpush1.bf16.msra.mxu0 %v1015
    %1443 = vmatprep.subr.bf16.mxu0 0
    %1444 = vmatpush1.bf16.msra.mxu0 %v1014
    %1445 = vmatprep.subr.bf16.mxu0 0
    %1446 = vmatpush1.bf16.msra.mxu0 %v1013
    %1447 = vmatprep.subr.bf16.mxu0 0
    %1448 = vmatpush1.bf16.msra.mxu0 %v1012
    %1449 = vmatprep.subr.bf16.mxu0 0
    %1450 = vmatpush1.bf16.msra.mxu0 %v1011
    %1451 = vmatprep.subr.bf16.mxu0 0
    %1452 = vmatpush2.bf16.msra.mxu0 %v1026
    %1453 = vmatprep.subr.bf16.mxu0 0
    %1454 = vmatpush2.bf16.msra.mxu0 %v1025
    %1455 = vmatprep.subr.bf16.mxu0 0
    %1456 = vmatpush2.bf16.msra.mxu0 %v1024
    %1457 = vmatprep.subr.bf16.mxu0 0
    %1458 = vmatpush2.bf16.msra.mxu0 %v1023
    %1459 = vmatprep.subr.bf16.mxu0 0
    %1460 = vmatpush2.bf16.msra.mxu0 %v1022
    %1461 = vmatprep.subr.bf16.mxu0 0
    %1462 = vmatpush2.bf16.msra.mxu0 %v1021
    %1463 = vmatprep.subr.bf16.mxu0 0
    %1464 = vmatpush2.bf16.msra.mxu0 %v1020
    %1465 = vmatprep.subr.bf16.mxu0 0
    %1466 = vmatpush2.bf16.msra.mxu0 %v1019
    %1467 = vmatprep.mubr.bf16.mxu0 %v370
    %1468 = vmatmul.mubr.bf16.gmra.mxu0 %v368
    %v1469 = vpop.f32.mrf.mxu0
    %v1470 = vadd.f32 %v1430, %v1469
    %v1471 = vpop.f32.mrf.mxu0
    %v1472 = vpop.f32.mrf.mxu0
    %v1473 = vpop.f32.mrf.mxu0
    %1474 = vdwg.mxu0
    %v1475 = vmul.f32 %v1470, 0.5
    %v1476 = vtanh.pop %v1475
    %v1477 = vadd.f32 %v1476, 1.0
    %v1478 = vmul.f32 %v1477, 0.5
    %vm1479 = vcmask 8192
    %1480 = vst.msk [vmem:[#allocation2] sm:$0x1] %vm1479, %v1478
    // Predicated region
    $region10: #{discriminator_forward.11} parent=1 // pred_check
      _
    $region11: #{discriminator_forward.11} parent=1 // pred_check_branch
      %1482 = sbr.rel (0) target = $region13
    $region12: #{discriminator_forward.11} parent=1 // pred_region
      %s1484 = ssub.s32 16, 16
      %1485 = vsyncadd [#allocation3], %s1484
      %s1487 = sshll.u32 [#allocation2], 4
      %s1488 = int_to_ptr.vmem [resolvable:$true] %s1487
      %1490 = dma.vmem_to_hbm [thread:$0]  %s1488, 16, %s2, [#allocation3]
    $region13: #{discriminator_forward.11} parent=1 // pred_fallthru
      _
    // Predicated region
    $region14: #{discriminator_forward.11} parent=1 // pred_check
      _
    $region15: #{discriminator_forward.11} parent=1 // pred_check_branch
      %1492 = sbr.rel (0) target = $region17
    $region16: #{discriminator_forward.11} parent=1 // pred_region
      %1493 = dma.done [#allocation3], 16
    $region17: #{discriminator_forward.11} parent=1 // pred_fallthru
      _
    %1494 = vsyncpa [#allocation3], 1

</llo_original>
